<compile_context>
chip_gen: v7x
topology: tpu7x:2x2x1
jax: 0.10.0
libtpu: 0.0.40
codegen_flags: <defaults>
</compile_context>

<pallas_src>
import functools

import jax
import jax.numpy as jnp
from jax.experimental import pallas as pl
from jax.experimental.pallas import tpu as pltpu

BN_EPS = 1e-5
LEAKY_SLOPE = 0.2

# (Cin, Cout, K, stride) for conv1..conv6
CONV_CFG = [
    (1, 16, 7, 4),
    (16, 32, 7, 3),
    (32, 64, 5, 2),
    (64, 64, 3, 1),
    (64, 128, 3, 1),
    (128, 256, 3, 1),
]

_VMEM_LIMIT = 32 * 1024 * 1024  # safe on v5e/v6e (128 MiB) and v7x (64 MiB physical)
_ACT_DTYPE = jnp.bfloat16        # inter-layer activation storage dtype


# ---------------------------------------------------------------------------
# Kernel-side shared compute: Conv1d + bias + LeakyReLU(0.2) + BatchNorm (per-view stats)
# ---------------------------------------------------------------------------
def _conv_bn_normalized(x_ref, w_ref, b_ref, g_ref, beta_ref, *, k_size, stride, lout):
    """x_ref: (B, stride, Lq, Cin) stride-decimated activation for ONE view.
       w_ref: (K*Cin, Cout)  (bf16 for Cin>1, f32 for Cin==1), feature order = tap-outer.
       Returns a list of B normalized (lout, Cout) f32 tiles (BN stats over all B rows)."""
    bsz = x_ref.shape[0]
    cin = x_ref.shape[3]
    cout = w_ref.shape[1]

    # (1, Cout) broadcasts hoisted out of the per-batch loop.
    bias = b_ref[...]
    gamma = g_ref[...]
    beta = beta_ref[...]

    ys = []
    for b in range(bsz):  # static unroll; B is small here
        acc = jnp.zeros((lout, cout), jnp.float32)
        for k in range(k_size):
            r = k % stride
            q0 = k // stride
            xs = x_ref[b, r, q0:q0 + lout, :]            # (lout, Cin), contiguous static slice
            wk = w_ref[k * cin:(k + 1) * cin, :]         # (Cin, Cout)
            if cin == 1:
                # Degenerate contraction (conv1): VPU broadcast-FMA, skip the MXU.
                acc = acc + xs.astype(jnp.float32) * wk
            else:
                acc = acc + jnp.dot(xs.astype(jnp.bfloat16), wk,
                                    preferred_element_type=jnp.float32)
        y = acc + bias
        y = jnp.where(y > 0, y, LEAKY_SLOPE * y)         # LeakyReLU(negative_slope=0.2)
        ys.append(y)

    # BatchNorm1d training-mode statistics over (batch, length) of this view,
    # single pass (E[y], E[y^2]) in f32; biased variance, eps=1e-5 (PyTorch semantics).
    s1 = ys[0].sum(axis=0, keepdims=True)
    s2 = (ys[0] * ys[0]).sum(axis=0, keepdims=True)
    for y in ys[1:]:
        s1 = s1 + y.sum(axis=0, keepdims=True)
        s2 = s2 + (y * y).sum(axis=0, keepdims=True)
    inv_m = 1.0 / float(bsz * lout)
    mean = s1 * inv_m
    var = s2 * inv_m - mean * mean
    scale = gamma * jax.lax.rsqrt(var + BN_EPS)          # (1, Cout)
    shift = beta - mean * scale                          # (1, Cout)
    return [y * scale + shift for y in ys]


def conv_bn_kernel(x_ref, w_ref, b_ref, g_ref, beta_ref, o_ref, *, k_size, stride, lout):
    ys = _conv_bn_normalized(x_ref, w_ref, b_ref, g_ref, beta_ref,
                             k_size=k_size, stride=stride, lout=lout)
    for b, y in enumerate(ys):
        o_ref[b] = y.astype(o_ref.dtype)


def conv_bn_pool_head_kernel(x_ref, w_ref, b_ref, g_ref, beta_ref, wh_ref, bh_ref, o_ref,
                             *, k_size, stride, lout):
    """Last conv layer fused with AdaptiveAvgPool1d(1) and the folded Linear-Linear head."""
    ys = _conv_bn_normalized(x_ref, w_ref, b_ref, g_ref, beta_ref,
                             k_size=k_size, stride=stride, lout=lout)
    wh = wh_ref[...]                                     # (256, 128) bf16 (= w1 @ w2)
    bh = bh_ref[...]                                     # (1, 128) f32   (= b1 @ w2 + b2)
    for b, y in enumerate(ys):
        pooled = jnp.mean(y, axis=0, keepdims=True)      # AdaptiveAvgPool1d(1) -> (1, 256)
        emb = jnp.dot(pooled.astype(jnp.bfloat16), wh,
                      preferred_element_type=jnp.float32) + bh
        o_ref[b:b + 1, :] = emb.astype(o_ref.dtype)


# ---------------------------------------------------------------------------
# pallas_call wrappers (grid over views; "parallel" -> megacore/dual-TC sharding)
# ---------------------------------------------------------------------------
def _compiler_params():
    return pltpu.CompilerParams(dimension_semantics=("parallel",),
                                vmem_limit_bytes=_VMEM_LIMIT)


def conv_bn_layer(x_dec, p, k_size, stride, lout, cout):
    v, bsz, s, lq, cin = x_dec.shape
    kern = functools.partial(conv_bn_kernel, k_size=k_size, stride=stride, lout=lout)
    return pl.pallas_call(
        kern,
        out_shape=jax.ShapeDtypeStruct((v, bsz, lout, cout), _ACT_DTYPE),
        grid=(v,),
        in_specs=[
            pl.BlockSpec((None, bsz, s, lq, cin), lambda i: (i, 0, 0, 0, 0)),
            pl.BlockSpec((k_size * cin, cout), lambda i: (0, 0)),
            pl.BlockSpec((1, cout), lambda i: (0, 0)),
            pl.BlockSpec((1, cout), lambda i: (0, 0)),
            pl.BlockSpec((1, cout), lambda i: (0, 0)),
        ],
        out_specs=pl.BlockSpec((None, bsz, lout, cout), lambda i: (i, 0, 0, 0)),
        compiler_params=_compiler_params(),
    )(x_dec, p["w"], p["b"], p["gamma"], p["beta"])


def conv_bn_pool_head_layer(x_dec, p, w_head, b_head, k_size, stride, lout, cout):
    v, bsz, s, lq, cin = x_dec.shape
    out_dim = w_head.shape[1]
    kern = functools.partial(conv_bn_pool_head_kernel, k_size=k_size, stride=stride, lout=lout)
    return pl.pallas_call(
        kern,
        out_shape=jax.ShapeDtypeStruct((v, bsz, out_dim), jnp.float32),
        grid=(v,),
        in_specs=[
            pl.BlockSpec((None, bsz, s, lq, cin), lambda i: (i, 0, 0, 0, 0)),
            pl.BlockSpec((k_size * cin, cout), lambda i: (0, 0)),
            pl.BlockSpec((1, cout), lambda i: (0, 0)),
            pl.BlockSpec((1, cout), lambda i: (0, 0)),
            pl.BlockSpec((1, cout), lambda i: (0, 0)),
            pl.BlockSpec((cout, out_dim), lambda i: (0, 0)),
            pl.BlockSpec((1, out_dim), lambda i: (0, 0)),
        ],
        out_specs=pl.BlockSpec((None, bsz, out_dim), lambda i: (i, 0, 0)),
        compiler_params=_compiler_params(),
    )(x_dec, p["w"], p["b"], p["gamma"], p["beta"], w_head, b_head)


# ---------------------------------------------------------------------------
# Wrapper-side stride decimation: (V,B,L,C) -> (V,B,stride,Lq,C).  Pure pad/reshape/
# transpose at 1x traffic — no K-fold im2col duplication in HBM.
# Element (v,b,r,q,c) holds x[v, b, q*stride + r, c]; tap k of output t reads
# (r=k%stride, q=t+k//stride), a contiguous slice inside the kernel.
# ---------------------------------------------------------------------------
def decimate(x, k_size, stride):
    v, b, length, c = x.shape
    lout = (length - k_size) // stride + 1
    lq = (k_size - 1) // stride + lout
    need = stride * lq
    if need > length:
        x = jnp.pad(x, ((0, 0), (0, 0), (0, need - length), (0, 0)))
    elif need < length:
        x = x[:, :, :need, :]       # tail beyond the last read; never touched by any tap
    x = x.reshape(v, b, lq, stride, c)
    x = jnp.transpose(x, (0, 1, 3, 2, 4))   # (V, B, stride, Lq, C)
    return x, lout


# ---------------------------------------------------------------------------
# Parameter init (deterministic, synthetic — PyTorch shapes, converted to matmul layout)
# ---------------------------------------------------------------------------
def init_params(key):
    params = {"convs": []}
    for (cin, cout, k, _stride) in CONV_CFG:
        key, kw, kb, kg, kbeta = jax.random.split(key, 5)
        bound = (cin * k) ** -0.5
        # PyTorch weight is (Cout, Cin, K); stored as (K*Cin, Cout), tap-outer / chan-inner.
        w = jax.random.uniform(kw, (k * cin, cout), jnp.float32, -bound, bound)
        b = jax.random.uniform(kb, (1, cout), jnp.float32, -bound, bound)
        gamma = 1.0 + 0.1 * jax.random.normal(kg, (1, cout), jnp.float32)
        beta = 0.1 * jax.random.normal(kbeta, (1, cout), jnp.float32)
        params["convs"].append({
            # bf16 MXU operand; conv1 (Cin=1) stays f32 for the VPU FMA path.
            "w": w if cin == 1 else w.astype(jnp.bfloat16),
            "b": b, "gamma": gamma, "beta": beta,
        })
    key, k1, k2, k3, k4 = jax.random.split(key, 5)
    w1 = jax.random.uniform(k1, (256, 256), jnp.float32, -1 / 16.0, 1 / 16.0)
    b1 = jax.random.uniform(k2, (1, 256), jnp.float32, -1 / 16.0, 1 / 16.0)
    w2 = jax.random.uniform(k3, (256, 128), jnp.float32, -1 / 16.0, 1 / 16.0)
    b2 = jax.random.uniform(k4, (1, 128), jnp.float32, -1 / 16.0, 1 / 16.0)
    # finalLayer = Linear(256,256) -> Linear(256,128) with no nonlinearity between:
    # fold into a single affine map (exact up to rounding).
    params["w_head"] = (w1 @ w2).astype(jnp.bfloat16)
    params["b_head"] = b1 @ w2 + b2
    return params


# ---------------------------------------------------------------------------
# Forward pass (classification=False, avg_embeddings=False)
# ---------------------------------------------------------------------------
@jax.jit
def baseline_convnet_forward(params, x):
    """x: (B, V, L) float32  ->  (B, V, 128) float32."""
    cur = jnp.transpose(x, (1, 0, 2))[..., None]         # (V, B, L, 1), NLC per view
    for idx, (_cin, cout, k, stride) in enumerate(CONV_CFG[:-1]):
        x_dec, lout = decimate(cur, k, stride)           # (V, B, stride, Lq, Cin)
        cur = conv_bn_layer(x_dec, params["convs"][idx], k, stride, lout, cout)
    _cin, cout, k, stride = CONV_CFG[-1]
    x_dec, lout = decimate(cur, k, stride)
    out_vb = conv_bn_pool_head_layer(x_dec, params["convs"][-1],
                                     params["w_head"], params["b_head"],
                                     k, stride, lout, cout)   # (V, B, 128)
    return jnp.transpose(out_vb, (1, 0, 2))              # (B, V, 128)


if __name__ == "__main__":
    key = jax.random.PRNGKey(0)
    kp, kx = jax.random.split(key)
    params = init_params(kp)

    # Small but valid: seq length must be large enough for the 6-layer strided conv stack.
    B, V, L = 2, 8, 256
    x = jax.random.normal(kx, (B, V, L), jnp.float32)

    out = baseline_convnet_forward(params, x)
    out = jax.block_until_ready(out)
    assert out.shape == (B, V, 128), out.shape
    assert jnp.all(jnp.isfinite(out))
    print("KERNEL_OK")
</pallas_src>

<mosaic_0001>
module attributes {stable_mosaic.version = 11 : i64} {
  func.func @conv_bn_kernel(%arg0: i32, %arg1: memref<1x2x4x64x1xf32, #tpu.memory_space<vmem>>, %arg2: memref<7x16xf32, #tpu.memory_space<vmem>>, %arg3: memref<1x16xf32, #tpu.memory_space<vmem>>, %arg4: memref<1x16xf32, #tpu.memory_space<vmem>>, %arg5: memref<1x16xf32, #tpu.memory_space<vmem>>, %arg6: memref<1x2x63x16xbf16, #tpu.memory_space<vmem>>) attributes {dimension_semantics = [#tpu.dimension_semantics<parallel>], iteration_bounds = array<i64: 8>, scalar_prefetch = 0 : i64, scratch_operands = 0 : i64, tpu.core_type = #tpu.core_type<tc>, window_params = [{transform_indices = @transform_0, window_bounds = array<i64: 1, 2, 4, 64, 1>}, {pipeline_mode = #tpu.pipeline_mode<synchronous>, transform_indices = @transform_1, window_bounds = array<i64: 7, 16>}, {pipeline_mode = #tpu.pipeline_mode<synchronous>, transform_indices = @transform_2, window_bounds = array<i64: 1, 16>}, {pipeline_mode = #tpu.pipeline_mode<synchronous>, transform_indices = @transform_3, window_bounds = array<i64: 1, 16>}, {pipeline_mode = #tpu.pipeline_mode<synchronous>, transform_indices = @transform_4, window_bounds = array<i64: 1, 16>}, {transform_indices = @transform_5, window_bounds = array<i64: 1, 2, 63, 16>}]} {
    %c0 = arith.constant 0 : index
    %c0_0 = arith.constant 0 : index
    %0 = vector.load %arg3[%c0, %c0_0] : memref<1x16xf32, #tpu.memory_space<vmem>>, vector<1x16xf32>
    %c0_1 = arith.constant 0 : index
    %c0_2 = arith.constant 0 : index
    %1 = vector.load %arg4[%c0_1, %c0_2] : memref<1x16xf32, #tpu.memory_space<vmem>>, vector<1x16xf32>
    %c0_3 = arith.constant 0 : index
    %c0_4 = arith.constant 0 : index
    %2 = vector.load %arg5[%c0_3, %c0_4] : memref<1x16xf32, #tpu.memory_space<vmem>>, vector<1x16xf32>
    %cst = arith.constant 0.000000e+00 : f32
    %3 = vector.broadcast %cst : f32 to vector<63x16xf32>
    %c0_5 = arith.constant 0 : index
    %c0_6 = arith.constant 0 : index
    %c0_7 = arith.constant 0 : index
    %c0_8 = arith.constant 0 : index
    %c0_9 = arith.constant 0 : index
    %4 = vector.load %arg1[%c0_5, %c0_6, %c0_7, %c0_8, %c0_9] : memref<1x2x4x64x1xf32, #tpu.memory_space<vmem>>, vector<1x1x1x63x1xf32>
    %5 = vector.shape_cast %4 : vector<1x1x1x63x1xf32> to vector<63x1xf32>
    %c0_10 = arith.constant 0 : index
    %c0_11 = arith.constant 0 : index
    %6 = vector.load %arg2[%c0_10, %c0_11] : memref<7x16xf32, #tpu.memory_space<vmem>>, vector<1x16xf32>
    %7 = vector.broadcast %5 : vector<63x1xf32> to vector<63x16xf32>
    %8 = vector.broadcast %6 : vector<1x16xf32> to vector<63x16xf32>
    %9 = arith.mulf %7, %8 : vector<63x16xf32>
    %10 = arith.addf %3, %9 : vector<63x16xf32>
    %c0_12 = arith.constant 0 : index
    %c0_13 = arith.constant 0 : index
    %c1 = arith.constant 1 : index
    %c0_14 = arith.constant 0 : index
    %c0_15 = arith.constant 0 : index
    %11 = vector.load %arg1[%c0_12, %c0_13, %c1, %c0_14, %c0_15] : memref<1x2x4x64x1xf32, #tpu.memory_space<vmem>>, vector<1x1x1x63x1xf32>
    %12 = vector.shape_cast %11 : vector<1x1x1x63x1xf32> to vector<63x1xf32>
    %c1_16 = arith.constant 1 : index
    %c0_17 = arith.constant 0 : index
    %13 = vector.load %arg2[%c1_16, %c0_17] : memref<7x16xf32, #tpu.memory_space<vmem>>, vector<1x16xf32>
    %14 = vector.broadcast %12 : vector<63x1xf32> to vector<63x16xf32>
    %15 = vector.broadcast %13 : vector<1x16xf32> to vector<63x16xf32>
    %16 = arith.mulf %14, %15 : vector<63x16xf32>
    %17 = arith.addf %10, %16 : vector<63x16xf32>
    %c0_18 = arith.constant 0 : index
    %c0_19 = arith.constant 0 : index
    %c2 = arith.constant 2 : index
    %c0_20 = arith.constant 0 : index
    %c0_21 = arith.constant 0 : index
    %18 = vector.load %arg1[%c0_18, %c0_19, %c2, %c0_20, %c0_21] : memref<1x2x4x64x1xf32, #tpu.memory_space<vmem>>, vector<1x1x1x63x1xf32>
    %19 = vector.shape_cast %18 : vector<1x1x1x63x1xf32> to vector<63x1xf32>
    %c2_22 = arith.constant 2 : index
    %c0_23 = arith.constant 0 : index
    %20 = vector.load %arg2[%c2_22, %c0_23] : memref<7x16xf32, #tpu.memory_space<vmem>>, vector<1x16xf32>
    %21 = vector.broadcast %19 : vector<63x1xf32> to vector<63x16xf32>
    %22 = vector.broadcast %20 : vector<1x16xf32> to vector<63x16xf32>
    %23 = arith.mulf %21, %22 : vector<63x16xf32>
    %24 = arith.addf %17, %23 : vector<63x16xf32>
    %c0_24 = arith.constant 0 : index
    %c0_25 = arith.constant 0 : index
    %c3 = arith.constant 3 : index
    %c0_26 = arith.constant 0 : index
    %c0_27 = arith.constant 0 : index
    %25 = vector.load %arg1[%c0_24, %c0_25, %c3, %c0_26, %c0_27] : memref<1x2x4x64x1xf32, #tpu.memory_space<vmem>>, vector<1x1x1x63x1xf32>
    %26 = vector.shape_cast %25 : vector<1x1x1x63x1xf32> to vector<63x1xf32>
    %c3_28 = arith.constant 3 : index
    %c0_29 = arith.constant 0 : index
    %27 = vector.load %arg2[%c3_28, %c0_29] : memref<7x16xf32, #tpu.memory_space<vmem>>, vector<1x16xf32>
    %28 = vector.broadcast %26 : vector<63x1xf32> to vector<63x16xf32>
    %29 = vector.broadcast %27 : vector<1x16xf32> to vector<63x16xf32>
    %30 = arith.mulf %28, %29 : vector<63x16xf32>
    %31 = arith.addf %24, %30 : vector<63x16xf32>
    %c0_30 = arith.constant 0 : index
    %c0_31 = arith.constant 0 : index
    %c0_32 = arith.constant 0 : index
    %c1_33 = arith.constant 1 : index
    %c0_34 = arith.constant 0 : index
    %32 = vector.load %arg1[%c0_30, %c0_31, %c0_32, %c1_33, %c0_34] : memref<1x2x4x64x1xf32, #tpu.memory_space<vmem>>, vector<1x1x1x63x1xf32>
    %33 = vector.shape_cast %32 : vector<1x1x1x63x1xf32> to vector<63x1xf32>
    %c4 = arith.constant 4 : index
    %c0_35 = arith.constant 0 : index
    %34 = vector.load %arg2[%c4, %c0_35] : memref<7x16xf32, #tpu.memory_space<vmem>>, vector<1x16xf32>
    %35 = vector.broadcast %33 : vector<63x1xf32> to vector<63x16xf32>
    %36 = vector.broadcast %34 : vector<1x16xf32> to vector<63x16xf32>
    %37 = arith.mulf %35, %36 : vector<63x16xf32>
    %38 = arith.addf %31, %37 : vector<63x16xf32>
    %c0_36 = arith.constant 0 : index
    %c0_37 = arith.constant 0 : index
    %c1_38 = arith.constant 1 : index
    %c1_39 = arith.constant 1 : index
    %c0_40 = arith.constant 0 : index
    %39 = vector.load %arg1[%c0_36, %c0_37, %c1_38, %c1_39, %c0_40] : memref<1x2x4x64x1xf32, #tpu.memory_space<vmem>>, vector<1x1x1x63x1xf32>
    %40 = vector.shape_cast %39 : vector<1x1x1x63x1xf32> to vector<63x1xf32>
    %c5 = arith.constant 5 : index
    %c0_41 = arith.constant 0 : index
    %41 = vector.load %arg2[%c5, %c0_41] : memref<7x16xf32, #tpu.memory_space<vmem>>, vector<1x16xf32>
    %42 = vector.broadcast %40 : vector<63x1xf32> to vector<63x16xf32>
    %43 = vector.broadcast %41 : vector<1x16xf32> to vector<63x16xf32>
    %44 = arith.mulf %42, %43 : vector<63x16xf32>
    %45 = arith.addf %38, %44 : vector<63x16xf32>
    %c0_42 = arith.constant 0 : index
    %c0_43 = arith.constant 0 : index
    %c2_44 = arith.constant 2 : index
    %c1_45 = arith.constant 1 : index
    %c0_46 = arith.constant 0 : index
    %46 = vector.load %arg1[%c0_42, %c0_43, %c2_44, %c1_45, %c0_46] : memref<1x2x4x64x1xf32, #tpu.memory_space<vmem>>, vector<1x1x1x63x1xf32>
    %47 = vector.shape_cast %46 : vector<1x1x1x63x1xf32> to vector<63x1xf32>
    %c6 = arith.constant 6 : index
    %c0_47 = arith.constant 0 : index
    %48 = vector.load %arg2[%c6, %c0_47] : memref<7x16xf32, #tpu.memory_space<vmem>>, vector<1x16xf32>
    %49 = vector.broadcast %47 : vector<63x1xf32> to vector<63x16xf32>
    %50 = vector.broadcast %48 : vector<1x16xf32> to vector<63x16xf32>
    %51 = arith.mulf %49, %50 : vector<63x16xf32>
    %52 = arith.addf %45, %51 : vector<63x16xf32>
    %53 = vector.broadcast %0 : vector<1x16xf32> to vector<63x16xf32>
    %54 = arith.addf %52, %53 : vector<63x16xf32>
    %cst_48 = arith.constant 0.000000e+00 : f32
    %55 = vector.broadcast %cst_48 : f32 to vector<63x16xf32>
    %56 = arith.cmpf ogt, %54, %55 : vector<63x16xf32>
    %cst_49 = arith.constant 2.000000e-01 : f32
    %57 = vector.broadcast %cst_49 : f32 to vector<63x16xf32>
    %58 = arith.mulf %57, %54 : vector<63x16xf32>
    %59 = arith.select %56, %54, %58 : vector<63x16xi1>, vector<63x16xf32>
    %cst_50 = arith.constant 0.000000e+00 : f32
    %60 = vector.broadcast %cst_50 : f32 to vector<63x16xf32>
    %c0_51 = arith.constant 0 : index
    %c1_52 = arith.constant 1 : index
    %c0_53 = arith.constant 0 : index
    %c0_54 = arith.constant 0 : index
    %c0_55 = arith.constant 0 : index
    %61 = vector.load %arg1[%c0_51, %c1_52, %c0_53, %c0_54, %c0_55] : memref<1x2x4x64x1xf32, #tpu.memory_space<vmem>>, vector<1x1x1x63x1xf32>
    %62 = vector.shape_cast %61 : vector<1x1x1x63x1xf32> to vector<63x1xf32>
    %c0_56 = arith.constant 0 : index
    %c0_57 = arith.constant 0 : index
    %63 = vector.load %arg2[%c0_56, %c0_57] : memref<7x16xf32, #tpu.memory_space<vmem>>, vector<1x16xf32>
    %64 = vector.broadcast %62 : vector<63x1xf32> to vector<63x16xf32>
    %65 = vector.broadcast %63 : vector<1x16xf32> to vector<63x16xf32>
    %66 = arith.mulf %64, %65 : vector<63x16xf32>
    %67 = arith.addf %60, %66 : vector<63x16xf32>
    %c0_58 = arith.constant 0 : index
    %c1_59 = arith.constant 1 : index
    %c1_60 = arith.constant 1 : index
    %c0_61 = arith.constant 0 : index
    %c0_62 = arith.constant 0 : index
    %68 = vector.load %arg1[%c0_58, %c1_59, %c1_60, %c0_61, %c0_62] : memref<1x2x4x64x1xf32, #tpu.memory_space<vmem>>, vector<1x1x1x63x1xf32>
    %69 = vector.shape_cast %68 : vector<1x1x1x63x1xf32> to vector<63x1xf32>
    %c1_63 = arith.constant 1 : index
    %c0_64 = arith.constant 0 : index
    %70 = vector.load %arg2[%c1_63, %c0_64] : memref<7x16xf32, #tpu.memory_space<vmem>>, vector<1x16xf32>
    %71 = vector.broadcast %69 : vector<63x1xf32> to vector<63x16xf32>
    %72 = vector.broadcast %70 : vector<1x16xf32> to vector<63x16xf32>
    %73 = arith.mulf %71, %72 : vector<63x16xf32>
    %74 = arith.addf %67, %73 : vector<63x16xf32>
    %c0_65 = arith.constant 0 : index
    %c1_66 = arith.constant 1 : index
    %c2_67 = arith.constant 2 : index
    %c0_68 = arith.constant 0 : index
    %c0_69 = arith.constant 0 : index
    %75 = vector.load %arg1[%c0_65, %c1_66, %c2_67, %c0_68, %c0_69] : memref<1x2x4x64x1xf32, #tpu.memory_space<vmem>>, vector<1x1x1x63x1xf32>
    %76 = vector.shape_cast %75 : vector<1x1x1x63x1xf32> to vector<63x1xf32>
    %c2_70 = arith.constant 2 : index
    %c0_71 = arith.constant 0 : index
    %77 = vector.load %arg2[%c2_70, %c0_71] : memref<7x16xf32, #tpu.memory_space<vmem>>, vector<1x16xf32>
    %78 = vector.broadcast %76 : vector<63x1xf32> to vector<63x16xf32>
    %79 = vector.broadcast %77 : vector<1x16xf32> to vector<63x16xf32>
    %80 = arith.mulf %78, %79 : vector<63x16xf32>
    %81 = arith.addf %74, %80 : vector<63x16xf32>
    %c0_72 = arith.constant 0 : index
    %c1_73 = arith.constant 1 : index
    %c3_74 = arith.constant 3 : index
    %c0_75 = arith.constant 0 : index
    %c0_76 = arith.constant 0 : index
    %82 = vector.load %arg1[%c0_72, %c1_73, %c3_74, %c0_75, %c0_76] : memref<1x2x4x64x1xf32, #tpu.memory_space<vmem>>, vector<1x1x1x63x1xf32>
    %83 = vector.shape_cast %82 : vector<1x1x1x63x1xf32> to vector<63x1xf32>
    %c3_77 = arith.constant 3 : index
    %c0_78 = arith.constant 0 : index
    %84 = vector.load %arg2[%c3_77, %c0_78] : memref<7x16xf32, #tpu.memory_space<vmem>>, vector<1x16xf32>
    %85 = vector.broadcast %83 : vector<63x1xf32> to vector<63x16xf32>
    %86 = vector.broadcast %84 : vector<1x16xf32> to vector<63x16xf32>
    %87 = arith.mulf %85, %86 : vector<63x16xf32>
    %88 = arith.addf %81, %87 : vector<63x16xf32>
    %c0_79 = arith.constant 0 : index
    %c1_80 = arith.constant 1 : index
    %c0_81 = arith.constant 0 : index
    %c1_82 = arith.constant 1 : index
    %c0_83 = arith.constant 0 : index
    %89 = vector.load %arg1[%c0_79, %c1_80, %c0_81, %c1_82, %c0_83] : memref<1x2x4x64x1xf32, #tpu.memory_space<vmem>>, vector<1x1x1x63x1xf32>
    %90 = vector.shape_cast %89 : vector<1x1x1x63x1xf32> to vector<63x1xf32>
    %c4_84 = arith.constant 4 : index
    %c0_85 = arith.constant 0 : index
    %91 = vector.load %arg2[%c4_84, %c0_85] : memref<7x16xf32, #tpu.memory_space<vmem>>, vector<1x16xf32>
    %92 = vector.broadcast %90 : vector<63x1xf32> to vector<63x16xf32>
    %93 = vector.broadcast %91 : vector<1x16xf32> to vector<63x16xf32>
    %94 = arith.mulf %92, %93 : vector<63x16xf32>
    %95 = arith.addf %88, %94 : vector<63x16xf32>
    %c0_86 = arith.constant 0 : index
    %c1_87 = arith.constant 1 : index
    %c1_88 = arith.constant 1 : index
    %c1_89 = arith.constant 1 : index
    %c0_90 = arith.constant 0 : index
    %96 = vector.load %arg1[%c0_86, %c1_87, %c1_88, %c1_89, %c0_90] : memref<1x2x4x64x1xf32, #tpu.memory_space<vmem>>, vector<1x1x1x63x1xf32>
    %97 = vector.shape_cast %96 : vector<1x1x1x63x1xf32> to vector<63x1xf32>
    %c5_91 = arith.constant 5 : index
    %c0_92 = arith.constant 0 : index
    %98 = vector.load %arg2[%c5_91, %c0_92] : memref<7x16xf32, #tpu.memory_space<vmem>>, vector<1x16xf32>
    %99 = vector.broadcast %97 : vector<63x1xf32> to vector<63x16xf32>
    %100 = vector.broadcast %98 : vector<1x16xf32> to vector<63x16xf32>
    %101 = arith.mulf %99, %100 : vector<63x16xf32>
    %102 = arith.addf %95, %101 : vector<63x16xf32>
    %c0_93 = arith.constant 0 : index
    %c1_94 = arith.constant 1 : index
    %c2_95 = arith.constant 2 : index
    %c1_96 = arith.constant 1 : index
    %c0_97 = arith.constant 0 : index
    %103 = vector.load %arg1[%c0_93, %c1_94, %c2_95, %c1_96, %c0_97] : memref<1x2x4x64x1xf32, #tpu.memory_space<vmem>>, vector<1x1x1x63x1xf32>
    %104 = vector.shape_cast %103 : vector<1x1x1x63x1xf32> to vector<63x1xf32>
    %c6_98 = arith.constant 6 : index
    %c0_99 = arith.constant 0 : index
    %105 = vector.load %arg2[%c6_98, %c0_99] : memref<7x16xf32, #tpu.memory_space<vmem>>, vector<1x16xf32>
    %106 = vector.broadcast %104 : vector<63x1xf32> to vector<63x16xf32>
    %107 = vector.broadcast %105 : vector<1x16xf32> to vector<63x16xf32>
    %108 = arith.mulf %106, %107 : vector<63x16xf32>
    %109 = arith.addf %102, %108 : vector<63x16xf32>
    %110 = vector.broadcast %0 : vector<1x16xf32> to vector<63x16xf32>
    %111 = arith.addf %109, %110 : vector<63x16xf32>
    %cst_100 = arith.constant 0.000000e+00 : f32
    %112 = vector.broadcast %cst_100 : f32 to vector<63x16xf32>
    %113 = arith.cmpf ogt, %111, %112 : vector<63x16xf32>
    %cst_101 = arith.constant 2.000000e-01 : f32
    %114 = vector.broadcast %cst_101 : f32 to vector<63x16xf32>
    %115 = arith.mulf %114, %111 : vector<63x16xf32>
    %116 = arith.select %113, %111, %115 : vector<63x16xi1>, vector<63x16xf32>
    %cst_102 = arith.constant dense<0.000000e+00> : vector<16xf32>
    %117 = vector.multi_reduction <add>, %59, %cst_102 [0] : vector<63x16xf32> to vector<16xf32>
    %118 = vector.shape_cast %117 : vector<16xf32> to vector<1x16xf32>
    %119 = arith.mulf %59, %59 : vector<63x16xf32>
    %cst_103 = arith.constant dense<0.000000e+00> : vector<16xf32>
    %120 = vector.multi_reduction <add>, %119, %cst_103 [0] : vector<63x16xf32> to vector<16xf32>
    %121 = vector.shape_cast %120 : vector<16xf32> to vector<1x16xf32>
    %cst_104 = arith.constant dense<0.000000e+00> : vector<16xf32>
    %122 = vector.multi_reduction <add>, %116, %cst_104 [0] : vector<63x16xf32> to vector<16xf32>
    %123 = vector.shape_cast %122 : vector<16xf32> to vector<1x16xf32>
    %124 = arith.addf %118, %123 : vector<1x16xf32>
    %125 = arith.mulf %116, %116 : vector<63x16xf32>
    %cst_105 = arith.constant dense<0.000000e+00> : vector<16xf32>
    %126 = vector.multi_reduction <add>, %125, %cst_105 [0] : vector<63x16xf32> to vector<16xf32>
    %127 = vector.shape_cast %126 : vector<16xf32> to vector<1x16xf32>
    %128 = arith.addf %121, %127 : vector<1x16xf32>
    %cst_106 = arith.constant 0.00793650839 : f32
    %129 = vector.broadcast %cst_106 : f32 to vector<1x16xf32>
    %130 = arith.mulf %124, %129 : vector<1x16xf32>
    %cst_107 = arith.constant 0.00793650839 : f32
    %131 = vector.broadcast %cst_107 : f32 to vector<1x16xf32>
    %132 = arith.mulf %128, %131 : vector<1x16xf32>
    %133 = arith.mulf %130, %130 : vector<1x16xf32>
    %134 = arith.subf %132, %133 : vector<1x16xf32>
    %cst_108 = arith.constant 9.99999974E-6 : f32
    %135 = vector.broadcast %cst_108 : f32 to vector<1x16xf32>
    %136 = arith.addf %134, %135 : vector<1x16xf32>
    %137 = math.rsqrt %136 : vector<1x16xf32>
    %138 = arith.mulf %1, %137 : vector<1x16xf32>
    %139 = arith.mulf %130, %138 : vector<1x16xf32>
    %140 = arith.subf %2, %139 : vector<1x16xf32>
    %141 = vector.broadcast %138 : vector<1x16xf32> to vector<63x16xf32>
    %142 = arith.mulf %59, %141 : vector<63x16xf32>
    %143 = vector.broadcast %140 : vector<1x16xf32> to vector<63x16xf32>
    %144 = arith.addf %142, %143 : vector<63x16xf32>
    %145 = vector.broadcast %138 : vector<1x16xf32> to vector<63x16xf32>
    %146 = arith.mulf %116, %145 : vector<63x16xf32>
    %147 = vector.broadcast %140 : vector<1x16xf32> to vector<63x16xf32>
    %148 = arith.addf %146, %147 : vector<63x16xf32>
    %149 = arith.truncf %144 : vector<63x16xf32> to vector<63x16xbf16>
    %c0_109 = arith.constant 0 : index
    %c0_110 = arith.constant 0 : index
    %c0_111 = arith.constant 0 : index
    %c0_112 = arith.constant 0 : index
    %150 = vector.load %arg6[%c0_109, %c0_110, %c0_111, %c0_112] : memref<1x2x63x16xbf16, #tpu.memory_space<vmem>>, vector<1x1x63x16xbf16>
    %151 = vector.shape_cast %150 : vector<1x1x63x16xbf16> to vector<63x16xbf16>
    %152 = vector.shape_cast %149 : vector<63x16xbf16> to vector<1x1x63x16xbf16>
    tpu.vector_store %arg6[%c0_109, %c0_110, %c0_111, %c0_112], %152 {strides = array<i32>} : memref<1x2x63x16xbf16, #tpu.memory_space<vmem>>, vector<1x1x63x16xbf16>,
    %153 = arith.truncf %148 : vector<63x16xf32> to vector<63x16xbf16>
    %c0_113 = arith.constant 0 : index
    %c1_114 = arith.constant 1 : index
    %c0_115 = arith.constant 0 : index
    %c0_116 = arith.constant 0 : index
    %154 = vector.load %arg6[%c0_113, %c1_114, %c0_115, %c0_116] : memref<1x2x63x16xbf16, #tpu.memory_space<vmem>>, vector<1x1x63x16xbf16>
    %155 = vector.shape_cast %154 : vector<1x1x63x16xbf16> to vector<63x16xbf16>
    %156 = vector.shape_cast %153 : vector<63x16xbf16> to vector<1x1x63x16xbf16>
    tpu.vector_store %arg6[%c0_113, %c1_114, %c0_115, %c0_116], %156 {strides = array<i32>} : memref<1x2x63x16xbf16, #tpu.memory_space<vmem>>, vector<1x1x63x16xbf16>,
    return
  }
  func.func @transform_0(%arg0: i32) -> (i32, i32, i32, i32, i32) {
    %c0_i32 = arith.constant 0 : i32
    %c0_i32_0 = arith.constant 0 : i32
    %c0_i32_1 = arith.constant 0 : i32
    %c0_i32_2 = arith.constant 0 : i32
    %c0_i32_3 = arith.constant 0 : i32
    return %arg0, %c0_i32, %c0_i32_0, %c0_i32_1, %c0_i32_2 : i32, i32, i32, i32, i32
  }
  func.func @transform_1(%arg0: i32) -> (i32, i32) {
    %c0_i32 = arith.constant 0 : i32
    %c0_i32_0 = arith.constant 0 : i32
    %c0_i32_1 = arith.constant 0 : i32
    return %c0_i32, %c0_i32_0 : i32, i32
  }
  func.func @transform_2(%arg0: i32) -> (i32, i32) {
    %c0_i32 = arith.constant 0 : i32
    %c0_i32_0 = arith.constant 0 : i32
    %c0_i32_1 = arith.constant 0 : i32
    return %c0_i32, %c0_i32_0 : i32, i32
  }
  func.func @transform_3(%arg0: i32) -> (i32, i32) {
    %c0_i32 = arith.constant 0 : i32
    %c0_i32_0 = arith.constant 0 : i32
    %c0_i32_1 = arith.constant 0 : i32
    return %c0_i32, %c0_i32_0 : i32, i32
  }
  func.func @transform_4(%arg0: i32) -> (i32, i32) {
    %c0_i32 = arith.constant 0 : i32
    %c0_i32_0 = arith.constant 0 : i32
    %c0_i32_1 = arith.constant 0 : i32
    return %c0_i32, %c0_i32_0 : i32, i32
  }
  func.func @transform_5(%arg0: i32) -> (i32, i32, i32, i32) {
    %c0_i32 = arith.constant 0 : i32
    %c0_i32_0 = arith.constant 0 : i32
    %c0_i32_1 = arith.constant 0 : i32
    %c0_i32_2 = arith.constant 0 : i32
    return %arg0, %c0_i32, %c0_i32_0, %c0_i32_1 : i32, i32, i32, i32
  }
}

module attributes {stable_mosaic.version = 11 : i64} {
  func.func @conv_bn_kernel(%arg0: i32, %arg1: memref<1x2x3x21x16xbf16, #tpu.memory_space<vmem>>, %arg2: memref<112x32xbf16, #tpu.memory_space<vmem>>, %arg3: memref<1x32xf32, #tpu.memory_space<vmem>>, %arg4: memref<1x32xf32, #tpu.memory_space<vmem>>, %arg5: memref<1x32xf32, #tpu.memory_space<vmem>>, %arg6: memref<1x2x19x32xbf16, #tpu.memory_space<vmem>>) attributes {dimension_semantics = [#tpu.dimension_semantics<parallel>], iteration_bounds = array<i64: 8>, scalar_prefetch = 0 : i64, scratch_operands = 0 : i64, tpu.core_type = #tpu.core_type<tc>, window_params = [{transform_indices = @transform_0, window_bounds = array<i64: 1, 2, 3, 21, 16>}, {pipeline_mode = #tpu.pipeline_mode<synchronous>, transform_indices = @transform_1, window_bounds = array<i64: 112, 32>}, {pipeline_mode = #tpu.pipeline_mode<synchronous>, transform_indices = @transform_2, window_bounds = array<i64: 1, 32>}, {pipeline_mode = #tpu.pipeline_mode<synchronous>, transform_indices = @transform_3, window_bounds = array<i64: 1, 32>}, {pipeline_mode = #tpu.pipeline_mode<synchronous>, transform_indices = @transform_4, window_bounds = array<i64: 1, 32>}, {transform_indices = @transform_5, window_bounds = array<i64: 1, 2, 19, 32>}]} {
    %c0 = arith.constant 0 : index
    %c0_0 = arith.constant 0 : index
    %0 = vector.load %arg3[%c0, %c0_0] : memref<1x32xf32, #tpu.memory_space<vmem>>, vector<1x32xf32>
    %c0_1 = arith.constant 0 : index
    %c0_2 = arith.constant 0 : index
    %1 = vector.load %arg4[%c0_1, %c0_2] : memref<1x32xf32, #tpu.memory_space<vmem>>, vector<1x32xf32>
    %c0_3 = arith.constant 0 : index
    %c0_4 = arith.constant 0 : index
    %2 = vector.load %arg5[%c0_3, %c0_4] : memref<1x32xf32, #tpu.memory_space<vmem>>, vector<1x32xf32>
    %cst = arith.constant 0.000000e+00 : f32
    %3 = vector.broadcast %cst : f32 to vector<19x32xf32>
    %c0_5 = arith.constant 0 : index
    %c0_6 = arith.constant 0 : index
    %c0_7 = arith.constant 0 : index
    %c0_8 = arith.constant 0 : index
    %c0_9 = arith.constant 0 : index
    %4 = vector.load %arg1[%c0_5, %c0_6, %c0_7, %c0_8, %c0_9] : memref<1x2x3x21x16xbf16, #tpu.memory_space<vmem>>, vector<1x1x1x19x16xbf16>
    %5 = vector.shape_cast %4 : vector<1x1x1x19x16xbf16> to vector<19x16xbf16>
    %c0_10 = arith.constant 0 : index
    %c0_11 = arith.constant 0 : index
    %6 = vector.load %arg2[%c0_10, %c0_11] : memref<112x32xbf16, #tpu.memory_space<vmem>>, vector<16x32xbf16>
    %cst_12 = arith.constant dense<0.000000e+00> : vector<19x32xf32>
    %7 = tpu.matmul %5, %6, %cst_12 {dimension_numbers = #tpu.dot_dimension_numbers<[1], [0], [0], [1], [0, 0, 1, 1], [], []>} : vector<19x16xbf16>, vector<16x32xbf16>, vector<19x32xf32> -> vector<19x32xf32>
    %8 = arith.addf %3, %7 : vector<19x32xf32>
    %c0_13 = arith.constant 0 : index
    %c0_14 = arith.constant 0 : index
    %c1 = arith.constant 1 : index
    %c0_15 = arith.constant 0 : index
    %c0_16 = arith.constant 0 : index
    %9 = vector.load %arg1[%c0_13, %c0_14, %c1, %c0_15, %c0_16] : memref<1x2x3x21x16xbf16, #tpu.memory_space<vmem>>, vector<1x1x1x19x16xbf16>
    %10 = vector.shape_cast %9 : vector<1x1x1x19x16xbf16> to vector<19x16xbf16>
    %c16 = arith.constant 16 : index
    %c0_17 = arith.constant 0 : index
    %11 = vector.load %arg2[%c16, %c0_17] : memref<112x32xbf16, #tpu.memory_space<vmem>>, vector<16x32xbf16>
    %cst_18 = arith.constant dense<0.000000e+00> : vector<19x32xf32>
    %12 = tpu.matmul %10, %11, %cst_18 {dimension_numbers = #tpu.dot_dimension_numbers<[1], [0], [0], [1], [0, 0, 1, 1], [], []>} : vector<19x16xbf16>, vector<16x32xbf16>, vector<19x32xf32> -> vector<19x32xf32>
    %13 = arith.addf %8, %12 : vector<19x32xf32>
    %c0_19 = arith.constant 0 : index
    %c0_20 = arith.constant 0 : index
    %c2 = arith.constant 2 : index
    %c0_21 = arith.constant 0 : index
    %c0_22 = arith.constant 0 : index
    %14 = vector.load %arg1[%c0_19, %c0_20, %c2, %c0_21, %c0_22] : memref<1x2x3x21x16xbf16, #tpu.memory_space<vmem>>, vector<1x1x1x19x16xbf16>
    %15 = vector.shape_cast %14 : vector<1x1x1x19x16xbf16> to vector<19x16xbf16>
    %c32 = arith.constant 32 : index
    %c0_23 = arith.constant 0 : index
    %16 = vector.load %arg2[%c32, %c0_23] : memref<112x32xbf16, #tpu.memory_space<vmem>>, vector<16x32xbf16>
    %cst_24 = arith.constant dense<0.000000e+00> : vector<19x32xf32>
    %17 = tpu.matmul %15, %16, %cst_24 {dimension_numbers = #tpu.dot_dimension_numbers<[1], [0], [0], [1], [0, 0, 1, 1], [], []>} : vector<19x16xbf16>, vector<16x32xbf16>, vector<19x32xf32> -> vector<19x32xf32>
    %18 = arith.addf %13, %17 : vector<19x32xf32>
    %c0_25 = arith.constant 0 : index
    %c0_26 = arith.constant 0 : index
    %c0_27 = arith.constant 0 : index
    %c1_28 = arith.constant 1 : index
    %c0_29 = arith.constant 0 : index
    %19 = vector.load %arg1[%c0_25, %c0_26, %c0_27, %c1_28, %c0_29] : memref<1x2x3x21x16xbf16, #tpu.memory_space<vmem>>, vector<1x1x1x19x16xbf16>
    %20 = vector.shape_cast %19 : vector<1x1x1x19x16xbf16> to vector<19x16xbf16>
    %c48 = arith.constant 48 : index
    %c0_30 = arith.constant 0 : index
    %21 = vector.load %arg2[%c48, %c0_30] : memref<112x32xbf16, #tpu.memory_space<vmem>>, vector<16x32xbf16>
    %cst_31 = arith.constant dense<0.000000e+00> : vector<19x32xf32>
    %22 = tpu.matmul %20, %21, %cst_31 {dimension_numbers = #tpu.dot_dimension_numbers<[1], [0], [0], [1], [0, 0, 1, 1], [], []>} : vector<19x16xbf16>, vector<16x32xbf16>, vector<19x32xf32> -> vector<19x32xf32>
    %23 = arith.addf %18, %22 : vector<19x32xf32>
    %c0_32 = arith.constant 0 : index
    %c0_33 = arith.constant 0 : index
    %c1_34 = arith.constant 1 : index
    %c1_35 = arith.constant 1 : index
    %c0_36 = arith.constant 0 : index
    %24 = vector.load %arg1[%c0_32, %c0_33, %c1_34, %c1_35, %c0_36] : memref<1x2x3x21x16xbf16, #tpu.memory_space<vmem>>, vector<1x1x1x19x16xbf16>
    %25 = vector.shape_cast %24 : vector<1x1x1x19x16xbf16> to vector<19x16xbf16>
    %c64 = arith.constant 64 : index
    %c0_37 = arith.constant 0 : index
    %26 = vector.load %arg2[%c64, %c0_37] : memref<112x32xbf16, #tpu.memory_space<vmem>>, vector<16x32xbf16>
    %cst_38 = arith.constant dense<0.000000e+00> : vector<19x32xf32>
    %27 = tpu.matmul %25, %26, %cst_38 {dimension_numbers = #tpu.dot_dimension_numbers<[1], [0], [0], [1], [0, 0, 1, 1], [], []>} : vector<19x16xbf16>, vector<16x32xbf16>, vector<19x32xf32> -> vector<19x32xf32>
    %28 = arith.addf %23, %27 : vector<19x32xf32>
    %c0_39 = arith.constant 0 : index
    %c0_40 = arith.constant 0 : index
    %c2_41 = arith.constant 2 : index
    %c1_42 = arith.constant 1 : index
    %c0_43 = arith.constant 0 : index
    %29 = vector.load %arg1[%c0_39, %c0_40, %c2_41, %c1_42, %c0_43] : memref<1x2x3x21x16xbf16, #tpu.memory_space<vmem>>, vector<1x1x1x19x16xbf16>
    %30 = vector.shape_cast %29 : vector<1x1x1x19x16xbf16> to vector<19x16xbf16>
    %c80 = arith.constant 80 : index
    %c0_44 = arith.constant 0 : index
    %31 = vector.load %arg2[%c80, %c0_44] : memref<112x32xbf16, #tpu.memory_space<vmem>>, vector<16x32xbf16>
    %cst_45 = arith.constant dense<0.000000e+00> : vector<19x32xf32>
    %32 = tpu.matmul %30, %31, %cst_45 {dimension_numbers = #tpu.dot_dimension_numbers<[1], [0], [0], [1], [0, 0, 1, 1], [], []>} : vector<19x16xbf16>, vector<16x32xbf16>, vector<19x32xf32> -> vector<19x32xf32>
    %33 = arith.addf %28, %32 : vector<19x32xf32>
    %c0_46 = arith.constant 0 : index
    %c0_47 = arith.constant 0 : index
    %c0_48 = arith.constant 0 : index
    %c2_49 = arith.constant 2 : index
    %c0_50 = arith.constant 0 : index
    %34 = vector.load %arg1[%c0_46, %c0_47, %c0_48, %c2_49, %c0_50] : memref<1x2x3x21x16xbf16, #tpu.memory_space<vmem>>, vector<1x1x1x19x16xbf16>
    %35 = vector.shape_cast %34 : vector<1x1x1x19x16xbf16> to vector<19x16xbf16>
    %c96 = arith.constant 96 : index
    %c0_51 = arith.constant 0 : index
    %36 = vector.load %arg2[%c96, %c0_51] : memref<112x32xbf16, #tpu.memory_space<vmem>>, vector<16x32xbf16>
    %cst_52 = arith.constant dense<0.000000e+00> : vector<19x32xf32>
    %37 = tpu.matmul %35, %36, %cst_52 {dimension_numbers = #tpu.dot_dimension_numbers<[1], [0], [0], [1], [0, 0, 1, 1], [], []>} : vector<19x16xbf16>, vector<16x32xbf16>, vector<19x32xf32> -> vector<19x32xf32>
    %38 = arith.addf %33, %37 : vector<19x32xf32>
    %39 = vector.broadcast %0 : vector<1x32xf32> to vector<19x32xf32>
    %40 = arith.addf %38, %39 : vector<19x32xf32>
    %cst_53 = arith.constant 0.000000e+00 : f32
    %41 = vector.broadcast %cst_53 : f32 to vector<19x32xf32>
    %42 = arith.cmpf ogt, %40, %41 : vector<19x32xf32>
    %cst_54 = arith.constant 2.000000e-01 : f32
    %43 = vector.broadcast %cst_54 : f32 to vector<19x32xf32>
    %44 = arith.mulf %43, %40 : vector<19x32xf32>
    %45 = arith.select %42, %40, %44 : vector<19x32xi1>, vector<19x32xf32>
    %cst_55 = arith.constant 0.000000e+00 : f32
    %46 = vector.broadcast %cst_55 : f32 to vector<19x32xf32>
    %c0_56 = arith.constant 0 : index
    %c1_57 = arith.constant 1 : index
    %c0_58 = arith.constant 0 : index
    %c0_59 = arith.constant 0 : index
    %c0_60 = arith.constant 0 : index
    %47 = vector.load %arg1[%c0_56, %c1_57, %c0_58, %c0_59, %c0_60] : memref<1x2x3x21x16xbf16, #tpu.memory_space<vmem>>, vector<1x1x1x19x16xbf16>
    %48 = vector.shape_cast %47 : vector<1x1x1x19x16xbf16> to vector<19x16xbf16>
    %c0_61 = arith.constant 0 : index
    %c0_62 = arith.constant 0 : index
    %49 = vector.load %arg2[%c0_61, %c0_62] : memref<112x32xbf16, #tpu.memory_space<vmem>>, vector<16x32xbf16>
    %cst_63 = arith.constant dense<0.000000e+00> : vector<19x32xf32>
    %50 = tpu.matmul %48, %49, %cst_63 {dimension_numbers = #tpu.dot_dimension_numbers<[1], [0], [0], [1], [0, 0, 1, 1], [], []>} : vector<19x16xbf16>, vector<16x32xbf16>, vector<19x32xf32> -> vector<19x32xf32>
    %51 = arith.addf %46, %50 : vector<19x32xf32>
    %c0_64 = arith.constant 0 : index
    %c1_65 = arith.constant 1 : index
    %c1_66 = arith.constant 1 : index
    %c0_67 = arith.constant 0 : index
    %c0_68 = arith.constant 0 : index
    %52 = vector.load %arg1[%c0_64, %c1_65, %c1_66, %c0_67, %c0_68] : memref<1x2x3x21x16xbf16, #tpu.memory_space<vmem>>, vector<1x1x1x19x16xbf16>
    %53 = vector.shape_cast %52 : vector<1x1x1x19x16xbf16> to vector<19x16xbf16>
    %c16_69 = arith.constant 16 : index
    %c0_70 = arith.constant 0 : index
    %54 = vector.load %arg2[%c16_69, %c0_70] : memref<112x32xbf16, #tpu.memory_space<vmem>>, vector<16x32xbf16>
    %cst_71 = arith.constant dense<0.000000e+00> : vector<19x32xf32>
    %55 = tpu.matmul %53, %54, %cst_71 {dimension_numbers = #tpu.dot_dimension_numbers<[1], [0], [0], [1], [0, 0, 1, 1], [], []>} : vector<19x16xbf16>, vector<16x32xbf16>, vector<19x32xf32> -> vector<19x32xf32>
    %56 = arith.addf %51, %55 : vector<19x32xf32>
    %c0_72 = arith.constant 0 : index
    %c1_73 = arith.constant 1 : index
    %c2_74 = arith.constant 2 : index
    %c0_75 = arith.constant 0 : index
    %c0_76 = arith.constant 0 : index
    %57 = vector.load %arg1[%c0_72, %c1_73, %c2_74, %c0_75, %c0_76] : memref<1x2x3x21x16xbf16, #tpu.memory_space<vmem>>, vector<1x1x1x19x16xbf16>
    %58 = vector.shape_cast %57 : vector<1x1x1x19x16xbf16> to vector<19x16xbf16>
    %c32_77 = arith.constant 32 : index
    %c0_78 = arith.constant 0 : index
    %59 = vector.load %arg2[%c32_77, %c0_78] : memref<112x32xbf16, #tpu.memory_space<vmem>>, vector<16x32xbf16>
    %cst_79 = arith.constant dense<0.000000e+00> : vector<19x32xf32>
    %60 = tpu.matmul %58, %59, %cst_79 {dimension_numbers = #tpu.dot_dimension_numbers<[1], [0], [0], [1], [0, 0, 1, 1], [], []>} : vector<19x16xbf16>, vector<16x32xbf16>, vector<19x32xf32> -> vector<19x32xf32>
    %61 = arith.addf %56, %60 : vector<19x32xf32>
    %c0_80 = arith.constant 0 : index
    %c1_81 = arith.constant 1 : index
    %c0_82 = arith.constant 0 : index
    %c1_83 = arith.constant 1 : index
    %c0_84 = arith.constant 0 : index
    %62 = vector.load %arg1[%c0_80, %c1_81, %c0_82, %c1_83, %c0_84] : memref<1x2x3x21x16xbf16, #tpu.memory_space<vmem>>, vector<1x1x1x19x16xbf16>
    %63 = vector.shape_cast %62 : vector<1x1x1x19x16xbf16> to vector<19x16xbf16>
    %c48_85 = arith.constant 48 : index
    %c0_86 = arith.constant 0 : index
    %64 = vector.load %arg2[%c48_85, %c0_86] : memref<112x32xbf16, #tpu.memory_space<vmem>>, vector<16x32xbf16>
    %cst_87 = arith.constant dense<0.000000e+00> : vector<19x32xf32>
    %65 = tpu.matmul %63, %64, %cst_87 {dimension_numbers = #tpu.dot_dimension_numbers<[1], [0], [0], [1], [0, 0, 1, 1], [], []>} : vector<19x16xbf16>, vector<16x32xbf16>, vector<19x32xf32> -> vector<19x32xf32>
    %66 = arith.addf %61, %65 : vector<19x32xf32>
    %c0_88 = arith.constant 0 : index
    %c1_89 = arith.constant 1 : index
    %c1_90 = arith.constant 1 : index
    %c1_91 = arith.constant 1 : index
    %c0_92 = arith.constant 0 : index
    %67 = vector.load %arg1[%c0_88, %c1_89, %c1_90, %c1_91, %c0_92] : memref<1x2x3x21x16xbf16, #tpu.memory_space<vmem>>, vector<1x1x1x19x16xbf16>
    %68 = vector.shape_cast %67 : vector<1x1x1x19x16xbf16> to vector<19x16xbf16>
    %c64_93 = arith.constant 64 : index
    %c0_94 = arith.constant 0 : index
    %69 = vector.load %arg2[%c64_93, %c0_94] : memref<112x32xbf16, #tpu.memory_space<vmem>>, vector<16x32xbf16>
    %cst_95 = arith.constant dense<0.000000e+00> : vector<19x32xf32>
    %70 = tpu.matmul %68, %69, %cst_95 {dimension_numbers = #tpu.dot_dimension_numbers<[1], [0], [0], [1], [0, 0, 1, 1], [], []>} : vector<19x16xbf16>, vector<16x32xbf16>, vector<19x32xf32> -> vector<19x32xf32>
    %71 = arith.addf %66, %70 : vector<19x32xf32>
    %c0_96 = arith.constant 0 : index
    %c1_97 = arith.constant 1 : index
    %c2_98 = arith.constant 2 : index
    %c1_99 = arith.constant 1 : index
    %c0_100 = arith.constant 0 : index
    %72 = vector.load %arg1[%c0_96, %c1_97, %c2_98, %c1_99, %c0_100] : memref<1x2x3x21x16xbf16, #tpu.memory_space<vmem>>, vector<1x1x1x19x16xbf16>
    %73 = vector.shape_cast %72 : vector<1x1x1x19x16xbf16> to vector<19x16xbf16>
    %c80_101 = arith.constant 80 : index
    %c0_102 = arith.constant 0 : index
    %74 = vector.load %arg2[%c80_101, %c0_102] : memref<112x32xbf16, #tpu.memory_space<vmem>>, vector<16x32xbf16>
    %cst_103 = arith.constant dense<0.000000e+00> : vector<19x32xf32>
    %75 = tpu.matmul %73, %74, %cst_103 {dimension_numbers = #tpu.dot_dimension_numbers<[1], [0], [0], [1], [0, 0, 1, 1], [], []>} : vector<19x16xbf16>, vector<16x32xbf16>, vector<19x32xf32> -> vector<19x32xf32>
    %76 = arith.addf %71, %75 : vector<19x32xf32>
    %c0_104 = arith.constant 0 : index
    %c1_105 = arith.constant 1 : index
    %c0_106 = arith.constant 0 : index
    %c2_107 = arith.constant 2 : index
    %c0_108 = arith.constant 0 : index
    %77 = vector.load %arg1[%c0_104, %c1_105, %c0_106, %c2_107, %c0_108] : memref<1x2x3x21x16xbf16, #tpu.memory_space<vmem>>, vector<1x1x1x19x16xbf16>
    %78 = vector.shape_cast %77 : vector<1x1x1x19x16xbf16> to vector<19x16xbf16>
    %c96_109 = arith.constant 96 : index
    %c0_110 = arith.constant 0 : index
    %79 = vector.load %arg2[%c96_109, %c0_110] : memref<112x32xbf16, #tpu.memory_space<vmem>>, vector<16x32xbf16>
    %cst_111 = arith.constant dense<0.000000e+00> : vector<19x32xf32>
    %80 = tpu.matmul %78, %79, %cst_111 {dimension_numbers = #tpu.dot_dimension_numbers<[1], [0], [0], [1], [0, 0, 1, 1], [], []>} : vector<19x16xbf16>, vector<16x32xbf16>, vector<19x32xf32> -> vector<19x32xf32>
    %81 = arith.addf %76, %80 : vector<19x32xf32>
    %82 = vector.broadcast %0 : vector<1x32xf32> to vector<19x32xf32>
    %83 = arith.addf %81, %82 : vector<19x32xf32>
    %cst_112 = arith.constant 0.000000e+00 : f32
    %84 = vector.broadcast %cst_112 : f32 to vector<19x32xf32>
    %85 = arith.cmpf ogt, %83, %84 : vector<19x32xf32>
    %cst_113 = arith.constant 2.000000e-01 : f32
    %86 = vector.broadcast %cst_113 : f32 to vector<19x32xf32>
    %87 = arith.mulf %86, %83 : vector<19x32xf32>
    %88 = arith.select %85, %83, %87 : vector<19x32xi1>, vector<19x32xf32>
    %cst_114 = arith.constant dense<0.000000e+00> : vector<32xf32>
    %89 = vector.multi_reduction <add>, %45, %cst_114 [0] : vector<19x32xf32> to vector<32xf32>
    %90 = vector.shape_cast %89 : vector<32xf32> to vector<1x32xf32>
    %91 = arith.mulf %45, %45 : vector<19x32xf32>
    %cst_115 = arith.constant dense<0.000000e+00> : vector<32xf32>
    %92 = vector.multi_reduction <add>, %91, %cst_115 [0] : vector<19x32xf32> to vector<32xf32>
    %93 = vector.shape_cast %92 : vector<32xf32> to vector<1x32xf32>
    %cst_116 = arith.constant dense<0.000000e+00> : vector<32xf32>
    %94 = vector.multi_reduction <add>, %88, %cst_116 [0] : vector<19x32xf32> to vector<32xf32>
    %95 = vector.shape_cast %94 : vector<32xf32> to vector<1x32xf32>
    %96 = arith.addf %90, %95 : vector<1x32xf32>
    %97 = arith.mulf %88, %88 : vector<19x32xf32>
    %cst_117 = arith.constant dense<0.000000e+00> : vector<32xf32>
    %98 = vector.multi_reduction <add>, %97, %cst_117 [0] : vector<19x32xf32> to vector<32xf32>
    %99 = vector.shape_cast %98 : vector<32xf32> to vector<1x32xf32>
    %100 = arith.addf %93, %99 : vector<1x32xf32>
    %cst_118 = arith.constant 0.0263157897 : f32
    %101 = vector.broadcast %cst_118 : f32 to vector<1x32xf32>
    %102 = arith.mulf %96, %101 : vector<1x32xf32>
    %cst_119 = arith.constant 0.0263157897 : f32
    %103 = vector.broadcast %cst_119 : f32 to vector<1x32xf32>
    %104 = arith.mulf %100, %103 : vector<1x32xf32>
    %105 = arith.mulf %102, %102 : vector<1x32xf32>
    %106 = arith.subf %104, %105 : vector<1x32xf32>
    %cst_120 = arith.constant 9.99999974E-6 : f32
    %107 = vector.broadcast %cst_120 : f32 to vector<1x32xf32>
    %108 = arith.addf %106, %107 : vector<1x32xf32>
    %109 = math.rsqrt %108 : vector<1x32xf32>
    %110 = arith.mulf %1, %109 : vector<1x32xf32>
    %111 = arith.mulf %102, %110 : vector<1x32xf32>
    %112 = arith.subf %2, %111 : vector<1x32xf32>
    %113 = vector.broadcast %110 : vector<1x32xf32> to vector<19x32xf32>
    %114 = arith.mulf %45, %113 : vector<19x32xf32>
    %115 = vector.broadcast %112 : vector<1x32xf32> to vector<19x32xf32>
    %116 = arith.addf %114, %115 : vector<19x32xf32>
    %117 = vector.broadcast %110 : vector<1x32xf32> to vector<19x32xf32>
    %118 = arith.mulf %88, %117 : vector<19x32xf32>
    %119 = vector.broadcast %112 : vector<1x32xf32> to vector<19x32xf32>
    %120 = arith.addf %118, %119 : vector<19x32xf32>
    %121 = arith.truncf %116 : vector<19x32xf32> to vector<19x32xbf16>
    %c0_121 = arith.constant 0 : index
    %c0_122 = arith.constant 0 : index
    %c0_123 = arith.constant 0 : index
    %c0_124 = arith.constant 0 : index
    %122 = vector.load %arg6[%c0_121, %c0_122, %c0_123, %c0_124] : memref<1x2x19x32xbf16, #tpu.memory_space<vmem>>, vector<1x1x19x32xbf16>
    %123 = vector.shape_cast %122 : vector<1x1x19x32xbf16> to vector<19x32xbf16>
    %124 = vector.shape_cast %121 : vector<19x32xbf16> to vector<1x1x19x32xbf16>
    tpu.vector_store %arg6[%c0_121, %c0_122, %c0_123, %c0_124], %124 {strides = array<i32>} : memref<1x2x19x32xbf16, #tpu.memory_space<vmem>>, vector<1x1x19x32xbf16>,
    %125 = arith.truncf %120 : vector<19x32xf32> to vector<19x32xbf16>
    %c0_125 = arith.constant 0 : index
    %c1_126 = arith.constant 1 : index
    %c0_127 = arith.constant 0 : index
    %c0_128 = arith.constant 0 : index
    %126 = vector.load %arg6[%c0_125, %c1_126, %c0_127, %c0_128] : memref<1x2x19x32xbf16, #tpu.memory_space<vmem>>, vector<1x1x19x32xbf16>
    %127 = vector.shape_cast %126 : vector<1x1x19x32xbf16> to vector<19x32xbf16>
    %128 = vector.shape_cast %125 : vector<19x32xbf16> to vector<1x1x19x32xbf16>
    tpu.vector_store %arg6[%c0_125, %c1_126, %c0_127, %c0_128], %128 {strides = array<i32>} : memref<1x2x19x32xbf16, #tpu.memory_space<vmem>>, vector<1x1x19x32xbf16>,
    return
  }
  func.func @transform_0(%arg0: i32) -> (i32, i32, i32, i32, i32) {
    %c0_i32 = arith.constant 0 : i32
    %c0_i32_0 = arith.constant 0 : i32
    %c0_i32_1 = arith.constant 0 : i32
    %c0_i32_2 = arith.constant 0 : i32
    %c0_i32_3 = arith.constant 0 : i32
    return %arg0, %c0_i32, %c0_i32_0, %c0_i32_1, %c0_i32_2 : i32, i32, i32, i32, i32
  }
  func.func @transform_1(%arg0: i32) -> (i32, i32) {
    %c0_i32 = arith.constant 0 : i32
    %c0_i32_0 = arith.constant 0 : i32
    %c0_i32_1 = arith.constant 0 : i32
    return %c0_i32, %c0_i32_0 : i32, i32
  }
  func.func @transform_2(%arg0: i32) -> (i32, i32) {
    %c0_i32 = arith.constant 0 : i32
    %c0_i32_0 = arith.constant 0 : i32
    %c0_i32_1 = arith.constant 0 : i32
    return %c0_i32, %c0_i32_0 : i32, i32
  }
  func.func @transform_3(%arg0: i32) -> (i32, i32) {
    %c0_i32 = arith.constant 0 : i32
    %c0_i32_0 = arith.constant 0 : i32
    %c0_i32_1 = arith.constant 0 : i32
    return %c0_i32, %c0_i32_0 : i32, i32
  }
  func.func @transform_4(%arg0: i32) -> (i32, i32) {
    %c0_i32 = arith.constant 0 : i32
    %c0_i32_0 = arith.constant 0 : i32
    %c0_i32_1 = arith.constant 0 : i32
    return %c0_i32, %c0_i32_0 : i32, i32
  }
  func.func @transform_5(%arg0: i32) -> (i32, i32, i32, i32) {
    %c0_i32 = arith.constant 0 : i32
    %c0_i32_0 = arith.constant 0 : i32
    %c0_i32_1 = arith.constant 0 : i32
    %c0_i32_2 = arith.constant 0 : i32
    return %arg0, %c0_i32, %c0_i32_0, %c0_i32_1 : i32, i32, i32, i32
  }
}

module attributes {stable_mosaic.version = 11 : i64} {
  func.func @conv_bn_kernel(%arg0: i32, %arg1: memref<1x2x2x10x32xbf16, #tpu.memory_space<vmem>>, %arg2: memref<160x64xbf16, #tpu.memory_space<vmem>>, %arg3: memref<1x64xf32, #tpu.memory_space<vmem>>, %arg4: memref<1x64xf32, #tpu.memory_space<vmem>>, %arg5: memref<1x64xf32, #tpu.memory_space<vmem>>, %arg6: memref<1x2x8x64xbf16, #tpu.memory_space<vmem>>) attributes {dimension_semantics = [#tpu.dimension_semantics<parallel>], iteration_bounds = array<i64: 8>, scalar_prefetch = 0 : i64, scratch_operands = 0 : i64, tpu.core_type = #tpu.core_type<tc>, window_params = [{transform_indices = @transform_0, window_bounds = array<i64: 1, 2, 2, 10, 32>}, {pipeline_mode = #tpu.pipeline_mode<synchronous>, transform_indices = @transform_1, window_bounds = array<i64: 160, 64>}, {pipeline_mode = #tpu.pipeline_mode<synchronous>, transform_indices = @transform_2, window_bounds = array<i64: 1, 64>}, {pipeline_mode = #tpu.pipeline_mode<synchronous>, transform_indices = @transform_3, window_bounds = array<i64: 1, 64>}, {pipeline_mode = #tpu.pipeline_mode<synchronous>, transform_indices = @transform_4, window_bounds = array<i64: 1, 64>}, {transform_indices = @transform_5, window_bounds = array<i64: 1, 2, 8, 64>}]} {
    %c0 = arith.constant 0 : index
    %c0_0 = arith.constant 0 : index
    %0 = vector.load %arg3[%c0, %c0_0] : memref<1x64xf32, #tpu.memory_space<vmem>>, vector<1x64xf32>
    %c0_1 = arith.constant 0 : index
    %c0_2 = arith.constant 0 : index
    %1 = vector.load %arg4[%c0_1, %c0_2] : memref<1x64xf32, #tpu.memory_space<vmem>>, vector<1x64xf32>
    %c0_3 = arith.constant 0 : index
    %c0_4 = arith.constant 0 : index
    %2 = vector.load %arg5[%c0_3, %c0_4] : memref<1x64xf32, #tpu.memory_space<vmem>>, vector<1x64xf32>
    %cst = arith.constant 0.000000e+00 : f32
    %3 = vector.broadcast %cst : f32 to vector<8x64xf32>
    %c0_5 = arith.constant 0 : index
    %c0_6 = arith.constant 0 : index
    %c0_7 = arith.constant 0 : index
    %c0_8 = arith.constant 0 : index
    %c0_9 = arith.constant 0 : index
    %4 = vector.load %arg1[%c0_5, %c0_6, %c0_7, %c0_8, %c0_9] : memref<1x2x2x10x32xbf16, #tpu.memory_space<vmem>>, vector<1x1x1x8x32xbf16>
    %5 = vector.shape_cast %4 : vector<1x1x1x8x32xbf16> to vector<8x32xbf16>
    %c0_10 = arith.constant 0 : index
    %c0_11 = arith.constant 0 : index
    %6 = vector.load %arg2[%c0_10, %c0_11] : memref<160x64xbf16, #tpu.memory_space<vmem>>, vector<32x64xbf16>
    %cst_12 = arith.constant dense<0.000000e+00> : vector<8x64xf32>
    %7 = tpu.matmul %5, %6, %cst_12 {dimension_numbers = #tpu.dot_dimension_numbers<[1], [0], [0], [1], [0, 0, 1, 1], [], []>} : vector<8x32xbf16>, vector<32x64xbf16>, vector<8x64xf32> -> vector<8x64xf32>
    %8 = arith.addf %3, %7 : vector<8x64xf32>
    %c0_13 = arith.constant 0 : index
    %c0_14 = arith.constant 0 : index
    %c1 = arith.constant 1 : index
    %c0_15 = arith.constant 0 : index
    %c0_16 = arith.constant 0 : index
    %9 = vector.load %arg1[%c0_13, %c0_14, %c1, %c0_15, %c0_16] : memref<1x2x2x10x32xbf16, #tpu.memory_space<vmem>>, vector<1x1x1x8x32xbf16>
    %10 = vector.shape_cast %9 : vector<1x1x1x8x32xbf16> to vector<8x32xbf16>
    %c32 = arith.constant 32 : index
    %c0_17 = arith.constant 0 : index
    %11 = vector.load %arg2[%c32, %c0_17] : memref<160x64xbf16, #tpu.memory_space<vmem>>, vector<32x64xbf16>
    %cst_18 = arith.constant dense<0.000000e+00> : vector<8x64xf32>
    %12 = tpu.matmul %10, %11, %cst_18 {dimension_numbers = #tpu.dot_dimension_numbers<[1], [0], [0], [1], [0, 0, 1, 1], [], []>} : vector<8x32xbf16>, vector<32x64xbf16>, vector<8x64xf32> -> vector<8x64xf32>
    %13 = arith.addf %8, %12 : vector<8x64xf32>
    %c0_19 = arith.constant 0 : index
    %c0_20 = arith.constant 0 : index
    %c0_21 = arith.constant 0 : index
    %c1_22 = arith.constant 1 : index
    %c0_23 = arith.constant 0 : index
    %14 = vector.load %arg1[%c0_19, %c0_20, %c0_21, %c1_22, %c0_23] : memref<1x2x2x10x32xbf16, #tpu.memory_space<vmem>>, vector<1x1x1x8x32xbf16>
    %15 = vector.shape_cast %14 : vector<1x1x1x8x32xbf16> to vector<8x32xbf16>
    %c64 = arith.constant 64 : index
    %c0_24 = arith.constant 0 : index
    %16 = vector.load %arg2[%c64, %c0_24] : memref<160x64xbf16, #tpu.memory_space<vmem>>, vector<32x64xbf16>
    %cst_25 = arith.constant dense<0.000000e+00> : vector<8x64xf32>
    %17 = tpu.matmul %15, %16, %cst_25 {dimension_numbers = #tpu.dot_dimension_numbers<[1], [0], [0], [1], [0, 0, 1, 1], [], []>} : vector<8x32xbf16>, vector<32x64xbf16>, vector<8x64xf32> -> vector<8x64xf32>
    %18 = arith.addf %13, %17 : vector<8x64xf32>
    %c0_26 = arith.constant 0 : index
    %c0_27 = arith.constant 0 : index
    %c1_28 = arith.constant 1 : index
    %c1_29 = arith.constant 1 : index
    %c0_30 = arith.constant 0 : index
    %19 = vector.load %arg1[%c0_26, %c0_27, %c1_28, %c1_29, %c0_30] : memref<1x2x2x10x32xbf16, #tpu.memory_space<vmem>>, vector<1x1x1x8x32xbf16>
    %20 = vector.shape_cast %19 : vector<1x1x1x8x32xbf16> to vector<8x32xbf16>
    %c96 = arith.constant 96 : index
    %c0_31 = arith.constant 0 : index
    %21 = vector.load %arg2[%c96, %c0_31] : memref<160x64xbf16, #tpu.memory_space<vmem>>, vector<32x64xbf16>
    %cst_32 = arith.constant dense<0.000000e+00> : vector<8x64xf32>
    %22 = tpu.matmul %20, %21, %cst_32 {dimension_numbers = #tpu.dot_dimension_numbers<[1], [0], [0], [1], [0, 0, 1, 1], [], []>} : vector<8x32xbf16>, vector<32x64xbf16>, vector<8x64xf32> -> vector<8x64xf32>
    %23 = arith.addf %18, %22 : vector<8x64xf32>
    %c0_33 = arith.constant 0 : index
    %c0_34 = arith.constant 0 : index
    %c0_35 = arith.constant 0 : index
    %c2 = arith.constant 2 : index
    %c0_36 = arith.constant 0 : index
    %24 = vector.load %arg1[%c0_33, %c0_34, %c0_35, %c2, %c0_36] : memref<1x2x2x10x32xbf16, #tpu.memory_space<vmem>>, vector<1x1x1x8x32xbf16>
    %25 = vector.shape_cast %24 : vector<1x1x1x8x32xbf16> to vector<8x32xbf16>
    %c128 = arith.constant 128 : index
    %c0_37 = arith.constant 0 : index
    %26 = vector.load %arg2[%c128, %c0_37] : memref<160x64xbf16, #tpu.memory_space<vmem>>, vector<32x64xbf16>
    %cst_38 = arith.constant dense<0.000000e+00> : vector<8x64xf32>
    %27 = tpu.matmul %25, %26, %cst_38 {dimension_numbers = #tpu.dot_dimension_numbers<[1], [0], [0], [1], [0, 0, 1, 1], [], []>} : vector<8x32xbf16>, vector<32x64xbf16>, vector<8x64xf32> -> vector<8x64xf32>
    %28 = arith.addf %23, %27 : vector<8x64xf32>
    %29 = vector.broadcast %0 : vector<1x64xf32> to vector<8x64xf32>
    %30 = arith.addf %28, %29 : vector<8x64xf32>
    %cst_39 = arith.constant 0.000000e+00 : f32
    %31 = vector.broadcast %cst_39 : f32 to vector<8x64xf32>
    %32 = arith.cmpf ogt, %30, %31 : vector<8x64xf32>
    %cst_40 = arith.constant 2.000000e-01 : f32
    %33 = vector.broadcast %cst_40 : f32 to vector<8x64xf32>
    %34 = arith.mulf %33, %30 : vector<8x64xf32>
    %35 = arith.select %32, %30, %34 : vector<8x64xi1>, vector<8x64xf32>
    %cst_41 = arith.constant 0.000000e+00 : f32
    %36 = vector.broadcast %cst_41 : f32 to vector<8x64xf32>
    %c0_42 = arith.constant 0 : index
    %c1_43 = arith.constant 1 : index
    %c0_44 = arith.constant 0 : index
    %c0_45 = arith.constant 0 : index
    %c0_46 = arith.constant 0 : index
    %37 = vector.load %arg1[%c0_42, %c1_43, %c0_44, %c0_45, %c0_46] : memref<1x2x2x10x32xbf16, #tpu.memory_space<vmem>>, vector<1x1x1x8x32xbf16>
    %38 = vector.shape_cast %37 : vector<1x1x1x8x32xbf16> to vector<8x32xbf16>
    %c0_47 = arith.constant 0 : index
    %c0_48 = arith.constant 0 : index
    %39 = vector.load %arg2[%c0_47, %c0_48] : memref<160x64xbf16, #tpu.memory_space<vmem>>, vector<32x64xbf16>
    %cst_49 = arith.constant dense<0.000000e+00> : vector<8x64xf32>
    %40 = tpu.matmul %38, %39, %cst_49 {dimension_numbers = #tpu.dot_dimension_numbers<[1], [0], [0], [1], [0, 0, 1, 1], [], []>} : vector<8x32xbf16>, vector<32x64xbf16>, vector<8x64xf32> -> vector<8x64xf32>
    %41 = arith.addf %36, %40 : vector<8x64xf32>
    %c0_50 = arith.constant 0 : index
    %c1_51 = arith.constant 1 : index
    %c1_52 = arith.constant 1 : index
    %c0_53 = arith.constant 0 : index
    %c0_54 = arith.constant 0 : index
    %42 = vector.load %arg1[%c0_50, %c1_51, %c1_52, %c0_53, %c0_54] : memref<1x2x2x10x32xbf16, #tpu.memory_space<vmem>>, vector<1x1x1x8x32xbf16>
    %43 = vector.shape_cast %42 : vector<1x1x1x8x32xbf16> to vector<8x32xbf16>
    %c32_55 = arith.constant 32 : index
    %c0_56 = arith.constant 0 : index
    %44 = vector.load %arg2[%c32_55, %c0_56] : memref<160x64xbf16, #tpu.memory_space<vmem>>, vector<32x64xbf16>
    %cst_57 = arith.constant dense<0.000000e+00> : vector<8x64xf32>
    %45 = tpu.matmul %43, %44, %cst_57 {dimension_numbers = #tpu.dot_dimension_numbers<[1], [0], [0], [1], [0, 0, 1, 1], [], []>} : vector<8x32xbf16>, vector<32x64xbf16>, vector<8x64xf32> -> vector<8x64xf32>
    %46 = arith.addf %41, %45 : vector<8x64xf32>
    %c0_58 = arith.constant 0 : index
    %c1_59 = arith.constant 1 : index
    %c0_60 = arith.constant 0 : index
    %c1_61 = arith.constant 1 : index
    %c0_62 = arith.constant 0 : index
    %47 = vector.load %arg1[%c0_58, %c1_59, %c0_60, %c1_61, %c0_62] : memref<1x2x2x10x32xbf16, #tpu.memory_space<vmem>>, vector<1x1x1x8x32xbf16>
    %48 = vector.shape_cast %47 : vector<1x1x1x8x32xbf16> to vector<8x32xbf16>
    %c64_63 = arith.constant 64 : index
    %c0_64 = arith.constant 0 : index
    %49 = vector.load %arg2[%c64_63, %c0_64] : memref<160x64xbf16, #tpu.memory_space<vmem>>, vector<32x64xbf16>
    %cst_65 = arith.constant dense<0.000000e+00> : vector<8x64xf32>
    %50 = tpu.matmul %48, %49, %cst_65 {dimension_numbers = #tpu.dot_dimension_numbers<[1], [0], [0], [1], [0, 0, 1, 1], [], []>} : vector<8x32xbf16>, vector<32x64xbf16>, vector<8x64xf32> -> vector<8x64xf32>
    %51 = arith.addf %46, %50 : vector<8x64xf32>
    %c0_66 = arith.constant 0 : index
    %c1_67 = arith.constant 1 : index
    %c1_68 = arith.constant 1 : index
    %c1_69 = arith.constant 1 : index
    %c0_70 = arith.constant 0 : index
    %52 = vector.load %arg1[%c0_66, %c1_67, %c1_68, %c1_69, %c0_70] : memref<1x2x2x10x32xbf16, #tpu.memory_space<vmem>>, vector<1x1x1x8x32xbf16>
    %53 = vector.shape_cast %52 : vector<1x1x1x8x32xbf16> to vector<8x32xbf16>
    %c96_71 = arith.constant 96 : index
    %c0_72 = arith.constant 0 : index
    %54 = vector.load %arg2[%c96_71, %c0_72] : memref<160x64xbf16, #tpu.memory_space<vmem>>, vector<32x64xbf16>
    %cst_73 = arith.constant dense<0.000000e+00> : vector<8x64xf32>
    %55 = tpu.matmul %53, %54, %cst_73 {dimension_numbers = #tpu.dot_dimension_numbers<[1], [0], [0], [1], [0, 0, 1, 1], [], []>} : vector<8x32xbf16>, vector<32x64xbf16>, vector<8x64xf32> -> vector<8x64xf32>
    %56 = arith.addf %51, %55 : vector<8x64xf32>
    %c0_74 = arith.constant 0 : index
    %c1_75 = arith.constant 1 : index
    %c0_76 = arith.constant 0 : index
    %c2_77 = arith.constant 2 : index
    %c0_78 = arith.constant 0 : index
    %57 = vector.load %arg1[%c0_74, %c1_75, %c0_76, %c2_77, %c0_78] : memref<1x2x2x10x32xbf16, #tpu.memory_space<vmem>>, vector<1x1x1x8x32xbf16>
    %58 = vector.shape_cast %57 : vector<1x1x1x8x32xbf16> to vector<8x32xbf16>
    %c128_79 = arith.constant 128 : index
    %c0_80 = arith.constant 0 : index
    %59 = vector.load %arg2[%c128_79, %c0_80] : memref<160x64xbf16, #tpu.memory_space<vmem>>, vector<32x64xbf16>
    %cst_81 = arith.constant dense<0.000000e+00> : vector<8x64xf32>
    %60 = tpu.matmul %58, %59, %cst_81 {dimension_numbers = #tpu.dot_dimension_numbers<[1], [0], [0], [1], [0, 0, 1, 1], [], []>} : vector<8x32xbf16>, vector<32x64xbf16>, vector<8x64xf32> -> vector<8x64xf32>
    %61 = arith.addf %56, %60 : vector<8x64xf32>
    %62 = vector.broadcast %0 : vector<1x64xf32> to vector<8x64xf32>
    %63 = arith.addf %61, %62 : vector<8x64xf32>
    %cst_82 = arith.constant 0.000000e+00 : f32
    %64 = vector.broadcast %cst_82 : f32 to vector<8x64xf32>
    %65 = arith.cmpf ogt, %63, %64 : vector<8x64xf32>
    %cst_83 = arith.constant 2.000000e-01 : f32
    %66 = vector.broadcast %cst_83 : f32 to vector<8x64xf32>
    %67 = arith.mulf %66, %63 : vector<8x64xf32>
    %68 = arith.select %65, %63, %67 : vector<8x64xi1>, vector<8x64xf32>
    %cst_84 = arith.constant dense<0.000000e+00> : vector<64xf32>
    %69 = vector.multi_reduction <add>, %35, %cst_84 [0] : vector<8x64xf32> to vector<64xf32>
    %70 = vector.shape_cast %69 : vector<64xf32> to vector<1x64xf32>
    %71 = arith.mulf %35, %35 : vector<8x64xf32>
    %cst_85 = arith.constant dense<0.000000e+00> : vector<64xf32>
    %72 = vector.multi_reduction <add>, %71, %cst_85 [0] : vector<8x64xf32> to vector<64xf32>
    %73 = vector.shape_cast %72 : vector<64xf32> to vector<1x64xf32>
    %cst_86 = arith.constant dense<0.000000e+00> : vector<64xf32>
    %74 = vector.multi_reduction <add>, %68, %cst_86 [0] : vector<8x64xf32> to vector<64xf32>
    %75 = vector.shape_cast %74 : vector<64xf32> to vector<1x64xf32>
    %76 = arith.addf %70, %75 : vector<1x64xf32>
    %77 = arith.mulf %68, %68 : vector<8x64xf32>
    %cst_87 = arith.constant dense<0.000000e+00> : vector<64xf32>
    %78 = vector.multi_reduction <add>, %77, %cst_87 [0] : vector<8x64xf32> to vector<64xf32>
    %79 = vector.shape_cast %78 : vector<64xf32> to vector<1x64xf32>
    %80 = arith.addf %73, %79 : vector<1x64xf32>
    %cst_88 = arith.constant 6.250000e-02 : f32
    %81 = vector.broadcast %cst_88 : f32 to vector<1x64xf32>
    %82 = arith.mulf %76, %81 : vector<1x64xf32>
    %cst_89 = arith.constant 6.250000e-02 : f32
    %83 = vector.broadcast %cst_89 : f32 to vector<1x64xf32>
    %84 = arith.mulf %80, %83 : vector<1x64xf32>
    %85 = arith.mulf %82, %82 : vector<1x64xf32>
    %86 = arith.subf %84, %85 : vector<1x64xf32>
    %cst_90 = arith.constant 9.99999974E-6 : f32
    %87 = vector.broadcast %cst_90 : f32 to vector<1x64xf32>
    %88 = arith.addf %86, %87 : vector<1x64xf32>
    %89 = math.rsqrt %88 : vector<1x64xf32>
    %90 = arith.mulf %1, %89 : vector<1x64xf32>
    %91 = arith.mulf %82, %90 : vector<1x64xf32>
    %92 = arith.subf %2, %91 : vector<1x64xf32>
    %93 = vector.broadcast %90 : vector<1x64xf32> to vector<8x64xf32>
    %94 = arith.mulf %35, %93 : vector<8x64xf32>
    %95 = vector.broadcast %92 : vector<1x64xf32> to vector<8x64xf32>
    %96 = arith.addf %94, %95 : vector<8x64xf32>
    %97 = vector.broadcast %90 : vector<1x64xf32> to vector<8x64xf32>
    %98 = arith.mulf %68, %97 : vector<8x64xf32>
    %99 = vector.broadcast %92 : vector<1x64xf32> to vector<8x64xf32>
    %100 = arith.addf %98, %99 : vector<8x64xf32>
    %101 = arith.truncf %96 : vector<8x64xf32> to vector<8x64xbf16>
    %c0_91 = arith.constant 0 : index
    %c0_92 = arith.constant 0 : index
    %c0_93 = arith.constant 0 : index
    %c0_94 = arith.constant 0 : index
    %102 = vector.load %arg6[%c0_91, %c0_92, %c0_93, %c0_94] : memref<1x2x8x64xbf16, #tpu.memory_space<vmem>>, vector<1x1x8x64xbf16>
    %103 = vector.shape_cast %102 : vector<1x1x8x64xbf16> to vector<8x64xbf16>
    %104 = vector.shape_cast %101 : vector<8x64xbf16> to vector<1x1x8x64xbf16>
    tpu.vector_store %arg6[%c0_91, %c0_92, %c0_93, %c0_94], %104 {strides = array<i32>} : memref<1x2x8x64xbf16, #tpu.memory_space<vmem>>, vector<1x1x8x64xbf16>,
    %105 = arith.truncf %100 : vector<8x64xf32> to vector<8x64xbf16>
    %c0_95 = arith.constant 0 : index
    %c1_96 = arith.constant 1 : index
    %c0_97 = arith.constant 0 : index
    %c0_98 = arith.constant 0 : index
    %106 = vector.load %arg6[%c0_95, %c1_96, %c0_97, %c0_98] : memref<1x2x8x64xbf16, #tpu.memory_space<vmem>>, vector<1x1x8x64xbf16>
    %107 = vector.shape_cast %106 : vector<1x1x8x64xbf16> to vector<8x64xbf16>
    %108 = vector.shape_cast %105 : vector<8x64xbf16> to vector<1x1x8x64xbf16>
    tpu.vector_store %arg6[%c0_95, %c1_96, %c0_97, %c0_98], %108 {strides = array<i32>} : memref<1x2x8x64xbf16, #tpu.memory_space<vmem>>, vector<1x1x8x64xbf16>,
    return
  }
  func.func @transform_0(%arg0: i32) -> (i32, i32, i32, i32, i32) {
    %c0_i32 = arith.constant 0 : i32
    %c0_i32_0 = arith.constant 0 : i32
    %c0_i32_1 = arith.constant 0 : i32
    %c0_i32_2 = arith.constant 0 : i32
    %c0_i32_3 = arith.constant 0 : i32
    return %arg0, %c0_i32, %c0_i32_0, %c0_i32_1, %c0_i32_2 : i32, i32, i32, i32, i32
  }
  func.func @transform_1(%arg0: i32) -> (i32, i32) {
    %c0_i32 = arith.constant 0 : i32
    %c0_i32_0 = arith.constant 0 : i32
    %c0_i32_1 = arith.constant 0 : i32
    return %c0_i32, %c0_i32_0 : i32, i32
  }
  func.func @transform_2(%arg0: i32) -> (i32, i32) {
    %c0_i32 = arith.constant 0 : i32
    %c0_i32_0 = arith.constant 0 : i32
    %c0_i32_1 = arith.constant 0 : i32
    return %c0_i32, %c0_i32_0 : i32, i32
  }
  func.func @transform_3(%arg0: i32) -> (i32, i32) {
    %c0_i32 = arith.constant 0 : i32
    %c0_i32_0 = arith.constant 0 : i32
    %c0_i32_1 = arith.constant 0 : i32
    return %c0_i32, %c0_i32_0 : i32, i32
  }
  func.func @transform_4(%arg0: i32) -> (i32, i32) {
    %c0_i32 = arith.constant 0 : i32
    %c0_i32_0 = arith.constant 0 : i32
    %c0_i32_1 = arith.constant 0 : i32
    return %c0_i32, %c0_i32_0 : i32, i32
  }
  func.func @transform_5(%arg0: i32) -> (i32, i32, i32, i32) {
    %c0_i32 = arith.constant 0 : i32
    %c0_i32_0 = arith.constant 0 : i32
    %c0_i32_1 = arith.constant 0 : i32
    %c0_i32_2 = arith.constant 0 : i32
    return %arg0, %c0_i32, %c0_i32_0, %c0_i32_1 : i32, i32, i32, i32
  }
}

module attributes {stable_mosaic.version = 11 : i64} {
  func.func @conv_bn_kernel(%arg0: i32, %arg1: memref<1x2x1x8x64xbf16, #tpu.memory_space<vmem>>, %arg2: memref<192x64xbf16, #tpu.memory_space<vmem>>, %arg3: memref<1x64xf32, #tpu.memory_space<vmem>>, %arg4: memref<1x64xf32, #tpu.memory_space<vmem>>, %arg5: memref<1x64xf32, #tpu.memory_space<vmem>>, %arg6: memref<1x2x6x64xbf16, #tpu.memory_space<vmem>>) attributes {dimension_semantics = [#tpu.dimension_semantics<parallel>], iteration_bounds = array<i64: 8>, scalar_prefetch = 0 : i64, scratch_operands = 0 : i64, tpu.core_type = #tpu.core_type<tc>, window_params = [{transform_indices = @transform_0, window_bounds = array<i64: 1, 2, 1, 8, 64>}, {pipeline_mode = #tpu.pipeline_mode<synchronous>, transform_indices = @transform_1, window_bounds = array<i64: 192, 64>}, {pipeline_mode = #tpu.pipeline_mode<synchronous>, transform_indices = @transform_2, window_bounds = array<i64: 1, 64>}, {pipeline_mode = #tpu.pipeline_mode<synchronous>, transform_indices = @transform_3, window_bounds = array<i64: 1, 64>}, {pipeline_mode = #tpu.pipeline_mode<synchronous>, transform_indices = @transform_4, window_bounds = array<i64: 1, 64>}, {transform_indices = @transform_5, window_bounds = array<i64: 1, 2, 6, 64>}]} {
    %c0 = arith.constant 0 : index
    %c0_0 = arith.constant 0 : index
    %0 = vector.load %arg3[%c0, %c0_0] : memref<1x64xf32, #tpu.memory_space<vmem>>, vector<1x64xf32>
    %c0_1 = arith.constant 0 : index
    %c0_2 = arith.constant 0 : index
    %1 = vector.load %arg4[%c0_1, %c0_2] : memref<1x64xf32, #tpu.memory_space<vmem>>, vector<1x64xf32>
    %c0_3 = arith.constant 0 : index
    %c0_4 = arith.constant 0 : index
    %2 = vector.load %arg5[%c0_3, %c0_4] : memref<1x64xf32, #tpu.memory_space<vmem>>, vector<1x64xf32>
    %cst = arith.constant 0.000000e+00 : f32
    %3 = vector.broadcast %cst : f32 to vector<6x64xf32>
    %c0_5 = arith.constant 0 : index
    %c0_6 = arith.constant 0 : index
    %c0_7 = arith.constant 0 : index
    %c0_8 = arith.constant 0 : index
    %c0_9 = arith.constant 0 : index
    %4 = vector.load %arg1[%c0_5, %c0_6, %c0_7, %c0_8, %c0_9] : memref<1x2x1x8x64xbf16, #tpu.memory_space<vmem>>, vector<1x1x1x6x64xbf16>
    %5 = vector.shape_cast %4 : vector<1x1x1x6x64xbf16> to vector<6x64xbf16>
    %c0_10 = arith.constant 0 : index
    %c0_11 = arith.constant 0 : index
    %6 = vector.load %arg2[%c0_10, %c0_11] : memref<192x64xbf16, #tpu.memory_space<vmem>>, vector<64x64xbf16>
    %cst_12 = arith.constant dense<0.000000e+00> : vector<6x64xf32>
    %7 = tpu.matmul %5, %6, %cst_12 {dimension_numbers = #tpu.dot_dimension_numbers<[1], [0], [0], [1], [0, 0, 1, 1], [], []>} : vector<6x64xbf16>, vector<64x64xbf16>, vector<6x64xf32> -> vector<6x64xf32>
    %8 = arith.addf %3, %7 : vector<6x64xf32>
    %c0_13 = arith.constant 0 : index
    %c0_14 = arith.constant 0 : index
    %c0_15 = arith.constant 0 : index
    %c1 = arith.constant 1 : index
    %c0_16 = arith.constant 0 : index
    %9 = vector.load %arg1[%c0_13, %c0_14, %c0_15, %c1, %c0_16] : memref<1x2x1x8x64xbf16, #tpu.memory_space<vmem>>, vector<1x1x1x6x64xbf16>
    %10 = vector.shape_cast %9 : vector<1x1x1x6x64xbf16> to vector<6x64xbf16>
    %c64 = arith.constant 64 : index
    %c0_17 = arith.constant 0 : index
    %11 = vector.load %arg2[%c64, %c0_17] : memref<192x64xbf16, #tpu.memory_space<vmem>>, vector<64x64xbf16>
    %cst_18 = arith.constant dense<0.000000e+00> : vector<6x64xf32>
    %12 = tpu.matmul %10, %11, %cst_18 {dimension_numbers = #tpu.dot_dimension_numbers<[1], [0], [0], [1], [0, 0, 1, 1], [], []>} : vector<6x64xbf16>, vector<64x64xbf16>, vector<6x64xf32> -> vector<6x64xf32>
    %13 = arith.addf %8, %12 : vector<6x64xf32>
    %c0_19 = arith.constant 0 : index
    %c0_20 = arith.constant 0 : index
    %c0_21 = arith.constant 0 : index
    %c2 = arith.constant 2 : index
    %c0_22 = arith.constant 0 : index
    %14 = vector.load %arg1[%c0_19, %c0_20, %c0_21, %c2, %c0_22] : memref<1x2x1x8x64xbf16, #tpu.memory_space<vmem>>, vector<1x1x1x6x64xbf16>
    %15 = vector.shape_cast %14 : vector<1x1x1x6x64xbf16> to vector<6x64xbf16>
    %c128 = arith.constant 128 : index
    %c0_23 = arith.constant 0 : index
    %16 = vector.load %arg2[%c128, %c0_23] : memref<192x64xbf16, #tpu.memory_space<vmem>>, vector<64x64xbf16>
    %cst_24 = arith.constant dense<0.000000e+00> : vector<6x64xf32>
    %17 = tpu.matmul %15, %16, %cst_24 {dimension_numbers = #tpu.dot_dimension_numbers<[1], [0], [0], [1], [0, 0, 1, 1], [], []>} : vector<6x64xbf16>, vector<64x64xbf16>, vector<6x64xf32> -> vector<6x64xf32>
    %18 = arith.addf %13, %17 : vector<6x64xf32>
    %19 = vector.broadcast %0 : vector<1x64xf32> to vector<6x64xf32>
    %20 = arith.addf %18, %19 : vector<6x64xf32>
    %cst_25 = arith.constant 0.000000e+00 : f32
    %21 = vector.broadcast %cst_25 : f32 to vector<6x64xf32>
    %22 = arith.cmpf ogt, %20, %21 : vector<6x64xf32>
    %cst_26 = arith.constant 2.000000e-01 : f32
    %23 = vector.broadcast %cst_26 : f32 to vector<6x64xf32>
    %24 = arith.mulf %23, %20 : vector<6x64xf32>
    %25 = arith.select %22, %20, %24 : vector<6x64xi1>, vector<6x64xf32>
    %cst_27 = arith.constant 0.000000e+00 : f32
    %26 = vector.broadcast %cst_27 : f32 to vector<6x64xf32>
    %c0_28 = arith.constant 0 : index
    %c1_29 = arith.constant 1 : index
    %c0_30 = arith.constant 0 : index
    %c0_31 = arith.constant 0 : index
    %c0_32 = arith.constant 0 : index
    %27 = vector.load %arg1[%c0_28, %c1_29, %c0_30, %c0_31, %c0_32] : memref<1x2x1x8x64xbf16, #tpu.memory_space<vmem>>, vector<1x1x1x6x64xbf16>
    %28 = vector.shape_cast %27 : vector<1x1x1x6x64xbf16> to vector<6x64xbf16>
    %c0_33 = arith.constant 0 : index
    %c0_34 = arith.constant 0 : index
    %29 = vector.load %arg2[%c0_33, %c0_34] : memref<192x64xbf16, #tpu.memory_space<vmem>>, vector<64x64xbf16>
    %cst_35 = arith.constant dense<0.000000e+00> : vector<6x64xf32>
    %30 = tpu.matmul %28, %29, %cst_35 {dimension_numbers = #tpu.dot_dimension_numbers<[1], [0], [0], [1], [0, 0, 1, 1], [], []>} : vector<6x64xbf16>, vector<64x64xbf16>, vector<6x64xf32> -> vector<6x64xf32>
    %31 = arith.addf %26, %30 : vector<6x64xf32>
    %c0_36 = arith.constant 0 : index
    %c1_37 = arith.constant 1 : index
    %c0_38 = arith.constant 0 : index
    %c1_39 = arith.constant 1 : index
    %c0_40 = arith.constant 0 : index
    %32 = vector.load %arg1[%c0_36, %c1_37, %c0_38, %c1_39, %c0_40] : memref<1x2x1x8x64xbf16, #tpu.memory_space<vmem>>, vector<1x1x1x6x64xbf16>
    %33 = vector.shape_cast %32 : vector<1x1x1x6x64xbf16> to vector<6x64xbf16>
    %c64_41 = arith.constant 64 : index
    %c0_42 = arith.constant 0 : index
    %34 = vector.load %arg2[%c64_41, %c0_42] : memref<192x64xbf16, #tpu.memory_space<vmem>>, vector<64x64xbf16>
    %cst_43 = arith.constant dense<0.000000e+00> : vector<6x64xf32>
    %35 = tpu.matmul %33, %34, %cst_43 {dimension_numbers = #tpu.dot_dimension_numbers<[1], [0], [0], [1], [0, 0, 1, 1], [], []>} : vector<6x64xbf16>, vector<64x64xbf16>, vector<6x64xf32> -> vector<6x64xf32>
    %36 = arith.addf %31, %35 : vector<6x64xf32>
    %c0_44 = arith.constant 0 : index
    %c1_45 = arith.constant 1 : index
    %c0_46 = arith.constant 0 : index
    %c2_47 = arith.constant 2 : index
    %c0_48 = arith.constant 0 : index
    %37 = vector.load %arg1[%c0_44, %c1_45, %c0_46, %c2_47, %c0_48] : memref<1x2x1x8x64xbf16, #tpu.memory_space<vmem>>, vector<1x1x1x6x64xbf16>
    %38 = vector.shape_cast %37 : vector<1x1x1x6x64xbf16> to vector<6x64xbf16>
    %c128_49 = arith.constant 128 : index
    %c0_50 = arith.constant 0 : index
    %39 = vector.load %arg2[%c128_49, %c0_50] : memref<192x64xbf16, #tpu.memory_space<vmem>>, vector<64x64xbf16>
    %cst_51 = arith.constant dense<0.000000e+00> : vector<6x64xf32>
    %40 = tpu.matmul %38, %39, %cst_51 {dimension_numbers = #tpu.dot_dimension_numbers<[1], [0], [0], [1], [0, 0, 1, 1], [], []>} : vector<6x64xbf16>, vector<64x64xbf16>, vector<6x64xf32> -> vector<6x64xf32>
    %41 = arith.addf %36, %40 : vector<6x64xf32>
    %42 = vector.broadcast %0 : vector<1x64xf32> to vector<6x64xf32>
    %43 = arith.addf %41, %42 : vector<6x64xf32>
    %cst_52 = arith.constant 0.000000e+00 : f32
    %44 = vector.broadcast %cst_52 : f32 to vector<6x64xf32>
    %45 = arith.cmpf ogt, %43, %44 : vector<6x64xf32>
    %cst_53 = arith.constant 2.000000e-01 : f32
    %46 = vector.broadcast %cst_53 : f32 to vector<6x64xf32>
    %47 = arith.mulf %46, %43 : vector<6x64xf32>
    %48 = arith.select %45, %43, %47 : vector<6x64xi1>, vector<6x64xf32>
    %cst_54 = arith.constant dense<0.000000e+00> : vector<64xf32>
    %49 = vector.multi_reduction <add>, %25, %cst_54 [0] : vector<6x64xf32> to vector<64xf32>
    %50 = vector.shape_cast %49 : vector<64xf32> to vector<1x64xf32>
    %51 = arith.mulf %25, %25 : vector<6x64xf32>
    %cst_55 = arith.constant dense<0.000000e+00> : vector<64xf32>
    %52 = vector.multi_reduction <add>, %51, %cst_55 [0] : vector<6x64xf32> to vector<64xf32>
    %53 = vector.shape_cast %52 : vector<64xf32> to vector<1x64xf32>
    %cst_56 = arith.constant dense<0.000000e+00> : vector<64xf32>
    %54 = vector.multi_reduction <add>, %48, %cst_56 [0] : vector<6x64xf32> to vector<64xf32>
    %55 = vector.shape_cast %54 : vector<64xf32> to vector<1x64xf32>
    %56 = arith.addf %50, %55 : vector<1x64xf32>
    %57 = arith.mulf %48, %48 : vector<6x64xf32>
    %cst_57 = arith.constant dense<0.000000e+00> : vector<64xf32>
    %58 = vector.multi_reduction <add>, %57, %cst_57 [0] : vector<6x64xf32> to vector<64xf32>
    %59 = vector.shape_cast %58 : vector<64xf32> to vector<1x64xf32>
    %60 = arith.addf %53, %59 : vector<1x64xf32>
    %cst_58 = arith.constant 0.0833333358 : f32
    %61 = vector.broadcast %cst_58 : f32 to vector<1x64xf32>
    %62 = arith.mulf %56, %61 : vector<1x64xf32>
    %cst_59 = arith.constant 0.0833333358 : f32
    %63 = vector.broadcast %cst_59 : f32 to vector<1x64xf32>
    %64 = arith.mulf %60, %63 : vector<1x64xf32>
    %65 = arith.mulf %62, %62 : vector<1x64xf32>
    %66 = arith.subf %64, %65 : vector<1x64xf32>
    %cst_60 = arith.constant 9.99999974E-6 : f32
    %67 = vector.broadcast %cst_60 : f32 to vector<1x64xf32>
    %68 = arith.addf %66, %67 : vector<1x64xf32>
    %69 = math.rsqrt %68 : vector<1x64xf32>
    %70 = arith.mulf %1, %69 : vector<1x64xf32>
    %71 = arith.mulf %62, %70 : vector<1x64xf32>
    %72 = arith.subf %2, %71 : vector<1x64xf32>
    %73 = vector.broadcast %70 : vector<1x64xf32> to vector<6x64xf32>
    %74 = arith.mulf %25, %73 : vector<6x64xf32>
    %75 = vector.broadcast %72 : vector<1x64xf32> to vector<6x64xf32>
    %76 = arith.addf %74, %75 : vector<6x64xf32>
    %77 = vector.broadcast %70 : vector<1x64xf32> to vector<6x64xf32>
    %78 = arith.mulf %48, %77 : vector<6x64xf32>
    %79 = vector.broadcast %72 : vector<1x64xf32> to vector<6x64xf32>
    %80 = arith.addf %78, %79 : vector<6x64xf32>
    %81 = arith.truncf %76 : vector<6x64xf32> to vector<6x64xbf16>
    %c0_61 = arith.constant 0 : index
    %c0_62 = arith.constant 0 : index
    %c0_63 = arith.constant 0 : index
    %c0_64 = arith.constant 0 : index
    %82 = vector.load %arg6[%c0_61, %c0_62, %c0_63, %c0_64] : memref<1x2x6x64xbf16, #tpu.memory_space<vmem>>, vector<1x1x6x64xbf16>
    %83 = vector.shape_cast %82 : vector<1x1x6x64xbf16> to vector<6x64xbf16>
    %84 = vector.shape_cast %81 : vector<6x64xbf16> to vector<1x1x6x64xbf16>
    tpu.vector_store %arg6[%c0_61, %c0_62, %c0_63, %c0_64], %84 {strides = array<i32>} : memref<1x2x6x64xbf16, #tpu.memory_space<vmem>>, vector<1x1x6x64xbf16>,
    %85 = arith.truncf %80 : vector<6x64xf32> to vector<6x64xbf16>
    %c0_65 = arith.constant 0 : index
    %c1_66 = arith.constant 1 : index
    %c0_67 = arith.constant 0 : index
    %c0_68 = arith.constant 0 : index
    %86 = vector.load %arg6[%c0_65, %c1_66, %c0_67, %c0_68] : memref<1x2x6x64xbf16, #tpu.memory_space<vmem>>, vector<1x1x6x64xbf16>
    %87 = vector.shape_cast %86 : vector<1x1x6x64xbf16> to vector<6x64xbf16>
    %88 = vector.shape_cast %85 : vector<6x64xbf16> to vector<1x1x6x64xbf16>
    tpu.vector_store %arg6[%c0_65, %c1_66, %c0_67, %c0_68], %88 {strides = array<i32>} : memref<1x2x6x64xbf16, #tpu.memory_space<vmem>>, vector<1x1x6x64xbf16>,
    return
  }
  func.func @transform_0(%arg0: i32) -> (i32, i32, i32, i32, i32) {
    %c0_i32 = arith.constant 0 : i32
    %c0_i32_0 = arith.constant 0 : i32
    %c0_i32_1 = arith.constant 0 : i32
    %c0_i32_2 = arith.constant 0 : i32
    %c0_i32_3 = arith.constant 0 : i32
    return %arg0, %c0_i32, %c0_i32_0, %c0_i32_1, %c0_i32_2 : i32, i32, i32, i32, i32
  }
  func.func @transform_1(%arg0: i32) -> (i32, i32) {
    %c0_i32 = arith.constant 0 : i32
    %c0_i32_0 = arith.constant 0 : i32
    %c0_i32_1 = arith.constant 0 : i32
    return %c0_i32, %c0_i32_0 : i32, i32
  }
  func.func @transform_2(%arg0: i32) -> (i32, i32) {
    %c0_i32 = arith.constant 0 : i32
    %c0_i32_0 = arith.constant 0 : i32
    %c0_i32_1 = arith.constant 0 : i32
    return %c0_i32, %c0_i32_0 : i32, i32
  }
  func.func @transform_3(%arg0: i32) -> (i32, i32) {
    %c0_i32 = arith.constant 0 : i32
    %c0_i32_0 = arith.constant 0 : i32
    %c0_i32_1 = arith.constant 0 : i32
    return %c0_i32, %c0_i32_0 : i32, i32
  }
  func.func @transform_4(%arg0: i32) -> (i32, i32) {
    %c0_i32 = arith.constant 0 : i32
    %c0_i32_0 = arith.constant 0 : i32
    %c0_i32_1 = arith.constant 0 : i32
    return %c0_i32, %c0_i32_0 : i32, i32
  }
  func.func @transform_5(%arg0: i32) -> (i32, i32, i32, i32) {
    %c0_i32 = arith.constant 0 : i32
    %c0_i32_0 = arith.constant 0 : i32
    %c0_i32_1 = arith.constant 0 : i32
    %c0_i32_2 = arith.constant 0 : i32
    return %arg0, %c0_i32, %c0_i32_0, %c0_i32_1 : i32, i32, i32, i32
  }
}

module attributes {stable_mosaic.version = 11 : i64} {
  func.func @conv_bn_kernel(%arg0: i32, %arg1: memref<1x2x1x6x64xbf16, #tpu.memory_space<vmem>>, %arg2: memref<192x128xbf16, #tpu.memory_space<vmem>>, %arg3: memref<1x128xf32, #tpu.memory_space<vmem>>, %arg4: memref<1x128xf32, #tpu.memory_space<vmem>>, %arg5: memref<1x128xf32, #tpu.memory_space<vmem>>, %arg6: memref<1x2x4x128xbf16, #tpu.memory_space<vmem>>) attributes {dimension_semantics = [#tpu.dimension_semantics<parallel>], iteration_bounds = array<i64: 8>, scalar_prefetch = 0 : i64, scratch_operands = 0 : i64, tpu.core_type = #tpu.core_type<tc>, window_params = [{transform_indices = @transform_0, window_bounds = array<i64: 1, 2, 1, 6, 64>}, {pipeline_mode = #tpu.pipeline_mode<synchronous>, transform_indices = @transform_1, window_bounds = array<i64: 192, 128>}, {pipeline_mode = #tpu.pipeline_mode<synchronous>, transform_indices = @transform_2, window_bounds = array<i64: 1, 128>}, {pipeline_mode = #tpu.pipeline_mode<synchronous>, transform_indices = @transform_3, window_bounds = array<i64: 1, 128>}, {pipeline_mode = #tpu.pipeline_mode<synchronous>, transform_indices = @transform_4, window_bounds = array<i64: 1, 128>}, {transform_indices = @transform_5, window_bounds = array<i64: 1, 2, 4, 128>}]} {
    %c0 = arith.constant 0 : index
    %c0_0 = arith.constant 0 : index
    %0 = vector.load %arg3[%c0, %c0_0] : memref<1x128xf32, #tpu.memory_space<vmem>>, vector<1x128xf32>
    %c0_1 = arith.constant 0 : index
    %c0_2 = arith.constant 0 : index
    %1 = vector.load %arg4[%c0_1, %c0_2] : memref<1x128xf32, #tpu.memory_space<vmem>>, vector<1x128xf32>
    %c0_3 = arith.constant 0 : index
    %c0_4 = arith.constant 0 : index
    %2 = vector.load %arg5[%c0_3, %c0_4] : memref<1x128xf32, #tpu.memory_space<vmem>>, vector<1x128xf32>
    %cst = arith.constant 0.000000e+00 : f32
    %3 = vector.broadcast %cst : f32 to vector<4x128xf32>
    %c0_5 = arith.constant 0 : index
    %c0_6 = arith.constant 0 : index
    %c0_7 = arith.constant 0 : index
    %c0_8 = arith.constant 0 : index
    %c0_9 = arith.constant 0 : index
    %4 = vector.load %arg1[%c0_5, %c0_6, %c0_7, %c0_8, %c0_9] : memref<1x2x1x6x64xbf16, #tpu.memory_space<vmem>>, vector<1x1x1x4x64xbf16>
    %5 = vector.shape_cast %4 : vector<1x1x1x4x64xbf16> to vector<4x64xbf16>
    %c0_10 = arith.constant 0 : index
    %c0_11 = arith.constant 0 : index
    %6 = vector.load %arg2[%c0_10, %c0_11] : memref<192x128xbf16, #tpu.memory_space<vmem>>, vector<64x128xbf16>
    %cst_12 = arith.constant dense<0.000000e+00> : vector<4x128xf32>
    %7 = tpu.matmul %5, %6, %cst_12 {dimension_numbers = #tpu.dot_dimension_numbers<[1], [0], [0], [1], [0, 0, 1, 1], [], []>} : vector<4x64xbf16>, vector<64x128xbf16>, vector<4x128xf32> -> vector<4x128xf32>
    %8 = arith.addf %3, %7 : vector<4x128xf32>
    %c0_13 = arith.constant 0 : index
    %c0_14 = arith.constant 0 : index
    %c0_15 = arith.constant 0 : index
    %c1 = arith.constant 1 : index
    %c0_16 = arith.constant 0 : index
    %9 = vector.load %arg1[%c0_13, %c0_14, %c0_15, %c1, %c0_16] : memref<1x2x1x6x64xbf16, #tpu.memory_space<vmem>>, vector<1x1x1x4x64xbf16>
    %10 = vector.shape_cast %9 : vector<1x1x1x4x64xbf16> to vector<4x64xbf16>
    %c64 = arith.constant 64 : index
    %c0_17 = arith.constant 0 : index
    %11 = vector.load %arg2[%c64, %c0_17] : memref<192x128xbf16, #tpu.memory_space<vmem>>, vector<64x128xbf16>
    %cst_18 = arith.constant dense<0.000000e+00> : vector<4x128xf32>
    %12 = tpu.matmul %10, %11, %cst_18 {dimension_numbers = #tpu.dot_dimension_numbers<[1], [0], [0], [1], [0, 0, 1, 1], [], []>} : vector<4x64xbf16>, vector<64x128xbf16>, vector<4x128xf32> -> vector<4x128xf32>
    %13 = arith.addf %8, %12 : vector<4x128xf32>
    %c0_19 = arith.constant 0 : index
    %c0_20 = arith.constant 0 : index
    %c0_21 = arith.constant 0 : index
    %c2 = arith.constant 2 : index
    %c0_22 = arith.constant 0 : index
    %14 = vector.load %arg1[%c0_19, %c0_20, %c0_21, %c2, %c0_22] : memref<1x2x1x6x64xbf16, #tpu.memory_space<vmem>>, vector<1x1x1x4x64xbf16>
    %15 = vector.shape_cast %14 : vector<1x1x1x4x64xbf16> to vector<4x64xbf16>
    %c128 = arith.constant 128 : index
    %c0_23 = arith.constant 0 : index
    %16 = vector.load %arg2[%c128, %c0_23] : memref<192x128xbf16, #tpu.memory_space<vmem>>, vector<64x128xbf16>
    %cst_24 = arith.constant dense<0.000000e+00> : vector<4x128xf32>
    %17 = tpu.matmul %15, %16, %cst_24 {dimension_numbers = #tpu.dot_dimension_numbers<[1], [0], [0], [1], [0, 0, 1, 1], [], []>} : vector<4x64xbf16>, vector<64x128xbf16>, vector<4x128xf32> -> vector<4x128xf32>
    %18 = arith.addf %13, %17 : vector<4x128xf32>
    %19 = vector.broadcast %0 : vector<1x128xf32> to vector<4x128xf32>
    %20 = arith.addf %18, %19 : vector<4x128xf32>
    %cst_25 = arith.constant 0.000000e+00 : f32
    %21 = vector.broadcast %cst_25 : f32 to vector<4x128xf32>
    %22 = arith.cmpf ogt, %20, %21 : vector<4x128xf32>
    %cst_26 = arith.constant 2.000000e-01 : f32
    %23 = vector.broadcast %cst_26 : f32 to vector<4x128xf32>
    %24 = arith.mulf %23, %20 : vector<4x128xf32>
    %25 = arith.select %22, %20, %24 : vector<4x128xi1>, vector<4x128xf32>
    %cst_27 = arith.constant 0.000000e+00 : f32
    %26 = vector.broadcast %cst_27 : f32 to vector<4x128xf32>
    %c0_28 = arith.constant 0 : index
    %c1_29 = arith.constant 1 : index
    %c0_30 = arith.constant 0 : index
    %c0_31 = arith.constant 0 : index
    %c0_32 = arith.constant 0 : index
    %27 = vector.load %arg1[%c0_28, %c1_29, %c0_30, %c0_31, %c0_32] : memref<1x2x1x6x64xbf16, #tpu.memory_space<vmem>>, vector<1x1x1x4x64xbf16>
    %28 = vector.shape_cast %27 : vector<1x1x1x4x64xbf16> to vector<4x64xbf16>
    %c0_33 = arith.constant 0 : index
    %c0_34 = arith.constant 0 : index
    %29 = vector.load %arg2[%c0_33, %c0_34] : memref<192x128xbf16, #tpu.memory_space<vmem>>, vector<64x128xbf16>
    %cst_35 = arith.constant dense<0.000000e+00> : vector<4x128xf32>
    %30 = tpu.matmul %28, %29, %cst_35 {dimension_numbers = #tpu.dot_dimension_numbers<[1], [0], [0], [1], [0, 0, 1, 1], [], []>} : vector<4x64xbf16>, vector<64x128xbf16>, vector<4x128xf32> -> vector<4x128xf32>
    %31 = arith.addf %26, %30 : vector<4x128xf32>
    %c0_36 = arith.constant 0 : index
    %c1_37 = arith.constant 1 : index
    %c0_38 = arith.constant 0 : index
    %c1_39 = arith.constant 1 : index
    %c0_40 = arith.constant 0 : index
    %32 = vector.load %arg1[%c0_36, %c1_37, %c0_38, %c1_39, %c0_40] : memref<1x2x1x6x64xbf16, #tpu.memory_space<vmem>>, vector<1x1x1x4x64xbf16>
    %33 = vector.shape_cast %32 : vector<1x1x1x4x64xbf16> to vector<4x64xbf16>
    %c64_41 = arith.constant 64 : index
    %c0_42 = arith.constant 0 : index
    %34 = vector.load %arg2[%c64_41, %c0_42] : memref<192x128xbf16, #tpu.memory_space<vmem>>, vector<64x128xbf16>
    %cst_43 = arith.constant dense<0.000000e+00> : vector<4x128xf32>
    %35 = tpu.matmul %33, %34, %cst_43 {dimension_numbers = #tpu.dot_dimension_numbers<[1], [0], [0], [1], [0, 0, 1, 1], [], []>} : vector<4x64xbf16>, vector<64x128xbf16>, vector<4x128xf32> -> vector<4x128xf32>
    %36 = arith.addf %31, %35 : vector<4x128xf32>
    %c0_44 = arith.constant 0 : index
    %c1_45 = arith.constant 1 : index
    %c0_46 = arith.constant 0 : index
    %c2_47 = arith.constant 2 : index
    %c0_48 = arith.constant 0 : index
    %37 = vector.load %arg1[%c0_44, %c1_45, %c0_46, %c2_47, %c0_48] : memref<1x2x1x6x64xbf16, #tpu.memory_space<vmem>>, vector<1x1x1x4x64xbf16>
    %38 = vector.shape_cast %37 : vector<1x1x1x4x64xbf16> to vector<4x64xbf16>
    %c128_49 = arith.constant 128 : index
    %c0_50 = arith.constant 0 : index
    %39 = vector.load %arg2[%c128_49, %c0_50] : memref<192x128xbf16, #tpu.memory_space<vmem>>, vector<64x128xbf16>
    %cst_51 = arith.constant dense<0.000000e+00> : vector<4x128xf32>
    %40 = tpu.matmul %38, %39, %cst_51 {dimension_numbers = #tpu.dot_dimension_numbers<[1], [0], [0], [1], [0, 0, 1, 1], [], []>} : vector<4x64xbf16>, vector<64x128xbf16>, vector<4x128xf32> -> vector<4x128xf32>
    %41 = arith.addf %36, %40 : vector<4x128xf32>
    %42 = vector.broadcast %0 : vector<1x128xf32> to vector<4x128xf32>
    %43 = arith.addf %41, %42 : vector<4x128xf32>
    %cst_52 = arith.constant 0.000000e+00 : f32
    %44 = vector.broadcast %cst_52 : f32 to vector<4x128xf32>
    %45 = arith.cmpf ogt, %43, %44 : vector<4x128xf32>
    %cst_53 = arith.constant 2.000000e-01 : f32
    %46 = vector.broadcast %cst_53 : f32 to vector<4x128xf32>
    %47 = arith.mulf %46, %43 : vector<4x128xf32>
    %48 = arith.select %45, %43, %47 : vector<4x128xi1>, vector<4x128xf32>
    %cst_54 = arith.constant dense<0.000000e+00> : vector<128xf32>
    %49 = vector.multi_reduction <add>, %25, %cst_54 [0] : vector<4x128xf32> to vector<128xf32>
    %50 = vector.shape_cast %49 : vector<128xf32> to vector<1x128xf32>
    %51 = arith.mulf %25, %25 : vector<4x128xf32>
    %cst_55 = arith.constant dense<0.000000e+00> : vector<128xf32>
    %52 = vector.multi_reduction <add>, %51, %cst_55 [0] : vector<4x128xf32> to vector<128xf32>
    %53 = vector.shape_cast %52 : vector<128xf32> to vector<1x128xf32>
    %cst_56 = arith.constant dense<0.000000e+00> : vector<128xf32>
    %54 = vector.multi_reduction <add>, %48, %cst_56 [0] : vector<4x128xf32> to vector<128xf32>
    %55 = vector.shape_cast %54 : vector<128xf32> to vector<1x128xf32>
    %56 = arith.addf %50, %55 : vector<1x128xf32>
    %57 = arith.mulf %48, %48 : vector<4x128xf32>
    %cst_57 = arith.constant dense<0.000000e+00> : vector<128xf32>
    %58 = vector.multi_reduction <add>, %57, %cst_57 [0] : vector<4x128xf32> to vector<128xf32>
    %59 = vector.shape_cast %58 : vector<128xf32> to vector<1x128xf32>
    %60 = arith.addf %53, %59 : vector<1x128xf32>
    %cst_58 = arith.constant 1.250000e-01 : f32
    %61 = vector.broadcast %cst_58 : f32 to vector<1x128xf32>
    %62 = arith.mulf %56, %61 : vector<1x128xf32>
    %cst_59 = arith.constant 1.250000e-01 : f32
    %63 = vector.broadcast %cst_59 : f32 to vector<1x128xf32>
    %64 = arith.mulf %60, %63 : vector<1x128xf32>
    %65 = arith.mulf %62, %62 : vector<1x128xf32>
    %66 = arith.subf %64, %65 : vector<1x128xf32>
    %cst_60 = arith.constant 9.99999974E-6 : f32
    %67 = vector.broadcast %cst_60 : f32 to vector<1x128xf32>
    %68 = arith.addf %66, %67 : vector<1x128xf32>
    %69 = math.rsqrt %68 : vector<1x128xf32>
    %70 = arith.mulf %1, %69 : vector<1x128xf32>
    %71 = arith.mulf %62, %70 : vector<1x128xf32>
    %72 = arith.subf %2, %71 : vector<1x128xf32>
    %73 = vector.broadcast %70 : vector<1x128xf32> to vector<4x128xf32>
    %74 = arith.mulf %25, %73 : vector<4x128xf32>
    %75 = vector.broadcast %72 : vector<1x128xf32> to vector<4x128xf32>
    %76 = arith.addf %74, %75 : vector<4x128xf32>
    %77 = vector.broadcast %70 : vector<1x128xf32> to vector<4x128xf32>
    %78 = arith.mulf %48, %77 : vector<4x128xf32>
    %79 = vector.broadcast %72 : vector<1x128xf32> to vector<4x128xf32>
    %80 = arith.addf %78, %79 : vector<4x128xf32>
    %81 = arith.truncf %76 : vector<4x128xf32> to vector<4x128xbf16>
    %c0_61 = arith.constant 0 : index
    %c0_62 = arith.constant 0 : index
    %c0_63 = arith.constant 0 : index
    %c0_64 = arith.constant 0 : index
    %82 = vector.load %arg6[%c0_61, %c0_62, %c0_63, %c0_64] : memref<1x2x4x128xbf16, #tpu.memory_space<vmem>>, vector<1x1x4x128xbf16>
    %83 = vector.shape_cast %82 : vector<1x1x4x128xbf16> to vector<4x128xbf16>
    %84 = vector.shape_cast %81 : vector<4x128xbf16> to vector<1x1x4x128xbf16>
    tpu.vector_store %arg6[%c0_61, %c0_62, %c0_63, %c0_64], %84 {strides = array<i32>} : memref<1x2x4x128xbf16, #tpu.memory_space<vmem>>, vector<1x1x4x128xbf16>,
    %85 = arith.truncf %80 : vector<4x128xf32> to vector<4x128xbf16>
    %c0_65 = arith.constant 0 : index
    %c1_66 = arith.constant 1 : index
    %c0_67 = arith.constant 0 : index
    %c0_68 = arith.constant 0 : index
    %86 = vector.load %arg6[%c0_65, %c1_66, %c0_67, %c0_68] : memref<1x2x4x128xbf16, #tpu.memory_space<vmem>>, vector<1x1x4x128xbf16>
    %87 = vector.shape_cast %86 : vector<1x1x4x128xbf16> to vector<4x128xbf16>
    %88 = vector.shape_cast %85 : vector<4x128xbf16> to vector<1x1x4x128xbf16>
    tpu.vector_store %arg6[%c0_65, %c1_66, %c0_67, %c0_68], %88 {strides = array<i32>} : memref<1x2x4x128xbf16, #tpu.memory_space<vmem>>, vector<1x1x4x128xbf16>,
    return
  }
  func.func @transform_0(%arg0: i32) -> (i32, i32, i32, i32, i32) {
    %c0_i32 = arith.constant 0 : i32
    %c0_i32_0 = arith.constant 0 : i32
    %c0_i32_1 = arith.constant 0 : i32
    %c0_i32_2 = arith.constant 0 : i32
    %c0_i32_3 = arith.constant 0 : i32
    return %arg0, %c0_i32, %c0_i32_0, %c0_i32_1, %c0_i32_2 : i32, i32, i32, i32, i32
  }
  func.func @transform_1(%arg0: i32) -> (i32, i32) {
    %c0_i32 = arith.constant 0 : i32
    %c0_i32_0 = arith.constant 0 : i32
    %c0_i32_1 = arith.constant 0 : i32
    return %c0_i32, %c0_i32_0 : i32, i32
  }
  func.func @transform_2(%arg0: i32) -> (i32, i32) {
    %c0_i32 = arith.constant 0 : i32
    %c0_i32_0 = arith.constant 0 : i32
    %c0_i32_1 = arith.constant 0 : i32
    return %c0_i32, %c0_i32_0 : i32, i32
  }
  func.func @transform_3(%arg0: i32) -> (i32, i32) {
    %c0_i32 = arith.constant 0 : i32
    %c0_i32_0 = arith.constant 0 : i32
    %c0_i32_1 = arith.constant 0 : i32
    return %c0_i32, %c0_i32_0 : i32, i32
  }
  func.func @transform_4(%arg0: i32) -> (i32, i32) {
    %c0_i32 = arith.constant 0 : i32
    %c0_i32_0 = arith.constant 0 : i32
    %c0_i32_1 = arith.constant 0 : i32
    return %c0_i32, %c0_i32_0 : i32, i32
  }
  func.func @transform_5(%arg0: i32) -> (i32, i32, i32, i32) {
    %c0_i32 = arith.constant 0 : i32
    %c0_i32_0 = arith.constant 0 : i32
    %c0_i32_1 = arith.constant 0 : i32
    %c0_i32_2 = arith.constant 0 : i32
    return %arg0, %c0_i32, %c0_i32_0, %c0_i32_1 : i32, i32, i32, i32
  }
}

module attributes {stable_mosaic.version = 11 : i64} {
  func.func @conv_bn_pool_head_kernel(%arg0: i32, %arg1: memref<1x2x1x4x128xbf16, #tpu.memory_space<vmem>>, %arg2: memref<384x256xbf16, #tpu.memory_space<vmem>>, %arg3: memref<1x256xf32, #tpu.memory_space<vmem>>, %arg4: memref<1x256xf32, #tpu.memory_space<vmem>>, %arg5: memref<1x256xf32, #tpu.memory_space<vmem>>, %arg6: memref<256x128xbf16, #tpu.memory_space<vmem>>, %arg7: memref<1x128xf32, #tpu.memory_space<vmem>>, %arg8: memref<1x2x128xf32, #tpu.memory_space<vmem>>) attributes {dimension_semantics = [#tpu.dimension_semantics<parallel>], iteration_bounds = array<i64: 8>, scalar_prefetch = 0 : i64, scratch_operands = 0 : i64, tpu.core_type = #tpu.core_type<tc>, window_params = [{transform_indices = @transform_0, window_bounds = array<i64: 1, 2, 1, 4, 128>}, {pipeline_mode = #tpu.pipeline_mode<synchronous>, transform_indices = @transform_1, window_bounds = array<i64: 384, 256>}, {pipeline_mode = #tpu.pipeline_mode<synchronous>, transform_indices = @transform_2, window_bounds = array<i64: 1, 256>}, {pipeline_mode = #tpu.pipeline_mode<synchronous>, transform_indices = @transform_3, window_bounds = array<i64: 1, 256>}, {pipeline_mode = #tpu.pipeline_mode<synchronous>, transform_indices = @transform_4, window_bounds = array<i64: 1, 256>}, {pipeline_mode = #tpu.pipeline_mode<synchronous>, transform_indices = @transform_5, window_bounds = array<i64: 256, 128>}, {pipeline_mode = #tpu.pipeline_mode<synchronous>, transform_indices = @transform_6, window_bounds = array<i64: 1, 128>}, {transform_indices = @transform_7, window_bounds = array<i64: 1, 2, 128>}]} {
    %c0 = arith.constant 0 : index
    %c0_0 = arith.constant 0 : index
    %0 = vector.load %arg3[%c0, %c0_0] : memref<1x256xf32, #tpu.memory_space<vmem>>, vector<1x256xf32>
    %c0_1 = arith.constant 0 : index
    %c0_2 = arith.constant 0 : index
    %1 = vector.load %arg4[%c0_1, %c0_2] : memref<1x256xf32, #tpu.memory_space<vmem>>, vector<1x256xf32>
    %c0_3 = arith.constant 0 : index
    %c0_4 = arith.constant 0 : index
    %2 = vector.load %arg5[%c0_3, %c0_4] : memref<1x256xf32, #tpu.memory_space<vmem>>, vector<1x256xf32>
    %cst = arith.constant 0.000000e+00 : f32
    %3 = vector.broadcast %cst : f32 to vector<2x256xf32>
    %c0_5 = arith.constant 0 : index
    %c0_6 = arith.constant 0 : index
    %c0_7 = arith.constant 0 : index
    %c0_8 = arith.constant 0 : index
    %c0_9 = arith.constant 0 : index
    %4 = vector.load %arg1[%c0_5, %c0_6, %c0_7, %c0_8, %c0_9] : memref<1x2x1x4x128xbf16, #tpu.memory_space<vmem>>, vector<1x1x1x2x128xbf16>
    %5 = vector.shape_cast %4 : vector<1x1x1x2x128xbf16> to vector<2x128xbf16>
    %c0_10 = arith.constant 0 : index
    %c0_11 = arith.constant 0 : index
    %6 = vector.load %arg2[%c0_10, %c0_11] : memref<384x256xbf16, #tpu.memory_space<vmem>>, vector<128x256xbf16>
    %cst_12 = arith.constant dense<0.000000e+00> : vector<2x256xf32>
    %7 = tpu.matmul %5, %6, %cst_12 {dimension_numbers = #tpu.dot_dimension_numbers<[1], [0], [0], [1], [0, 0, 1, 1], [], []>} : vector<2x128xbf16>, vector<128x256xbf16>, vector<2x256xf32> -> vector<2x256xf32>
    %8 = arith.addf %3, %7 : vector<2x256xf32>
    %c0_13 = arith.constant 0 : index
    %c0_14 = arith.constant 0 : index
    %c0_15 = arith.constant 0 : index
    %c1 = arith.constant 1 : index
    %c0_16 = arith.constant 0 : index
    %9 = vector.load %arg1[%c0_13, %c0_14, %c0_15, %c1, %c0_16] : memref<1x2x1x4x128xbf16, #tpu.memory_space<vmem>>, vector<1x1x1x2x128xbf16>
    %10 = vector.shape_cast %9 : vector<1x1x1x2x128xbf16> to vector<2x128xbf16>
    %c128 = arith.constant 128 : index
    %c0_17 = arith.constant 0 : index
    %11 = vector.load %arg2[%c128, %c0_17] : memref<384x256xbf16, #tpu.memory_space<vmem>>, vector<128x256xbf16>
    %cst_18 = arith.constant dense<0.000000e+00> : vector<2x256xf32>
    %12 = tpu.matmul %10, %11, %cst_18 {dimension_numbers = #tpu.dot_dimension_numbers<[1], [0], [0], [1], [0, 0, 1, 1], [], []>} : vector<2x128xbf16>, vector<128x256xbf16>, vector<2x256xf32> -> vector<2x256xf32>
    %13 = arith.addf %8, %12 : vector<2x256xf32>
    %c0_19 = arith.constant 0 : index
    %c0_20 = arith.constant 0 : index
    %c0_21 = arith.constant 0 : index
    %c2 = arith.constant 2 : index
    %c0_22 = arith.constant 0 : index
    %14 = vector.load %arg1[%c0_19, %c0_20, %c0_21, %c2, %c0_22] : memref<1x2x1x4x128xbf16, #tpu.memory_space<vmem>>, vector<1x1x1x2x128xbf16>
    %15 = vector.shape_cast %14 : vector<1x1x1x2x128xbf16> to vector<2x128xbf16>
    %c256 = arith.constant 256 : index
    %c0_23 = arith.constant 0 : index
    %16 = vector.load %arg2[%c256, %c0_23] : memref<384x256xbf16, #tpu.memory_space<vmem>>, vector<128x256xbf16>
    %cst_24 = arith.constant dense<0.000000e+00> : vector<2x256xf32>
    %17 = tpu.matmul %15, %16, %cst_24 {dimension_numbers = #tpu.dot_dimension_numbers<[1], [0], [0], [1], [0, 0, 1, 1], [], []>} : vector<2x128xbf16>, vector<128x256xbf16>, vector<2x256xf32> -> vector<2x256xf32>
    %18 = arith.addf %13, %17 : vector<2x256xf32>
    %19 = vector.broadcast %0 : vector<1x256xf32> to vector<2x256xf32>
    %20 = arith.addf %18, %19 : vector<2x256xf32>
    %cst_25 = arith.constant 0.000000e+00 : f32
    %21 = vector.broadcast %cst_25 : f32 to vector<2x256xf32>
    %22 = arith.cmpf ogt, %20, %21 : vector<2x256xf32>
    %cst_26 = arith.constant 2.000000e-01 : f32
    %23 = vector.broadcast %cst_26 : f32 to vector<2x256xf32>
    %24 = arith.mulf %23, %20 : vector<2x256xf32>
    %25 = arith.select %22, %20, %24 : vector<2x256xi1>, vector<2x256xf32>
    %cst_27 = arith.constant 0.000000e+00 : f32
    %26 = vector.broadcast %cst_27 : f32 to vector<2x256xf32>
    %c0_28 = arith.constant 0 : index
    %c1_29 = arith.constant 1 : index
    %c0_30 = arith.constant 0 : index
    %c0_31 = arith.constant 0 : index
    %c0_32 = arith.constant 0 : index
    %27 = vector.load %arg1[%c0_28, %c1_29, %c0_30, %c0_31, %c0_32] : memref<1x2x1x4x128xbf16, #tpu.memory_space<vmem>>, vector<1x1x1x2x128xbf16>
    %28 = vector.shape_cast %27 : vector<1x1x1x2x128xbf16> to vector<2x128xbf16>
    %c0_33 = arith.constant 0 : index
    %c0_34 = arith.constant 0 : index
    %29 = vector.load %arg2[%c0_33, %c0_34] : memref<384x256xbf16, #tpu.memory_space<vmem>>, vector<128x256xbf16>
    %cst_35 = arith.constant dense<0.000000e+00> : vector<2x256xf32>
    %30 = tpu.matmul %28, %29, %cst_35 {dimension_numbers = #tpu.dot_dimension_numbers<[1], [0], [0], [1], [0, 0, 1, 1], [], []>} : vector<2x128xbf16>, vector<128x256xbf16>, vector<2x256xf32> -> vector<2x256xf32>
    %31 = arith.addf %26, %30 : vector<2x256xf32>
    %c0_36 = arith.constant 0 : index
    %c1_37 = arith.constant 1 : index
    %c0_38 = arith.constant 0 : index
    %c1_39 = arith.constant 1 : index
    %c0_40 = arith.constant 0 : index
    %32 = vector.load %arg1[%c0_36, %c1_37, %c0_38, %c1_39, %c0_40] : memref<1x2x1x4x128xbf16, #tpu.memory_space<vmem>>, vector<1x1x1x2x128xbf16>
    %33 = vector.shape_cast %32 : vector<1x1x1x2x128xbf16> to vector<2x128xbf16>
    %c128_41 = arith.constant 128 : index
    %c0_42 = arith.constant 0 : index
    %34 = vector.load %arg2[%c128_41, %c0_42] : memref<384x256xbf16, #tpu.memory_space<vmem>>, vector<128x256xbf16>
    %cst_43 = arith.constant dense<0.000000e+00> : vector<2x256xf32>
    %35 = tpu.matmul %33, %34, %cst_43 {dimension_numbers = #tpu.dot_dimension_numbers<[1], [0], [0], [1], [0, 0, 1, 1], [], []>} : vector<2x128xbf16>, vector<128x256xbf16>, vector<2x256xf32> -> vector<2x256xf32>
    %36 = arith.addf %31, %35 : vector<2x256xf32>
    %c0_44 = arith.constant 0 : index
    %c1_45 = arith.constant 1 : index
    %c0_46 = arith.constant 0 : index
    %c2_47 = arith.constant 2 : index
    %c0_48 = arith.constant 0 : index
    %37 = vector.load %arg1[%c0_44, %c1_45, %c0_46, %c2_47, %c0_48] : memref<1x2x1x4x128xbf16, #tpu.memory_space<vmem>>, vector<1x1x1x2x128xbf16>
    %38 = vector.shape_cast %37 : vector<1x1x1x2x128xbf16> to vector<2x128xbf16>
    %c256_49 = arith.constant 256 : index
    %c0_50 = arith.constant 0 : index
    %39 = vector.load %arg2[%c256_49, %c0_50] : memref<384x256xbf16, #tpu.memory_space<vmem>>, vector<128x256xbf16>
    %cst_51 = arith.constant dense<0.000000e+00> : vector<2x256xf32>
    %40 = tpu.matmul %38, %39, %cst_51 {dimension_numbers = #tpu.dot_dimension_numbers<[1], [0], [0], [1], [0, 0, 1, 1], [], []>} : vector<2x128xbf16>, vector<128x256xbf16>, vector<2x256xf32> -> vector<2x256xf32>
    %41 = arith.addf %36, %40 : vector<2x256xf32>
    %42 = vector.broadcast %0 : vector<1x256xf32> to vector<2x256xf32>
    %43 = arith.addf %41, %42 : vector<2x256xf32>
    %cst_52 = arith.constant 0.000000e+00 : f32
    %44 = vector.broadcast %cst_52 : f32 to vector<2x256xf32>
    %45 = arith.cmpf ogt, %43, %44 : vector<2x256xf32>
    %cst_53 = arith.constant 2.000000e-01 : f32
    %46 = vector.broadcast %cst_53 : f32 to vector<2x256xf32>
    %47 = arith.mulf %46, %43 : vector<2x256xf32>
    %48 = arith.select %45, %43, %47 : vector<2x256xi1>, vector<2x256xf32>
    %cst_54 = arith.constant dense<0.000000e+00> : vector<256xf32>
    %49 = vector.multi_reduction <add>, %25, %cst_54 [0] : vector<2x256xf32> to vector<256xf32>
    %50 = vector.shape_cast %49 : vector<256xf32> to vector<1x256xf32>
    %51 = arith.mulf %25, %25 : vector<2x256xf32>
    %cst_55 = arith.constant dense<0.000000e+00> : vector<256xf32>
    %52 = vector.multi_reduction <add>, %51, %cst_55 [0] : vector<2x256xf32> to vector<256xf32>
    %53 = vector.shape_cast %52 : vector<256xf32> to vector<1x256xf32>
    %cst_56 = arith.constant dense<0.000000e+00> : vector<256xf32>
    %54 = vector.multi_reduction <add>, %48, %cst_56 [0] : vector<2x256xf32> to vector<256xf32>
    %55 = vector.shape_cast %54 : vector<256xf32> to vector<1x256xf32>
    %56 = arith.addf %50, %55 : vector<1x256xf32>
    %57 = arith.mulf %48, %48 : vector<2x256xf32>
    %cst_57 = arith.constant dense<0.000000e+00> : vector<256xf32>
    %58 = vector.multi_reduction <add>, %57, %cst_57 [0] : vector<2x256xf32> to vector<256xf32>
    %59 = vector.shape_cast %58 : vector<256xf32> to vector<1x256xf32>
    %60 = arith.addf %53, %59 : vector<1x256xf32>
    %cst_58 = arith.constant 2.500000e-01 : f32
    %61 = vector.broadcast %cst_58 : f32 to vector<1x256xf32>
    %62 = arith.mulf %56, %61 : vector<1x256xf32>
    %cst_59 = arith.constant 2.500000e-01 : f32
    %63 = vector.broadcast %cst_59 : f32 to vector<1x256xf32>
    %64 = arith.mulf %60, %63 : vector<1x256xf32>
    %65 = arith.mulf %62, %62 : vector<1x256xf32>
    %66 = arith.subf %64, %65 : vector<1x256xf32>
    %cst_60 = arith.constant 9.99999974E-6 : f32
    %67 = vector.broadcast %cst_60 : f32 to vector<1x256xf32>
    %68 = arith.addf %66, %67 : vector<1x256xf32>
    %69 = math.rsqrt %68 : vector<1x256xf32>
    %70 = arith.mulf %1, %69 : vector<1x256xf32>
    %71 = arith.mulf %62, %70 : vector<1x256xf32>
    %72 = arith.subf %2, %71 : vector<1x256xf32>
    %73 = vector.broadcast %70 : vector<1x256xf32> to vector<2x256xf32>
    %74 = arith.mulf %25, %73 : vector<2x256xf32>
    %75 = vector.broadcast %72 : vector<1x256xf32> to vector<2x256xf32>
    %76 = arith.addf %74, %75 : vector<2x256xf32>
    %77 = vector.broadcast %70 : vector<1x256xf32> to vector<2x256xf32>
    %78 = arith.mulf %48, %77 : vector<2x256xf32>
    %79 = vector.broadcast %72 : vector<1x256xf32> to vector<2x256xf32>
    %80 = arith.addf %78, %79 : vector<2x256xf32>
    %c0_61 = arith.constant 0 : index
    %c0_62 = arith.constant 0 : index
    %81 = vector.load %arg6[%c0_61, %c0_62] : memref<256x128xbf16, #tpu.memory_space<vmem>>, vector<256x128xbf16>
    %c0_63 = arith.constant 0 : index
    %c0_64 = arith.constant 0 : index
    %82 = vector.load %arg7[%c0_63, %c0_64] : memref<1x128xf32, #tpu.memory_space<vmem>>, vector<1x128xf32>
    %cst_65 = arith.constant dense<0.000000e+00> : vector<256xf32>
    %83 = vector.multi_reduction <add>, %76, %cst_65 [0] : vector<2x256xf32> to vector<256xf32>
    %84 = vector.shape_cast %83 : vector<256xf32> to vector<1x256xf32>
    %cst_66 = arith.constant 2.000000e+00 : f32
    %85 = vector.broadcast %cst_66 : f32 to vector<1x256xf32>
    %86 = arith.divf %84, %85 : vector<1x256xf32>
    %87 = arith.truncf %86 : vector<1x256xf32> to vector<1x256xbf16>
    %cst_67 = arith.constant dense<0.000000e+00> : vector<1x128xf32>
    %88 = tpu.matmul %87, %81, %cst_67 {dimension_numbers = #tpu.dot_dimension_numbers<[1], [0], [0], [1], [0, 0, 1, 1], [], []>} : vector<1x256xbf16>, vector<256x128xbf16>, vector<1x128xf32> -> vector<1x128xf32>
    %89 = arith.addf %88, %82 : vector<1x128xf32>
    %c0_68 = arith.constant 0 : index
    %c0_69 = arith.constant 0 : index
    %c0_70 = arith.constant 0 : index
    %90 = vector.load %arg8[%c0_68, %c0_69, %c0_70] : memref<1x2x128xf32, #tpu.memory_space<vmem>>, vector<1x1x128xf32>
    %91 = vector.shape_cast %90 : vector<1x1x128xf32> to vector<1x128xf32>
    %92 = vector.shape_cast %89 : vector<1x128xf32> to vector<1x1x128xf32>
    tpu.vector_store %arg8[%c0_68, %c0_69, %c0_70], %92 {strides = array<i32>} : memref<1x2x128xf32, #tpu.memory_space<vmem>>, vector<1x1x128xf32>,
    %cst_71 = arith.constant dense<0.000000e+00> : vector<256xf32>
    %93 = vector.multi_reduction <add>, %80, %cst_71 [0] : vector<2x256xf32> to vector<256xf32>
    %94 = vector.shape_cast %93 : vector<256xf32> to vector<1x256xf32>
    %cst_72 = arith.constant 2.000000e+00 : f32
    %95 = vector.broadcast %cst_72 : f32 to vector<1x256xf32>
    %96 = arith.divf %94, %95 : vector<1x256xf32>
    %97 = arith.truncf %96 : vector<1x256xf32> to vector<1x256xbf16>
    %cst_73 = arith.constant dense<0.000000e+00> : vector<1x128xf32>
    %98 = tpu.matmul %97, %81, %cst_73 {dimension_numbers = #tpu.dot_dimension_numbers<[1], [0], [0], [1], [0, 0, 1, 1], [], []>} : vector<1x256xbf16>, vector<256x128xbf16>, vector<1x128xf32> -> vector<1x128xf32>
    %99 = arith.addf %98, %82 : vector<1x128xf32>
    %c0_74 = arith.constant 0 : index
    %c1_75 = arith.constant 1 : index
    %c0_76 = arith.constant 0 : index
    %100 = vector.load %arg8[%c0_74, %c1_75, %c0_76] : memref<1x2x128xf32, #tpu.memory_space<vmem>>, vector<1x1x128xf32>
    %101 = vector.shape_cast %100 : vector<1x1x128xf32> to vector<1x128xf32>
    %102 = vector.shape_cast %99 : vector<1x128xf32> to vector<1x1x128xf32>
    tpu.vector_store %arg8[%c0_74, %c1_75, %c0_76], %102 {strides = array<i32>} : memref<1x2x128xf32, #tpu.memory_space<vmem>>, vector<1x1x128xf32>,
    return
  }
  func.func @transform_0(%arg0: i32) -> (i32, i32, i32, i32, i32) {
    %c0_i32 = arith.constant 0 : i32
    %c0_i32_0 = arith.constant 0 : i32
    %c0_i32_1 = arith.constant 0 : i32
    %c0_i32_2 = arith.constant 0 : i32
    %c0_i32_3 = arith.constant 0 : i32
    return %arg0, %c0_i32, %c0_i32_0, %c0_i32_1, %c0_i32_2 : i32, i32, i32, i32, i32
  }
  func.func @transform_1(%arg0: i32) -> (i32, i32) {
    %c0_i32 = arith.constant 0 : i32
    %c0_i32_0 = arith.constant 0 : i32
    %c0_i32_1 = arith.constant 0 : i32
    return %c0_i32, %c0_i32_0 : i32, i32
  }
  func.func @transform_2(%arg0: i32) -> (i32, i32) {
    %c0_i32 = arith.constant 0 : i32
    %c0_i32_0 = arith.constant 0 : i32
    %c0_i32_1 = arith.constant 0 : i32
    return %c0_i32, %c0_i32_0 : i32, i32
  }
  func.func @transform_3(%arg0: i32) -> (i32, i32) {
    %c0_i32 = arith.constant 0 : i32
    %c0_i32_0 = arith.constant 0 : i32
    %c0_i32_1 = arith.constant 0 : i32
    return %c0_i32, %c0_i32_0 : i32, i32
  }
  func.func @transform_4(%arg0: i32) -> (i32, i32) {
    %c0_i32 = arith.constant 0 : i32
    %c0_i32_0 = arith.constant 0 : i32
    %c0_i32_1 = arith.constant 0 : i32
    return %c0_i32, %c0_i32_0 : i32, i32
  }
  func.func @transform_5(%arg0: i32) -> (i32, i32) {
    %c0_i32 = arith.constant 0 : i32
    %c0_i32_0 = arith.constant 0 : i32
    %c0_i32_1 = arith.constant 0 : i32
    return %c0_i32, %c0_i32_0 : i32, i32
  }
  func.func @transform_6(%arg0: i32) -> (i32, i32) {
    %c0_i32 = arith.constant 0 : i32
    %c0_i32_0 = arith.constant 0 : i32
    %c0_i32_1 = arith.constant 0 : i32
    return %c0_i32, %c0_i32_0 : i32, i32
  }
  func.func @transform_7(%arg0: i32) -> (i32, i32, i32) {
    %c0_i32 = arith.constant 0 : i32
    %c0_i32_0 = arith.constant 0 : i32
    %c0_i32_1 = arith.constant 0 : i32
    return %arg0, %c0_i32, %c0_i32_0 : i32, i32, i32
  }
}

</mosaic_0001>

<llo_original>
// kernel: baseline_convnet_forward.6
$region0: #{baseline_convnet_forward.6}
  #allocation0 [shape = 'u32[]', space=smem, size = 0x4, offset = 0x4, fixed_abs, tag = 'smem constant byte address 0x4 - core index']
  #allocation1 [shape = 'u32[144,128]{1,0:T(1,128)}', space=vmem, size = 0x12000, scoped, tag = 'internal scratch']
  %s0 = inlined_call_operand.vmem [shape: f32[8,2,4,64,1], index: 0, kind: input, shape index: {}]
  %s1 = inlined_call_operand.vmem [shape: f32[7,16], index: 1, kind: input, shape index: {}]
  %s2 = inlined_call_operand.vmem [shape: f32[1,16], index: 2, kind: input, shape index: {}]
  %s3 = inlined_call_operand.vmem [shape: f32[1,16], index: 3, kind: input, shape index: {}]
  %s4 = inlined_call_operand.vmem [shape: f32[1,16], index: 4, kind: input, shape index: {}]
  %s5 = inlined_call_operand.vmem [shape: bf16[8,2,63,16], index: 5, kind: output, shape index: {}]
  %s6 = sld [smem:[#allocation0]]
  $region53: #{baseline_convnet_forward.6} parent=0
    _
  %s8 = ssub.s32 1, %s6
  %s9 = scalar_select 0, %s8, %s6
  loop: start=0, step=1, limit=10
  $region2: #{baseline_convnet_forward.6} parent=0 // loop_pre_header
    _
  $region3: #{baseline_convnet_forward.6} parent=0 // loop_header
    %s11 = sphi 0, %s15
    %p12 = scmp.ge.s32.totalorder %s11, 10
    %s21 = sphi 0, %s23
    %s24 = sphi 0, %s21
    %s25 = sphi 0, %s24
    %s41 = sphi 0, %s25
    %s45 = sphi 0, %s45
    %s47 = sphi 0, %s45
    %s48 = sphi 0, %s47
    %s62 = sphi 0, %s48
    %s66 = sphi 0, %s66
    %s68 = sphi 0, %s66
    %s69 = sphi 0, %s68
    %s83 = sphi 0, %s69
    %s87 = sphi 0, %s87
    %s89 = sphi 0, %s87
    %s90 = sphi 0, %s89
    %s104 = sphi 0, %s90
    %s108 = sphi 0, %s108
    %s110 = sphi 0, %s108
    %s111 = sphi 0, %s110
    %s125 = sphi 0, %s111
    %s131 = sphi 0, %s133
    %s134 = sphi 0, %s131
    %s135 = sphi 0, %s134
    %s151 = sphi 0, %s135
  $region4: #{baseline_convnet_forward.6} parent=0 // loop_header_branch
    %14 = sbr.rel (%p12) target = $region8
  $region5: #{baseline_convnet_forward.6} parent=0 // loop_body
    %s16 = ssub.s32 %s11, 1
    %s17 = ssub.s32 %s11, 2
    %s18 = sadd.s32 %s11, 1
    %s19 = ssub.s32 %s11, %s18
    %p20 = scmp.eq.s32.totalorder %s19, 0
    %s22 = sadd.s32 %s21, 1
    %s23 = scalar_select %p20, %s21, %s22
    %p26 = pneg %p20
    %p27 = scmp.eq.s32.totalorder %s11, 7
    %p28 = por %p26, %p27
    %p29 = scmp.ne.s32.totalorder %s21, %s24
    %p30 = scmp.eq.s32.totalorder %s11, 0
    %p31 = por %p29, %p30
    %p32 = scmp.ne.s32.totalorder %s21, %s24
    %p33 = scmp.eq.s32.totalorder %s16, 7
    %p34 = por %p32, %p33
    %p35 = scmp.ne.s32.totalorder %s24, %s25
    %p36 = scmp.eq.s32.totalorder %s16, 0
    %p37 = por %p35, %p36
    %p38 = scmp.ne.s32.totalorder %s24, %s25
    %p39 = scmp.eq.s32.totalorder %s17, 7
    %p40 = por %p38, %p39
    %p42 = scmp.ne.s32.totalorder %s25, %s41
    %p43 = scmp.eq.s32.totalorder %s17, 0
    %p44 = por %p42, %p43
    %s46 = sadd.s32 %s45, 1
    %p49 = scmp.eq.s32.totalorder %s11, 7
    %p50 = scmp.ne.s32.totalorder %s45, %s47
    %p51 = scmp.eq.s32.totalorder %s11, 0
    %p52 = por %p50, %p51
    %p53 = scmp.ne.s32.totalorder %s45, %s47
    %p54 = scmp.eq.s32.totalorder %s16, 7
    %p55 = por %p53, %p54
    %p56 = scmp.ne.s32.totalorder %s47, %s48
    %p57 = scmp.eq.s32.totalorder %s16, 0
    %p58 = por %p56, %p57
    %p59 = scmp.ne.s32.totalorder %s47, %s48
    %p60 = scmp.eq.s32.totalorder %s17, 7
    %p61 = por %p59, %p60
    %p63 = scmp.ne.s32.totalorder %s48, %s62
    %p64 = scmp.eq.s32.totalorder %s17, 0
    %p65 = por %p63, %p64
    %s67 = sadd.s32 %s66, 1
    %p70 = scmp.eq.s32.totalorder %s11, 7
    %p71 = scmp.ne.s32.totalorder %s66, %s68
    %p72 = scmp.eq.s32.totalorder %s11, 0
    %p73 = por %p71, %p72
    %p74 = scmp.ne.s32.totalorder %s66, %s68
    %p75 = scmp.eq.s32.totalorder %s16, 7
    %p76 = por %p74, %p75
    %p77 = scmp.ne.s32.totalorder %s68, %s69
    %p78 = scmp.eq.s32.totalorder %s16, 0
    %p79 = por %p77, %p78
    %p80 = scmp.ne.s32.totalorder %s68, %s69
    %p81 = scmp.eq.s32.totalorder %s17, 7
    %p82 = por %p80, %p81
    %p84 = scmp.ne.s32.totalorder %s69, %s83
    %p85 = scmp.eq.s32.totalorder %s17, 0
    %p86 = por %p84, %p85
    %s88 = sadd.s32 %s87, 1
    %p91 = scmp.eq.s32.totalorder %s11, 7
    %p92 = scmp.ne.s32.totalorder %s87, %s89
    %p93 = scmp.eq.s32.totalorder %s11, 0
    %p94 = por %p92, %p93
    %p95 = scmp.ne.s32.totalorder %s87, %s89
    %p96 = scmp.eq.s32.totalorder %s16, 7
    %p97 = por %p95, %p96
    %p98 = scmp.ne.s32.totalorder %s89, %s90
    %p99 = scmp.eq.s32.totalorder %s16, 0
    %p100 = por %p98, %p99
    %p101 = scmp.ne.s32.totalorder %s89, %s90
    %p102 = scmp.eq.s32.totalorder %s17, 7
    %p103 = por %p101, %p102
    %p105 = scmp.ne.s32.totalorder %s90, %s104
    %p106 = scmp.eq.s32.totalorder %s17, 0
    %p107 = por %p105, %p106
    %s109 = sadd.s32 %s108, 1
    %p112 = scmp.eq.s32.totalorder %s11, 7
    %p113 = scmp.ne.s32.totalorder %s108, %s110
    %p114 = scmp.eq.s32.totalorder %s11, 0
    %p115 = por %p113, %p114
    %p116 = scmp.ne.s32.totalorder %s108, %s110
    %p117 = scmp.eq.s32.totalorder %s16, 7
    %p118 = por %p116, %p117
    %p119 = scmp.ne.s32.totalorder %s110, %s111
    %p120 = scmp.eq.s32.totalorder %s16, 0
    %p121 = por %p119, %p120
    %p122 = scmp.ne.s32.totalorder %s110, %s111
    %p123 = scmp.eq.s32.totalorder %s17, 7
    %p124 = por %p122, %p123
    %p126 = scmp.ne.s32.totalorder %s111, %s125
    %p127 = scmp.eq.s32.totalorder %s17, 0
    %p128 = por %p126, %p127
    %s129 = ssub.s32 %s11, %s18
    %p130 = scmp.eq.s32.totalorder %s129, 0
    %s132 = sadd.s32 %s131, 1
    %s133 = scalar_select %p130, %s131, %s132
    %p136 = pneg %p130
    %p137 = scmp.eq.s32.totalorder %s11, 7
    %p138 = por %p136, %p137
    %p139 = scmp.ne.s32.totalorder %s131, %s134
    %p140 = scmp.eq.s32.totalorder %s11, 0
    %p141 = por %p139, %p140
    %p142 = scmp.ne.s32.totalorder %s131, %s134
    %p143 = scmp.eq.s32.totalorder %s16, 7
    %p144 = por %p142, %p143
    %p145 = scmp.ne.s32.totalorder %s134, %s135
    %p146 = scmp.eq.s32.totalorder %s16, 0
    %p147 = por %p145, %p146
    %p148 = scmp.ne.s32.totalorder %s134, %s135
    %p149 = scmp.eq.s32.totalorder %s17, 7
    %p150 = por %p148, %p149
    %p152 = scmp.ne.s32.totalorder %s135, %s151
    %p153 = scmp.eq.s32.totalorder %s17, 0
    %p154 = por %p152, %p153
    %p155 = scmp.le.s32.totalorder 1, %s11
    %p156 = scmp.lt.s32.totalorder %s11, 9
    %p157 = pnand %p155, %p156
    %p158 = pneg %p157
    // Predicated region
    $region9: #{baseline_convnet_forward.6} parent=5 // pred_check
      _
    $region10: #{baseline_convnet_forward.6} parent=5 // pred_check_branch
      %160 = sbr.rel (%p157) target = $region12
    $region11: #{baseline_convnet_forward.6} parent=5 // pred_region
      %s161 = ssub.s32 %s11, 1
      // Predicated region
      $region13: #{baseline_convnet_forward.6} parent=11 // pred_check
        %p162 = pneg %p58
      $region14: #{baseline_convnet_forward.6} parent=11 // pred_check_branch
        %164 = sbr.rel (%p162) target = $region16
      $region15: #{baseline_convnet_forward.6} parent=11 // pred_region
        _
      $region16: #{baseline_convnet_forward.6} parent=11 // pred_fallthru
        _
      // Predicated region
      $region17: #{baseline_convnet_forward.6} parent=11 // pred_check
        %p165 = pneg %p79
      $region18: #{baseline_convnet_forward.6} parent=11 // pred_check_branch
        %167 = sbr.rel (%p165) target = $region20
      $region19: #{baseline_convnet_forward.6} parent=11 // pred_region
        _
      $region20: #{baseline_convnet_forward.6} parent=11 // pred_fallthru
        _
      // Predicated region
      $region21: #{baseline_convnet_forward.6} parent=11 // pred_check
        %p168 = pneg %p100
      $region22: #{baseline_convnet_forward.6} parent=11 // pred_check_branch
        %170 = sbr.rel (%p168) target = $region24
      $region23: #{baseline_convnet_forward.6} parent=11 // pred_region
        _
      $region24: #{baseline_convnet_forward.6} parent=11 // pred_fallthru
        _
      // Predicated region
      $region25: #{baseline_convnet_forward.6} parent=11 // pred_check
        %p171 = pneg %p121
      $region26: #{baseline_convnet_forward.6} parent=11 // pred_check_branch
        %173 = sbr.rel (%p171) target = $region28
      $region27: #{baseline_convnet_forward.6} parent=11 // pred_region
        _
      $region28: #{baseline_convnet_forward.6} parent=11 // pred_fallthru
        _
    $region12: #{baseline_convnet_forward.6} parent=5 // pred_fallthru
      _
    %p174 = scmp.lt.s32.totalorder %s11, 8
    // Predicated region
    $region29: #{baseline_convnet_forward.6} parent=5 // pred_check
      %p175 = pneg %p174
    $region30: #{baseline_convnet_forward.6} parent=5 // pred_check_branch
      %177 = sbr.rel (%p175) target = $region32
    $region31: #{baseline_convnet_forward.6} parent=5 // pred_region
      // Predicated region
      $region33: #{baseline_convnet_forward.6} parent=31 // pred_check
        %p178 = pneg %p31
      $region34: #{baseline_convnet_forward.6} parent=31 // pred_check_branch
        %180 = sbr.rel (%p178) target = $region36
      $region35: #{baseline_convnet_forward.6} parent=31 // pred_region
        %p181 = scmp.lt.s32.totalorder %s11, 7
        %s182 = scalar_select %p181, %s11, 7
        %s183 = smul.addr %s182, 64
        %s184 = smul.addr %s183, 8
        %s185 = scalar_lea.vmem %s0, %s184
      $region36: #{baseline_convnet_forward.6} parent=31 // pred_fallthru
        _
    $region32: #{baseline_convnet_forward.6} parent=5 // pred_fallthru
      _
    %p186 = scmp.le.s32.totalorder 1, %s11
    %p187 = scmp.lt.s32.totalorder %s11, 9
    %p188 = pnand %p186, %p187
    %p189 = pneg %p188
    // Predicated region
    $region37: #{baseline_convnet_forward.6} parent=5 // pred_check
      _
    $region38: #{baseline_convnet_forward.6} parent=5 // pred_check_branch
      %191 = sbr.rel (%p188) target = $region40
    $region39: #{baseline_convnet_forward.6} parent=5 // pred_region
      %s192 = ssub.s32 %s11, 1
      %p193 = scmp.lt.s32.totalorder %s16, 7
      %s194 = scalar_select %p193, %s16, 7
      %s195 = smul.addr %s194, 64
      %s196 = smul.addr %s195, 8
      %s197 = scalar_lea.vmem %s0, %s196
      %p198 = pneg %p37
      %p199 = pneg %p34
      %p200 = pneg %p58
      %p201 = pneg %p55
      %p202 = pneg %p79
      %p203 = pneg %p76
      %p204 = pneg %p100
      %p205 = pneg %p97
      %p206 = pneg %p121
      %p207 = pneg %p118
      %p208 = pneg %p147
      %p209 = pneg %p144
      %p210 = scmp.lt.s32.totalorder %s16, 7
      %s211 = scalar_select %p210, %s16, 7
      %s212 = smul.addr %s211, 16
      %s213 = smul.addr %s212, 4
      %s214 = scalar_lea.vmem %s5, %s213
      %p215 = scmp.lt.s32.totalorder %s16, 7
      %s216 = scalar_select %p215, %s16, 7
      %s217 = smul.addr %s216, 64
      %s218 = smul.addr %s217, 8
      %s219 = scalar_lea.vmem %s0, %s218
      %p220 = scmp.lt.s32.totalorder %s16, 7
      %s221 = scalar_select %p220, %s16, 7
      %s222 = smul.addr %s221, 16
      %s223 = smul.addr %s222, 4
      %s224 = scalar_lea.vmem %s5, %s223
      %v225 = vld [vmem:[%s2] sm:$0x1]
      %v226 = vld [vmem:[%s3] sm:$0x1]
      %v227 = vld [vmem:[%s4] sm:$0x1]
      %v228 = vld [vmem:[%s219] sm:$0xff]
      %v229 = vld [vmem:[%s219 + $0x8] sm:$0xff]
      %v230 = vld [vmem:[%s219 + $0x10] sm:$0xff]
      %v231 = vld [vmem:[%s219 + $0x18] sm:$0xff]
      %v232 = vld [vmem:[%s219 + $0x20] sm:$0xff]
      %v233 = vld [vmem:[%s219 + $0x28] sm:$0xff]
      %v234 = vld [vmem:[%s219 + $0x30] sm:$0xff]
      %v235 = vld [vmem:[%s219 + $0x38] sm:$0x7f]
      %v236 = vld [vmem:[%s1] sm:$0x1]
      %238 = vset.pattern.permute.xlu0 0
      %239 = vperm.xlu0 %238, %v228
      %v240 = vpop.permute.xlu0 %239
      %243 = vset.pattern.permute.xlu0 0
      %244 = vperm.xlu0 %243, %v229
      %v245 = vpop.permute.xlu0 %244
      %248 = vset.pattern.permute.xlu0 0
      %249 = vperm.xlu0 %248, %v230
      %v250 = vpop.permute.xlu0 %249
      %253 = vset.pattern.permute.xlu0 0
      %254 = vperm.xlu0 %253, %v231
      %v255 = vpop.permute.xlu0 %254
      %258 = vset.pattern.permute.xlu0 0
      %259 = vperm.xlu0 %258, %v232
      %v260 = vpop.permute.xlu0 %259
      %263 = vset.pattern.permute.xlu0 0
      %264 = vperm.xlu0 %263, %v233
      %v265 = vpop.permute.xlu0 %264
      %268 = vset.pattern.permute.xlu0 0
      %269 = vperm.xlu0 %268, %v234
      %v270 = vpop.permute.xlu0 %269
      %273 = vset.pattern.permute.xlu0 0
      %274 = vperm.xlu0 %273, %v235
      %v275 = vpop.permute.xlu0 %274
      %v277 = vlaneseq
      %v278 = vshrl.u32 %v277, 7
      %v279 = vsub.s32 0, %v278
      %v280 = vrot.slane %v236, %v279
      %v281 = vmul.f32 %v240, %v280
      %v282 = vmul.f32 %v245, %v280
      %v283 = vmul.f32 %v250, %v280
      %v284 = vmul.f32 %v255, %v280
      %v285 = vmul.f32 %v260, %v280
      %v286 = vmul.f32 %v265, %v280
      %v287 = vmul.f32 %v270, %v280
      %v288 = vmul.f32 %v275, %v280
      %v289 = vadd.f32 %v281, 0.0
      %v290 = vadd.f32 %v282, 0.0
      %v291 = vadd.f32 %v283, 0.0
      %v292 = vadd.f32 %v284, 0.0
      %v293 = vadd.f32 %v285, 0.0
      %v294 = vadd.f32 %v286, 0.0
      %v295 = vadd.f32 %v287, 0.0
      %v296 = vadd.f32 %v288, 0.0
      %s297 = scalar_lea.vmem %s219, 64
      %v298 = vld [vmem:[%s297] sm:$0xff]
      %v299 = vld [vmem:[%s297 + $0x8] sm:$0xff]
      %v300 = vld [vmem:[%s297 + $0x10] sm:$0xff]
      %v301 = vld [vmem:[%s297 + $0x18] sm:$0xff]
      %v302 = vld [vmem:[%s297 + $0x20] sm:$0xff]
      %v303 = vld [vmem:[%s297 + $0x28] sm:$0xff]
      %v304 = vld [vmem:[%s297 + $0x30] sm:$0xff]
      %v305 = vld [vmem:[%s297 + $0x38] sm:$0x7f]
      %v306 = vld [vmem:[%s1 + $0x1] sm:$0x1]
      %308 = vset.pattern.permute.xlu0 0
      %309 = vperm.xlu0 %308, %v298
      %v310 = vpop.permute.xlu0 %309
      %313 = vset.pattern.permute.xlu0 0
      %314 = vperm.xlu0 %313, %v299
      %v315 = vpop.permute.xlu0 %314
      %318 = vset.pattern.permute.xlu0 0
      %319 = vperm.xlu0 %318, %v300
      %v320 = vpop.permute.xlu0 %319
      %323 = vset.pattern.permute.xlu0 0
      %324 = vperm.xlu0 %323, %v301
      %v325 = vpop.permute.xlu0 %324
      %328 = vset.pattern.permute.xlu0 0
      %329 = vperm.xlu0 %328, %v302
      %v330 = vpop.permute.xlu0 %329
      %333 = vset.pattern.permute.xlu0 0
      %334 = vperm.xlu0 %333, %v303
      %v335 = vpop.permute.xlu0 %334
      %338 = vset.pattern.permute.xlu0 0
      %339 = vperm.xlu0 %338, %v304
      %v340 = vpop.permute.xlu0 %339
      %343 = vset.pattern.permute.xlu0 0
      %344 = vperm.xlu0 %343, %v305
      %v345 = vpop.permute.xlu0 %344
      %v347 = vlaneseq
      %v348 = vshrl.u32 %v347, 7
      %v349 = vsub.s32 0, %v348
      %v350 = vrot.slane %v306, %v349
      %v351 = vmul.f32 %v310, %v350
      %v352 = vmul.f32 %v315, %v350
      %v353 = vmul.f32 %v320, %v350
      %v354 = vmul.f32 %v325, %v350
      %v355 = vmul.f32 %v330, %v350
      %v356 = vmul.f32 %v335, %v350
      %v357 = vmul.f32 %v340, %v350
      %v358 = vmul.f32 %v345, %v350
      %v359 = vadd.f32 %v289, %v351
      %v360 = vadd.f32 %v290, %v352
      %v361 = vadd.f32 %v291, %v353
      %v362 = vadd.f32 %v292, %v354
      %v363 = vadd.f32 %v293, %v355
      %v364 = vadd.f32 %v294, %v356
      %v365 = vadd.f32 %v295, %v357
      %v366 = vadd.f32 %v296, %v358
      %s367 = scalar_lea.vmem %s219, 128
      %v368 = vld [vmem:[%s367] sm:$0xff]
      %v369 = vld [vmem:[%s367 + $0x8] sm:$0xff]
      %v370 = vld [vmem:[%s367 + $0x10] sm:$0xff]
      %v371 = vld [vmem:[%s367 + $0x18] sm:$0xff]
      %v372 = vld [vmem:[%s367 + $0x20] sm:$0xff]
      %v373 = vld [vmem:[%s367 + $0x28] sm:$0xff]
      %v374 = vld [vmem:[%s367 + $0x30] sm:$0xff]
      %v375 = vld [vmem:[%s367 + $0x38] sm:$0x7f]
      %v376 = vld [vmem:[%s1 + $0x2] sm:$0x1]
      %378 = vset.pattern.permute.xlu0 0
      %379 = vperm.xlu0 %378, %v368
      %v380 = vpop.permute.xlu0 %379
      %383 = vset.pattern.permute.xlu0 0
      %384 = vperm.xlu0 %383, %v369
      %v385 = vpop.permute.xlu0 %384
      %388 = vset.pattern.permute.xlu0 0
      %389 = vperm.xlu0 %388, %v370
      %v390 = vpop.permute.xlu0 %389
      %393 = vset.pattern.permute.xlu0 0
      %394 = vperm.xlu0 %393, %v371
      %v395 = vpop.permute.xlu0 %394
      %398 = vset.pattern.permute.xlu0 0
      %399 = vperm.xlu0 %398, %v372
      %v400 = vpop.permute.xlu0 %399
      %403 = vset.pattern.permute.xlu0 0
      %404 = vperm.xlu0 %403, %v373
      %v405 = vpop.permute.xlu0 %404
      %408 = vset.pattern.permute.xlu0 0
      %409 = vperm.xlu0 %408, %v374
      %v410 = vpop.permute.xlu0 %409
      %413 = vset.pattern.permute.xlu0 0
      %414 = vperm.xlu0 %413, %v375
      %v415 = vpop.permute.xlu0 %414
      %v417 = vlaneseq
      %v418 = vshrl.u32 %v417, 7
      %v419 = vsub.s32 0, %v418
      %v420 = vrot.slane %v376, %v419
      %v421 = vmul.f32 %v380, %v420
      %v422 = vmul.f32 %v385, %v420
      %v423 = vmul.f32 %v390, %v420
      %v424 = vmul.f32 %v395, %v420
      %v425 = vmul.f32 %v400, %v420
      %v426 = vmul.f32 %v405, %v420
      %v427 = vmul.f32 %v410, %v420
      %v428 = vmul.f32 %v415, %v420
      %v429 = vadd.f32 %v359, %v421
      %v430 = vadd.f32 %v360, %v422
      %v431 = vadd.f32 %v361, %v423
      %v432 = vadd.f32 %v362, %v424
      %v433 = vadd.f32 %v363, %v425
      %v434 = vadd.f32 %v364, %v426
      %v435 = vadd.f32 %v365, %v427
      %v436 = vadd.f32 %v366, %v428
      %s437 = scalar_lea.vmem %s219, 192
      %v438 = vld [vmem:[%s437] sm:$0xff]
      %v439 = vld [vmem:[%s437 + $0x8] sm:$0xff]
      %v440 = vld [vmem:[%s437 + $0x10] sm:$0xff]
      %v441 = vld [vmem:[%s437 + $0x18] sm:$0xff]
      %v442 = vld [vmem:[%s437 + $0x20] sm:$0xff]
      %v443 = vld [vmem:[%s437 + $0x28] sm:$0xff]
      %v444 = vld [vmem:[%s437 + $0x30] sm:$0xff]
      %v445 = vld [vmem:[%s437 + $0x38] sm:$0x7f]
      %v446 = vld [vmem:[%s1 + $0x3] sm:$0x1]
      %448 = vset.pattern.permute.xlu0 0
      %449 = vperm.xlu0 %448, %v438
      %v450 = vpop.permute.xlu0 %449
      %453 = vset.pattern.permute.xlu0 0
      %454 = vperm.xlu0 %453, %v439
      %v455 = vpop.permute.xlu0 %454
      %458 = vset.pattern.permute.xlu0 0
      %459 = vperm.xlu0 %458, %v440
      %v460 = vpop.permute.xlu0 %459
      %463 = vset.pattern.permute.xlu0 0
      %464 = vperm.xlu0 %463, %v441
      %v465 = vpop.permute.xlu0 %464
      %468 = vset.pattern.permute.xlu0 0
      %469 = vperm.xlu0 %468, %v442
      %v470 = vpop.permute.xlu0 %469
      %473 = vset.pattern.permute.xlu0 0
      %474 = vperm.xlu0 %473, %v443
      %v475 = vpop.permute.xlu0 %474
      %478 = vset.pattern.permute.xlu0 0
      %479 = vperm.xlu0 %478, %v444
      %v480 = vpop.permute.xlu0 %479
      %483 = vset.pattern.permute.xlu0 0
      %484 = vperm.xlu0 %483, %v445
      %v485 = vpop.permute.xlu0 %484
      %v487 = vlaneseq
      %v488 = vshrl.u32 %v487, 7
      %v489 = vsub.s32 0, %v488
      %v490 = vrot.slane %v446, %v489
      %v491 = vmul.f32 %v450, %v490
      %v492 = vmul.f32 %v455, %v490
      %v493 = vmul.f32 %v460, %v490
      %v494 = vmul.f32 %v465, %v490
      %v495 = vmul.f32 %v470, %v490
      %v496 = vmul.f32 %v475, %v490
      %v497 = vmul.f32 %v480, %v490
      %v498 = vmul.f32 %v485, %v490
      %v499 = vadd.f32 %v429, %v491
      %v500 = vadd.f32 %v430, %v492
      %v501 = vadd.f32 %v431, %v493
      %v502 = vadd.f32 %v432, %v494
      %v503 = vadd.f32 %v433, %v495
      %v504 = vadd.f32 %v434, %v496
      %v505 = vadd.f32 %v435, %v497
      %v506 = vadd.f32 %v436, %v498
      %v507 = vld [vmem:[%s219 + $0x1] sm:$0xff]
      %v508 = vld [vmem:[%s219 + $0x9] sm:$0xff]
      %v509 = vld [vmem:[%s219 + $0x11] sm:$0xff]
      %v510 = vld [vmem:[%s219 + $0x19] sm:$0xff]
      %v511 = vld [vmem:[%s219 + $0x21] sm:$0xff]
      %v512 = vld [vmem:[%s219 + $0x29] sm:$0xff]
      %v513 = vld [vmem:[%s219 + $0x31] sm:$0xff]
      %v514 = vld [vmem:[%s219 + $0x39] sm:$0x7f]
      %v515 = vld [vmem:[%s1 + $0x4] sm:$0x1]
      %517 = vset.pattern.permute.xlu0 0
      %518 = vperm.xlu0 %517, %v507
      %v519 = vpop.permute.xlu0 %518
      %522 = vset.pattern.permute.xlu0 0
      %523 = vperm.xlu0 %522, %v508
      %v524 = vpop.permute.xlu0 %523
      %527 = vset.pattern.permute.xlu0 0
      %528 = vperm.xlu0 %527, %v509
      %v529 = vpop.permute.xlu0 %528
      %532 = vset.pattern.permute.xlu0 0
      %533 = vperm.xlu0 %532, %v510
      %v534 = vpop.permute.xlu0 %533
      %537 = vset.pattern.permute.xlu0 0
      %538 = vperm.xlu0 %537, %v511
      %v539 = vpop.permute.xlu0 %538
      %542 = vset.pattern.permute.xlu0 0
      %543 = vperm.xlu0 %542, %v512
      %v544 = vpop.permute.xlu0 %543
      %547 = vset.pattern.permute.xlu0 0
      %548 = vperm.xlu0 %547, %v513
      %v549 = vpop.permute.xlu0 %548
      %552 = vset.pattern.permute.xlu0 0
      %553 = vperm.xlu0 %552, %v514
      %v554 = vpop.permute.xlu0 %553
      %v556 = vlaneseq
      %v557 = vshrl.u32 %v556, 7
      %v558 = vsub.s32 0, %v557
      %v559 = vrot.slane %v515, %v558
      %v560 = vmul.f32 %v519, %v559
      %v561 = vmul.f32 %v524, %v559
      %v562 = vmul.f32 %v529, %v559
      %v563 = vmul.f32 %v534, %v559
      %v564 = vmul.f32 %v539, %v559
      %v565 = vmul.f32 %v544, %v559
      %v566 = vmul.f32 %v549, %v559
      %v567 = vmul.f32 %v554, %v559
      %v568 = vadd.f32 %v499, %v560
      %v569 = vadd.f32 %v500, %v561
      %v570 = vadd.f32 %v501, %v562
      %v571 = vadd.f32 %v502, %v563
      %v572 = vadd.f32 %v503, %v564
      %v573 = vadd.f32 %v504, %v565
      %v574 = vadd.f32 %v505, %v566
      %v575 = vadd.f32 %v506, %v567
      %v576 = vld [vmem:[%s297 + $0x1] sm:$0xff]
      %v577 = vld [vmem:[%s297 + $0x9] sm:$0xff]
      %v578 = vld [vmem:[%s297 + $0x11] sm:$0xff]
      %v579 = vld [vmem:[%s297 + $0x19] sm:$0xff]
      %v580 = vld [vmem:[%s297 + $0x21] sm:$0xff]
      %v581 = vld [vmem:[%s297 + $0x29] sm:$0xff]
      %v582 = vld [vmem:[%s297 + $0x31] sm:$0xff]
      %v583 = vld [vmem:[%s297 + $0x39] sm:$0x7f]
      %v584 = vld [vmem:[%s1 + $0x5] sm:$0x1]
      %586 = vset.pattern.permute.xlu0 0
      %587 = vperm.xlu0 %586, %v576
      %v588 = vpop.permute.xlu0 %587
      %591 = vset.pattern.permute.xlu0 0
      %592 = vperm.xlu0 %591, %v577
      %v593 = vpop.permute.xlu0 %592
      %596 = vset.pattern.permute.xlu0 0
      %597 = vperm.xlu0 %596, %v578
      %v598 = vpop.permute.xlu0 %597
      %601 = vset.pattern.permute.xlu0 0
      %602 = vperm.xlu0 %601, %v579
      %v603 = vpop.permute.xlu0 %602
      %606 = vset.pattern.permute.xlu0 0
      %607 = vperm.xlu0 %606, %v580
      %v608 = vpop.permute.xlu0 %607
      %611 = vset.pattern.permute.xlu0 0
      %612 = vperm.xlu0 %611, %v581
      %v613 = vpop.permute.xlu0 %612
      %616 = vset.pattern.permute.xlu0 0
      %617 = vperm.xlu0 %616, %v582
      %v618 = vpop.permute.xlu0 %617
      %621 = vset.pattern.permute.xlu0 0
      %622 = vperm.xlu0 %621, %v583
      %v623 = vpop.permute.xlu0 %622
      %v625 = vlaneseq
      %v626 = vshrl.u32 %v625, 7
      %v627 = vsub.s32 0, %v626
      %v628 = vrot.slane %v584, %v627
      %v629 = vmul.f32 %v588, %v628
      %v630 = vmul.f32 %v593, %v628
      %v631 = vmul.f32 %v598, %v628
      %v632 = vmul.f32 %v603, %v628
      %v633 = vmul.f32 %v608, %v628
      %v634 = vmul.f32 %v613, %v628
      %v635 = vmul.f32 %v618, %v628
      %v636 = vmul.f32 %v623, %v628
      %v637 = vadd.f32 %v568, %v629
      %v638 = vadd.f32 %v569, %v630
      %v639 = vadd.f32 %v570, %v631
      %v640 = vadd.f32 %v571, %v632
      %v641 = vadd.f32 %v572, %v633
      %v642 = vadd.f32 %v573, %v634
      %v643 = vadd.f32 %v574, %v635
      %v644 = vadd.f32 %v575, %v636
      %v645 = vld [vmem:[%s367 + $0x1] sm:$0xff]
      %v646 = vld [vmem:[%s367 + $0x9] sm:$0xff]
      %v647 = vld [vmem:[%s367 + $0x11] sm:$0xff]
      %v648 = vld [vmem:[%s367 + $0x19] sm:$0xff]
      %v649 = vld [vmem:[%s367 + $0x21] sm:$0xff]
      %v650 = vld [vmem:[%s367 + $0x29] sm:$0xff]
      %v651 = vld [vmem:[%s367 + $0x31] sm:$0xff]
      %v652 = vld [vmem:[%s367 + $0x39] sm:$0x7f]
      %v653 = vld [vmem:[%s1 + $0x6] sm:$0x1]
      %655 = vset.pattern.permute.xlu0 0
      %656 = vperm.xlu0 %655, %v645
      %v657 = vpop.permute.xlu0 %656
      %660 = vset.pattern.permute.xlu0 0
      %661 = vperm.xlu0 %660, %v646
      %v662 = vpop.permute.xlu0 %661
      %665 = vset.pattern.permute.xlu0 0
      %666 = vperm.xlu0 %665, %v647
      %v667 = vpop.permute.xlu0 %666
      %670 = vset.pattern.permute.xlu0 0
      %671 = vperm.xlu0 %670, %v648
      %v672 = vpop.permute.xlu0 %671
      %675 = vset.pattern.permute.xlu0 0
      %676 = vperm.xlu0 %675, %v649
      %v677 = vpop.permute.xlu0 %676
      %680 = vset.pattern.permute.xlu0 0
      %681 = vperm.xlu0 %680, %v650
      %v682 = vpop.permute.xlu0 %681
      %685 = vset.pattern.permute.xlu0 0
      %686 = vperm.xlu0 %685, %v651
      %v687 = vpop.permute.xlu0 %686
      %690 = vset.pattern.permute.xlu0 0
      %691 = vperm.xlu0 %690, %v652
      %v692 = vpop.permute.xlu0 %691
      %v694 = vlaneseq
      %v695 = vshrl.u32 %v694, 7
      %v696 = vsub.s32 0, %v695
      %v697 = vrot.slane %v653, %v696
      %v698 = vmul.f32 %v657, %v697
      %v699 = vmul.f32 %v662, %v697
      %v700 = vmul.f32 %v667, %v697
      %v701 = vmul.f32 %v672, %v697
      %v702 = vmul.f32 %v677, %v697
      %v703 = vmul.f32 %v682, %v697
      %v704 = vmul.f32 %v687, %v697
      %v705 = vmul.f32 %v692, %v697
      %v706 = vadd.f32 %v637, %v698
      %v707 = vadd.f32 %v638, %v699
      %v708 = vadd.f32 %v639, %v700
      %v709 = vadd.f32 %v640, %v701
      %v710 = vadd.f32 %v641, %v702
      %v711 = vadd.f32 %v642, %v703
      %v712 = vadd.f32 %v643, %v704
      %v713 = vadd.f32 %v644, %v705
      %v715 = vlaneseq
      %v716 = vshrl.u32 %v715, 7
      %v717 = vsub.s32 0, %v716
      %v718 = vrot.slane %v225, %v717
      %v720 = vadd.f32 %v706, %v718
      %v721 = vadd.f32 %v707, %v718
      %v722 = vadd.f32 %v708, %v718
      %v723 = vadd.f32 %v709, %v718
      %v724 = vadd.f32 %v710, %v718
      %v725 = vadd.f32 %v711, %v718
      %v726 = vadd.f32 %v712, %v718
      %v727 = vadd.f32 %v713, %v718
      %vm728 = vcmp.gt.f32.partialorder %v720, 0.0
      %vm729 = vcmp.gt.f32.partialorder %v721, 0.0
      %vm730 = vcmp.gt.f32.partialorder %v722, 0.0
      %vm731 = vcmp.gt.f32.partialorder %v723, 0.0
      %vm732 = vcmp.gt.f32.partialorder %v724, 0.0
      %vm733 = vcmp.gt.f32.partialorder %v725, 0.0
      %vm734 = vcmp.gt.f32.partialorder %v726, 0.0
      %vm735 = vcmp.gt.f32.partialorder %v727, 0.0
      %v736 = vmul.f32 %v720, 0.2
      %v737 = vmul.f32 %v721, 0.2
      %v738 = vmul.f32 %v722, 0.2
      %v739 = vmul.f32 %v723, 0.2
      %v740 = vmul.f32 %v724, 0.2
      %v741 = vmul.f32 %v725, 0.2
      %v742 = vmul.f32 %v726, 0.2
      %v743 = vmul.f32 %v727, 0.2
      %v744 = vsel %vm728, %v720, %v736
      %v745 = vsel %vm729, %v721, %v737
      %v746 = vsel %vm730, %v722, %v738
      %v747 = vsel %vm731, %v723, %v739
      %v748 = vsel %vm732, %v724, %v740
      %v749 = vsel %vm733, %v725, %v741
      %v750 = vsel %vm734, %v726, %v742
      %v751 = vsel %vm735, %v727, %v743
      %s752 = scalar_lea.vmem %s219, 256
      %v753 = vld [vmem:[%s752] sm:$0xff]
      %v754 = vld [vmem:[%s752 + $0x8] sm:$0xff]
      %v755 = vld [vmem:[%s752 + $0x10] sm:$0xff]
      %v756 = vld [vmem:[%s752 + $0x18] sm:$0xff]
      %v757 = vld [vmem:[%s752 + $0x20] sm:$0xff]
      %v758 = vld [vmem:[%s752 + $0x28] sm:$0xff]
      %v759 = vld [vmem:[%s752 + $0x30] sm:$0xff]
      %v760 = vld [vmem:[%s752 + $0x38] sm:$0x7f]
      %762 = vset.pattern.permute.xlu0 0
      %763 = vperm.xlu0 %762, %v753
      %v764 = vpop.permute.xlu0 %763
      %767 = vset.pattern.permute.xlu0 0
      %768 = vperm.xlu0 %767, %v754
      %v769 = vpop.permute.xlu0 %768
      %772 = vset.pattern.permute.xlu0 0
      %773 = vperm.xlu0 %772, %v755
      %v774 = vpop.permute.xlu0 %773
      %777 = vset.pattern.permute.xlu0 0
      %778 = vperm.xlu0 %777, %v756
      %v779 = vpop.permute.xlu0 %778
      %782 = vset.pattern.permute.xlu0 0
      %783 = vperm.xlu0 %782, %v757
      %v784 = vpop.permute.xlu0 %783
      %787 = vset.pattern.permute.xlu0 0
      %788 = vperm.xlu0 %787, %v758
      %v789 = vpop.permute.xlu0 %788
      %792 = vset.pattern.permute.xlu0 0
      %793 = vperm.xlu0 %792, %v759
      %v794 = vpop.permute.xlu0 %793
      %797 = vset.pattern.permute.xlu0 0
      %798 = vperm.xlu0 %797, %v760
      %v799 = vpop.permute.xlu0 %798
      %v801 = vmul.f32 %v764, %v280
      %v802 = vmul.f32 %v769, %v280
      %v803 = vmul.f32 %v774, %v280
      %v804 = vmul.f32 %v779, %v280
      %v805 = vmul.f32 %v784, %v280
      %v806 = vmul.f32 %v789, %v280
      %v807 = vmul.f32 %v794, %v280
      %v808 = vmul.f32 %v799, %v280
      %v809 = vadd.f32 %v801, 0.0
      %v810 = vadd.f32 %v802, 0.0
      %v811 = vadd.f32 %v803, 0.0
      %v812 = vadd.f32 %v804, 0.0
      %v813 = vadd.f32 %v805, 0.0
      %v814 = vadd.f32 %v806, 0.0
      %v815 = vadd.f32 %v807, 0.0
      %v816 = vadd.f32 %v808, 0.0
      %s817 = scalar_lea.vmem %s219, 320
      %v818 = vld [vmem:[%s817] sm:$0xff]
      %v819 = vld [vmem:[%s817 + $0x8] sm:$0xff]
      %v820 = vld [vmem:[%s817 + $0x10] sm:$0xff]
      %v821 = vld [vmem:[%s817 + $0x18] sm:$0xff]
      %v822 = vld [vmem:[%s817 + $0x20] sm:$0xff]
      %v823 = vld [vmem:[%s817 + $0x28] sm:$0xff]
      %v824 = vld [vmem:[%s817 + $0x30] sm:$0xff]
      %v825 = vld [vmem:[%s817 + $0x38] sm:$0x7f]
      %827 = vset.pattern.permute.xlu0 0
      %828 = vperm.xlu0 %827, %v818
      %v829 = vpop.permute.xlu0 %828
      %832 = vset.pattern.permute.xlu0 0
      %833 = vperm.xlu0 %832, %v819
      %v834 = vpop.permute.xlu0 %833
      %837 = vset.pattern.permute.xlu0 0
      %838 = vperm.xlu0 %837, %v820
      %v839 = vpop.permute.xlu0 %838
      %842 = vset.pattern.permute.xlu0 0
      %843 = vperm.xlu0 %842, %v821
      %v844 = vpop.permute.xlu0 %843
      %847 = vset.pattern.permute.xlu0 0
      %848 = vperm.xlu0 %847, %v822
      %v849 = vpop.permute.xlu0 %848
      %852 = vset.pattern.permute.xlu0 0
      %853 = vperm.xlu0 %852, %v823
      %v854 = vpop.permute.xlu0 %853
      %857 = vset.pattern.permute.xlu0 0
      %858 = vperm.xlu0 %857, %v824
      %v859 = vpop.permute.xlu0 %858
      %862 = vset.pattern.permute.xlu0 0
      %863 = vperm.xlu0 %862, %v825
      %v864 = vpop.permute.xlu0 %863
      %v866 = vmul.f32 %v829, %v350
      %v867 = vmul.f32 %v834, %v350
      %v868 = vmul.f32 %v839, %v350
      %v869 = vmul.f32 %v844, %v350
      %v870 = vmul.f32 %v849, %v350
      %v871 = vmul.f32 %v854, %v350
      %v872 = vmul.f32 %v859, %v350
      %v873 = vmul.f32 %v864, %v350
      %v874 = vadd.f32 %v809, %v866
      %v875 = vadd.f32 %v810, %v867
      %v876 = vadd.f32 %v811, %v868
      %v877 = vadd.f32 %v812, %v869
      %v878 = vadd.f32 %v813, %v870
      %v879 = vadd.f32 %v814, %v871
      %v880 = vadd.f32 %v815, %v872
      %v881 = vadd.f32 %v816, %v873
      %s882 = scalar_lea.vmem %s219, 384
      %v883 = vld [vmem:[%s882] sm:$0xff]
      %v884 = vld [vmem:[%s882 + $0x8] sm:$0xff]
      %v885 = vld [vmem:[%s882 + $0x10] sm:$0xff]
      %v886 = vld [vmem:[%s882 + $0x18] sm:$0xff]
      %v887 = vld [vmem:[%s882 + $0x20] sm:$0xff]
      %v888 = vld [vmem:[%s882 + $0x28] sm:$0xff]
      %v889 = vld [vmem:[%s882 + $0x30] sm:$0xff]
      %v890 = vld [vmem:[%s882 + $0x38] sm:$0x7f]
      %892 = vset.pattern.permute.xlu0 0
      %893 = vperm.xlu0 %892, %v883
      %v894 = vpop.permute.xlu0 %893
      %897 = vset.pattern.permute.xlu0 0
      %898 = vperm.xlu0 %897, %v884
      %v899 = vpop.permute.xlu0 %898
      %902 = vset.pattern.permute.xlu0 0
      %903 = vperm.xlu0 %902, %v885
      %v904 = vpop.permute.xlu0 %903
      %907 = vset.pattern.permute.xlu0 0
      %908 = vperm.xlu0 %907, %v886
      %v909 = vpop.permute.xlu0 %908
      %912 = vset.pattern.permute.xlu0 0
      %913 = vperm.xlu0 %912, %v887
      %v914 = vpop.permute.xlu0 %913
      %917 = vset.pattern.permute.xlu0 0
      %918 = vperm.xlu0 %917, %v888
      %v919 = vpop.permute.xlu0 %918
      %922 = vset.pattern.permute.xlu0 0
      %923 = vperm.xlu0 %922, %v889
      %v924 = vpop.permute.xlu0 %923
      %927 = vset.pattern.permute.xlu0 0
      %928 = vperm.xlu0 %927, %v890
      %v929 = vpop.permute.xlu0 %928
      %v931 = vmul.f32 %v894, %v420
      %v932 = vmul.f32 %v899, %v420
      %v933 = vmul.f32 %v904, %v420
      %v934 = vmul.f32 %v909, %v420
      %v935 = vmul.f32 %v914, %v420
      %v936 = vmul.f32 %v919, %v420
      %v937 = vmul.f32 %v924, %v420
      %v938 = vmul.f32 %v929, %v420
      %v939 = vadd.f32 %v874, %v931
      %v940 = vadd.f32 %v875, %v932
      %v941 = vadd.f32 %v876, %v933
      %v942 = vadd.f32 %v877, %v934
      %v943 = vadd.f32 %v878, %v935
      %v944 = vadd.f32 %v879, %v936
      %v945 = vadd.f32 %v880, %v937
      %v946 = vadd.f32 %v881, %v938
      %s947 = scalar_lea.vmem %s219, 448
      %v948 = vld [vmem:[%s947] sm:$0xff]
      %v949 = vld [vmem:[%s947 + $0x8] sm:$0xff]
      %v950 = vld [vmem:[%s947 + $0x10] sm:$0xff]
      %v951 = vld [vmem:[%s947 + $0x18] sm:$0xff]
      %v952 = vld [vmem:[%s947 + $0x20] sm:$0xff]
      %v953 = vld [vmem:[%s947 + $0x28] sm:$0xff]
      %v954 = vld [vmem:[%s947 + $0x30] sm:$0xff]
      %v955 = vld [vmem:[%s947 + $0x38] sm:$0x7f]
      %957 = vset.pattern.permute.xlu0 0
      %958 = vperm.xlu0 %957, %v948
      %v959 = vpop.permute.xlu0 %958
      %962 = vset.pattern.permute.xlu0 0
      %963 = vperm.xlu0 %962, %v949
      %v964 = vpop.permute.xlu0 %963
      %967 = vset.pattern.permute.xlu0 0
      %968 = vperm.xlu0 %967, %v950
      %v969 = vpop.permute.xlu0 %968
      %972 = vset.pattern.permute.xlu0 0
      %973 = vperm.xlu0 %972, %v951
      %v974 = vpop.permute.xlu0 %973
      %977 = vset.pattern.permute.xlu0 0
      %978 = vperm.xlu0 %977, %v952
      %v979 = vpop.permute.xlu0 %978
      %982 = vset.pattern.permute.xlu0 0
      %983 = vperm.xlu0 %982, %v953
      %v984 = vpop.permute.xlu0 %983
      %987 = vset.pattern.permute.xlu0 0
      %988 = vperm.xlu0 %987, %v954
      %v989 = vpop.permute.xlu0 %988
      %992 = vset.pattern.permute.xlu0 0
      %993 = vperm.xlu0 %992, %v955
      %v994 = vpop.permute.xlu0 %993
      %v996 = vmul.f32 %v959, %v490
      %v997 = vmul.f32 %v964, %v490
      %v998 = vmul.f32 %v969, %v490
      %v999 = vmul.f32 %v974, %v490
      %v1000 = vmul.f32 %v979, %v490
      %v1001 = vmul.f32 %v984, %v490
      %v1002 = vmul.f32 %v989, %v490
      %v1003 = vmul.f32 %v994, %v490
      %v1004 = vadd.f32 %v939, %v996
      %v1005 = vadd.f32 %v940, %v997
      %v1006 = vadd.f32 %v941, %v998
      %v1007 = vadd.f32 %v942, %v999
      %v1008 = vadd.f32 %v943, %v1000
      %v1009 = vadd.f32 %v944, %v1001
      %v1010 = vadd.f32 %v945, %v1002
      %v1011 = vadd.f32 %v946, %v1003
      %v1012 = vld [vmem:[%s752 + $0x1] sm:$0xff]
      %v1013 = vld [vmem:[%s752 + $0x9] sm:$0xff]
      %v1014 = vld [vmem:[%s752 + $0x11] sm:$0xff]
      %v1015 = vld [vmem:[%s752 + $0x19] sm:$0xff]
      %v1016 = vld [vmem:[%s752 + $0x21] sm:$0xff]
      %v1017 = vld [vmem:[%s752 + $0x29] sm:$0xff]
      %v1018 = vld [vmem:[%s752 + $0x31] sm:$0xff]
      %v1019 = vld [vmem:[%s752 + $0x39] sm:$0x7f]
      %1021 = vset.pattern.permute.xlu0 0
      %1022 = vperm.xlu0 %1021, %v1012
      %v1023 = vpop.permute.xlu0 %1022
      %1026 = vset.pattern.permute.xlu0 0
      %1027 = vperm.xlu0 %1026, %v1013
      %v1028 = vpop.permute.xlu0 %1027
      %1031 = vset.pattern.permute.xlu0 0
      %1032 = vperm.xlu0 %1031, %v1014
      %v1033 = vpop.permute.xlu0 %1032
      %1036 = vset.pattern.permute.xlu0 0
      %1037 = vperm.xlu0 %1036, %v1015
      %v1038 = vpop.permute.xlu0 %1037
      %1041 = vset.pattern.permute.xlu0 0
      %1042 = vperm.xlu0 %1041, %v1016
      %v1043 = vpop.permute.xlu0 %1042
      %1046 = vset.pattern.permute.xlu0 0
      %1047 = vperm.xlu0 %1046, %v1017
      %v1048 = vpop.permute.xlu0 %1047
      %1051 = vset.pattern.permute.xlu0 0
      %1052 = vperm.xlu0 %1051, %v1018
      %v1053 = vpop.permute.xlu0 %1052
      %1056 = vset.pattern.permute.xlu0 0
      %1057 = vperm.xlu0 %1056, %v1019
      %v1058 = vpop.permute.xlu0 %1057
      %v1060 = vmul.f32 %v1023, %v559
      %v1061 = vmul.f32 %v1028, %v559
      %v1062 = vmul.f32 %v1033, %v559
      %v1063 = vmul.f32 %v1038, %v559
      %v1064 = vmul.f32 %v1043, %v559
      %v1065 = vmul.f32 %v1048, %v559
      %v1066 = vmul.f32 %v1053, %v559
      %v1067 = vmul.f32 %v1058, %v559
      %v1068 = vadd.f32 %v1004, %v1060
      %v1069 = vadd.f32 %v1005, %v1061
      %v1070 = vadd.f32 %v1006, %v1062
      %v1071 = vadd.f32 %v1007, %v1063
      %v1072 = vadd.f32 %v1008, %v1064
      %v1073 = vadd.f32 %v1009, %v1065
      %v1074 = vadd.f32 %v1010, %v1066
      %v1075 = vadd.f32 %v1011, %v1067
      %v1076 = vld [vmem:[%s817 + $0x1] sm:$0xff]
      %v1077 = vld [vmem:[%s817 + $0x9] sm:$0xff]
      %v1078 = vld [vmem:[%s817 + $0x11] sm:$0xff]
      %v1079 = vld [vmem:[%s817 + $0x19] sm:$0xff]
      %v1080 = vld [vmem:[%s817 + $0x21] sm:$0xff]
      %v1081 = vld [vmem:[%s817 + $0x29] sm:$0xff]
      %v1082 = vld [vmem:[%s817 + $0x31] sm:$0xff]
      %v1083 = vld [vmem:[%s817 + $0x39] sm:$0x7f]
      %1085 = vset.pattern.permute.xlu0 0
      %1086 = vperm.xlu0 %1085, %v1076
      %v1087 = vpop.permute.xlu0 %1086
      %1090 = vset.pattern.permute.xlu0 0
      %1091 = vperm.xlu0 %1090, %v1077
      %v1092 = vpop.permute.xlu0 %1091
      %1095 = vset.pattern.permute.xlu0 0
      %1096 = vperm.xlu0 %1095, %v1078
      %v1097 = vpop.permute.xlu0 %1096
      %1100 = vset.pattern.permute.xlu0 0
      %1101 = vperm.xlu0 %1100, %v1079
      %v1102 = vpop.permute.xlu0 %1101
      %1105 = vset.pattern.permute.xlu0 0
      %1106 = vperm.xlu0 %1105, %v1080
      %v1107 = vpop.permute.xlu0 %1106
      %1110 = vset.pattern.permute.xlu0 0
      %1111 = vperm.xlu0 %1110, %v1081
      %v1112 = vpop.permute.xlu0 %1111
      %1115 = vset.pattern.permute.xlu0 0
      %1116 = vperm.xlu0 %1115, %v1082
      %v1117 = vpop.permute.xlu0 %1116
      %1120 = vset.pattern.permute.xlu0 0
      %1121 = vperm.xlu0 %1120, %v1083
      %v1122 = vpop.permute.xlu0 %1121
      %v1124 = vmul.f32 %v1087, %v628
      %v1125 = vmul.f32 %v1092, %v628
      %v1126 = vmul.f32 %v1097, %v628
      %v1127 = vmul.f32 %v1102, %v628
      %v1128 = vmul.f32 %v1107, %v628
      %v1129 = vmul.f32 %v1112, %v628
      %v1130 = vmul.f32 %v1117, %v628
      %v1131 = vmul.f32 %v1122, %v628
      %v1132 = vadd.f32 %v1068, %v1124
      %v1133 = vadd.f32 %v1069, %v1125
      %v1134 = vadd.f32 %v1070, %v1126
      %v1135 = vadd.f32 %v1071, %v1127
      %v1136 = vadd.f32 %v1072, %v1128
      %v1137 = vadd.f32 %v1073, %v1129
      %v1138 = vadd.f32 %v1074, %v1130
      %v1139 = vadd.f32 %v1075, %v1131
      %v1140 = vld [vmem:[%s882 + $0x1] sm:$0xff]
      %v1141 = vld [vmem:[%s882 + $0x9] sm:$0xff]
      %v1142 = vld [vmem:[%s882 + $0x11] sm:$0xff]
      %v1143 = vld [vmem:[%s882 + $0x19] sm:$0xff]
      %v1144 = vld [vmem:[%s882 + $0x21] sm:$0xff]
      %v1145 = vld [vmem:[%s882 + $0x29] sm:$0xff]
      %v1146 = vld [vmem:[%s882 + $0x31] sm:$0xff]
      %v1147 = vld [vmem:[%s882 + $0x39] sm:$0x7f]
      %1149 = vset.pattern.permute.xlu0 0
      %1150 = vperm.xlu0 %1149, %v1140
      %v1151 = vpop.permute.xlu0 %1150
      %1154 = vset.pattern.permute.xlu0 0
      %1155 = vperm.xlu0 %1154, %v1141
      %v1156 = vpop.permute.xlu0 %1155
      %1159 = vset.pattern.permute.xlu0 0
      %1160 = vperm.xlu0 %1159, %v1142
      %v1161 = vpop.permute.xlu0 %1160
      %1164 = vset.pattern.permute.xlu0 0
      %1165 = vperm.xlu0 %1164, %v1143
      %v1166 = vpop.permute.xlu0 %1165
      %1169 = vset.pattern.permute.xlu0 0
      %1170 = vperm.xlu0 %1169, %v1144
      %v1171 = vpop.permute.xlu0 %1170
      %1174 = vset.pattern.permute.xlu0 0
      %1175 = vperm.xlu0 %1174, %v1145
      %v1176 = vpop.permute.xlu0 %1175
      %1179 = vset.pattern.permute.xlu0 0
      %1180 = vperm.xlu0 %1179, %v1146
      %v1181 = vpop.permute.xlu0 %1180
      %1184 = vset.pattern.permute.xlu0 0
      %1185 = vperm.xlu0 %1184, %v1147
      %v1186 = vpop.permute.xlu0 %1185
      %v1188 = vmul.f32 %v1151, %v697
      %v1189 = vmul.f32 %v1156, %v697
      %v1190 = vmul.f32 %v1161, %v697
      %v1191 = vmul.f32 %v1166, %v697
      %v1192 = vmul.f32 %v1171, %v697
      %v1193 = vmul.f32 %v1176, %v697
      %v1194 = vmul.f32 %v1181, %v697
      %v1195 = vmul.f32 %v1186, %v697
      %v1196 = vadd.f32 %v1132, %v1188
      %v1197 = vadd.f32 %v1133, %v1189
      %v1198 = vadd.f32 %v1134, %v1190
      %v1199 = vadd.f32 %v1135, %v1191
      %v1200 = vadd.f32 %v1136, %v1192
      %v1201 = vadd.f32 %v1137, %v1193
      %v1202 = vadd.f32 %v1138, %v1194
      %v1203 = vadd.f32 %v1139, %v1195
      %v1204 = vadd.f32 %v1196, %v718
      %v1205 = vadd.f32 %v1197, %v718
      %v1206 = vadd.f32 %v1198, %v718
      %v1207 = vadd.f32 %v1199, %v718
      %v1208 = vadd.f32 %v1200, %v718
      %v1209 = vadd.f32 %v1201, %v718
      %v1210 = vadd.f32 %v1202, %v718
      %v1211 = vadd.f32 %v1203, %v718
      %vm1212 = vcmp.gt.f32.partialorder %v1204, 0.0
      %vm1213 = vcmp.gt.f32.partialorder %v1205, 0.0
      %vm1214 = vcmp.gt.f32.partialorder %v1206, 0.0
      %vm1215 = vcmp.gt.f32.partialorder %v1207, 0.0
      %vm1216 = vcmp.gt.f32.partialorder %v1208, 0.0
      %vm1217 = vcmp.gt.f32.partialorder %v1209, 0.0
      %vm1218 = vcmp.gt.f32.partialorder %v1210, 0.0
      %vm1219 = vcmp.gt.f32.partialorder %v1211, 0.0
      %v1220 = vmul.f32 %v1204, 0.2
      %v1221 = vmul.f32 %v1205, 0.2
      %v1222 = vmul.f32 %v1206, 0.2
      %v1223 = vmul.f32 %v1207, 0.2
      %v1224 = vmul.f32 %v1208, 0.2
      %v1225 = vmul.f32 %v1209, 0.2
      %v1226 = vmul.f32 %v1210, 0.2
      %v1227 = vmul.f32 %v1211, 0.2
      %v1228 = vsel %vm1212, %v1204, %v1220
      %v1229 = vsel %vm1213, %v1205, %v1221
      %v1230 = vsel %vm1214, %v1206, %v1222
      %v1231 = vsel %vm1215, %v1207, %v1223
      %v1232 = vsel %vm1216, %v1208, %v1224
      %v1233 = vsel %vm1217, %v1209, %v1225
      %v1234 = vsel %vm1218, %v1210, %v1226
      %v1235 = vsel %vm1219, %v1211, %v1227
      %vm1236 = vcmask 130048
      %v1237 = vsel %vm1236, %v744, 0.0
      %v1238 = vsel %vm1236, %v745, 0.0
      %v1239 = vadd.f32 %v1237, %v1238
      %v1240 = vsel %vm1236, %v746, 0.0
      %v1241 = vadd.f32 %v1239, %v1240
      %v1242 = vsel %vm1236, %v747, 0.0
      %v1243 = vadd.f32 %v1241, %v1242
      %v1244 = vsel %vm1236, %v748, 0.0
      %v1245 = vadd.f32 %v1243, %v1244
      %v1246 = vsel %vm1236, %v749, 0.0
      %v1247 = vadd.f32 %v1245, %v1246
      %v1248 = vsel %vm1236, %v750, 0.0
      %v1249 = vadd.f32 %v1247, %v1248
      %vm1250 = vcmask 129024
      %v1251 = vsel %vm1250, %v751, 0.0
      %v1252 = vadd.f32 %v1249, %v1251
      %v1253 = vrot.slane %v1252, 4
      %v1254 = vadd.f32 %v1252, %v1253
      %v1255 = vrot.slane %v1254, 2
      %v1256 = vadd.f32 %v1254, %v1255
      %v1257 = vrot.slane %v1256, 1
      %v1258 = vadd.f32 %v1256, %v1257
      %v1259 = vmul.f32 %v744, %v744
      %v1260 = vmul.f32 %v745, %v745
      %v1261 = vmul.f32 %v746, %v746
      %v1262 = vmul.f32 %v747, %v747
      %v1263 = vmul.f32 %v748, %v748
      %v1264 = vmul.f32 %v749, %v749
      %v1265 = vmul.f32 %v750, %v750
      %v1266 = vmul.f32 %v751, %v751
      %v1267 = vsel %vm1236, %v1259, 0.0
      %v1268 = vsel %vm1236, %v1260, 0.0
      %v1269 = vadd.f32 %v1267, %v1268
      %v1270 = vsel %vm1236, %v1261, 0.0
      %v1271 = vadd.f32 %v1269, %v1270
      %v1272 = vsel %vm1236, %v1262, 0.0
      %v1273 = vadd.f32 %v1271, %v1272
      %v1274 = vsel %vm1236, %v1263, 0.0
      %v1275 = vadd.f32 %v1273, %v1274
      %v1276 = vsel %vm1236, %v1264, 0.0
      %v1277 = vadd.f32 %v1275, %v1276
      %v1278 = vsel %vm1236, %v1265, 0.0
      %v1279 = vadd.f32 %v1277, %v1278
      %v1280 = vsel %vm1250, %v1266, 0.0
      %v1281 = vadd.f32 %v1279, %v1280
      %v1282 = vrot.slane %v1281, 4
      %v1283 = vadd.f32 %v1281, %v1282
      %v1284 = vrot.slane %v1283, 2
      %v1285 = vadd.f32 %v1283, %v1284
      %v1286 = vrot.slane %v1285, 1
      %v1287 = vadd.f32 %v1285, %v1286
      %v1288 = vsel %vm1236, %v1228, 0.0
      %v1289 = vsel %vm1236, %v1229, 0.0
      %v1290 = vadd.f32 %v1288, %v1289
      %v1291 = vsel %vm1236, %v1230, 0.0
      %v1292 = vadd.f32 %v1290, %v1291
      %v1293 = vsel %vm1236, %v1231, 0.0
      %v1294 = vadd.f32 %v1292, %v1293
      %v1295 = vsel %vm1236, %v1232, 0.0
      %v1296 = vadd.f32 %v1294, %v1295
      %v1297 = vsel %vm1236, %v1233, 0.0
      %v1298 = vadd.f32 %v1296, %v1297
      %v1299 = vsel %vm1236, %v1234, 0.0
      %v1300 = vadd.f32 %v1298, %v1299
      %v1301 = vsel %vm1250, %v1235, 0.0
      %v1302 = vadd.f32 %v1300, %v1301
      %v1303 = vrot.slane %v1302, 4
      %v1304 = vadd.f32 %v1302, %v1303
      %v1305 = vrot.slane %v1304, 2
      %v1306 = vadd.f32 %v1304, %v1305
      %v1307 = vrot.slane %v1306, 1
      %v1308 = vadd.f32 %v1306, %v1307
      %v1309 = vadd.f32 %v1258, %v1308
      %v1310 = vmul.f32 %v1228, %v1228
      %v1311 = vmul.f32 %v1229, %v1229
      %v1312 = vmul.f32 %v1230, %v1230
      %v1313 = vmul.f32 %v1231, %v1231
      %v1314 = vmul.f32 %v1232, %v1232
      %v1315 = vmul.f32 %v1233, %v1233
      %v1316 = vmul.f32 %v1234, %v1234
      %v1317 = vmul.f32 %v1235, %v1235
      %v1318 = vsel %vm1236, %v1310, 0.0
      %v1319 = vsel %vm1236, %v1311, 0.0
      %v1320 = vadd.f32 %v1318, %v1319
      %v1321 = vsel %vm1236, %v1312, 0.0
      %v1322 = vadd.f32 %v1320, %v1321
      %v1323 = vsel %vm1236, %v1313, 0.0
      %v1324 = vadd.f32 %v1322, %v1323
      %v1325 = vsel %vm1236, %v1314, 0.0
      %v1326 = vadd.f32 %v1324, %v1325
      %v1327 = vsel %vm1236, %v1315, 0.0
      %v1328 = vadd.f32 %v1326, %v1327
      %v1329 = vsel %vm1236, %v1316, 0.0
      %v1330 = vadd.f32 %v1328, %v1329
      %v1331 = vsel %vm1250, %v1317, 0.0
      %v1332 = vadd.f32 %v1330, %v1331
      %v1333 = vrot.slane %v1332, 4
      %v1334 = vadd.f32 %v1332, %v1333
      %v1335 = vrot.slane %v1334, 2
      %v1336 = vadd.f32 %v1334, %v1335
      %v1337 = vrot.slane %v1336, 1
      %v1338 = vadd.f32 %v1336, %v1337
      %v1339 = vadd.f32 %v1287, %v1338
      %v1340 = vmul.f32 %v1309, 0.007936508
      %v1341 = vmul.f32 %v1339, 0.007936508
      %v1342 = vmul.f32 %v1340, %v1340
      %v1343 = vsub.f32 %v1341, %v1342
      %v1344 = vadd.f32 %v1343, 1e-05
      %v1345 = vrsqrt.pop %v1344
      %v1346 = vmul.f32 %v226, %v1345
      %v1347 = vmul.f32 %v1340, %v1346
      %v1348 = vsub.f32 %v227, %v1347
      %v1350 = vlaneseq
      %v1351 = vshrl.u32 %v1350, 7
      %v1352 = vsub.s32 0, %v1351
      %v1353 = vrot.slane %v1346, %v1352
      %v1355 = vmul.f32 %v744, %v1353
      %v1356 = vmul.f32 %v745, %v1353
      %v1357 = vmul.f32 %v746, %v1353
      %v1358 = vmul.f32 %v747, %v1353
      %v1359 = vmul.f32 %v748, %v1353
      %v1360 = vmul.f32 %v749, %v1353
      %v1361 = vmul.f32 %v750, %v1353
      %v1362 = vmul.f32 %v751, %v1353
      %v1364 = vlaneseq
      %v1365 = vshrl.u32 %v1364, 7
      %v1366 = vsub.s32 0, %v1365
      %v1367 = vrot.slane %v1348, %v1366
      %v1369 = vadd.f32 %v1355, %v1367
      %v1370 = vadd.f32 %v1356, %v1367
      %v1371 = vadd.f32 %v1357, %v1367
      %v1372 = vadd.f32 %v1358, %v1367
      %v1373 = vadd.f32 %v1359, %v1367
      %v1374 = vadd.f32 %v1360, %v1367
      %v1375 = vadd.f32 %v1361, %v1367
      %v1376 = vadd.f32 %v1362, %v1367
      %v1377 = vmul.f32 %v1228, %v1353
      %v1378 = vmul.f32 %v1229, %v1353
      %v1379 = vmul.f32 %v1230, %v1353
      %v1380 = vmul.f32 %v1231, %v1353
      %v1381 = vmul.f32 %v1232, %v1353
      %v1382 = vmul.f32 %v1233, %v1353
      %v1383 = vmul.f32 %v1234, %v1353
      %v1384 = vmul.f32 %v1235, %v1353
      %v1385 = vadd.f32 %v1377, %v1367
      %v1386 = vadd.f32 %v1378, %v1367
      %v1387 = vadd.f32 %v1379, %v1367
      %v1388 = vadd.f32 %v1380, %v1367
      %v1389 = vadd.f32 %v1381, %v1367
      %v1390 = vadd.f32 %v1382, %v1367
      %v1391 = vadd.f32 %v1383, %v1367
      %v1392 = vadd.f32 %v1384, %v1367
      %v1393 = vpack.c.bf16 %v1370, %v1369
      %v1394 = vpack.c.bf16 %v1372, %v1371
      %v1395 = vpack.c.bf16 %v1374, %v1373
      %v1396 = vpack.c.bf16 %v1376, %v1375
      %v1401 = vunpack.c.l.b16 %v1393
      %v1402 = vunpack.c.h.b16 %v1393
      %v1403 = vunpack.c.l.b16 %v1394
      %v1404 = vunpack.c.h.b16 %v1394
      %v1405 = vunpack.c.l.b16 %v1395
      %v1406 = vunpack.c.h.b16 %v1395
      %v1407 = vunpack.c.l.b16 %v1396
      %v1408 = vunpack.c.h.b16 %v1396
      %v1409 = vpack.c.b16 %v1401, %v1401
      %v1410 = vpack.c.b16 %v1402, %v1402
      %v1411 = vpack.c.b16 %v1403, %v1403
      %v1412 = vpack.c.b16 %v1404, %v1404
      %v1413 = vpack.c.b16 %v1405, %v1405
      %v1414 = vpack.c.b16 %v1406, %v1406
      %v1415 = vpack.c.b16 %v1407, %v1407
      %v1416 = vpack.c.b16 %v1408, %v1408
      %vm1425 = vcmask 125952
      %1426 = vst.msk [vmem:[%s224] sm:$0xf] %vm1425, %v1409
      %1427 = vst.msk [vmem:[%s224 + $0x4] sm:$0xf] %vm1425, %v1410
      %1428 = vst.msk [vmem:[%s224 + $0x8] sm:$0xf] %vm1425, %v1411
      %1429 = vst.msk [vmem:[%s224 + $0xc] sm:$0xf] %vm1425, %v1412
      %1430 = vst.msk [vmem:[%s224 + $0x10] sm:$0xf] %vm1425, %v1413
      %1431 = vst.msk [vmem:[%s224 + $0x14] sm:$0xf] %vm1425, %v1414
      %1432 = vst.msk [vmem:[%s224 + $0x18] sm:$0xf] %vm1425, %v1415
      %vm1433 = vcmask 125952
      %vm1434 = vsmask.f32 3328
      %vm1435 = vmand %vm1433, %vm1434
      %v1436 = vld [vmem:[%s224 + $0x1c] sm:$0xf]
      %v1437 = vsel %vm1435, %v1416, %v1436
      %1438 = vst [vmem:[%s224 + $0x1c] sm:$0xf] %v1437
      %v1439 = vpack.c.bf16 %v1386, %v1385
      %v1440 = vpack.c.bf16 %v1388, %v1387
      %v1441 = vpack.c.bf16 %v1390, %v1389
      %v1442 = vpack.c.bf16 %v1392, %v1391
      %v1447 = vunpack.c.l.b16 %v1439
      %v1448 = vunpack.c.h.b16 %v1439
      %v1449 = vunpack.c.l.b16 %v1440
      %v1450 = vunpack.c.h.b16 %v1440
      %v1451 = vunpack.c.l.b16 %v1441
      %v1452 = vunpack.c.h.b16 %v1441
      %v1453 = vunpack.c.l.b16 %v1442
      %v1454 = vunpack.c.h.b16 %v1442
      %v1455 = vpack.c.b16 %v1447, %v1447
      %v1456 = vpack.c.b16 %v1448, %v1448
      %v1457 = vpack.c.b16 %v1449, %v1449
      %v1458 = vpack.c.b16 %v1450, %v1450
      %v1459 = vpack.c.b16 %v1451, %v1451
      %v1460 = vpack.c.b16 %v1452, %v1452
      %v1461 = vpack.c.b16 %v1453, %v1453
      %v1462 = vpack.c.b16 %v1454, %v1454
      %s1471 = scalar_lea.vmem %s224, 32
      %1472 = vst.msk [vmem:[%s1471] sm:$0xf] %vm1425, %v1455
      %1473 = vst.msk [vmem:[%s1471 + $0x4] sm:$0xf] %vm1425, %v1456
      %1474 = vst.msk [vmem:[%s1471 + $0x8] sm:$0xf] %vm1425, %v1457
      %1475 = vst.msk [vmem:[%s1471 + $0xc] sm:$0xf] %vm1425, %v1458
      %1476 = vst.msk [vmem:[%s1471 + $0x10] sm:$0xf] %vm1425, %v1459
      %1477 = vst.msk [vmem:[%s1471 + $0x14] sm:$0xf] %vm1425, %v1460
      %1478 = vst.msk [vmem:[%s1471 + $0x18] sm:$0xf] %vm1425, %v1461
      %v1479 = vld [vmem:[%s1471 + $0x1c] sm:$0xf]
      %v1480 = vsel %vm1435, %v1462, %v1479
      %1481 = vst [vmem:[%s1471 + $0x1c] sm:$0xf] %v1480
      %p1482 = scmp.lt.s32.totalorder %s16, 7
      %s1483 = scalar_select %p1482, %s16, 7
      %s1484 = smul.addr %s1483, 16
      %s1485 = smul.addr %s1484, 4
      %s1486 = scalar_lea.vmem %s5, %s1485
      // Predicated region
      $region41: #{baseline_convnet_forward.6} parent=39 // pred_check
        %p1487 = pneg %p144
      $region42: #{baseline_convnet_forward.6} parent=39 // pred_check_branch
        %1489 = sbr.rel (%p1487) target = $region44
      $region43: #{baseline_convnet_forward.6} parent=39 // pred_region
        _
      $region44: #{baseline_convnet_forward.6} parent=39 // pred_fallthru
        _
    $region40: #{baseline_convnet_forward.6} parent=5 // pred_fallthru
      _
    %p1490 = scmp.le.s32.totalorder 2, %s11
    // Predicated region
    $region45: #{baseline_convnet_forward.6} parent=5 // pred_check
      %p1491 = pneg %p1490
    $region46: #{baseline_convnet_forward.6} parent=5 // pred_check_branch
      %1493 = sbr.rel (%p1491) target = $region48
    $region47: #{baseline_convnet_forward.6} parent=5 // pred_region
      %s1494 = ssub.s32 %s11, 2
      // Predicated region
      $region49: #{baseline_convnet_forward.6} parent=47 // pred_check
        %p1495 = pneg %p150
      $region50: #{baseline_convnet_forward.6} parent=47 // pred_check_branch
        %1497 = sbr.rel (%p1495) target = $region52
      $region51: #{baseline_convnet_forward.6} parent=47 // pred_region
        %p1498 = scmp.lt.s32.totalorder %s17, 7
        %s1499 = scalar_select %p1498, %s17, 7
        %s1500 = smul.addr %s1499, 16
        %s1501 = smul.addr %s1500, 4
        %s1502 = scalar_lea.vmem %s5, %s1501
      $region52: #{baseline_convnet_forward.6} parent=47 // pred_fallthru
        _
    $region48: #{baseline_convnet_forward.6} parent=5 // pred_fallthru
      _
  $region6: #{baseline_convnet_forward.6} parent=0 // loop_footer
    %s15 = sadd.s32 1, %s11
  $region7: #{baseline_convnet_forward.6} parent=0 // loop_footer_branch
    %10 = sbr.rel target = $region3
  $region8: #{baseline_convnet_forward.6} parent=0 // loop_exit
    _

// kernel: baseline_convnet_forward.7
$region0: #{baseline_convnet_forward.7}
  #allocation0 [shape = 'u32[]', space=smem, size = 0x4, offset = 0x4, fixed_abs, tag = 'smem constant byte address 0x4 - core index']
  #allocation1 [shape = 'u32[144,128]{1,0:T(1,128)}', space=vmem, size = 0x12000, scoped, tag = 'internal scratch']
  %s0 = inlined_call_operand.vmem [shape: bf16[8,2,3,21,16], index: 0, kind: input, shape index: {}]
  %s1 = inlined_call_operand.vmem [shape: bf16[112,32], index: 1, kind: input, shape index: {}]
  %s2 = inlined_call_operand.vmem [shape: f32[1,32], index: 2, kind: input, shape index: {}]
  %s3 = inlined_call_operand.vmem [shape: f32[1,32], index: 3, kind: input, shape index: {}]
  %s4 = inlined_call_operand.vmem [shape: f32[1,32], index: 4, kind: input, shape index: {}]
  %s5 = inlined_call_operand.vmem [shape: bf16[8,2,19,32], index: 5, kind: output, shape index: {}]
  %s6 = sld [smem:[#allocation0]]
  $region53: #{baseline_convnet_forward.7} parent=0
    _
  %s8 = ssub.s32 1, %s6
  %s9 = scalar_select 0, %s8, %s6
  loop: start=0, step=1, limit=10
  $region2: #{baseline_convnet_forward.7} parent=0 // loop_pre_header
    _
  $region3: #{baseline_convnet_forward.7} parent=0 // loop_header
    %s11 = sphi 0, %s15
    %p12 = scmp.ge.s32.totalorder %s11, 10
    %s21 = sphi 0, %s23
    %s24 = sphi 0, %s21
    %s25 = sphi 0, %s24
    %s41 = sphi 0, %s25
    %s45 = sphi 0, %s45
    %s47 = sphi 0, %s45
    %s48 = sphi 0, %s47
    %s62 = sphi 0, %s48
    %s66 = sphi 0, %s66
    %s68 = sphi 0, %s66
    %s69 = sphi 0, %s68
    %s83 = sphi 0, %s69
    %s87 = sphi 0, %s87
    %s89 = sphi 0, %s87
    %s90 = sphi 0, %s89
    %s104 = sphi 0, %s90
    %s108 = sphi 0, %s108
    %s110 = sphi 0, %s108
    %s111 = sphi 0, %s110
    %s125 = sphi 0, %s111
    %s131 = sphi 0, %s133
    %s134 = sphi 0, %s131
    %s135 = sphi 0, %s134
    %s151 = sphi 0, %s135
  $region4: #{baseline_convnet_forward.7} parent=0 // loop_header_branch
    %14 = sbr.rel (%p12) target = $region8
  $region5: #{baseline_convnet_forward.7} parent=0 // loop_body
    %s16 = ssub.s32 %s11, 1
    %s17 = ssub.s32 %s11, 2
    %s18 = sadd.s32 %s11, 1
    %s19 = ssub.s32 %s11, %s18
    %p20 = scmp.eq.s32.totalorder %s19, 0
    %s22 = sadd.s32 %s21, 1
    %s23 = scalar_select %p20, %s21, %s22
    %p26 = pneg %p20
    %p27 = scmp.eq.s32.totalorder %s11, 7
    %p28 = por %p26, %p27
    %p29 = scmp.ne.s32.totalorder %s21, %s24
    %p30 = scmp.eq.s32.totalorder %s11, 0
    %p31 = por %p29, %p30
    %p32 = scmp.ne.s32.totalorder %s21, %s24
    %p33 = scmp.eq.s32.totalorder %s16, 7
    %p34 = por %p32, %p33
    %p35 = scmp.ne.s32.totalorder %s24, %s25
    %p36 = scmp.eq.s32.totalorder %s16, 0
    %p37 = por %p35, %p36
    %p38 = scmp.ne.s32.totalorder %s24, %s25
    %p39 = scmp.eq.s32.totalorder %s17, 7
    %p40 = por %p38, %p39
    %p42 = scmp.ne.s32.totalorder %s25, %s41
    %p43 = scmp.eq.s32.totalorder %s17, 0
    %p44 = por %p42, %p43
    %s46 = sadd.s32 %s45, 1
    %p49 = scmp.eq.s32.totalorder %s11, 7
    %p50 = scmp.ne.s32.totalorder %s45, %s47
    %p51 = scmp.eq.s32.totalorder %s11, 0
    %p52 = por %p50, %p51
    %p53 = scmp.ne.s32.totalorder %s45, %s47
    %p54 = scmp.eq.s32.totalorder %s16, 7
    %p55 = por %p53, %p54
    %p56 = scmp.ne.s32.totalorder %s47, %s48
    %p57 = scmp.eq.s32.totalorder %s16, 0
    %p58 = por %p56, %p57
    %p59 = scmp.ne.s32.totalorder %s47, %s48
    %p60 = scmp.eq.s32.totalorder %s17, 7
    %p61 = por %p59, %p60
    %p63 = scmp.ne.s32.totalorder %s48, %s62
    %p64 = scmp.eq.s32.totalorder %s17, 0
    %p65 = por %p63, %p64
    %s67 = sadd.s32 %s66, 1
    %p70 = scmp.eq.s32.totalorder %s11, 7
    %p71 = scmp.ne.s32.totalorder %s66, %s68
    %p72 = scmp.eq.s32.totalorder %s11, 0
    %p73 = por %p71, %p72
    %p74 = scmp.ne.s32.totalorder %s66, %s68
    %p75 = scmp.eq.s32.totalorder %s16, 7
    %p76 = por %p74, %p75
    %p77 = scmp.ne.s32.totalorder %s68, %s69
    %p78 = scmp.eq.s32.totalorder %s16, 0
    %p79 = por %p77, %p78
    %p80 = scmp.ne.s32.totalorder %s68, %s69
    %p81 = scmp.eq.s32.totalorder %s17, 7
    %p82 = por %p80, %p81
    %p84 = scmp.ne.s32.totalorder %s69, %s83
    %p85 = scmp.eq.s32.totalorder %s17, 0
    %p86 = por %p84, %p85
    %s88 = sadd.s32 %s87, 1
    %p91 = scmp.eq.s32.totalorder %s11, 7
    %p92 = scmp.ne.s32.totalorder %s87, %s89
    %p93 = scmp.eq.s32.totalorder %s11, 0
    %p94 = por %p92, %p93
    %p95 = scmp.ne.s32.totalorder %s87, %s89
    %p96 = scmp.eq.s32.totalorder %s16, 7
    %p97 = por %p95, %p96
    %p98 = scmp.ne.s32.totalorder %s89, %s90
    %p99 = scmp.eq.s32.totalorder %s16, 0
    %p100 = por %p98, %p99
    %p101 = scmp.ne.s32.totalorder %s89, %s90
    %p102 = scmp.eq.s32.totalorder %s17, 7
    %p103 = por %p101, %p102
    %p105 = scmp.ne.s32.totalorder %s90, %s104
    %p106 = scmp.eq.s32.totalorder %s17, 0
    %p107 = por %p105, %p106
    %s109 = sadd.s32 %s108, 1
    %p112 = scmp.eq.s32.totalorder %s11, 7
    %p113 = scmp.ne.s32.totalorder %s108, %s110
    %p114 = scmp.eq.s32.totalorder %s11, 0
    %p115 = por %p113, %p114
    %p116 = scmp.ne.s32.totalorder %s108, %s110
    %p117 = scmp.eq.s32.totalorder %s16, 7
    %p118 = por %p116, %p117
    %p119 = scmp.ne.s32.totalorder %s110, %s111
    %p120 = scmp.eq.s32.totalorder %s16, 0
    %p121 = por %p119, %p120
    %p122 = scmp.ne.s32.totalorder %s110, %s111
    %p123 = scmp.eq.s32.totalorder %s17, 7
    %p124 = por %p122, %p123
    %p126 = scmp.ne.s32.totalorder %s111, %s125
    %p127 = scmp.eq.s32.totalorder %s17, 0
    %p128 = por %p126, %p127
    %s129 = ssub.s32 %s11, %s18
    %p130 = scmp.eq.s32.totalorder %s129, 0
    %s132 = sadd.s32 %s131, 1
    %s133 = scalar_select %p130, %s131, %s132
    %p136 = pneg %p130
    %p137 = scmp.eq.s32.totalorder %s11, 7
    %p138 = por %p136, %p137
    %p139 = scmp.ne.s32.totalorder %s131, %s134
    %p140 = scmp.eq.s32.totalorder %s11, 0
    %p141 = por %p139, %p140
    %p142 = scmp.ne.s32.totalorder %s131, %s134
    %p143 = scmp.eq.s32.totalorder %s16, 7
    %p144 = por %p142, %p143
    %p145 = scmp.ne.s32.totalorder %s134, %s135
    %p146 = scmp.eq.s32.totalorder %s16, 0
    %p147 = por %p145, %p146
    %p148 = scmp.ne.s32.totalorder %s134, %s135
    %p149 = scmp.eq.s32.totalorder %s17, 7
    %p150 = por %p148, %p149
    %p152 = scmp.ne.s32.totalorder %s135, %s151
    %p153 = scmp.eq.s32.totalorder %s17, 0
    %p154 = por %p152, %p153
    %p155 = scmp.le.s32.totalorder 1, %s11
    %p156 = scmp.lt.s32.totalorder %s11, 9
    %p157 = pnand %p155, %p156
    %p158 = pneg %p157
    // Predicated region
    $region9: #{baseline_convnet_forward.7} parent=5 // pred_check
      _
    $region10: #{baseline_convnet_forward.7} parent=5 // pred_check_branch
      %160 = sbr.rel (%p157) target = $region12
    $region11: #{baseline_convnet_forward.7} parent=5 // pred_region
      %s161 = ssub.s32 %s11, 1
      // Predicated region
      $region13: #{baseline_convnet_forward.7} parent=11 // pred_check
        %p162 = pneg %p58
      $region14: #{baseline_convnet_forward.7} parent=11 // pred_check_branch
        %164 = sbr.rel (%p162) target = $region16
      $region15: #{baseline_convnet_forward.7} parent=11 // pred_region
        _
      $region16: #{baseline_convnet_forward.7} parent=11 // pred_fallthru
        _
      // Predicated region
      $region17: #{baseline_convnet_forward.7} parent=11 // pred_check
        %p165 = pneg %p79
      $region18: #{baseline_convnet_forward.7} parent=11 // pred_check_branch
        %167 = sbr.rel (%p165) target = $region20
      $region19: #{baseline_convnet_forward.7} parent=11 // pred_region
        _
      $region20: #{baseline_convnet_forward.7} parent=11 // pred_fallthru
        _
      // Predicated region
      $region21: #{baseline_convnet_forward.7} parent=11 // pred_check
        %p168 = pneg %p100
      $region22: #{baseline_convnet_forward.7} parent=11 // pred_check_branch
        %170 = sbr.rel (%p168) target = $region24
      $region23: #{baseline_convnet_forward.7} parent=11 // pred_region
        _
      $region24: #{baseline_convnet_forward.7} parent=11 // pred_fallthru
        _
      // Predicated region
      $region25: #{baseline_convnet_forward.7} parent=11 // pred_check
        %p171 = pneg %p121
      $region26: #{baseline_convnet_forward.7} parent=11 // pred_check_branch
        %173 = sbr.rel (%p171) target = $region28
      $region27: #{baseline_convnet_forward.7} parent=11 // pred_region
        _
      $region28: #{baseline_convnet_forward.7} parent=11 // pred_fallthru
        _
    $region12: #{baseline_convnet_forward.7} parent=5 // pred_fallthru
      _
    %p174 = scmp.lt.s32.totalorder %s11, 8
    // Predicated region
    $region29: #{baseline_convnet_forward.7} parent=5 // pred_check
      %p175 = pneg %p174
    $region30: #{baseline_convnet_forward.7} parent=5 // pred_check_branch
      %177 = sbr.rel (%p175) target = $region32
    $region31: #{baseline_convnet_forward.7} parent=5 // pred_region
      // Predicated region
      $region33: #{baseline_convnet_forward.7} parent=31 // pred_check
        %p178 = pneg %p31
      $region34: #{baseline_convnet_forward.7} parent=31 // pred_check_branch
        %180 = sbr.rel (%p178) target = $region36
      $region35: #{baseline_convnet_forward.7} parent=31 // pred_region
        %p181 = scmp.lt.s32.totalorder %s11, 7
        %s182 = scalar_select %p181, %s11, 7
        %s183 = smul.addr %s182, 18
        %s184 = smul.addr %s183, 4
        %s185 = scalar_lea.vmem %s0, %s184
      $region36: #{baseline_convnet_forward.7} parent=31 // pred_fallthru
        _
    $region32: #{baseline_convnet_forward.7} parent=5 // pred_fallthru
      _
    %p186 = scmp.le.s32.totalorder 1, %s11
    %p187 = scmp.lt.s32.totalorder %s11, 9
    %p188 = pnand %p186, %p187
    %p189 = pneg %p188
    // Predicated region
    $region37: #{baseline_convnet_forward.7} parent=5 // pred_check
      _
    $region38: #{baseline_convnet_forward.7} parent=5 // pred_check_branch
      %191 = sbr.rel (%p188) target = $region40
    $region39: #{baseline_convnet_forward.7} parent=5 // pred_region
      %s192 = ssub.s32 %s11, 1
      %p193 = scmp.lt.s32.totalorder %s16, 7
      %s194 = scalar_select %p193, %s16, 7
      %s195 = smul.addr %s194, 18
      %s196 = smul.addr %s195, 4
      %s197 = scalar_lea.vmem %s0, %s196
      %p198 = pneg %p37
      %p199 = pneg %p34
      %p200 = pneg %p58
      %p201 = pneg %p55
      %p202 = pneg %p79
      %p203 = pneg %p76
      %p204 = pneg %p100
      %p205 = pneg %p97
      %p206 = pneg %p121
      %p207 = pneg %p118
      %p208 = pneg %p147
      %p209 = pneg %p144
      %p210 = scmp.lt.s32.totalorder %s16, 7
      %s211 = scalar_select %p210, %s16, 7
      %s212 = smul.addr %s211, 6
      %s213 = smul.addr %s212, 4
      %s214 = scalar_lea.vmem %s5, %s213
      %p215 = scmp.lt.s32.totalorder %s16, 7
      %s216 = scalar_select %p215, %s16, 7
      %s217 = smul.addr %s216, 18
      %s218 = smul.addr %s217, 4
      %s219 = scalar_lea.vmem %s0, %s218
      %p220 = scmp.lt.s32.totalorder %s16, 7
      %s221 = scalar_select %p220, %s16, 7
      %s222 = smul.addr %s221, 6
      %s223 = smul.addr %s222, 4
      %s224 = scalar_lea.vmem %s5, %s223
      %v226 = vld [vmem:[%s2] sm:$0x1]
      %v227 = vld [vmem:[%s3] sm:$0x1]
      %v228 = vld [vmem:[%s4] sm:$0x1]
      %v229 = vld [vmem:[%s219] sm:$0xf]
      %v230 = vld [vmem:[%s219 + $0x4] sm:$0xf]
      %v231 = vld [vmem:[%s219 + $0x8] sm:$0x3]
      %v232 = vld [vmem:[%s1] sm:$0xf]
      %v233 = vld [vmem:[%s1 + $0x4] sm:$0xf]
      %s234 = scalar_lea.vmem %s219, 12
      %v235 = vld [vmem:[%s234] sm:$0xf]
      %v236 = vld [vmem:[%s234 + $0x4] sm:$0xf]
      %v237 = vld [vmem:[%s234 + $0x8] sm:$0x3]
      %v238 = vld [vmem:[%s1 + $0x8] sm:$0xf]
      %v239 = vld [vmem:[%s1 + $0xc] sm:$0xf]
      %v243 = vunpack.c.l.b16 %v235
      %v244 = vunpack.c.l.b16 %v236
      %v245 = vunpack.c.l.b16 %v237
      %v246 = vpack.c.b16 %v244, %v243
      %v247 = vpack.c.b16 %v245, %v245
      %v250 = vunpack.c.l.b16 %v238
      %v251 = vunpack.c.l.b16 %v239
      %v252 = vpack.c.b16 %v251, %v250
      %vm254 = vcmask 130048
      %v256 = vsel %vm254, %v246, 0
      %v259 = vsel %vm254, %v247, 0
      %261 = vmatprep.subr.bf16.mxu0 0
      %262 = vmatpush1.bf16.msra.mxu0 %v252
      %263 = vmatprep.subr.bf16.mxu0 0
      %264 = vmatpush1.bf16.msra.mxu0 0
      %265 = vmatprep.subr.bf16.mxu0 0
      %266 = vmatpush1.bf16.msra.mxu0 0
      %267 = vmatprep.subr.bf16.mxu0 0
      %268 = vmatpush1.bf16.msra.mxu0 0
      %269 = vmatprep.subr.bf16.mxu0 0
      %270 = vmatpush1.bf16.msra.mxu0 0
      %271 = vmatprep.subr.bf16.mxu0 0
      %272 = vmatpush1.bf16.msra.mxu0 0
      %273 = vmatprep.subr.bf16.mxu0 0
      %274 = vmatpush1.bf16.msra.mxu0 0
      %275 = vmatprep.subr.bf16.mxu0 0
      %276 = vmatpush1.bf16.msra.mxu0 0
      %277 = vmatprep.subr.bf16.mxu0 0
      %278 = vmatpush1.bf16.msra.mxu0 0
      %279 = vmatprep.subr.bf16.mxu0 0
      %280 = vmatpush1.bf16.msra.mxu0 0
      %281 = vmatprep.subr.bf16.mxu0 0
      %282 = vmatpush1.bf16.msra.mxu0 0
      %283 = vmatprep.subr.bf16.mxu0 0
      %284 = vmatpush1.bf16.msra.mxu0 0
      %285 = vmatprep.subr.bf16.mxu0 0
      %286 = vmatpush1.bf16.msra.mxu0 0
      %287 = vmatprep.subr.bf16.mxu0 0
      %288 = vmatpush1.bf16.msra.mxu0 0
      %289 = vmatprep.subr.bf16.mxu0 0
      %290 = vmatpush1.bf16.msra.mxu0 0
      %291 = vmatprep.subr.bf16.mxu0 0
      %292 = vmatpush1.bf16.msra.mxu0 0
      %293 = vmatprep.mubr.bf16.mxu0 0
      %294 = vmatmul.mubr.bf16.gmra.mrb[0].mxu0 %v256
      %v295 = vpop.f32.mrb[0].mxu0
      %v296 = vadd.f32 0.0, %v295
      %v297 = vpop.f32.mrb[0].mxu0
      %v298 = vpop.f32.mrb[0].mxu0
      %v299 = vadd.f32 0.0, %v298
      %v300 = vpop.f32.mrb[0].mxu0
      %301 = vmatprep.mubr.bf16.mxu0 0
      %302 = vmatmul.mubr.bf16.gmra.mrb[0].mxu0 %v259
      %v303 = vpop.f32.mrb[0].mxu0
      %v304 = vadd.f32 0.0, %v303
      %v305 = vpop.f32.mrb[0].mxu0
      %v306 = vpop.f32.mrb[0].mxu0
      %v307 = vpop.f32.mrb[0].mxu0
      %308 = vdwg.mxu0
      %v312 = vunpack.c.l.b16 %v229
      %v313 = vunpack.c.l.b16 %v230
      %v314 = vunpack.c.l.b16 %v231
      %v315 = vpack.c.b16 %v313, %v312
      %v316 = vpack.c.b16 %v314, %v314
      %v319 = vunpack.c.l.b16 %v232
      %v320 = vunpack.c.l.b16 %v233
      %v321 = vpack.c.b16 %v320, %v319
      %v324 = vsel %vm254, %v315, 0
      %v327 = vsel %vm254, %v316, 0
      %329 = vmatprep.subr.bf16.mxu0 0
      %330 = vmatpush1.bf16.msra.mxu0 %v321
      %331 = vmatprep.subr.bf16.mxu0 0
      %332 = vmatpush1.bf16.msra.mxu0 0
      %333 = vmatprep.subr.bf16.mxu0 0
      %334 = vmatpush1.bf16.msra.mxu0 0
      %335 = vmatprep.subr.bf16.mxu0 0
      %336 = vmatpush1.bf16.msra.mxu0 0
      %337 = vmatprep.subr.bf16.mxu0 0
      %338 = vmatpush1.bf16.msra.mxu0 0
      %339 = vmatprep.subr.bf16.mxu0 0
      %340 = vmatpush1.bf16.msra.mxu0 0
      %341 = vmatprep.subr.bf16.mxu0 0
      %342 = vmatpush1.bf16.msra.mxu0 0
      %343 = vmatprep.subr.bf16.mxu0 0
      %344 = vmatpush1.bf16.msra.mxu0 0
      %345 = vmatprep.subr.bf16.mxu0 0
      %346 = vmatpush1.bf16.msra.mxu0 0
      %347 = vmatprep.subr.bf16.mxu0 0
      %348 = vmatpush1.bf16.msra.mxu0 0
      %349 = vmatprep.subr.bf16.mxu0 0
      %350 = vmatpush1.bf16.msra.mxu0 0
      %351 = vmatprep.subr.bf16.mxu0 0
      %352 = vmatpush1.bf16.msra.mxu0 0
      %353 = vmatprep.subr.bf16.mxu0 0
      %354 = vmatpush1.bf16.msra.mxu0 0
      %355 = vmatprep.subr.bf16.mxu0 0
      %356 = vmatpush1.bf16.msra.mxu0 0
      %357 = vmatprep.subr.bf16.mxu0 0
      %358 = vmatpush1.bf16.msra.mxu0 0
      %359 = vmatprep.subr.bf16.mxu0 0
      %360 = vmatpush1.bf16.msra.mxu0 0
      %361 = vmatprep.mubr.bf16.mxu0 0
      %362 = vmatmul.mubr.bf16.gmra.mrb[0].mxu0 %v324
      %v363 = vpop.f32.mrb[0].mxu0
      %v364 = vadd.f32 %v296, %v363
      %v365 = vpop.f32.mrb[0].mxu0
      %v366 = vpop.f32.mrb[0].mxu0
      %v367 = vadd.f32 %v299, %v366
      %v368 = vpop.f32.mrb[0].mxu0
      %369 = vmatprep.mubr.bf16.mxu0 0
      %370 = vmatmul.mubr.bf16.gmra.mrb[0].mxu0 %v327
      %v371 = vpop.f32.mrb[0].mxu0
      %v372 = vadd.f32 %v304, %v371
      %v373 = vpop.f32.mrb[0].mxu0
      %v374 = vpop.f32.mrb[0].mxu0
      %v375 = vpop.f32.mrb[0].mxu0
      %376 = vdwg.mxu0
      %s377 = scalar_lea.vmem %s219, 24
      %v378 = vld [vmem:[%s377] sm:$0xf]
      %v379 = vld [vmem:[%s377 + $0x4] sm:$0xf]
      %v380 = vld [vmem:[%s377 + $0x8] sm:$0x3]
      %v381 = vld [vmem:[%s1 + $0x10] sm:$0xf]
      %v382 = vld [vmem:[%s1 + $0x14] sm:$0xf]
      %v386 = vunpack.c.l.b16 %v378
      %v387 = vunpack.c.l.b16 %v379
      %v388 = vunpack.c.l.b16 %v380
      %v389 = vpack.c.b16 %v387, %v386
      %v390 = vpack.c.b16 %v388, %v388
      %v393 = vunpack.c.l.b16 %v381
      %v394 = vunpack.c.l.b16 %v382
      %v395 = vpack.c.b16 %v394, %v393
      %v398 = vsel %vm254, %v389, 0
      %v401 = vsel %vm254, %v390, 0
      %403 = vmatprep.subr.bf16.mxu0 0
      %404 = vmatpush1.bf16.msra.mxu0 %v395
      %405 = vmatprep.subr.bf16.mxu0 0
      %406 = vmatpush1.bf16.msra.mxu0 0
      %407 = vmatprep.subr.bf16.mxu0 0
      %408 = vmatpush1.bf16.msra.mxu0 0
      %409 = vmatprep.subr.bf16.mxu0 0
      %410 = vmatpush1.bf16.msra.mxu0 0
      %411 = vmatprep.subr.bf16.mxu0 0
      %412 = vmatpush1.bf16.msra.mxu0 0
      %413 = vmatprep.subr.bf16.mxu0 0
      %414 = vmatpush1.bf16.msra.mxu0 0
      %415 = vmatprep.subr.bf16.mxu0 0
      %416 = vmatpush1.bf16.msra.mxu0 0
      %417 = vmatprep.subr.bf16.mxu0 0
      %418 = vmatpush1.bf16.msra.mxu0 0
      %419 = vmatprep.subr.bf16.mxu0 0
      %420 = vmatpush1.bf16.msra.mxu0 0
      %421 = vmatprep.subr.bf16.mxu0 0
      %422 = vmatpush1.bf16.msra.mxu0 0
      %423 = vmatprep.subr.bf16.mxu0 0
      %424 = vmatpush1.bf16.msra.mxu0 0
      %425 = vmatprep.subr.bf16.mxu0 0
      %426 = vmatpush1.bf16.msra.mxu0 0
      %427 = vmatprep.subr.bf16.mxu0 0
      %428 = vmatpush1.bf16.msra.mxu0 0
      %429 = vmatprep.subr.bf16.mxu0 0
      %430 = vmatpush1.bf16.msra.mxu0 0
      %431 = vmatprep.subr.bf16.mxu0 0
      %432 = vmatpush1.bf16.msra.mxu0 0
      %433 = vmatprep.subr.bf16.mxu0 0
      %434 = vmatpush1.bf16.msra.mxu0 0
      %435 = vmatprep.mubr.bf16.mxu0 0
      %436 = vmatmul.mubr.bf16.gmra.mrb[0].mxu0 %v398
      %v437 = vpop.f32.mrb[0].mxu0
      %v438 = vadd.f32 0.0, %v437
      %v439 = vpop.f32.mrb[0].mxu0
      %v440 = vpop.f32.mrb[0].mxu0
      %v441 = vadd.f32 0.0, %v440
      %v442 = vpop.f32.mrb[0].mxu0
      %443 = vmatprep.mubr.bf16.mxu0 0
      %444 = vmatmul.mubr.bf16.gmra.mrb[0].mxu0 %v401
      %v445 = vpop.f32.mrb[0].mxu0
      %v446 = vadd.f32 0.0, %v445
      %v447 = vpop.f32.mrb[0].mxu0
      %v448 = vpop.f32.mrb[0].mxu0
      %v449 = vpop.f32.mrb[0].mxu0
      %450 = vdwg.mxu0
      %v451 = vadd.f32 %v364, %v438
      %v452 = vadd.f32 %v367, %v441
      %v453 = vadd.f32 %v372, %v446
      %v454 = vld [vmem:[%s1 + $0x18] sm:$0xf]
      %v455 = vld [vmem:[%s1 + $0x1c] sm:$0xf]
      %vm456 = vsmask.f32 7424
      %v457 = vshrl.u32 %v315, 16
      %v459 = vshll.u32 %v315, 16
      %v461 = vrot.slane %v459, 1
      %v462 = vor.u32 %v457, %v461
      %v463 = vshll.u32 %v316, 16
      %v465 = vrot.slane %v463, 1
      %v466 = vsel %vm456, %v462, %v465
      %v467 = vshrl.u32 %v316, 16
      %v469 = vor.u32 %v467, %v465
      %v472 = vunpack.c.l.b16 %v454
      %v473 = vunpack.c.l.b16 %v455
      %v474 = vpack.c.b16 %v473, %v472
      %v477 = vsel %vm254, %v466, 0
      %v480 = vsel %vm254, %v469, 0
      %482 = vmatprep.subr.bf16.mxu0 0
      %483 = vmatpush1.bf16.msra.mxu0 %v474
      %484 = vmatprep.subr.bf16.mxu0 0
      %485 = vmatpush1.bf16.msra.mxu0 0
      %486 = vmatprep.subr.bf16.mxu0 0
      %487 = vmatpush1.bf16.msra.mxu0 0
      %488 = vmatprep.subr.bf16.mxu0 0
      %489 = vmatpush1.bf16.msra.mxu0 0
      %490 = vmatprep.subr.bf16.mxu0 0
      %491 = vmatpush1.bf16.msra.mxu0 0
      %492 = vmatprep.subr.bf16.mxu0 0
      %493 = vmatpush1.bf16.msra.mxu0 0
      %494 = vmatprep.subr.bf16.mxu0 0
      %495 = vmatpush1.bf16.msra.mxu0 0
      %496 = vmatprep.subr.bf16.mxu0 0
      %497 = vmatpush1.bf16.msra.mxu0 0
      %498 = vmatprep.subr.bf16.mxu0 0
      %499 = vmatpush1.bf16.msra.mxu0 0
      %500 = vmatprep.subr.bf16.mxu0 0
      %501 = vmatpush1.bf16.msra.mxu0 0
      %502 = vmatprep.subr.bf16.mxu0 0
      %503 = vmatpush1.bf16.msra.mxu0 0
      %504 = vmatprep.subr.bf16.mxu0 0
      %505 = vmatpush1.bf16.msra.mxu0 0
      %506 = vmatprep.subr.bf16.mxu0 0
      %507 = vmatpush1.bf16.msra.mxu0 0
      %508 = vmatprep.subr.bf16.mxu0 0
      %509 = vmatpush1.bf16.msra.mxu0 0
      %510 = vmatprep.subr.bf16.mxu0 0
      %511 = vmatpush1.bf16.msra.mxu0 0
      %512 = vmatprep.subr.bf16.mxu0 0
      %513 = vmatpush1.bf16.msra.mxu0 0
      %514 = vmatprep.mubr.bf16.mxu0 0
      %515 = vmatmul.mubr.bf16.gmra.mrb[0].mxu0 %v477
      %v516 = vpop.f32.mrb[0].mxu0
      %v517 = vadd.f32 0.0, %v516
      %v518 = vpop.f32.mrb[0].mxu0
      %v519 = vpop.f32.mrb[0].mxu0
      %v520 = vadd.f32 0.0, %v519
      %v521 = vpop.f32.mrb[0].mxu0
      %522 = vmatprep.mubr.bf16.mxu0 0
      %523 = vmatmul.mubr.bf16.gmra.mrb[0].mxu0 %v480
      %v524 = vpop.f32.mrb[0].mxu0
      %v525 = vadd.f32 0.0, %v524
      %v526 = vpop.f32.mrb[0].mxu0
      %v527 = vpop.f32.mrb[0].mxu0
      %v528 = vpop.f32.mrb[0].mxu0
      %529 = vdwg.mxu0
      %v530 = vadd.f32 %v451, %v517
      %v531 = vadd.f32 %v452, %v520
      %v532 = vadd.f32 %v453, %v525
      %v533 = vld [vmem:[%s1 + $0x20] sm:$0xf]
      %v534 = vld [vmem:[%s1 + $0x24] sm:$0xf]
      %v535 = vshrl.u32 %v246, 16
      %v537 = vshll.u32 %v246, 16
      %v539 = vrot.slane %v537, 1
      %v540 = vor.u32 %v535, %v539
      %v541 = vshll.u32 %v247, 16
      %v543 = vrot.slane %v541, 1
      %v544 = vsel %vm456, %v540, %v543
      %v545 = vshrl.u32 %v247, 16
      %v547 = vor.u32 %v545, %v543
      %v550 = vunpack.c.l.b16 %v533
      %v551 = vunpack.c.l.b16 %v534
      %v552 = vpack.c.b16 %v551, %v550
      %v555 = vsel %vm254, %v544, 0
      %v558 = vsel %vm254, %v547, 0
      %560 = vmatprep.subr.bf16.mxu0 0
      %561 = vmatpush1.bf16.msra.mxu0 %v552
      %562 = vmatprep.subr.bf16.mxu0 0
      %563 = vmatpush1.bf16.msra.mxu0 0
      %564 = vmatprep.subr.bf16.mxu0 0
      %565 = vmatpush1.bf16.msra.mxu0 0
      %566 = vmatprep.subr.bf16.mxu0 0
      %567 = vmatpush1.bf16.msra.mxu0 0
      %568 = vmatprep.subr.bf16.mxu0 0
      %569 = vmatpush1.bf16.msra.mxu0 0
      %570 = vmatprep.subr.bf16.mxu0 0
      %571 = vmatpush1.bf16.msra.mxu0 0
      %572 = vmatprep.subr.bf16.mxu0 0
      %573 = vmatpush1.bf16.msra.mxu0 0
      %574 = vmatprep.subr.bf16.mxu0 0
      %575 = vmatpush1.bf16.msra.mxu0 0
      %576 = vmatprep.subr.bf16.mxu0 0
      %577 = vmatpush1.bf16.msra.mxu0 0
      %578 = vmatprep.subr.bf16.mxu0 0
      %579 = vmatpush1.bf16.msra.mxu0 0
      %580 = vmatprep.subr.bf16.mxu0 0
      %581 = vmatpush1.bf16.msra.mxu0 0
      %582 = vmatprep.subr.bf16.mxu0 0
      %583 = vmatpush1.bf16.msra.mxu0 0
      %584 = vmatprep.subr.bf16.mxu0 0
      %585 = vmatpush1.bf16.msra.mxu0 0
      %586 = vmatprep.subr.bf16.mxu0 0
      %587 = vmatpush1.bf16.msra.mxu0 0
      %588 = vmatprep.subr.bf16.mxu0 0
      %589 = vmatpush1.bf16.msra.mxu0 0
      %590 = vmatprep.subr.bf16.mxu0 0
      %591 = vmatpush1.bf16.msra.mxu0 0
      %592 = vmatprep.mubr.bf16.mxu0 0
      %593 = vmatmul.mubr.bf16.gmra.mrb[0].mxu0 %v555
      %v594 = vpop.f32.mrb[0].mxu0
      %v595 = vadd.f32 0.0, %v594
      %v596 = vpop.f32.mrb[0].mxu0
      %v597 = vpop.f32.mrb[0].mxu0
      %v598 = vadd.f32 0.0, %v597
      %v599 = vpop.f32.mrb[0].mxu0
      %600 = vmatprep.mubr.bf16.mxu0 0
      %601 = vmatmul.mubr.bf16.gmra.mrb[0].mxu0 %v558
      %v602 = vpop.f32.mrb[0].mxu0
      %v603 = vadd.f32 0.0, %v602
      %v604 = vpop.f32.mrb[0].mxu0
      %v605 = vpop.f32.mrb[0].mxu0
      %v606 = vpop.f32.mrb[0].mxu0
      %607 = vdwg.mxu0
      %v608 = vadd.f32 %v530, %v595
      %v609 = vadd.f32 %v531, %v598
      %v610 = vadd.f32 %v532, %v603
      %v611 = vld [vmem:[%s1 + $0x28] sm:$0xf]
      %v612 = vld [vmem:[%s1 + $0x2c] sm:$0xf]
      %v613 = vshrl.u32 %v389, 16
      %v615 = vshll.u32 %v389, 16
      %v617 = vrot.slane %v615, 1
      %v618 = vor.u32 %v613, %v617
      %v619 = vshll.u32 %v390, 16
      %v621 = vrot.slane %v619, 1
      %v622 = vsel %vm456, %v618, %v621
      %v623 = vshrl.u32 %v390, 16
      %v625 = vor.u32 %v623, %v621
      %v628 = vunpack.c.l.b16 %v611
      %v629 = vunpack.c.l.b16 %v612
      %v630 = vpack.c.b16 %v629, %v628
      %v633 = vsel %vm254, %v622, 0
      %v636 = vsel %vm254, %v625, 0
      %638 = vmatprep.subr.bf16.mxu0 0
      %639 = vmatpush1.bf16.msra.mxu0 %v630
      %640 = vmatprep.subr.bf16.mxu0 0
      %641 = vmatpush1.bf16.msra.mxu0 0
      %642 = vmatprep.subr.bf16.mxu0 0
      %643 = vmatpush1.bf16.msra.mxu0 0
      %644 = vmatprep.subr.bf16.mxu0 0
      %645 = vmatpush1.bf16.msra.mxu0 0
      %646 = vmatprep.subr.bf16.mxu0 0
      %647 = vmatpush1.bf16.msra.mxu0 0
      %648 = vmatprep.subr.bf16.mxu0 0
      %649 = vmatpush1.bf16.msra.mxu0 0
      %650 = vmatprep.subr.bf16.mxu0 0
      %651 = vmatpush1.bf16.msra.mxu0 0
      %652 = vmatprep.subr.bf16.mxu0 0
      %653 = vmatpush1.bf16.msra.mxu0 0
      %654 = vmatprep.subr.bf16.mxu0 0
      %655 = vmatpush1.bf16.msra.mxu0 0
      %656 = vmatprep.subr.bf16.mxu0 0
      %657 = vmatpush1.bf16.msra.mxu0 0
      %658 = vmatprep.subr.bf16.mxu0 0
      %659 = vmatpush1.bf16.msra.mxu0 0
      %660 = vmatprep.subr.bf16.mxu0 0
      %661 = vmatpush1.bf16.msra.mxu0 0
      %662 = vmatprep.subr.bf16.mxu0 0
      %663 = vmatpush1.bf16.msra.mxu0 0
      %664 = vmatprep.subr.bf16.mxu0 0
      %665 = vmatpush1.bf16.msra.mxu0 0
      %666 = vmatprep.subr.bf16.mxu0 0
      %667 = vmatpush1.bf16.msra.mxu0 0
      %668 = vmatprep.subr.bf16.mxu0 0
      %669 = vmatpush1.bf16.msra.mxu0 0
      %670 = vmatprep.mubr.bf16.mxu0 0
      %671 = vmatmul.mubr.bf16.gmra.mrb[0].mxu0 %v633
      %v672 = vpop.f32.mrb[0].mxu0
      %v673 = vadd.f32 0.0, %v672
      %v674 = vpop.f32.mrb[0].mxu0
      %v675 = vpop.f32.mrb[0].mxu0
      %v676 = vadd.f32 0.0, %v675
      %v677 = vpop.f32.mrb[0].mxu0
      %678 = vmatprep.mubr.bf16.mxu0 0
      %679 = vmatmul.mubr.bf16.gmra.mrb[0].mxu0 %v636
      %v680 = vpop.f32.mrb[0].mxu0
      %v681 = vadd.f32 0.0, %v680
      %v682 = vpop.f32.mrb[0].mxu0
      %v683 = vpop.f32.mrb[0].mxu0
      %v684 = vpop.f32.mrb[0].mxu0
      %685 = vdwg.mxu0
      %v686 = vadd.f32 %v608, %v673
      %v687 = vadd.f32 %v609, %v676
      %v688 = vadd.f32 %v610, %v681
      %v689 = vld [vmem:[%s219] sm:$0xe]
      %v690 = vld [vmem:[%s219 + $0x8] sm:$0x7]
      %v691 = vld [vmem:[%s1 + $0x30] sm:$0xf]
      %v692 = vld [vmem:[%s1 + $0x34] sm:$0xf]
      %v695 = vunpack.c.l.b16 %v689
      %v696 = vunpack.c.l.b16 %v690
      %v697 = vpack.c.b16 %v313, %v695
      %v698 = vpack.c.b16 %v696, %v696
      %vm699 = vcmask 1046528
      %v700 = vrot.slane %v697, 1
      %v701 = vrot.slane %v698, 1
      %v702 = vsel %vm699, %v700, %v701
      %v705 = vunpack.c.l.b16 %v691
      %v706 = vunpack.c.l.b16 %v692
      %v707 = vpack.c.b16 %v706, %v705
      %v710 = vsel %vm254, %v702, 0
      %v713 = vsel %vm254, %v701, 0
      %715 = vmatprep.subr.bf16.mxu0 0
      %716 = vmatpush1.bf16.msra.mxu0 %v707
      %717 = vmatprep.subr.bf16.mxu0 0
      %718 = vmatpush1.bf16.msra.mxu0 0
      %719 = vmatprep.subr.bf16.mxu0 0
      %720 = vmatpush1.bf16.msra.mxu0 0
      %721 = vmatprep.subr.bf16.mxu0 0
      %722 = vmatpush1.bf16.msra.mxu0 0
      %723 = vmatprep.subr.bf16.mxu0 0
      %724 = vmatpush1.bf16.msra.mxu0 0
      %725 = vmatprep.subr.bf16.mxu0 0
      %726 = vmatpush1.bf16.msra.mxu0 0
      %727 = vmatprep.subr.bf16.mxu0 0
      %728 = vmatpush1.bf16.msra.mxu0 0
      %729 = vmatprep.subr.bf16.mxu0 0
      %730 = vmatpush1.bf16.msra.mxu0 0
      %731 = vmatprep.subr.bf16.mxu0 0
      %732 = vmatpush1.bf16.msra.mxu0 0
      %733 = vmatprep.subr.bf16.mxu0 0
      %734 = vmatpush1.bf16.msra.mxu0 0
      %735 = vmatprep.subr.bf16.mxu0 0
      %736 = vmatpush1.bf16.msra.mxu0 0
      %737 = vmatprep.subr.bf16.mxu0 0
      %738 = vmatpush1.bf16.msra.mxu0 0
      %739 = vmatprep.subr.bf16.mxu0 0
      %740 = vmatpush1.bf16.msra.mxu0 0
      %741 = vmatprep.subr.bf16.mxu0 0
      %742 = vmatpush1.bf16.msra.mxu0 0
      %743 = vmatprep.subr.bf16.mxu0 0
      %744 = vmatpush1.bf16.msra.mxu0 0
      %745 = vmatprep.subr.bf16.mxu0 0
      %746 = vmatpush1.bf16.msra.mxu0 0
      %747 = vmatprep.mubr.bf16.mxu0 0
      %748 = vmatmul.mubr.bf16.gmra.mrb[0].mxu0 %v710
      %v749 = vpop.f32.mrb[0].mxu0
      %v750 = vadd.f32 0.0, %v749
      %v751 = vpop.f32.mrb[0].mxu0
      %v752 = vpop.f32.mrb[0].mxu0
      %v753 = vadd.f32 0.0, %v752
      %v754 = vpop.f32.mrb[0].mxu0
      %755 = vmatprep.mubr.bf16.mxu0 0
      %756 = vmatmul.mubr.bf16.gmra.mrb[0].mxu0 %v713
      %v757 = vpop.f32.mrb[0].mxu0
      %v758 = vadd.f32 0.0, %v757
      %v759 = vpop.f32.mrb[0].mxu0
      %v760 = vpop.f32.mrb[0].mxu0
      %v761 = vpop.f32.mrb[0].mxu0
      %762 = vdwg.mxu0
      %v763 = vadd.f32 %v686, %v750
      %v764 = vadd.f32 %v687, %v753
      %v765 = vadd.f32 %v688, %v758
      %v767 = vlaneseq
      %v768 = vshrl.u32 %v767, 7
      %v769 = vsub.s32 0, %v768
      %v770 = vrot.slane %v226, %v769
      %v772 = vadd.f32 %v763, %v770
      %v773 = vadd.f32 %v764, %v770
      %v774 = vadd.f32 %v765, %v770
      %vm775 = vcmp.gt.f32.partialorder %v772, 0.0
      %vm776 = vcmp.gt.f32.partialorder %v773, 0.0
      %vm777 = vcmp.gt.f32.partialorder %v774, 0.0
      %v778 = vmul.f32 %v772, 0.2
      %v779 = vmul.f32 %v773, 0.2
      %v780 = vmul.f32 %v774, 0.2
      %v781 = vsel %vm775, %v772, %v778
      %v782 = vsel %vm776, %v773, %v779
      %v783 = vsel %vm777, %v774, %v780
      %s784 = scalar_lea.vmem %s219, 36
      %v785 = vld [vmem:[%s784] sm:$0xf]
      %v786 = vld [vmem:[%s784 + $0x4] sm:$0xf]
      %v787 = vld [vmem:[%s784 + $0x8] sm:$0x3]
      %s788 = scalar_lea.vmem %s219, 48
      %v789 = vld [vmem:[%s788] sm:$0xf]
      %v790 = vld [vmem:[%s788 + $0x4] sm:$0xf]
      %v791 = vld [vmem:[%s788 + $0x8] sm:$0x3]
      %v795 = vunpack.c.l.b16 %v789
      %v796 = vunpack.c.l.b16 %v790
      %v797 = vunpack.c.l.b16 %v791
      %v798 = vpack.c.b16 %v796, %v795
      %v799 = vpack.c.b16 %v797, %v797
      %v801 = vsel %vm254, %v798, 0
      %v804 = vsel %vm254, %v799, 0
      %806 = vmatprep.subr.bf16.mxu0 0
      %807 = vmatpush1.bf16.msra.mxu0 %v252
      %808 = vmatprep.subr.bf16.mxu0 0
      %809 = vmatpush1.bf16.msra.mxu0 0
      %810 = vmatprep.subr.bf16.mxu0 0
      %811 = vmatpush1.bf16.msra.mxu0 0
      %812 = vmatprep.subr.bf16.mxu0 0
      %813 = vmatpush1.bf16.msra.mxu0 0
      %814 = vmatprep.subr.bf16.mxu0 0
      %815 = vmatpush1.bf16.msra.mxu0 0
      %816 = vmatprep.subr.bf16.mxu0 0
      %817 = vmatpush1.bf16.msra.mxu0 0
      %818 = vmatprep.subr.bf16.mxu0 0
      %819 = vmatpush1.bf16.msra.mxu0 0
      %820 = vmatprep.subr.bf16.mxu0 0
      %821 = vmatpush1.bf16.msra.mxu0 0
      %822 = vmatprep.subr.bf16.mxu0 0
      %823 = vmatpush1.bf16.msra.mxu0 0
      %824 = vmatprep.subr.bf16.mxu0 0
      %825 = vmatpush1.bf16.msra.mxu0 0
      %826 = vmatprep.subr.bf16.mxu0 0
      %827 = vmatpush1.bf16.msra.mxu0 0
      %828 = vmatprep.subr.bf16.mxu0 0
      %829 = vmatpush1.bf16.msra.mxu0 0
      %830 = vmatprep.subr.bf16.mxu0 0
      %831 = vmatpush1.bf16.msra.mxu0 0
      %832 = vmatprep.subr.bf16.mxu0 0
      %833 = vmatpush1.bf16.msra.mxu0 0
      %834 = vmatprep.subr.bf16.mxu0 0
      %835 = vmatpush1.bf16.msra.mxu0 0
      %836 = vmatprep.subr.bf16.mxu0 0
      %837 = vmatpush1.bf16.msra.mxu0 0
      %838 = vmatprep.mubr.bf16.mxu0 0
      %839 = vmatmul.mubr.bf16.gmra.mrb[0].mxu0 %v801
      %v840 = vpop.f32.mrb[0].mxu0
      %v841 = vadd.f32 0.0, %v840
      %v842 = vpop.f32.mrb[0].mxu0
      %v843 = vpop.f32.mrb[0].mxu0
      %v844 = vadd.f32 0.0, %v843
      %v845 = vpop.f32.mrb[0].mxu0
      %846 = vmatprep.mubr.bf16.mxu0 0
      %847 = vmatmul.mubr.bf16.gmra.mrb[0].mxu0 %v804
      %v848 = vpop.f32.mrb[0].mxu0
      %v849 = vadd.f32 0.0, %v848
      %v850 = vpop.f32.mrb[0].mxu0
      %v851 = vpop.f32.mrb[0].mxu0
      %v852 = vpop.f32.mrb[0].mxu0
      %853 = vdwg.mxu0
      %v857 = vunpack.c.l.b16 %v785
      %v858 = vunpack.c.l.b16 %v786
      %v859 = vunpack.c.l.b16 %v787
      %v860 = vpack.c.b16 %v858, %v857
      %v861 = vpack.c.b16 %v859, %v859
      %v863 = vsel %vm254, %v860, 0
      %v866 = vsel %vm254, %v861, 0
      %868 = vmatprep.subr.bf16.mxu0 0
      %869 = vmatpush1.bf16.msra.mxu0 %v321
      %870 = vmatprep.subr.bf16.mxu0 0
      %871 = vmatpush1.bf16.msra.mxu0 0
      %872 = vmatprep.subr.bf16.mxu0 0
      %873 = vmatpush1.bf16.msra.mxu0 0
      %874 = vmatprep.subr.bf16.mxu0 0
      %875 = vmatpush1.bf16.msra.mxu0 0
      %876 = vmatprep.subr.bf16.mxu0 0
      %877 = vmatpush1.bf16.msra.mxu0 0
      %878 = vmatprep.subr.bf16.mxu0 0
      %879 = vmatpush1.bf16.msra.mxu0 0
      %880 = vmatprep.subr.bf16.mxu0 0
      %881 = vmatpush1.bf16.msra.mxu0 0
      %882 = vmatprep.subr.bf16.mxu0 0
      %883 = vmatpush1.bf16.msra.mxu0 0
      %884 = vmatprep.subr.bf16.mxu0 0
      %885 = vmatpush1.bf16.msra.mxu0 0
      %886 = vmatprep.subr.bf16.mxu0 0
      %887 = vmatpush1.bf16.msra.mxu0 0
      %888 = vmatprep.subr.bf16.mxu0 0
      %889 = vmatpush1.bf16.msra.mxu0 0
      %890 = vmatprep.subr.bf16.mxu0 0
      %891 = vmatpush1.bf16.msra.mxu0 0
      %892 = vmatprep.subr.bf16.mxu0 0
      %893 = vmatpush1.bf16.msra.mxu0 0
      %894 = vmatprep.subr.bf16.mxu0 0
      %895 = vmatpush1.bf16.msra.mxu0 0
      %896 = vmatprep.subr.bf16.mxu0 0
      %897 = vmatpush1.bf16.msra.mxu0 0
      %898 = vmatprep.subr.bf16.mxu0 0
      %899 = vmatpush1.bf16.msra.mxu0 0
      %900 = vmatprep.mubr.bf16.mxu0 0
      %901 = vmatmul.mubr.bf16.gmra.mrb[0].mxu0 %v863
      %v902 = vpop.f32.mrb[0].mxu0
      %v903 = vadd.f32 %v841, %v902
      %v904 = vpop.f32.mrb[0].mxu0
      %v905 = vpop.f32.mrb[0].mxu0
      %v906 = vadd.f32 %v844, %v905
      %v907 = vpop.f32.mrb[0].mxu0
      %908 = vmatprep.mubr.bf16.mxu0 0
      %909 = vmatmul.mubr.bf16.gmra.mrb[0].mxu0 %v866
      %v910 = vpop.f32.mrb[0].mxu0
      %v911 = vadd.f32 %v849, %v910
      %v912 = vpop.f32.mrb[0].mxu0
      %v913 = vpop.f32.mrb[0].mxu0
      %v914 = vpop.f32.mrb[0].mxu0
      %915 = vdwg.mxu0
      %s916 = scalar_lea.vmem %s219, 60
      %v917 = vld [vmem:[%s916] sm:$0xf]
      %v918 = vld [vmem:[%s916 + $0x4] sm:$0xf]
      %v919 = vld [vmem:[%s916 + $0x8] sm:$0x3]
      %v923 = vunpack.c.l.b16 %v917
      %v924 = vunpack.c.l.b16 %v918
      %v925 = vunpack.c.l.b16 %v919
      %v926 = vpack.c.b16 %v924, %v923
      %v927 = vpack.c.b16 %v925, %v925
      %v929 = vsel %vm254, %v926, 0
      %v932 = vsel %vm254, %v927, 0
      %934 = vmatprep.subr.bf16.mxu0 0
      %935 = vmatpush1.bf16.msra.mxu0 %v395
      %936 = vmatprep.subr.bf16.mxu0 0
      %937 = vmatpush1.bf16.msra.mxu0 0
      %938 = vmatprep.subr.bf16.mxu0 0
      %939 = vmatpush1.bf16.msra.mxu0 0
      %940 = vmatprep.subr.bf16.mxu0 0
      %941 = vmatpush1.bf16.msra.mxu0 0
      %942 = vmatprep.subr.bf16.mxu0 0
      %943 = vmatpush1.bf16.msra.mxu0 0
      %944 = vmatprep.subr.bf16.mxu0 0
      %945 = vmatpush1.bf16.msra.mxu0 0
      %946 = vmatprep.subr.bf16.mxu0 0
      %947 = vmatpush1.bf16.msra.mxu0 0
      %948 = vmatprep.subr.bf16.mxu0 0
      %949 = vmatpush1.bf16.msra.mxu0 0
      %950 = vmatprep.subr.bf16.mxu0 0
      %951 = vmatpush1.bf16.msra.mxu0 0
      %952 = vmatprep.subr.bf16.mxu0 0
      %953 = vmatpush1.bf16.msra.mxu0 0
      %954 = vmatprep.subr.bf16.mxu0 0
      %955 = vmatpush1.bf16.msra.mxu0 0
      %956 = vmatprep.subr.bf16.mxu0 0
      %957 = vmatpush1.bf16.msra.mxu0 0
      %958 = vmatprep.subr.bf16.mxu0 0
      %959 = vmatpush1.bf16.msra.mxu0 0
      %960 = vmatprep.subr.bf16.mxu0 0
      %961 = vmatpush1.bf16.msra.mxu0 0
      %962 = vmatprep.subr.bf16.mxu0 0
      %963 = vmatpush1.bf16.msra.mxu0 0
      %964 = vmatprep.subr.bf16.mxu0 0
      %965 = vmatpush1.bf16.msra.mxu0 0
      %966 = vmatprep.mubr.bf16.mxu0 0
      %967 = vmatmul.mubr.bf16.gmra.mrb[0].mxu0 %v929
      %v968 = vpop.f32.mrb[0].mxu0
      %v969 = vadd.f32 0.0, %v968
      %v970 = vpop.f32.mrb[0].mxu0
      %v971 = vpop.f32.mrb[0].mxu0
      %v972 = vadd.f32 0.0, %v971
      %v973 = vpop.f32.mrb[0].mxu0
      %974 = vmatprep.mubr.bf16.mxu0 0
      %975 = vmatmul.mubr.bf16.gmra.mrb[0].mxu0 %v932
      %v976 = vpop.f32.mrb[0].mxu0
      %v977 = vadd.f32 0.0, %v976
      %v978 = vpop.f32.mrb[0].mxu0
      %v979 = vpop.f32.mrb[0].mxu0
      %v980 = vpop.f32.mrb[0].mxu0
      %981 = vdwg.mxu0
      %v982 = vadd.f32 %v903, %v969
      %v983 = vadd.f32 %v906, %v972
      %v984 = vadd.f32 %v911, %v977
      %v985 = vshrl.u32 %v860, 16
      %v987 = vshll.u32 %v860, 16
      %v989 = vrot.slane %v987, 1
      %v990 = vor.u32 %v985, %v989
      %v991 = vshll.u32 %v861, 16
      %v993 = vrot.slane %v991, 1
      %v994 = vsel %vm456, %v990, %v993
      %v995 = vshrl.u32 %v861, 16
      %v997 = vor.u32 %v995, %v993
      %v999 = vsel %vm254, %v994, 0
      %v1002 = vsel %vm254, %v997, 0
      %1004 = vmatprep.subr.bf16.mxu0 0
      %1005 = vmatpush1.bf16.msra.mxu0 %v474
      %1006 = vmatprep.subr.bf16.mxu0 0
      %1007 = vmatpush1.bf16.msra.mxu0 0
      %1008 = vmatprep.subr.bf16.mxu0 0
      %1009 = vmatpush1.bf16.msra.mxu0 0
      %1010 = vmatprep.subr.bf16.mxu0 0
      %1011 = vmatpush1.bf16.msra.mxu0 0
      %1012 = vmatprep.subr.bf16.mxu0 0
      %1013 = vmatpush1.bf16.msra.mxu0 0
      %1014 = vmatprep.subr.bf16.mxu0 0
      %1015 = vmatpush1.bf16.msra.mxu0 0
      %1016 = vmatprep.subr.bf16.mxu0 0
      %1017 = vmatpush1.bf16.msra.mxu0 0
      %1018 = vmatprep.subr.bf16.mxu0 0
      %1019 = vmatpush1.bf16.msra.mxu0 0
      %1020 = vmatprep.subr.bf16.mxu0 0
      %1021 = vmatpush1.bf16.msra.mxu0 0
      %1022 = vmatprep.subr.bf16.mxu0 0
      %1023 = vmatpush1.bf16.msra.mxu0 0
      %1024 = vmatprep.subr.bf16.mxu0 0
      %1025 = vmatpush1.bf16.msra.mxu0 0
      %1026 = vmatprep.subr.bf16.mxu0 0
      %1027 = vmatpush1.bf16.msra.mxu0 0
      %1028 = vmatprep.subr.bf16.mxu0 0
      %1029 = vmatpush1.bf16.msra.mxu0 0
      %1030 = vmatprep.subr.bf16.mxu0 0
      %1031 = vmatpush1.bf16.msra.mxu0 0
      %1032 = vmatprep.subr.bf16.mxu0 0
      %1033 = vmatpush1.bf16.msra.mxu0 0
      %1034 = vmatprep.subr.bf16.mxu0 0
      %1035 = vmatpush1.bf16.msra.mxu0 0
      %1036 = vmatprep.mubr.bf16.mxu0 0
      %1037 = vmatmul.mubr.bf16.gmra.mrb[0].mxu0 %v999
      %v1038 = vpop.f32.mrb[0].mxu0
      %v1039 = vadd.f32 0.0, %v1038
      %v1040 = vpop.f32.mrb[0].mxu0
      %v1041 = vpop.f32.mrb[0].mxu0
      %v1042 = vadd.f32 0.0, %v1041
      %v1043 = vpop.f32.mrb[0].mxu0
      %1044 = vmatprep.mubr.bf16.mxu0 0
      %1045 = vmatmul.mubr.bf16.gmra.mrb[0].mxu0 %v1002
      %v1046 = vpop.f32.mrb[0].mxu0
      %v1047 = vadd.f32 0.0, %v1046
      %v1048 = vpop.f32.mrb[0].mxu0
      %v1049 = vpop.f32.mrb[0].mxu0
      %v1050 = vpop.f32.mrb[0].mxu0
      %1051 = vdwg.mxu0
      %v1052 = vadd.f32 %v982, %v1039
      %v1053 = vadd.f32 %v983, %v1042
      %v1054 = vadd.f32 %v984, %v1047
      %v1055 = vshrl.u32 %v798, 16
      %v1057 = vshll.u32 %v798, 16
      %v1059 = vrot.slane %v1057, 1
      %v1060 = vor.u32 %v1055, %v1059
      %v1061 = vshll.u32 %v799, 16
      %v1063 = vrot.slane %v1061, 1
      %v1064 = vsel %vm456, %v1060, %v1063
      %v1065 = vshrl.u32 %v799, 16
      %v1067 = vor.u32 %v1065, %v1063
      %v1069 = vsel %vm254, %v1064, 0
      %v1072 = vsel %vm254, %v1067, 0
      %1074 = vmatprep.subr.bf16.mxu0 0
      %1075 = vmatpush1.bf16.msra.mxu0 %v552
      %1076 = vmatprep.subr.bf16.mxu0 0
      %1077 = vmatpush1.bf16.msra.mxu0 0
      %1078 = vmatprep.subr.bf16.mxu0 0
      %1079 = vmatpush1.bf16.msra.mxu0 0
      %1080 = vmatprep.subr.bf16.mxu0 0
      %1081 = vmatpush1.bf16.msra.mxu0 0
      %1082 = vmatprep.subr.bf16.mxu0 0
      %1083 = vmatpush1.bf16.msra.mxu0 0
      %1084 = vmatprep.subr.bf16.mxu0 0
      %1085 = vmatpush1.bf16.msra.mxu0 0
      %1086 = vmatprep.subr.bf16.mxu0 0
      %1087 = vmatpush1.bf16.msra.mxu0 0
      %1088 = vmatprep.subr.bf16.mxu0 0
      %1089 = vmatpush1.bf16.msra.mxu0 0
      %1090 = vmatprep.subr.bf16.mxu0 0
      %1091 = vmatpush1.bf16.msra.mxu0 0
      %1092 = vmatprep.subr.bf16.mxu0 0
      %1093 = vmatpush1.bf16.msra.mxu0 0
      %1094 = vmatprep.subr.bf16.mxu0 0
      %1095 = vmatpush1.bf16.msra.mxu0 0
      %1096 = vmatprep.subr.bf16.mxu0 0
      %1097 = vmatpush1.bf16.msra.mxu0 0
      %1098 = vmatprep.subr.bf16.mxu0 0
      %1099 = vmatpush1.bf16.msra.mxu0 0
      %1100 = vmatprep.subr.bf16.mxu0 0
      %1101 = vmatpush1.bf16.msra.mxu0 0
      %1102 = vmatprep.subr.bf16.mxu0 0
      %1103 = vmatpush1.bf16.msra.mxu0 0
      %1104 = vmatprep.subr.bf16.mxu0 0
      %1105 = vmatpush1.bf16.msra.mxu0 0
      %1106 = vmatprep.mubr.bf16.mxu0 0
      %1107 = vmatmul.mubr.bf16.gmra.mrb[0].mxu0 %v1069
      %v1108 = vpop.f32.mrb[0].mxu0
      %v1109 = vadd.f32 0.0, %v1108
      %v1110 = vpop.f32.mrb[0].mxu0
      %v1111 = vpop.f32.mrb[0].mxu0
      %v1112 = vadd.f32 0.0, %v1111
      %v1113 = vpop.f32.mrb[0].mxu0
      %1114 = vmatprep.mubr.bf16.mxu0 0
      %1115 = vmatmul.mubr.bf16.gmra.mrb[0].mxu0 %v1072
      %v1116 = vpop.f32.mrb[0].mxu0
      %v1117 = vadd.f32 0.0, %v1116
      %v1118 = vpop.f32.mrb[0].mxu0
      %v1119 = vpop.f32.mrb[0].mxu0
      %v1120 = vpop.f32.mrb[0].mxu0
      %1121 = vdwg.mxu0
      %v1122 = vadd.f32 %v1052, %v1109
      %v1123 = vadd.f32 %v1053, %v1112
      %v1124 = vadd.f32 %v1054, %v1117
      %v1125 = vshrl.u32 %v926, 16
      %v1127 = vshll.u32 %v926, 16
      %v1129 = vrot.slane %v1127, 1
      %v1130 = vor.u32 %v1125, %v1129
      %v1131 = vshll.u32 %v927, 16
      %v1133 = vrot.slane %v1131, 1
      %v1134 = vsel %vm456, %v1130, %v1133
      %v1135 = vshrl.u32 %v927, 16
      %v1137 = vor.u32 %v1135, %v1133
      %v1139 = vsel %vm254, %v1134, 0
      %v1142 = vsel %vm254, %v1137, 0
      %1144 = vmatprep.subr.bf16.mxu0 0
      %1145 = vmatpush1.bf16.msra.mxu0 %v630
      %1146 = vmatprep.subr.bf16.mxu0 0
      %1147 = vmatpush1.bf16.msra.mxu0 0
      %1148 = vmatprep.subr.bf16.mxu0 0
      %1149 = vmatpush1.bf16.msra.mxu0 0
      %1150 = vmatprep.subr.bf16.mxu0 0
      %1151 = vmatpush1.bf16.msra.mxu0 0
      %1152 = vmatprep.subr.bf16.mxu0 0
      %1153 = vmatpush1.bf16.msra.mxu0 0
      %1154 = vmatprep.subr.bf16.mxu0 0
      %1155 = vmatpush1.bf16.msra.mxu0 0
      %1156 = vmatprep.subr.bf16.mxu0 0
      %1157 = vmatpush1.bf16.msra.mxu0 0
      %1158 = vmatprep.subr.bf16.mxu0 0
      %1159 = vmatpush1.bf16.msra.mxu0 0
      %1160 = vmatprep.subr.bf16.mxu0 0
      %1161 = vmatpush1.bf16.msra.mxu0 0
      %1162 = vmatprep.subr.bf16.mxu0 0
      %1163 = vmatpush1.bf16.msra.mxu0 0
      %1164 = vmatprep.subr.bf16.mxu0 0
      %1165 = vmatpush1.bf16.msra.mxu0 0
      %1166 = vmatprep.subr.bf16.mxu0 0
      %1167 = vmatpush1.bf16.msra.mxu0 0
      %1168 = vmatprep.subr.bf16.mxu0 0
      %1169 = vmatpush1.bf16.msra.mxu0 0
      %1170 = vmatprep.subr.bf16.mxu0 0
      %1171 = vmatpush1.bf16.msra.mxu0 0
      %1172 = vmatprep.subr.bf16.mxu0 0
      %1173 = vmatpush1.bf16.msra.mxu0 0
      %1174 = vmatprep.subr.bf16.mxu0 0
      %1175 = vmatpush1.bf16.msra.mxu0 0
      %1176 = vmatprep.mubr.bf16.mxu0 0
      %1177 = vmatmul.mubr.bf16.gmra.mrb[0].mxu0 %v1139
      %v1178 = vpop.f32.mrb[0].mxu0
      %v1179 = vadd.f32 0.0, %v1178
      %v1180 = vpop.f32.mrb[0].mxu0
      %v1181 = vpop.f32.mrb[0].mxu0
      %v1182 = vadd.f32 0.0, %v1181
      %v1183 = vpop.f32.mrb[0].mxu0
      %1184 = vmatprep.mubr.bf16.mxu0 0
      %1185 = vmatmul.mubr.bf16.gmra.mrb[0].mxu0 %v1142
      %v1186 = vpop.f32.mrb[0].mxu0
      %v1187 = vadd.f32 0.0, %v1186
      %v1188 = vpop.f32.mrb[0].mxu0
      %v1189 = vpop.f32.mrb[0].mxu0
      %v1190 = vpop.f32.mrb[0].mxu0
      %1191 = vdwg.mxu0
      %v1192 = vadd.f32 %v1122, %v1179
      %v1193 = vadd.f32 %v1123, %v1182
      %v1194 = vadd.f32 %v1124, %v1187
      %v1195 = vld [vmem:[%s784] sm:$0xe]
      %v1196 = vld [vmem:[%s784 + $0x8] sm:$0x7]
      %v1199 = vunpack.c.l.b16 %v1195
      %v1200 = vunpack.c.l.b16 %v1196
      %v1201 = vpack.c.b16 %v858, %v1199
      %v1202 = vpack.c.b16 %v1200, %v1200
      %v1203 = vrot.slane %v1201, 1
      %v1204 = vrot.slane %v1202, 1
      %v1205 = vsel %vm699, %v1203, %v1204
      %v1207 = vsel %vm254, %v1205, 0
      %v1210 = vsel %vm254, %v1204, 0
      %1212 = vmatprep.subr.bf16.mxu0 0
      %1213 = vmatpush1.bf16.msra.mxu0 %v707
      %1214 = vmatprep.subr.bf16.mxu0 0
      %1215 = vmatpush1.bf16.msra.mxu0 0
      %1216 = vmatprep.subr.bf16.mxu0 0
      %1217 = vmatpush1.bf16.msra.mxu0 0
      %1218 = vmatprep.subr.bf16.mxu0 0
      %1219 = vmatpush1.bf16.msra.mxu0 0
      %1220 = vmatprep.subr.bf16.mxu0 0
      %1221 = vmatpush1.bf16.msra.mxu0 0
      %1222 = vmatprep.subr.bf16.mxu0 0
      %1223 = vmatpush1.bf16.msra.mxu0 0
      %1224 = vmatprep.subr.bf16.mxu0 0
      %1225 = vmatpush1.bf16.msra.mxu0 0
      %1226 = vmatprep.subr.bf16.mxu0 0
      %1227 = vmatpush1.bf16.msra.mxu0 0
      %1228 = vmatprep.subr.bf16.mxu0 0
      %1229 = vmatpush1.bf16.msra.mxu0 0
      %1230 = vmatprep.subr.bf16.mxu0 0
      %1231 = vmatpush1.bf16.msra.mxu0 0
      %1232 = vmatprep.subr.bf16.mxu0 0
      %1233 = vmatpush1.bf16.msra.mxu0 0
      %1234 = vmatprep.subr.bf16.mxu0 0
      %1235 = vmatpush1.bf16.msra.mxu0 0
      %1236 = vmatprep.subr.bf16.mxu0 0
      %1237 = vmatpush1.bf16.msra.mxu0 0
      %1238 = vmatprep.subr.bf16.mxu0 0
      %1239 = vmatpush1.bf16.msra.mxu0 0
      %1240 = vmatprep.subr.bf16.mxu0 0
      %1241 = vmatpush1.bf16.msra.mxu0 0
      %1242 = vmatprep.subr.bf16.mxu0 0
      %1243 = vmatpush1.bf16.msra.mxu0 0
      %1244 = vmatprep.mubr.bf16.mxu0 0
      %1245 = vmatmul.mubr.bf16.gmra.mrb[0].mxu0 %v1207
      %v1246 = vpop.f32.mrb[0].mxu0
      %v1247 = vadd.f32 0.0, %v1246
      %v1248 = vpop.f32.mrb[0].mxu0
      %v1249 = vpop.f32.mrb[0].mxu0
      %v1250 = vadd.f32 0.0, %v1249
      %v1251 = vpop.f32.mrb[0].mxu0
      %1252 = vmatprep.mubr.bf16.mxu0 0
      %1253 = vmatmul.mubr.bf16.gmra.mrb[0].mxu0 %v1210
      %v1254 = vpop.f32.mrb[0].mxu0
      %v1255 = vadd.f32 0.0, %v1254
      %v1256 = vpop.f32.mrb[0].mxu0
      %v1257 = vpop.f32.mrb[0].mxu0
      %v1258 = vpop.f32.mrb[0].mxu0
      %1259 = vdwg.mxu0
      %v1260 = vadd.f32 %v1192, %v1247
      %v1261 = vadd.f32 %v1193, %v1250
      %v1262 = vadd.f32 %v1194, %v1255
      %v1263 = vadd.f32 %v1260, %v770
      %v1264 = vadd.f32 %v1261, %v770
      %v1265 = vadd.f32 %v1262, %v770
      %vm1266 = vcmp.gt.f32.partialorder %v1263, 0.0
      %vm1267 = vcmp.gt.f32.partialorder %v1264, 0.0
      %vm1268 = vcmp.gt.f32.partialorder %v1265, 0.0
      %v1269 = vmul.f32 %v1263, 0.2
      %v1270 = vmul.f32 %v1264, 0.2
      %v1271 = vmul.f32 %v1265, 0.2
      %v1272 = vsel %vm1266, %v1263, %v1269
      %v1273 = vsel %vm1267, %v1264, %v1270
      %v1274 = vsel %vm1268, %v1265, %v1271
      %vm1275 = vcmask 261120
      %v1276 = vsel %vm1275, %v781, 0.0
      %v1277 = vsel %vm1275, %v782, 0.0
      %v1278 = vadd.f32 %v1276, %v1277
      %vm1279 = vcmask 256000
      %v1280 = vsel %vm1279, %v783, 0.0
      %v1281 = vadd.f32 %v1278, %v1280
      %v1282 = vrot.slane %v1281, 4
      %v1283 = vadd.f32 %v1281, %v1282
      %v1284 = vrot.slane %v1283, 2
      %v1285 = vadd.f32 %v1283, %v1284
      %v1286 = vrot.slane %v1285, 1
      %v1287 = vadd.f32 %v1285, %v1286
      %v1288 = vmul.f32 %v781, %v781
      %v1289 = vmul.f32 %v782, %v782
      %v1290 = vmul.f32 %v783, %v783
      %v1291 = vsel %vm1275, %v1288, 0.0
      %v1292 = vsel %vm1275, %v1289, 0.0
      %v1293 = vadd.f32 %v1291, %v1292
      %v1294 = vsel %vm1279, %v1290, 0.0
      %v1295 = vadd.f32 %v1293, %v1294
      %v1296 = vrot.slane %v1295, 4
      %v1297 = vadd.f32 %v1295, %v1296
      %v1298 = vrot.slane %v1297, 2
      %v1299 = vadd.f32 %v1297, %v1298
      %v1300 = vrot.slane %v1299, 1
      %v1301 = vadd.f32 %v1299, %v1300
      %v1302 = vsel %vm1275, %v1272, 0.0
      %v1303 = vsel %vm1275, %v1273, 0.0
      %v1304 = vadd.f32 %v1302, %v1303
      %v1305 = vsel %vm1279, %v1274, 0.0
      %v1306 = vadd.f32 %v1304, %v1305
      %v1307 = vrot.slane %v1306, 4
      %v1308 = vadd.f32 %v1306, %v1307
      %v1309 = vrot.slane %v1308, 2
      %v1310 = vadd.f32 %v1308, %v1309
      %v1311 = vrot.slane %v1310, 1
      %v1312 = vadd.f32 %v1310, %v1311
      %v1313 = vadd.f32 %v1287, %v1312
      %v1314 = vmul.f32 %v1272, %v1272
      %v1315 = vmul.f32 %v1273, %v1273
      %v1316 = vmul.f32 %v1274, %v1274
      %v1317 = vsel %vm1275, %v1314, 0.0
      %v1318 = vsel %vm1275, %v1315, 0.0
      %v1319 = vadd.f32 %v1317, %v1318
      %v1320 = vsel %vm1279, %v1316, 0.0
      %v1321 = vadd.f32 %v1319, %v1320
      %v1322 = vrot.slane %v1321, 4
      %v1323 = vadd.f32 %v1321, %v1322
      %v1324 = vrot.slane %v1323, 2
      %v1325 = vadd.f32 %v1323, %v1324
      %v1326 = vrot.slane %v1325, 1
      %v1327 = vadd.f32 %v1325, %v1326
      %v1328 = vadd.f32 %v1301, %v1327
      %v1329 = vmul.f32 %v1313, 0.02631579
      %v1330 = vmul.f32 %v1328, 0.02631579
      %v1331 = vmul.f32 %v1329, %v1329
      %v1332 = vsub.f32 %v1330, %v1331
      %v1333 = vadd.f32 %v1332, 1e-05
      %v1334 = vrsqrt.pop %v1333
      %v1335 = vmul.f32 %v227, %v1334
      %v1336 = vmul.f32 %v1329, %v1335
      %v1337 = vsub.f32 %v228, %v1336
      %v1339 = vlaneseq
      %v1340 = vshrl.u32 %v1339, 7
      %v1341 = vsub.s32 0, %v1340
      %v1342 = vrot.slane %v1335, %v1341
      %v1344 = vmul.f32 %v781, %v1342
      %v1345 = vmul.f32 %v782, %v1342
      %v1346 = vmul.f32 %v783, %v1342
      %v1348 = vlaneseq
      %v1349 = vshrl.u32 %v1348, 7
      %v1350 = vsub.s32 0, %v1349
      %v1351 = vrot.slane %v1337, %v1350
      %v1353 = vadd.f32 %v1344, %v1351
      %v1354 = vadd.f32 %v1345, %v1351
      %v1355 = vadd.f32 %v1346, %v1351
      %v1356 = vmul.f32 %v1272, %v1342
      %v1357 = vmul.f32 %v1273, %v1342
      %v1358 = vmul.f32 %v1274, %v1342
      %v1359 = vadd.f32 %v1356, %v1351
      %v1360 = vadd.f32 %v1357, %v1351
      %v1361 = vadd.f32 %v1358, %v1351
      %v1362 = vpack.c.bf16 %v1354, %v1353
      %v1363 = vpack.c.bf16 %v1355, %v1355
      %v1366 = vunpack.c.l.b16 %v1362
      %v1367 = vunpack.c.h.b16 %v1362
      %v1368 = vunpack.c.l.b16 %v1363
      %v1369 = vpack.c.b16 %v1366, %v1366
      %v1370 = vpack.c.b16 %v1367, %v1367
      %v1371 = vpack.c.b16 %v1368, %v1368
      %vm1375 = vcmask 257024
      %1376 = vst.msk [vmem:[%s224] sm:$0xf] %vm1375, %v1369
      %1377 = vst.msk [vmem:[%s224 + $0x4] sm:$0xf] %vm1375, %v1370
      %vm1378 = vcmask 254976
      %vm1379 = vsmask.f32 1280
      %vm1380 = vmand %vm1378, %vm1379
      %v1381 = vld [vmem:[%s224 + $0x8] sm:$0x3]
      %v1382 = vsel %vm1380, %v1371, %v1381
      %1383 = vst [vmem:[%s224 + $0x8] sm:$0x3] %v1382
      %v1384 = vpack.c.bf16 %v1360, %v1359
      %v1385 = vpack.c.bf16 %v1361, %v1361
      %v1388 = vunpack.c.l.b16 %v1384
      %v1389 = vunpack.c.h.b16 %v1384
      %v1390 = vunpack.c.l.b16 %v1385
      %v1391 = vpack.c.b16 %v1388, %v1388
      %v1392 = vpack.c.b16 %v1389, %v1389
      %v1393 = vpack.c.b16 %v1390, %v1390
      %s1397 = scalar_lea.vmem %s224, 12
      %1398 = vst.msk [vmem:[%s1397] sm:$0xf] %vm1375, %v1391
      %1399 = vst.msk [vmem:[%s1397 + $0x4] sm:$0xf] %vm1375, %v1392
      %v1400 = vld [vmem:[%s1397 + $0x8] sm:$0x3]
      %v1401 = vsel %vm1380, %v1393, %v1400
      %1402 = vst [vmem:[%s1397 + $0x8] sm:$0x3] %v1401
      %p1403 = scmp.lt.s32.totalorder %s16, 7
      %s1404 = scalar_select %p1403, %s16, 7
      %s1405 = smul.addr %s1404, 6
      %s1406 = smul.addr %s1405, 4
      %s1407 = scalar_lea.vmem %s5, %s1406
      // Predicated region
      $region41: #{baseline_convnet_forward.7} parent=39 // pred_check
        %p1408 = pneg %p144
      $region42: #{baseline_convnet_forward.7} parent=39 // pred_check_branch
        %1410 = sbr.rel (%p1408) target = $region44
      $region43: #{baseline_convnet_forward.7} parent=39 // pred_region
        _
      $region44: #{baseline_convnet_forward.7} parent=39 // pred_fallthru
        _
    $region40: #{baseline_convnet_forward.7} parent=5 // pred_fallthru
      _
    %p1411 = scmp.le.s32.totalorder 2, %s11
    // Predicated region
    $region45: #{baseline_convnet_forward.7} parent=5 // pred_check
      %p1412 = pneg %p1411
    $region46: #{baseline_convnet_forward.7} parent=5 // pred_check_branch
      %1414 = sbr.rel (%p1412) target = $region48
    $region47: #{baseline_convnet_forward.7} parent=5 // pred_region
      %s1415 = ssub.s32 %s11, 2
      // Predicated region
      $region49: #{baseline_convnet_forward.7} parent=47 // pred_check
        %p1416 = pneg %p150
      $region50: #{baseline_convnet_forward.7} parent=47 // pred_check_branch
        %1418 = sbr.rel (%p1416) target = $region52
      $region51: #{baseline_convnet_forward.7} parent=47 // pred_region
        %p1419 = scmp.lt.s32.totalorder %s17, 7
        %s1420 = scalar_select %p1419, %s17, 7
        %s1421 = smul.addr %s1420, 6
        %s1422 = smul.addr %s1421, 4
        %s1423 = scalar_lea.vmem %s5, %s1422
      $region52: #{baseline_convnet_forward.7} parent=47 // pred_fallthru
        _
    $region48: #{baseline_convnet_forward.7} parent=5 // pred_fallthru
      _
  $region6: #{baseline_convnet_forward.7} parent=0 // loop_footer
    %s15 = sadd.s32 1, %s11
  $region7: #{baseline_convnet_forward.7} parent=0 // loop_footer_branch
    %10 = sbr.rel target = $region3
  $region8: #{baseline_convnet_forward.7} parent=0 // loop_exit
    _

// kernel: baseline_convnet_forward.8
$region0: #{baseline_convnet_forward.8}
  #allocation0 [shape = 'u32[]', space=smem, size = 0x4, offset = 0x4, fixed_abs, tag = 'smem constant byte address 0x4 - core index']
  #allocation1 [shape = 'u32[144,128]{1,0:T(1,128)}', space=vmem, size = 0x12000, scoped, tag = 'internal scratch']
  %s0 = inlined_call_operand.vmem [shape: bf16[8,2,2,10,32], index: 0, kind: input, shape index: {}]
  %s1 = inlined_call_operand.vmem [shape: bf16[160,64], index: 1, kind: input, shape index: {}]
  %s2 = inlined_call_operand.vmem [shape: f32[1,64], index: 2, kind: input, shape index: {}]
  %s3 = inlined_call_operand.vmem [shape: f32[1,64], index: 3, kind: input, shape index: {}]
  %s4 = inlined_call_operand.vmem [shape: f32[1,64], index: 4, kind: input, shape index: {}]
  %s5 = inlined_call_operand.vmem [shape: bf16[8,2,8,64], index: 5, kind: output, shape index: {}]
  %s6 = sld [smem:[#allocation0]]
  $region53: #{baseline_convnet_forward.8} parent=0
    _
  %s8 = ssub.s32 1, %s6
  %s9 = scalar_select 0, %s8, %s6
  loop: start=0, step=1, limit=10
  $region2: #{baseline_convnet_forward.8} parent=0 // loop_pre_header
    _
  $region3: #{baseline_convnet_forward.8} parent=0 // loop_header
    %s11 = sphi 0, %s15
    %p12 = scmp.ge.s32.totalorder %s11, 10
    %s21 = sphi 0, %s23
    %s24 = sphi 0, %s21
    %s25 = sphi 0, %s24
    %s41 = sphi 0, %s25
    %s45 = sphi 0, %s45
    %s47 = sphi 0, %s45
    %s48 = sphi 0, %s47
    %s62 = sphi 0, %s48
    %s66 = sphi 0, %s66
    %s68 = sphi 0, %s66
    %s69 = sphi 0, %s68
    %s83 = sphi 0, %s69
    %s87 = sphi 0, %s87
    %s89 = sphi 0, %s87
    %s90 = sphi 0, %s89
    %s104 = sphi 0, %s90
    %s108 = sphi 0, %s108
    %s110 = sphi 0, %s108
    %s111 = sphi 0, %s110
    %s125 = sphi 0, %s111
    %s131 = sphi 0, %s133
    %s134 = sphi 0, %s131
    %s135 = sphi 0, %s134
    %s151 = sphi 0, %s135
  $region4: #{baseline_convnet_forward.8} parent=0 // loop_header_branch
    %14 = sbr.rel (%p12) target = $region8
  $region5: #{baseline_convnet_forward.8} parent=0 // loop_body
    %s16 = ssub.s32 %s11, 1
    %s17 = ssub.s32 %s11, 2
    %s18 = sadd.s32 %s11, 1
    %s19 = ssub.s32 %s11, %s18
    %p20 = scmp.eq.s32.totalorder %s19, 0
    %s22 = sadd.s32 %s21, 1
    %s23 = scalar_select %p20, %s21, %s22
    %p26 = pneg %p20
    %p27 = scmp.eq.s32.totalorder %s11, 7
    %p28 = por %p26, %p27
    %p29 = scmp.ne.s32.totalorder %s21, %s24
    %p30 = scmp.eq.s32.totalorder %s11, 0
    %p31 = por %p29, %p30
    %p32 = scmp.ne.s32.totalorder %s21, %s24
    %p33 = scmp.eq.s32.totalorder %s16, 7
    %p34 = por %p32, %p33
    %p35 = scmp.ne.s32.totalorder %s24, %s25
    %p36 = scmp.eq.s32.totalorder %s16, 0
    %p37 = por %p35, %p36
    %p38 = scmp.ne.s32.totalorder %s24, %s25
    %p39 = scmp.eq.s32.totalorder %s17, 7
    %p40 = por %p38, %p39
    %p42 = scmp.ne.s32.totalorder %s25, %s41
    %p43 = scmp.eq.s32.totalorder %s17, 0
    %p44 = por %p42, %p43
    %s46 = sadd.s32 %s45, 1
    %p49 = scmp.eq.s32.totalorder %s11, 7
    %p50 = scmp.ne.s32.totalorder %s45, %s47
    %p51 = scmp.eq.s32.totalorder %s11, 0
    %p52 = por %p50, %p51
    %p53 = scmp.ne.s32.totalorder %s45, %s47
    %p54 = scmp.eq.s32.totalorder %s16, 7
    %p55 = por %p53, %p54
    %p56 = scmp.ne.s32.totalorder %s47, %s48
    %p57 = scmp.eq.s32.totalorder %s16, 0
    %p58 = por %p56, %p57
    %p59 = scmp.ne.s32.totalorder %s47, %s48
    %p60 = scmp.eq.s32.totalorder %s17, 7
    %p61 = por %p59, %p60
    %p63 = scmp.ne.s32.totalorder %s48, %s62
    %p64 = scmp.eq.s32.totalorder %s17, 0
    %p65 = por %p63, %p64
    %s67 = sadd.s32 %s66, 1
    %p70 = scmp.eq.s32.totalorder %s11, 7
    %p71 = scmp.ne.s32.totalorder %s66, %s68
    %p72 = scmp.eq.s32.totalorder %s11, 0
    %p73 = por %p71, %p72
    %p74 = scmp.ne.s32.totalorder %s66, %s68
    %p75 = scmp.eq.s32.totalorder %s16, 7
    %p76 = por %p74, %p75
    %p77 = scmp.ne.s32.totalorder %s68, %s69
    %p78 = scmp.eq.s32.totalorder %s16, 0
    %p79 = por %p77, %p78
    %p80 = scmp.ne.s32.totalorder %s68, %s69
    %p81 = scmp.eq.s32.totalorder %s17, 7
    %p82 = por %p80, %p81
    %p84 = scmp.ne.s32.totalorder %s69, %s83
    %p85 = scmp.eq.s32.totalorder %s17, 0
    %p86 = por %p84, %p85
    %s88 = sadd.s32 %s87, 1
    %p91 = scmp.eq.s32.totalorder %s11, 7
    %p92 = scmp.ne.s32.totalorder %s87, %s89
    %p93 = scmp.eq.s32.totalorder %s11, 0
    %p94 = por %p92, %p93
    %p95 = scmp.ne.s32.totalorder %s87, %s89
    %p96 = scmp.eq.s32.totalorder %s16, 7
    %p97 = por %p95, %p96
    %p98 = scmp.ne.s32.totalorder %s89, %s90
    %p99 = scmp.eq.s32.totalorder %s16, 0
    %p100 = por %p98, %p99
    %p101 = scmp.ne.s32.totalorder %s89, %s90
    %p102 = scmp.eq.s32.totalorder %s17, 7
    %p103 = por %p101, %p102
    %p105 = scmp.ne.s32.totalorder %s90, %s104
    %p106 = scmp.eq.s32.totalorder %s17, 0
    %p107 = por %p105, %p106
    %s109 = sadd.s32 %s108, 1
    %p112 = scmp.eq.s32.totalorder %s11, 7
    %p113 = scmp.ne.s32.totalorder %s108, %s110
    %p114 = scmp.eq.s32.totalorder %s11, 0
    %p115 = por %p113, %p114
    %p116 = scmp.ne.s32.totalorder %s108, %s110
    %p117 = scmp.eq.s32.totalorder %s16, 7
    %p118 = por %p116, %p117
    %p119 = scmp.ne.s32.totalorder %s110, %s111
    %p120 = scmp.eq.s32.totalorder %s16, 0
    %p121 = por %p119, %p120
    %p122 = scmp.ne.s32.totalorder %s110, %s111
    %p123 = scmp.eq.s32.totalorder %s17, 7
    %p124 = por %p122, %p123
    %p126 = scmp.ne.s32.totalorder %s111, %s125
    %p127 = scmp.eq.s32.totalorder %s17, 0
    %p128 = por %p126, %p127
    %s129 = ssub.s32 %s11, %s18
    %p130 = scmp.eq.s32.totalorder %s129, 0
    %s132 = sadd.s32 %s131, 1
    %s133 = scalar_select %p130, %s131, %s132
    %p136 = pneg %p130
    %p137 = scmp.eq.s32.totalorder %s11, 7
    %p138 = por %p136, %p137
    %p139 = scmp.ne.s32.totalorder %s131, %s134
    %p140 = scmp.eq.s32.totalorder %s11, 0
    %p141 = por %p139, %p140
    %p142 = scmp.ne.s32.totalorder %s131, %s134
    %p143 = scmp.eq.s32.totalorder %s16, 7
    %p144 = por %p142, %p143
    %p145 = scmp.ne.s32.totalorder %s134, %s135
    %p146 = scmp.eq.s32.totalorder %s16, 0
    %p147 = por %p145, %p146
    %p148 = scmp.ne.s32.totalorder %s134, %s135
    %p149 = scmp.eq.s32.totalorder %s17, 7
    %p150 = por %p148, %p149
    %p152 = scmp.ne.s32.totalorder %s135, %s151
    %p153 = scmp.eq.s32.totalorder %s17, 0
    %p154 = por %p152, %p153
    %p155 = scmp.le.s32.totalorder 1, %s11
    %p156 = scmp.lt.s32.totalorder %s11, 9
    %p157 = pnand %p155, %p156
    %p158 = pneg %p157
    // Predicated region
    $region9: #{baseline_convnet_forward.8} parent=5 // pred_check
      _
    $region10: #{baseline_convnet_forward.8} parent=5 // pred_check_branch
      %160 = sbr.rel (%p157) target = $region12
    $region11: #{baseline_convnet_forward.8} parent=5 // pred_region
      %s161 = ssub.s32 %s11, 1
      // Predicated region
      $region13: #{baseline_convnet_forward.8} parent=11 // pred_check
        %p162 = pneg %p58
      $region14: #{baseline_convnet_forward.8} parent=11 // pred_check_branch
        %164 = sbr.rel (%p162) target = $region16
      $region15: #{baseline_convnet_forward.8} parent=11 // pred_region
        _
      $region16: #{baseline_convnet_forward.8} parent=11 // pred_fallthru
        _
      // Predicated region
      $region17: #{baseline_convnet_forward.8} parent=11 // pred_check
        %p165 = pneg %p79
      $region18: #{baseline_convnet_forward.8} parent=11 // pred_check_branch
        %167 = sbr.rel (%p165) target = $region20
      $region19: #{baseline_convnet_forward.8} parent=11 // pred_region
        _
      $region20: #{baseline_convnet_forward.8} parent=11 // pred_fallthru
        _
      // Predicated region
      $region21: #{baseline_convnet_forward.8} parent=11 // pred_check
        %p168 = pneg %p100
      $region22: #{baseline_convnet_forward.8} parent=11 // pred_check_branch
        %170 = sbr.rel (%p168) target = $region24
      $region23: #{baseline_convnet_forward.8} parent=11 // pred_region
        _
      $region24: #{baseline_convnet_forward.8} parent=11 // pred_fallthru
        _
      // Predicated region
      $region25: #{baseline_convnet_forward.8} parent=11 // pred_check
        %p171 = pneg %p121
      $region26: #{baseline_convnet_forward.8} parent=11 // pred_check_branch
        %173 = sbr.rel (%p171) target = $region28
      $region27: #{baseline_convnet_forward.8} parent=11 // pred_region
        _
      $region28: #{baseline_convnet_forward.8} parent=11 // pred_fallthru
        _
    $region12: #{baseline_convnet_forward.8} parent=5 // pred_fallthru
      _
    %p174 = scmp.lt.s32.totalorder %s11, 8
    // Predicated region
    $region29: #{baseline_convnet_forward.8} parent=5 // pred_check
      %p175 = pneg %p174
    $region30: #{baseline_convnet_forward.8} parent=5 // pred_check_branch
      %177 = sbr.rel (%p175) target = $region32
    $region31: #{baseline_convnet_forward.8} parent=5 // pred_region
      // Predicated region
      $region33: #{baseline_convnet_forward.8} parent=31 // pred_check
        %p178 = pneg %p31
      $region34: #{baseline_convnet_forward.8} parent=31 // pred_check_branch
        %180 = sbr.rel (%p178) target = $region36
      $region35: #{baseline_convnet_forward.8} parent=31 // pred_region
        %p181 = scmp.lt.s32.totalorder %s11, 7
        %s182 = scalar_select %p181, %s11, 7
        %s183 = smul.addr %s182, 8
        %s184 = smul.addr %s183, 4
        %s185 = scalar_lea.vmem %s0, %s184
      $region36: #{baseline_convnet_forward.8} parent=31 // pred_fallthru
        _
    $region32: #{baseline_convnet_forward.8} parent=5 // pred_fallthru
      _
    %p186 = scmp.le.s32.totalorder 1, %s11
    %p187 = scmp.lt.s32.totalorder %s11, 9
    %p188 = pnand %p186, %p187
    %p189 = pneg %p188
    // Predicated region
    $region37: #{baseline_convnet_forward.8} parent=5 // pred_check
      _
    $region38: #{baseline_convnet_forward.8} parent=5 // pred_check_branch
      %191 = sbr.rel (%p188) target = $region40
    $region39: #{baseline_convnet_forward.8} parent=5 // pred_region
      %s192 = ssub.s32 %s11, 1
      %p193 = scmp.lt.s32.totalorder %s16, 7
      %s194 = scalar_select %p193, %s16, 7
      %s195 = smul.addr %s194, 8
      %s196 = smul.addr %s195, 4
      %s197 = scalar_lea.vmem %s0, %s196
      %p198 = pneg %p37
      %p199 = pneg %p34
      %p200 = pneg %p58
      %p201 = pneg %p55
      %p202 = pneg %p79
      %p203 = pneg %p76
      %p204 = pneg %p100
      %p205 = pneg %p97
      %p206 = pneg %p121
      %p207 = pneg %p118
      %p208 = pneg %p147
      %p209 = pneg %p144
      %p210 = scmp.lt.s32.totalorder %s16, 7
      %s211 = scalar_select %p210, %s16, 7
      %s212 = smul.addr %s211, 2
      %s213 = smul.addr %s212, 4
      %s214 = scalar_lea.vmem %s5, %s213
      %p215 = scmp.lt.s32.totalorder %s16, 7
      %s216 = scalar_select %p215, %s16, 7
      %s217 = smul.addr %s216, 8
      %s218 = smul.addr %s217, 4
      %s219 = scalar_lea.vmem %s0, %s218
      %p220 = scmp.lt.s32.totalorder %s16, 7
      %s221 = scalar_select %p220, %s16, 7
      %s222 = smul.addr %s221, 2
      %s223 = smul.addr %s222, 4
      %s224 = scalar_lea.vmem %s5, %s223
      %v226 = vld [vmem:[%s2] sm:$0x1]
      %v227 = vld [vmem:[%s3] sm:$0x1]
      %v228 = vld [vmem:[%s4] sm:$0x1]
      %v229 = vld [vmem:[%s219] sm:$0xf]
      %v230 = vld [vmem:[%s1] sm:$0xf]
      %v231 = vld [vmem:[%s1 + $0x4] sm:$0xf]
      %v232 = vld [vmem:[%s1 + $0x8] sm:$0xf]
      %v233 = vld [vmem:[%s1 + $0xc] sm:$0xf]
      %s234 = scalar_lea.vmem %s219, 8
      %v235 = vld [vmem:[%s234] sm:$0xf]
      %v236 = vld [vmem:[%s1 + $0x10] sm:$0xf]
      %v237 = vld [vmem:[%s1 + $0x14] sm:$0xf]
      %v238 = vld [vmem:[%s1 + $0x18] sm:$0xf]
      %v239 = vld [vmem:[%s1 + $0x1c] sm:$0xf]
      %v244 = vunpack.c.l.b16 %v236
      %v245 = vunpack.c.l.b16 %v237
      %v246 = vunpack.c.l.b16 %v238
      %v247 = vunpack.c.l.b16 %v239
      %v248 = vpack.c.b16 %v245, %v244
      %v249 = vpack.c.b16 %v247, %v246
      %vm252 = vcmask 261120
      %v254 = vsel %vm252, %v235, 0
      %256 = vmatprep.subr.bf16.mxu0 0
      %257 = vmatpush1.bf16.msra.mxu0 %v248
      %258 = vmatprep.subr.bf16.mxu0 0
      %259 = vmatpush1.bf16.msra.mxu0 %v249
      %260 = vmatprep.subr.bf16.mxu0 0
      %261 = vmatpush1.bf16.msra.mxu0 0
      %262 = vmatprep.subr.bf16.mxu0 0
      %263 = vmatpush1.bf16.msra.mxu0 0
      %264 = vmatprep.subr.bf16.mxu0 0
      %265 = vmatpush1.bf16.msra.mxu0 0
      %266 = vmatprep.subr.bf16.mxu0 0
      %267 = vmatpush1.bf16.msra.mxu0 0
      %268 = vmatprep.subr.bf16.mxu0 0
      %269 = vmatpush1.bf16.msra.mxu0 0
      %270 = vmatprep.subr.bf16.mxu0 0
      %271 = vmatpush1.bf16.msra.mxu0 0
      %272 = vmatprep.subr.bf16.mxu0 0
      %273 = vmatpush1.bf16.msra.mxu0 0
      %274 = vmatprep.subr.bf16.mxu0 0
      %275 = vmatpush1.bf16.msra.mxu0 0
      %276 = vmatprep.subr.bf16.mxu0 0
      %277 = vmatpush1.bf16.msra.mxu0 0
      %278 = vmatprep.subr.bf16.mxu0 0
      %279 = vmatpush1.bf16.msra.mxu0 0
      %280 = vmatprep.subr.bf16.mxu0 0
      %281 = vmatpush1.bf16.msra.mxu0 0
      %282 = vmatprep.subr.bf16.mxu0 0
      %283 = vmatpush1.bf16.msra.mxu0 0
      %284 = vmatprep.subr.bf16.mxu0 0
      %285 = vmatpush1.bf16.msra.mxu0 0
      %286 = vmatprep.subr.bf16.mxu0 0
      %287 = vmatpush1.bf16.msra.mxu0 0
      %288 = vmatprep.mubr.bf16.mxu0 0
      %289 = vmatmul.mubr.bf16.gmra.mrb[0].mxu0 %v254
      %v290 = vpop.f32.mrb[0].mxu0
      %v291 = vadd.f32 0.0, %v290
      %v292 = vpop.f32.mrb[0].mxu0
      %v293 = vpop.f32.mrb[0].mxu0
      %v294 = vpop.f32.mrb[0].mxu0
      %295 = vdwg.mxu0
      %v300 = vunpack.c.l.b16 %v230
      %v301 = vunpack.c.l.b16 %v231
      %v302 = vunpack.c.l.b16 %v232
      %v303 = vunpack.c.l.b16 %v233
      %v304 = vpack.c.b16 %v301, %v300
      %v305 = vpack.c.b16 %v303, %v302
      %v309 = vsel %vm252, %v229, 0
      %311 = vmatprep.subr.bf16.mxu0 0
      %312 = vmatpush1.bf16.msra.mxu0 %v304
      %313 = vmatprep.subr.bf16.mxu0 0
      %314 = vmatpush1.bf16.msra.mxu0 %v305
      %315 = vmatprep.subr.bf16.mxu0 0
      %316 = vmatpush1.bf16.msra.mxu0 0
      %317 = vmatprep.subr.bf16.mxu0 0
      %318 = vmatpush1.bf16.msra.mxu0 0
      %319 = vmatprep.subr.bf16.mxu0 0
      %320 = vmatpush1.bf16.msra.mxu0 0
      %321 = vmatprep.subr.bf16.mxu0 0
      %322 = vmatpush1.bf16.msra.mxu0 0
      %323 = vmatprep.subr.bf16.mxu0 0
      %324 = vmatpush1.bf16.msra.mxu0 0
      %325 = vmatprep.subr.bf16.mxu0 0
      %326 = vmatpush1.bf16.msra.mxu0 0
      %327 = vmatprep.subr.bf16.mxu0 0
      %328 = vmatpush1.bf16.msra.mxu0 0
      %329 = vmatprep.subr.bf16.mxu0 0
      %330 = vmatpush1.bf16.msra.mxu0 0
      %331 = vmatprep.subr.bf16.mxu0 0
      %332 = vmatpush1.bf16.msra.mxu0 0
      %333 = vmatprep.subr.bf16.mxu0 0
      %334 = vmatpush1.bf16.msra.mxu0 0
      %335 = vmatprep.subr.bf16.mxu0 0
      %336 = vmatpush1.bf16.msra.mxu0 0
      %337 = vmatprep.subr.bf16.mxu0 0
      %338 = vmatpush1.bf16.msra.mxu0 0
      %339 = vmatprep.subr.bf16.mxu0 0
      %340 = vmatpush1.bf16.msra.mxu0 0
      %341 = vmatprep.subr.bf16.mxu0 0
      %342 = vmatpush1.bf16.msra.mxu0 0
      %343 = vmatprep.mubr.bf16.mxu0 0
      %344 = vmatmul.mubr.bf16.gmra.mrb[0].mxu0 %v309
      %v345 = vpop.f32.mrb[0].mxu0
      %v346 = vadd.f32 %v291, %v345
      %v347 = vpop.f32.mrb[0].mxu0
      %v348 = vpop.f32.mrb[0].mxu0
      %v349 = vpop.f32.mrb[0].mxu0
      %350 = vdwg.mxu0
      %v351 = vld [vmem:[%s219] sm:$0xf]
      %v352 = vld [vmem:[%s219 + $0x4] sm:$0x1]
      %v353 = vld [vmem:[%s1 + $0x20] sm:$0xf]
      %v354 = vld [vmem:[%s1 + $0x24] sm:$0xf]
      %v355 = vld [vmem:[%s1 + $0x28] sm:$0xf]
      %v356 = vld [vmem:[%s1 + $0x2c] sm:$0xf]
      %v359 = vunpack.c.l.b16 %v351
      %v360 = vunpack.c.l.b16 %v352
      %v361 = vpack.c.b16 %v360, %v359
      %v363 = vshrl.u32 %v361, 16
      %v365 = vshll.u32 %v361, 16
      %v367 = vrot.slane %v365, 1
      %v368 = vor.u32 %v363, %v367
      %v373 = vunpack.c.l.b16 %v353
      %v374 = vunpack.c.l.b16 %v354
      %v375 = vunpack.c.l.b16 %v355
      %v376 = vunpack.c.l.b16 %v356
      %v377 = vpack.c.b16 %v374, %v373
      %v378 = vpack.c.b16 %v376, %v375
      %v382 = vsel %vm252, %v368, 0
      %384 = vmatprep.subr.bf16.mxu0 0
      %385 = vmatpush1.bf16.msra.mxu0 %v377
      %386 = vmatprep.subr.bf16.mxu0 0
      %387 = vmatpush1.bf16.msra.mxu0 %v378
      %388 = vmatprep.subr.bf16.mxu0 0
      %389 = vmatpush1.bf16.msra.mxu0 0
      %390 = vmatprep.subr.bf16.mxu0 0
      %391 = vmatpush1.bf16.msra.mxu0 0
      %392 = vmatprep.subr.bf16.mxu0 0
      %393 = vmatpush1.bf16.msra.mxu0 0
      %394 = vmatprep.subr.bf16.mxu0 0
      %395 = vmatpush1.bf16.msra.mxu0 0
      %396 = vmatprep.subr.bf16.mxu0 0
      %397 = vmatpush1.bf16.msra.mxu0 0
      %398 = vmatprep.subr.bf16.mxu0 0
      %399 = vmatpush1.bf16.msra.mxu0 0
      %400 = vmatprep.subr.bf16.mxu0 0
      %401 = vmatpush1.bf16.msra.mxu0 0
      %402 = vmatprep.subr.bf16.mxu0 0
      %403 = vmatpush1.bf16.msra.mxu0 0
      %404 = vmatprep.subr.bf16.mxu0 0
      %405 = vmatpush1.bf16.msra.mxu0 0
      %406 = vmatprep.subr.bf16.mxu0 0
      %407 = vmatpush1.bf16.msra.mxu0 0
      %408 = vmatprep.subr.bf16.mxu0 0
      %409 = vmatpush1.bf16.msra.mxu0 0
      %410 = vmatprep.subr.bf16.mxu0 0
      %411 = vmatpush1.bf16.msra.mxu0 0
      %412 = vmatprep.subr.bf16.mxu0 0
      %413 = vmatpush1.bf16.msra.mxu0 0
      %414 = vmatprep.subr.bf16.mxu0 0
      %415 = vmatpush1.bf16.msra.mxu0 0
      %416 = vmatprep.mubr.bf16.mxu0 0
      %417 = vmatmul.mubr.bf16.gmra.mrb[0].mxu0 %v382
      %v418 = vpop.f32.mrb[0].mxu0
      %v419 = vadd.f32 0.0, %v418
      %v420 = vpop.f32.mrb[0].mxu0
      %v421 = vpop.f32.mrb[0].mxu0
      %v422 = vpop.f32.mrb[0].mxu0
      %423 = vdwg.mxu0
      %v424 = vadd.f32 %v346, %v419
      %v425 = vld [vmem:[%s234] sm:$0xf]
      %v426 = vld [vmem:[%s234 + $0x4] sm:$0x1]
      %v427 = vld [vmem:[%s1 + $0x30] sm:$0xf]
      %v428 = vld [vmem:[%s1 + $0x34] sm:$0xf]
      %v429 = vld [vmem:[%s1 + $0x38] sm:$0xf]
      %v430 = vld [vmem:[%s1 + $0x3c] sm:$0xf]
      %v433 = vunpack.c.l.b16 %v425
      %v434 = vunpack.c.l.b16 %v426
      %v435 = vpack.c.b16 %v434, %v433
      %v437 = vshrl.u32 %v435, 16
      %v439 = vshll.u32 %v435, 16
      %v441 = vrot.slane %v439, 1
      %v442 = vor.u32 %v437, %v441
      %v447 = vunpack.c.l.b16 %v427
      %v448 = vunpack.c.l.b16 %v428
      %v449 = vunpack.c.l.b16 %v429
      %v450 = vunpack.c.l.b16 %v430
      %v451 = vpack.c.b16 %v448, %v447
      %v452 = vpack.c.b16 %v450, %v449
      %v456 = vsel %vm252, %v442, 0
      %458 = vmatprep.subr.bf16.mxu0 0
      %459 = vmatpush1.bf16.msra.mxu0 %v451
      %460 = vmatprep.subr.bf16.mxu0 0
      %461 = vmatpush1.bf16.msra.mxu0 %v452
      %462 = vmatprep.subr.bf16.mxu0 0
      %463 = vmatpush1.bf16.msra.mxu0 0
      %464 = vmatprep.subr.bf16.mxu0 0
      %465 = vmatpush1.bf16.msra.mxu0 0
      %466 = vmatprep.subr.bf16.mxu0 0
      %467 = vmatpush1.bf16.msra.mxu0 0
      %468 = vmatprep.subr.bf16.mxu0 0
      %469 = vmatpush1.bf16.msra.mxu0 0
      %470 = vmatprep.subr.bf16.mxu0 0
      %471 = vmatpush1.bf16.msra.mxu0 0
      %472 = vmatprep.subr.bf16.mxu0 0
      %473 = vmatpush1.bf16.msra.mxu0 0
      %474 = vmatprep.subr.bf16.mxu0 0
      %475 = vmatpush1.bf16.msra.mxu0 0
      %476 = vmatprep.subr.bf16.mxu0 0
      %477 = vmatpush1.bf16.msra.mxu0 0
      %478 = vmatprep.subr.bf16.mxu0 0
      %479 = vmatpush1.bf16.msra.mxu0 0
      %480 = vmatprep.subr.bf16.mxu0 0
      %481 = vmatpush1.bf16.msra.mxu0 0
      %482 = vmatprep.subr.bf16.mxu0 0
      %483 = vmatpush1.bf16.msra.mxu0 0
      %484 = vmatprep.subr.bf16.mxu0 0
      %485 = vmatpush1.bf16.msra.mxu0 0
      %486 = vmatprep.subr.bf16.mxu0 0
      %487 = vmatpush1.bf16.msra.mxu0 0
      %488 = vmatprep.subr.bf16.mxu0 0
      %489 = vmatpush1.bf16.msra.mxu0 0
      %490 = vmatprep.mubr.bf16.mxu0 0
      %491 = vmatmul.mubr.bf16.gmra.mrb[0].mxu0 %v456
      %v492 = vpop.f32.mrb[0].mxu0
      %v493 = vadd.f32 0.0, %v492
      %v494 = vpop.f32.mrb[0].mxu0
      %v495 = vpop.f32.mrb[0].mxu0
      %v496 = vpop.f32.mrb[0].mxu0
      %497 = vdwg.mxu0
      %v498 = vadd.f32 %v424, %v493
      %v499 = vld [vmem:[%s219] sm:$0xe]
      %v500 = vld [vmem:[%s1 + $0x40] sm:$0xf]
      %v501 = vld [vmem:[%s1 + $0x44] sm:$0xf]
      %v502 = vld [vmem:[%s1 + $0x48] sm:$0xf]
      %v503 = vld [vmem:[%s1 + $0x4c] sm:$0xf]
      %v505 = vunpack.c.l.b16 %v499
      %v506 = vpack.c.b16 %v360, %v505
      %v507 = vrot.slane %v506, 1
      %v512 = vunpack.c.l.b16 %v500
      %v513 = vunpack.c.l.b16 %v501
      %v514 = vunpack.c.l.b16 %v502
      %v515 = vunpack.c.l.b16 %v503
      %v516 = vpack.c.b16 %v513, %v512
      %v517 = vpack.c.b16 %v515, %v514
      %v521 = vsel %vm252, %v507, 0
      %523 = vmatprep.subr.bf16.mxu0 0
      %524 = vmatpush1.bf16.msra.mxu0 %v516
      %525 = vmatprep.subr.bf16.mxu0 0
      %526 = vmatpush1.bf16.msra.mxu0 %v517
      %527 = vmatprep.subr.bf16.mxu0 0
      %528 = vmatpush1.bf16.msra.mxu0 0
      %529 = vmatprep.subr.bf16.mxu0 0
      %530 = vmatpush1.bf16.msra.mxu0 0
      %531 = vmatprep.subr.bf16.mxu0 0
      %532 = vmatpush1.bf16.msra.mxu0 0
      %533 = vmatprep.subr.bf16.mxu0 0
      %534 = vmatpush1.bf16.msra.mxu0 0
      %535 = vmatprep.subr.bf16.mxu0 0
      %536 = vmatpush1.bf16.msra.mxu0 0
      %537 = vmatprep.subr.bf16.mxu0 0
      %538 = vmatpush1.bf16.msra.mxu0 0
      %539 = vmatprep.subr.bf16.mxu0 0
      %540 = vmatpush1.bf16.msra.mxu0 0
      %541 = vmatprep.subr.bf16.mxu0 0
      %542 = vmatpush1.bf16.msra.mxu0 0
      %543 = vmatprep.subr.bf16.mxu0 0
      %544 = vmatpush1.bf16.msra.mxu0 0
      %545 = vmatprep.subr.bf16.mxu0 0
      %546 = vmatpush1.bf16.msra.mxu0 0
      %547 = vmatprep.subr.bf16.mxu0 0
      %548 = vmatpush1.bf16.msra.mxu0 0
      %549 = vmatprep.subr.bf16.mxu0 0
      %550 = vmatpush1.bf16.msra.mxu0 0
      %551 = vmatprep.subr.bf16.mxu0 0
      %552 = vmatpush1.bf16.msra.mxu0 0
      %553 = vmatprep.subr.bf16.mxu0 0
      %554 = vmatpush1.bf16.msra.mxu0 0
      %555 = vmatprep.mubr.bf16.mxu0 0
      %556 = vmatmul.mubr.bf16.gmra.mrb[0].mxu0 %v521
      %v557 = vpop.f32.mrb[0].mxu0
      %v558 = vadd.f32 0.0, %v557
      %v559 = vpop.f32.mrb[0].mxu0
      %v560 = vpop.f32.mrb[0].mxu0
      %v561 = vpop.f32.mrb[0].mxu0
      %562 = vdwg.mxu0
      %v563 = vadd.f32 %v498, %v558
      %v565 = vlaneseq
      %v566 = vshrl.u32 %v565, 7
      %v567 = vsub.s32 0, %v566
      %v568 = vrot.slane %v226, %v567
      %v570 = vadd.f32 %v563, %v568
      %vm571 = vcmp.gt.f32.partialorder %v570, 0.0
      %v572 = vmul.f32 %v570, 0.2
      %v573 = vsel %vm571, %v570, %v572
      %s574 = scalar_lea.vmem %s219, 16
      %v575 = vld [vmem:[%s574] sm:$0xf]
      %s576 = scalar_lea.vmem %s219, 24
      %v577 = vld [vmem:[%s576] sm:$0xf]
      %v579 = vsel %vm252, %v577, 0
      %581 = vmatprep.subr.bf16.mxu0 0
      %582 = vmatpush1.bf16.msra.mxu0 %v248
      %583 = vmatprep.subr.bf16.mxu0 0
      %584 = vmatpush1.bf16.msra.mxu0 %v249
      %585 = vmatprep.subr.bf16.mxu0 0
      %586 = vmatpush1.bf16.msra.mxu0 0
      %587 = vmatprep.subr.bf16.mxu0 0
      %588 = vmatpush1.bf16.msra.mxu0 0
      %589 = vmatprep.subr.bf16.mxu0 0
      %590 = vmatpush1.bf16.msra.mxu0 0
      %591 = vmatprep.subr.bf16.mxu0 0
      %592 = vmatpush1.bf16.msra.mxu0 0
      %593 = vmatprep.subr.bf16.mxu0 0
      %594 = vmatpush1.bf16.msra.mxu0 0
      %595 = vmatprep.subr.bf16.mxu0 0
      %596 = vmatpush1.bf16.msra.mxu0 0
      %597 = vmatprep.subr.bf16.mxu0 0
      %598 = vmatpush1.bf16.msra.mxu0 0
      %599 = vmatprep.subr.bf16.mxu0 0
      %600 = vmatpush1.bf16.msra.mxu0 0
      %601 = vmatprep.subr.bf16.mxu0 0
      %602 = vmatpush1.bf16.msra.mxu0 0
      %603 = vmatprep.subr.bf16.mxu0 0
      %604 = vmatpush1.bf16.msra.mxu0 0
      %605 = vmatprep.subr.bf16.mxu0 0
      %606 = vmatpush1.bf16.msra.mxu0 0
      %607 = vmatprep.subr.bf16.mxu0 0
      %608 = vmatpush1.bf16.msra.mxu0 0
      %609 = vmatprep.subr.bf16.mxu0 0
      %610 = vmatpush1.bf16.msra.mxu0 0
      %611 = vmatprep.subr.bf16.mxu0 0
      %612 = vmatpush1.bf16.msra.mxu0 0
      %613 = vmatprep.mubr.bf16.mxu0 0
      %614 = vmatmul.mubr.bf16.gmra.mrb[0].mxu0 %v579
      %v615 = vpop.f32.mrb[0].mxu0
      %v616 = vadd.f32 0.0, %v615
      %v617 = vpop.f32.mrb[0].mxu0
      %v618 = vpop.f32.mrb[0].mxu0
      %v619 = vpop.f32.mrb[0].mxu0
      %620 = vdwg.mxu0
      %v622 = vsel %vm252, %v575, 0
      %624 = vmatprep.subr.bf16.mxu0 0
      %625 = vmatpush1.bf16.msra.mxu0 %v304
      %626 = vmatprep.subr.bf16.mxu0 0
      %627 = vmatpush1.bf16.msra.mxu0 %v305
      %628 = vmatprep.subr.bf16.mxu0 0
      %629 = vmatpush1.bf16.msra.mxu0 0
      %630 = vmatprep.subr.bf16.mxu0 0
      %631 = vmatpush1.bf16.msra.mxu0 0
      %632 = vmatprep.subr.bf16.mxu0 0
      %633 = vmatpush1.bf16.msra.mxu0 0
      %634 = vmatprep.subr.bf16.mxu0 0
      %635 = vmatpush1.bf16.msra.mxu0 0
      %636 = vmatprep.subr.bf16.mxu0 0
      %637 = vmatpush1.bf16.msra.mxu0 0
      %638 = vmatprep.subr.bf16.mxu0 0
      %639 = vmatpush1.bf16.msra.mxu0 0
      %640 = vmatprep.subr.bf16.mxu0 0
      %641 = vmatpush1.bf16.msra.mxu0 0
      %642 = vmatprep.subr.bf16.mxu0 0
      %643 = vmatpush1.bf16.msra.mxu0 0
      %644 = vmatprep.subr.bf16.mxu0 0
      %645 = vmatpush1.bf16.msra.mxu0 0
      %646 = vmatprep.subr.bf16.mxu0 0
      %647 = vmatpush1.bf16.msra.mxu0 0
      %648 = vmatprep.subr.bf16.mxu0 0
      %649 = vmatpush1.bf16.msra.mxu0 0
      %650 = vmatprep.subr.bf16.mxu0 0
      %651 = vmatpush1.bf16.msra.mxu0 0
      %652 = vmatprep.subr.bf16.mxu0 0
      %653 = vmatpush1.bf16.msra.mxu0 0
      %654 = vmatprep.subr.bf16.mxu0 0
      %655 = vmatpush1.bf16.msra.mxu0 0
      %656 = vmatprep.mubr.bf16.mxu0 0
      %657 = vmatmul.mubr.bf16.gmra.mrb[0].mxu0 %v622
      %v658 = vpop.f32.mrb[0].mxu0
      %v659 = vadd.f32 %v616, %v658
      %v660 = vpop.f32.mrb[0].mxu0
      %v661 = vpop.f32.mrb[0].mxu0
      %v662 = vpop.f32.mrb[0].mxu0
      %663 = vdwg.mxu0
      %v664 = vld [vmem:[%s574] sm:$0xf]
      %v665 = vld [vmem:[%s574 + $0x4] sm:$0x1]
      %v668 = vunpack.c.l.b16 %v664
      %v669 = vunpack.c.l.b16 %v665
      %v670 = vpack.c.b16 %v669, %v668
      %v672 = vshrl.u32 %v670, 16
      %v674 = vshll.u32 %v670, 16
      %v676 = vrot.slane %v674, 1
      %v677 = vor.u32 %v672, %v676
      %v679 = vsel %vm252, %v677, 0
      %681 = vmatprep.subr.bf16.mxu0 0
      %682 = vmatpush1.bf16.msra.mxu0 %v377
      %683 = vmatprep.subr.bf16.mxu0 0
      %684 = vmatpush1.bf16.msra.mxu0 %v378
      %685 = vmatprep.subr.bf16.mxu0 0
      %686 = vmatpush1.bf16.msra.mxu0 0
      %687 = vmatprep.subr.bf16.mxu0 0
      %688 = vmatpush1.bf16.msra.mxu0 0
      %689 = vmatprep.subr.bf16.mxu0 0
      %690 = vmatpush1.bf16.msra.mxu0 0
      %691 = vmatprep.subr.bf16.mxu0 0
      %692 = vmatpush1.bf16.msra.mxu0 0
      %693 = vmatprep.subr.bf16.mxu0 0
      %694 = vmatpush1.bf16.msra.mxu0 0
      %695 = vmatprep.subr.bf16.mxu0 0
      %696 = vmatpush1.bf16.msra.mxu0 0
      %697 = vmatprep.subr.bf16.mxu0 0
      %698 = vmatpush1.bf16.msra.mxu0 0
      %699 = vmatprep.subr.bf16.mxu0 0
      %700 = vmatpush1.bf16.msra.mxu0 0
      %701 = vmatprep.subr.bf16.mxu0 0
      %702 = vmatpush1.bf16.msra.mxu0 0
      %703 = vmatprep.subr.bf16.mxu0 0
      %704 = vmatpush1.bf16.msra.mxu0 0
      %705 = vmatprep.subr.bf16.mxu0 0
      %706 = vmatpush1.bf16.msra.mxu0 0
      %707 = vmatprep.subr.bf16.mxu0 0
      %708 = vmatpush1.bf16.msra.mxu0 0
      %709 = vmatprep.subr.bf16.mxu0 0
      %710 = vmatpush1.bf16.msra.mxu0 0
      %711 = vmatprep.subr.bf16.mxu0 0
      %712 = vmatpush1.bf16.msra.mxu0 0
      %713 = vmatprep.mubr.bf16.mxu0 0
      %714 = vmatmul.mubr.bf16.gmra.mrb[0].mxu0 %v679
      %v715 = vpop.f32.mrb[0].mxu0
      %v716 = vadd.f32 0.0, %v715
      %v717 = vpop.f32.mrb[0].mxu0
      %v718 = vpop.f32.mrb[0].mxu0
      %v719 = vpop.f32.mrb[0].mxu0
      %720 = vdwg.mxu0
      %v721 = vadd.f32 %v659, %v716
      %v722 = vld [vmem:[%s576] sm:$0xf]
      %v723 = vld [vmem:[%s576 + $0x4] sm:$0x1]
      %v726 = vunpack.c.l.b16 %v722
      %v727 = vunpack.c.l.b16 %v723
      %v728 = vpack.c.b16 %v727, %v726
      %v730 = vshrl.u32 %v728, 16
      %v732 = vshll.u32 %v728, 16
      %v734 = vrot.slane %v732, 1
      %v735 = vor.u32 %v730, %v734
      %v737 = vsel %vm252, %v735, 0
      %739 = vmatprep.subr.bf16.mxu0 0
      %740 = vmatpush1.bf16.msra.mxu0 %v451
      %741 = vmatprep.subr.bf16.mxu0 0
      %742 = vmatpush1.bf16.msra.mxu0 %v452
      %743 = vmatprep.subr.bf16.mxu0 0
      %744 = vmatpush1.bf16.msra.mxu0 0
      %745 = vmatprep.subr.bf16.mxu0 0
      %746 = vmatpush1.bf16.msra.mxu0 0
      %747 = vmatprep.subr.bf16.mxu0 0
      %748 = vmatpush1.bf16.msra.mxu0 0
      %749 = vmatprep.subr.bf16.mxu0 0
      %750 = vmatpush1.bf16.msra.mxu0 0
      %751 = vmatprep.subr.bf16.mxu0 0
      %752 = vmatpush1.bf16.msra.mxu0 0
      %753 = vmatprep.subr.bf16.mxu0 0
      %754 = vmatpush1.bf16.msra.mxu0 0
      %755 = vmatprep.subr.bf16.mxu0 0
      %756 = vmatpush1.bf16.msra.mxu0 0
      %757 = vmatprep.subr.bf16.mxu0 0
      %758 = vmatpush1.bf16.msra.mxu0 0
      %759 = vmatprep.subr.bf16.mxu0 0
      %760 = vmatpush1.bf16.msra.mxu0 0
      %761 = vmatprep.subr.bf16.mxu0 0
      %762 = vmatpush1.bf16.msra.mxu0 0
      %763 = vmatprep.subr.bf16.mxu0 0
      %764 = vmatpush1.bf16.msra.mxu0 0
      %765 = vmatprep.subr.bf16.mxu0 0
      %766 = vmatpush1.bf16.msra.mxu0 0
      %767 = vmatprep.subr.bf16.mxu0 0
      %768 = vmatpush1.bf16.msra.mxu0 0
      %769 = vmatprep.subr.bf16.mxu0 0
      %770 = vmatpush1.bf16.msra.mxu0 0
      %771 = vmatprep.mubr.bf16.mxu0 0
      %772 = vmatmul.mubr.bf16.gmra.mrb[0].mxu0 %v737
      %v773 = vpop.f32.mrb[0].mxu0
      %v774 = vadd.f32 0.0, %v773
      %v775 = vpop.f32.mrb[0].mxu0
      %v776 = vpop.f32.mrb[0].mxu0
      %v777 = vpop.f32.mrb[0].mxu0
      %778 = vdwg.mxu0
      %v779 = vadd.f32 %v721, %v774
      %v780 = vld [vmem:[%s574] sm:$0xe]
      %v782 = vunpack.c.l.b16 %v780
      %v783 = vpack.c.b16 %v669, %v782
      %v784 = vrot.slane %v783, 1
      %v786 = vsel %vm252, %v784, 0
      %788 = vmatprep.subr.bf16.mxu0 0
      %789 = vmatpush1.bf16.msra.mxu0 %v516
      %790 = vmatprep.subr.bf16.mxu0 0
      %791 = vmatpush1.bf16.msra.mxu0 %v517
      %792 = vmatprep.subr.bf16.mxu0 0
      %793 = vmatpush1.bf16.msra.mxu0 0
      %794 = vmatprep.subr.bf16.mxu0 0
      %795 = vmatpush1.bf16.msra.mxu0 0
      %796 = vmatprep.subr.bf16.mxu0 0
      %797 = vmatpush1.bf16.msra.mxu0 0
      %798 = vmatprep.subr.bf16.mxu0 0
      %799 = vmatpush1.bf16.msra.mxu0 0
      %800 = vmatprep.subr.bf16.mxu0 0
      %801 = vmatpush1.bf16.msra.mxu0 0
      %802 = vmatprep.subr.bf16.mxu0 0
      %803 = vmatpush1.bf16.msra.mxu0 0
      %804 = vmatprep.subr.bf16.mxu0 0
      %805 = vmatpush1.bf16.msra.mxu0 0
      %806 = vmatprep.subr.bf16.mxu0 0
      %807 = vmatpush1.bf16.msra.mxu0 0
      %808 = vmatprep.subr.bf16.mxu0 0
      %809 = vmatpush1.bf16.msra.mxu0 0
      %810 = vmatprep.subr.bf16.mxu0 0
      %811 = vmatpush1.bf16.msra.mxu0 0
      %812 = vmatprep.subr.bf16.mxu0 0
      %813 = vmatpush1.bf16.msra.mxu0 0
      %814 = vmatprep.subr.bf16.mxu0 0
      %815 = vmatpush1.bf16.msra.mxu0 0
      %816 = vmatprep.subr.bf16.mxu0 0
      %817 = vmatpush1.bf16.msra.mxu0 0
      %818 = vmatprep.subr.bf16.mxu0 0
      %819 = vmatpush1.bf16.msra.mxu0 0
      %820 = vmatprep.mubr.bf16.mxu0 0
      %821 = vmatmul.mubr.bf16.gmra.mrb[0].mxu0 %v786
      %v822 = vpop.f32.mrb[0].mxu0
      %v823 = vadd.f32 0.0, %v822
      %v824 = vpop.f32.mrb[0].mxu0
      %v825 = vpop.f32.mrb[0].mxu0
      %v826 = vpop.f32.mrb[0].mxu0
      %827 = vdwg.mxu0
      %v828 = vadd.f32 %v779, %v823
      %v829 = vadd.f32 %v828, %v568
      %vm830 = vcmp.gt.f32.partialorder %v829, 0.0
      %v831 = vmul.f32 %v829, 0.2
      %v832 = vsel %vm830, %v829, %v831
      %vm833 = vcmask 523264
      %v834 = vsel %vm833, %v573, 0.0
      %v835 = vrot.slane %v834, 4
      %v836 = vadd.f32 %v834, %v835
      %v837 = vrot.slane %v836, 2
      %v838 = vadd.f32 %v836, %v837
      %v839 = vrot.slane %v838, 1
      %v840 = vadd.f32 %v838, %v839
      %v841 = vmul.f32 %v573, %v573
      %v842 = vsel %vm833, %v841, 0.0
      %v843 = vrot.slane %v842, 4
      %v844 = vadd.f32 %v842, %v843
      %v845 = vrot.slane %v844, 2
      %v846 = vadd.f32 %v844, %v845
      %v847 = vrot.slane %v846, 1
      %v848 = vadd.f32 %v846, %v847
      %v849 = vsel %vm833, %v832, 0.0
      %v850 = vrot.slane %v849, 4
      %v851 = vadd.f32 %v849, %v850
      %v852 = vrot.slane %v851, 2
      %v853 = vadd.f32 %v851, %v852
      %v854 = vrot.slane %v853, 1
      %v855 = vadd.f32 %v853, %v854
      %v856 = vadd.f32 %v840, %v855
      %v857 = vmul.f32 %v832, %v832
      %v858 = vsel %vm833, %v857, 0.0
      %v859 = vrot.slane %v858, 4
      %v860 = vadd.f32 %v858, %v859
      %v861 = vrot.slane %v860, 2
      %v862 = vadd.f32 %v860, %v861
      %v863 = vrot.slane %v862, 1
      %v864 = vadd.f32 %v862, %v863
      %v865 = vadd.f32 %v848, %v864
      %v866 = vmul.f32 %v856, 0.0625
      %v867 = vmul.f32 %v865, 0.0625
      %v868 = vmul.f32 %v866, %v866
      %v869 = vsub.f32 %v867, %v868
      %v870 = vadd.f32 %v869, 1e-05
      %v871 = vrsqrt.pop %v870
      %v872 = vmul.f32 %v227, %v871
      %v873 = vmul.f32 %v866, %v872
      %v874 = vsub.f32 %v228, %v873
      %v876 = vlaneseq
      %v877 = vshrl.u32 %v876, 7
      %v878 = vsub.s32 0, %v877
      %v879 = vrot.slane %v872, %v878
      %v881 = vmul.f32 %v573, %v879
      %v883 = vlaneseq
      %v884 = vshrl.u32 %v883, 7
      %v885 = vsub.s32 0, %v884
      %v886 = vrot.slane %v874, %v885
      %v888 = vadd.f32 %v881, %v886
      %v889 = vmul.f32 %v832, %v879
      %v890 = vadd.f32 %v889, %v886
      %v891 = vpack.c.bf16 %v888, %v888
      %vm892 = vcmask 519168
      %893 = vst.msk [vmem:[%s224] sm:$0xf] %vm892, %v891
      %v894 = vpack.c.bf16 %v890, %v890
      %s895 = scalar_lea.vmem %s224, 4
      %896 = vst.msk [vmem:[%s895] sm:$0xf] %vm892, %v894
      %p897 = scmp.lt.s32.totalorder %s16, 7
      %s898 = scalar_select %p897, %s16, 7
      %s899 = smul.addr %s898, 2
      %s900 = smul.addr %s899, 4
      %s901 = scalar_lea.vmem %s5, %s900
      // Predicated region
      $region41: #{baseline_convnet_forward.8} parent=39 // pred_check
        %p902 = pneg %p144
      $region42: #{baseline_convnet_forward.8} parent=39 // pred_check_branch
        %904 = sbr.rel (%p902) target = $region44
      $region43: #{baseline_convnet_forward.8} parent=39 // pred_region
        _
      $region44: #{baseline_convnet_forward.8} parent=39 // pred_fallthru
        _
    $region40: #{baseline_convnet_forward.8} parent=5 // pred_fallthru
      _
    %p905 = scmp.le.s32.totalorder 2, %s11
    // Predicated region
    $region45: #{baseline_convnet_forward.8} parent=5 // pred_check
      %p906 = pneg %p905
    $region46: #{baseline_convnet_forward.8} parent=5 // pred_check_branch
      %908 = sbr.rel (%p906) target = $region48
    $region47: #{baseline_convnet_forward.8} parent=5 // pred_region
      %s909 = ssub.s32 %s11, 2
      // Predicated region
      $region49: #{baseline_convnet_forward.8} parent=47 // pred_check
        %p910 = pneg %p150
      $region50: #{baseline_convnet_forward.8} parent=47 // pred_check_branch
        %912 = sbr.rel (%p910) target = $region52
      $region51: #{baseline_convnet_forward.8} parent=47 // pred_region
        %p913 = scmp.lt.s32.totalorder %s17, 7
        %s914 = scalar_select %p913, %s17, 7
        %s915 = smul.addr %s914, 2
        %s916 = smul.addr %s915, 4
        %s917 = scalar_lea.vmem %s5, %s916
      $region52: #{baseline_convnet_forward.8} parent=47 // pred_fallthru
        _
    $region48: #{baseline_convnet_forward.8} parent=5 // pred_fallthru
      _
  $region6: #{baseline_convnet_forward.8} parent=0 // loop_footer
    %s15 = sadd.s32 1, %s11
  $region7: #{baseline_convnet_forward.8} parent=0 // loop_footer_branch
    %10 = sbr.rel target = $region3
  $region8: #{baseline_convnet_forward.8} parent=0 // loop_exit
    _

// kernel: baseline_convnet_forward.9
$region0: #{baseline_convnet_forward.9}
  #allocation0 [shape = 'u32[]', space=smem, size = 0x4, offset = 0x4, fixed_abs, tag = 'smem constant byte address 0x4 - core index']
  #allocation1 [shape = 'u32[144,128]{1,0:T(1,128)}', space=vmem, size = 0x12000, scoped, tag = 'internal scratch']
  %s0 = inlined_call_operand.vmem [shape: bf16[8,2,1,8,64], index: 0, kind: input, shape index: {}]
  %s1 = inlined_call_operand.vmem [shape: bf16[192,64], index: 1, kind: input, shape index: {}]
  %s2 = inlined_call_operand.vmem [shape: f32[1,64], index: 2, kind: input, shape index: {}]
  %s3 = inlined_call_operand.vmem [shape: f32[1,64], index: 3, kind: input, shape index: {}]
  %s4 = inlined_call_operand.vmem [shape: f32[1,64], index: 4, kind: input, shape index: {}]
  %s5 = inlined_call_operand.vmem [shape: bf16[8,2,6,64], index: 5, kind: output, shape index: {}]
  %s6 = sld [smem:[#allocation0]]
  $region53: #{baseline_convnet_forward.9} parent=0
    _
  %s8 = ssub.s32 1, %s6
  %s9 = scalar_select 0, %s8, %s6
  loop: start=0, step=1, limit=10
  $region2: #{baseline_convnet_forward.9} parent=0 // loop_pre_header
    _
  $region3: #{baseline_convnet_forward.9} parent=0 // loop_header
    %s11 = sphi 0, %s15
    %p12 = scmp.ge.s32.totalorder %s11, 10
    %s21 = sphi 0, %s23
    %s24 = sphi 0, %s21
    %s25 = sphi 0, %s24
    %s41 = sphi 0, %s25
    %s45 = sphi 0, %s45
    %s47 = sphi 0, %s45
    %s48 = sphi 0, %s47
    %s62 = sphi 0, %s48
    %s66 = sphi 0, %s66
    %s68 = sphi 0, %s66
    %s69 = sphi 0, %s68
    %s83 = sphi 0, %s69
    %s87 = sphi 0, %s87
    %s89 = sphi 0, %s87
    %s90 = sphi 0, %s89
    %s104 = sphi 0, %s90
    %s108 = sphi 0, %s108
    %s110 = sphi 0, %s108
    %s111 = sphi 0, %s110
    %s125 = sphi 0, %s111
    %s131 = sphi 0, %s133
    %s134 = sphi 0, %s131
    %s135 = sphi 0, %s134
    %s151 = sphi 0, %s135
  $region4: #{baseline_convnet_forward.9} parent=0 // loop_header_branch
    %14 = sbr.rel (%p12) target = $region8
  $region5: #{baseline_convnet_forward.9} parent=0 // loop_body
    %s16 = ssub.s32 %s11, 1
    %s17 = ssub.s32 %s11, 2
    %s18 = sadd.s32 %s11, 1
    %s19 = ssub.s32 %s11, %s18
    %p20 = scmp.eq.s32.totalorder %s19, 0
    %s22 = sadd.s32 %s21, 1
    %s23 = scalar_select %p20, %s21, %s22
    %p26 = pneg %p20
    %p27 = scmp.eq.s32.totalorder %s11, 7
    %p28 = por %p26, %p27
    %p29 = scmp.ne.s32.totalorder %s21, %s24
    %p30 = scmp.eq.s32.totalorder %s11, 0
    %p31 = por %p29, %p30
    %p32 = scmp.ne.s32.totalorder %s21, %s24
    %p33 = scmp.eq.s32.totalorder %s16, 7
    %p34 = por %p32, %p33
    %p35 = scmp.ne.s32.totalorder %s24, %s25
    %p36 = scmp.eq.s32.totalorder %s16, 0
    %p37 = por %p35, %p36
    %p38 = scmp.ne.s32.totalorder %s24, %s25
    %p39 = scmp.eq.s32.totalorder %s17, 7
    %p40 = por %p38, %p39
    %p42 = scmp.ne.s32.totalorder %s25, %s41
    %p43 = scmp.eq.s32.totalorder %s17, 0
    %p44 = por %p42, %p43
    %s46 = sadd.s32 %s45, 1
    %p49 = scmp.eq.s32.totalorder %s11, 7
    %p50 = scmp.ne.s32.totalorder %s45, %s47
    %p51 = scmp.eq.s32.totalorder %s11, 0
    %p52 = por %p50, %p51
    %p53 = scmp.ne.s32.totalorder %s45, %s47
    %p54 = scmp.eq.s32.totalorder %s16, 7
    %p55 = por %p53, %p54
    %p56 = scmp.ne.s32.totalorder %s47, %s48
    %p57 = scmp.eq.s32.totalorder %s16, 0
    %p58 = por %p56, %p57
    %p59 = scmp.ne.s32.totalorder %s47, %s48
    %p60 = scmp.eq.s32.totalorder %s17, 7
    %p61 = por %p59, %p60
    %p63 = scmp.ne.s32.totalorder %s48, %s62
    %p64 = scmp.eq.s32.totalorder %s17, 0
    %p65 = por %p63, %p64
    %s67 = sadd.s32 %s66, 1
    %p70 = scmp.eq.s32.totalorder %s11, 7
    %p71 = scmp.ne.s32.totalorder %s66, %s68
    %p72 = scmp.eq.s32.totalorder %s11, 0
    %p73 = por %p71, %p72
    %p74 = scmp.ne.s32.totalorder %s66, %s68
    %p75 = scmp.eq.s32.totalorder %s16, 7
    %p76 = por %p74, %p75
    %p77 = scmp.ne.s32.totalorder %s68, %s69
    %p78 = scmp.eq.s32.totalorder %s16, 0
    %p79 = por %p77, %p78
    %p80 = scmp.ne.s32.totalorder %s68, %s69
    %p81 = scmp.eq.s32.totalorder %s17, 7
    %p82 = por %p80, %p81
    %p84 = scmp.ne.s32.totalorder %s69, %s83
    %p85 = scmp.eq.s32.totalorder %s17, 0
    %p86 = por %p84, %p85
    %s88 = sadd.s32 %s87, 1
    %p91 = scmp.eq.s32.totalorder %s11, 7
    %p92 = scmp.ne.s32.totalorder %s87, %s89
    %p93 = scmp.eq.s32.totalorder %s11, 0
    %p94 = por %p92, %p93
    %p95 = scmp.ne.s32.totalorder %s87, %s89
    %p96 = scmp.eq.s32.totalorder %s16, 7
    %p97 = por %p95, %p96
    %p98 = scmp.ne.s32.totalorder %s89, %s90
    %p99 = scmp.eq.s32.totalorder %s16, 0
    %p100 = por %p98, %p99
    %p101 = scmp.ne.s32.totalorder %s89, %s90
    %p102 = scmp.eq.s32.totalorder %s17, 7
    %p103 = por %p101, %p102
    %p105 = scmp.ne.s32.totalorder %s90, %s104
    %p106 = scmp.eq.s32.totalorder %s17, 0
    %p107 = por %p105, %p106
    %s109 = sadd.s32 %s108, 1
    %p112 = scmp.eq.s32.totalorder %s11, 7
    %p113 = scmp.ne.s32.totalorder %s108, %s110
    %p114 = scmp.eq.s32.totalorder %s11, 0
    %p115 = por %p113, %p114
    %p116 = scmp.ne.s32.totalorder %s108, %s110
    %p117 = scmp.eq.s32.totalorder %s16, 7
    %p118 = por %p116, %p117
    %p119 = scmp.ne.s32.totalorder %s110, %s111
    %p120 = scmp.eq.s32.totalorder %s16, 0
    %p121 = por %p119, %p120
    %p122 = scmp.ne.s32.totalorder %s110, %s111
    %p123 = scmp.eq.s32.totalorder %s17, 7
    %p124 = por %p122, %p123
    %p126 = scmp.ne.s32.totalorder %s111, %s125
    %p127 = scmp.eq.s32.totalorder %s17, 0
    %p128 = por %p126, %p127
    %s129 = ssub.s32 %s11, %s18
    %p130 = scmp.eq.s32.totalorder %s129, 0
    %s132 = sadd.s32 %s131, 1
    %s133 = scalar_select %p130, %s131, %s132
    %p136 = pneg %p130
    %p137 = scmp.eq.s32.totalorder %s11, 7
    %p138 = por %p136, %p137
    %p139 = scmp.ne.s32.totalorder %s131, %s134
    %p140 = scmp.eq.s32.totalorder %s11, 0
    %p141 = por %p139, %p140
    %p142 = scmp.ne.s32.totalorder %s131, %s134
    %p143 = scmp.eq.s32.totalorder %s16, 7
    %p144 = por %p142, %p143
    %p145 = scmp.ne.s32.totalorder %s134, %s135
    %p146 = scmp.eq.s32.totalorder %s16, 0
    %p147 = por %p145, %p146
    %p148 = scmp.ne.s32.totalorder %s134, %s135
    %p149 = scmp.eq.s32.totalorder %s17, 7
    %p150 = por %p148, %p149
    %p152 = scmp.ne.s32.totalorder %s135, %s151
    %p153 = scmp.eq.s32.totalorder %s17, 0
    %p154 = por %p152, %p153
    %p155 = scmp.le.s32.totalorder 1, %s11
    %p156 = scmp.lt.s32.totalorder %s11, 9
    %p157 = pnand %p155, %p156
    %p158 = pneg %p157
    // Predicated region
    $region9: #{baseline_convnet_forward.9} parent=5 // pred_check
      _
    $region10: #{baseline_convnet_forward.9} parent=5 // pred_check_branch
      %160 = sbr.rel (%p157) target = $region12
    $region11: #{baseline_convnet_forward.9} parent=5 // pred_region
      %s161 = ssub.s32 %s11, 1
      // Predicated region
      $region13: #{baseline_convnet_forward.9} parent=11 // pred_check
        %p162 = pneg %p58
      $region14: #{baseline_convnet_forward.9} parent=11 // pred_check_branch
        %164 = sbr.rel (%p162) target = $region16
      $region15: #{baseline_convnet_forward.9} parent=11 // pred_region
        _
      $region16: #{baseline_convnet_forward.9} parent=11 // pred_fallthru
        _
      // Predicated region
      $region17: #{baseline_convnet_forward.9} parent=11 // pred_check
        %p165 = pneg %p79
      $region18: #{baseline_convnet_forward.9} parent=11 // pred_check_branch
        %167 = sbr.rel (%p165) target = $region20
      $region19: #{baseline_convnet_forward.9} parent=11 // pred_region
        _
      $region20: #{baseline_convnet_forward.9} parent=11 // pred_fallthru
        _
      // Predicated region
      $region21: #{baseline_convnet_forward.9} parent=11 // pred_check
        %p168 = pneg %p100
      $region22: #{baseline_convnet_forward.9} parent=11 // pred_check_branch
        %170 = sbr.rel (%p168) target = $region24
      $region23: #{baseline_convnet_forward.9} parent=11 // pred_region
        _
      $region24: #{baseline_convnet_forward.9} parent=11 // pred_fallthru
        _
      // Predicated region
      $region25: #{baseline_convnet_forward.9} parent=11 // pred_check
        %p171 = pneg %p121
      $region26: #{baseline_convnet_forward.9} parent=11 // pred_check_branch
        %173 = sbr.rel (%p171) target = $region28
      $region27: #{baseline_convnet_forward.9} parent=11 // pred_region
        _
      $region28: #{baseline_convnet_forward.9} parent=11 // pred_fallthru
        _
    $region12: #{baseline_convnet_forward.9} parent=5 // pred_fallthru
      _
    %p174 = scmp.lt.s32.totalorder %s11, 8
    // Predicated region
    $region29: #{baseline_convnet_forward.9} parent=5 // pred_check
      %p175 = pneg %p174
    $region30: #{baseline_convnet_forward.9} parent=5 // pred_check_branch
      %177 = sbr.rel (%p175) target = $region32
    $region31: #{baseline_convnet_forward.9} parent=5 // pred_region
      // Predicated region
      $region33: #{baseline_convnet_forward.9} parent=31 // pred_check
        %p178 = pneg %p31
      $region34: #{baseline_convnet_forward.9} parent=31 // pred_check_branch
        %180 = sbr.rel (%p178) target = $region36
      $region35: #{baseline_convnet_forward.9} parent=31 // pred_region
        %p181 = scmp.lt.s32.totalorder %s11, 7
        %s182 = scalar_select %p181, %s11, 7
        %s183 = smul.addr %s182, 2
        %s184 = smul.addr %s183, 4
        %s185 = scalar_lea.vmem %s0, %s184
      $region36: #{baseline_convnet_forward.9} parent=31 // pred_fallthru
        _
    $region32: #{baseline_convnet_forward.9} parent=5 // pred_fallthru
      _
    %p186 = scmp.le.s32.totalorder 1, %s11
    %p187 = scmp.lt.s32.totalorder %s11, 9
    %p188 = pnand %p186, %p187
    %p189 = pneg %p188
    // Predicated region
    $region37: #{baseline_convnet_forward.9} parent=5 // pred_check
      _
    $region38: #{baseline_convnet_forward.9} parent=5 // pred_check_branch
      %191 = sbr.rel (%p188) target = $region40
    $region39: #{baseline_convnet_forward.9} parent=5 // pred_region
      %s192 = ssub.s32 %s11, 1
      %p193 = scmp.lt.s32.totalorder %s16, 7
      %s194 = scalar_select %p193, %s16, 7
      %s195 = smul.addr %s194, 2
      %s196 = smul.addr %s195, 4
      %s197 = scalar_lea.vmem %s0, %s196
      %p198 = pneg %p37
      %p199 = pneg %p34
      %p200 = pneg %p58
      %p201 = pneg %p55
      %p202 = pneg %p79
      %p203 = pneg %p76
      %p204 = pneg %p100
      %p205 = pneg %p97
      %p206 = pneg %p121
      %p207 = pneg %p118
      %p208 = pneg %p147
      %p209 = pneg %p144
      %p210 = scmp.lt.s32.totalorder %s16, 7
      %s211 = scalar_select %p210, %s16, 7
      %s212 = smul.addr %s211, 2
      %s213 = smul.addr %s212, 4
      %s214 = scalar_lea.vmem %s5, %s213
      %p215 = scmp.lt.s32.totalorder %s16, 7
      %s216 = scalar_select %p215, %s16, 7
      %s217 = smul.addr %s216, 2
      %s218 = smul.addr %s217, 4
      %s219 = scalar_lea.vmem %s0, %s218
      %p220 = scmp.lt.s32.totalorder %s16, 7
      %s221 = scalar_select %p220, %s16, 7
      %s222 = smul.addr %s221, 2
      %s223 = smul.addr %s222, 4
      %s224 = scalar_lea.vmem %s5, %s223
      %v226 = vld [vmem:[%s2] sm:$0x1]
      %v227 = vld [vmem:[%s3] sm:$0x1]
      %v228 = vld [vmem:[%s4] sm:$0x1]
      %v229 = vld [vmem:[%s219] sm:$0x7]
      %v230 = vld [vmem:[%s1] sm:$0xf]
      %v231 = vld [vmem:[%s1 + $0x4] sm:$0xf]
      %v232 = vld [vmem:[%s1 + $0x8] sm:$0xf]
      %v233 = vld [vmem:[%s1 + $0xc] sm:$0xf]
      %v234 = vld [vmem:[%s1 + $0x10] sm:$0xf]
      %v235 = vld [vmem:[%s1 + $0x14] sm:$0xf]
      %v236 = vld [vmem:[%s1 + $0x18] sm:$0xf]
      %v237 = vld [vmem:[%s1 + $0x1c] sm:$0xf]
      %v238 = vld [vmem:[%s219] sm:$0xf]
      %v239 = vld [vmem:[%s1 + $0x20] sm:$0xf]
      %v240 = vld [vmem:[%s1 + $0x24] sm:$0xf]
      %v241 = vld [vmem:[%s1 + $0x28] sm:$0xf]
      %v242 = vld [vmem:[%s1 + $0x2c] sm:$0xf]
      %v243 = vld [vmem:[%s1 + $0x30] sm:$0xf]
      %v244 = vld [vmem:[%s1 + $0x34] sm:$0xf]
      %v245 = vld [vmem:[%s1 + $0x38] sm:$0xf]
      %v246 = vld [vmem:[%s1 + $0x3c] sm:$0xf]
      %v248 = vunpack.c.l.b16 %v238
      %v249 = vpack.c.b16 %v248, %v248
      %v251 = vshrl.u32 %v249, 16
      %v253 = vshll.u32 %v249, 16
      %v255 = vrot.slane %v253, 1
      %v256 = vor.u32 %v251, %v255
      %v265 = vunpack.c.l.b16 %v239
      %v266 = vunpack.c.l.b16 %v240
      %v267 = vunpack.c.l.b16 %v241
      %v268 = vunpack.c.l.b16 %v242
      %v269 = vunpack.c.l.b16 %v243
      %v270 = vunpack.c.l.b16 %v244
      %v271 = vunpack.c.l.b16 %v245
      %v272 = vunpack.c.l.b16 %v246
      %v273 = vpack.c.b16 %v266, %v265
      %v274 = vpack.c.b16 %v268, %v267
      %v275 = vpack.c.b16 %v270, %v269
      %v276 = vpack.c.b16 %v272, %v271
      %vm281 = vcmask 523264
      %v283 = vsel %vm281, %v256, 0
      %285 = vmatprep.subr.bf16.mxu0 0
      %286 = vmatpush1.bf16.msra.mxu0 %v273
      %287 = vmatprep.subr.bf16.mxu0 0
      %288 = vmatpush1.bf16.msra.mxu0 %v274
      %289 = vmatprep.subr.bf16.mxu0 0
      %290 = vmatpush1.bf16.msra.mxu0 %v275
      %291 = vmatprep.subr.bf16.mxu0 0
      %292 = vmatpush1.bf16.msra.mxu0 %v276
      %293 = vmatprep.subr.bf16.mxu0 0
      %294 = vmatpush1.bf16.msra.mxu0 0
      %295 = vmatprep.subr.bf16.mxu0 0
      %296 = vmatpush1.bf16.msra.mxu0 0
      %297 = vmatprep.subr.bf16.mxu0 0
      %298 = vmatpush1.bf16.msra.mxu0 0
      %299 = vmatprep.subr.bf16.mxu0 0
      %300 = vmatpush1.bf16.msra.mxu0 0
      %301 = vmatprep.subr.bf16.mxu0 0
      %302 = vmatpush1.bf16.msra.mxu0 0
      %303 = vmatprep.subr.bf16.mxu0 0
      %304 = vmatpush1.bf16.msra.mxu0 0
      %305 = vmatprep.subr.bf16.mxu0 0
      %306 = vmatpush1.bf16.msra.mxu0 0
      %307 = vmatprep.subr.bf16.mxu0 0
      %308 = vmatpush1.bf16.msra.mxu0 0
      %309 = vmatprep.subr.bf16.mxu0 0
      %310 = vmatpush1.bf16.msra.mxu0 0
      %311 = vmatprep.subr.bf16.mxu0 0
      %312 = vmatpush1.bf16.msra.mxu0 0
      %313 = vmatprep.subr.bf16.mxu0 0
      %314 = vmatpush1.bf16.msra.mxu0 0
      %315 = vmatprep.subr.bf16.mxu0 0
      %316 = vmatpush1.bf16.msra.mxu0 0
      %317 = vmatprep.mubr.bf16.mxu0 0
      %318 = vmatmul.mubr.bf16.gmra.mrb[0].mxu0 %v283
      %v319 = vpop.f32.mrb[0].mxu0
      %v320 = vadd.f32 0.0, %v319
      %v321 = vpop.f32.mrb[0].mxu0
      %v322 = vpop.f32.mrb[0].mxu0
      %v323 = vpop.f32.mrb[0].mxu0
      %324 = vdwg.mxu0
      %v333 = vunpack.c.l.b16 %v230
      %v334 = vunpack.c.l.b16 %v231
      %v335 = vunpack.c.l.b16 %v232
      %v336 = vunpack.c.l.b16 %v233
      %v337 = vunpack.c.l.b16 %v234
      %v338 = vunpack.c.l.b16 %v235
      %v339 = vunpack.c.l.b16 %v236
      %v340 = vunpack.c.l.b16 %v237
      %v341 = vpack.c.b16 %v334, %v333
      %v342 = vpack.c.b16 %v336, %v335
      %v343 = vpack.c.b16 %v338, %v337
      %v344 = vpack.c.b16 %v340, %v339
      %v350 = vsel %vm281, %v229, 0
      %352 = vmatprep.subr.bf16.mxu0 0
      %353 = vmatpush1.bf16.msra.mxu0 %v341
      %354 = vmatprep.subr.bf16.mxu0 0
      %355 = vmatpush1.bf16.msra.mxu0 %v342
      %356 = vmatprep.subr.bf16.mxu0 0
      %357 = vmatpush1.bf16.msra.mxu0 %v343
      %358 = vmatprep.subr.bf16.mxu0 0
      %359 = vmatpush1.bf16.msra.mxu0 %v344
      %360 = vmatprep.subr.bf16.mxu0 0
      %361 = vmatpush1.bf16.msra.mxu0 0
      %362 = vmatprep.subr.bf16.mxu0 0
      %363 = vmatpush1.bf16.msra.mxu0 0
      %364 = vmatprep.subr.bf16.mxu0 0
      %365 = vmatpush1.bf16.msra.mxu0 0
      %366 = vmatprep.subr.bf16.mxu0 0
      %367 = vmatpush1.bf16.msra.mxu0 0
      %368 = vmatprep.subr.bf16.mxu0 0
      %369 = vmatpush1.bf16.msra.mxu0 0
      %370 = vmatprep.subr.bf16.mxu0 0
      %371 = vmatpush1.bf16.msra.mxu0 0
      %372 = vmatprep.subr.bf16.mxu0 0
      %373 = vmatpush1.bf16.msra.mxu0 0
      %374 = vmatprep.subr.bf16.mxu0 0
      %375 = vmatpush1.bf16.msra.mxu0 0
      %376 = vmatprep.subr.bf16.mxu0 0
      %377 = vmatpush1.bf16.msra.mxu0 0
      %378 = vmatprep.subr.bf16.mxu0 0
      %379 = vmatpush1.bf16.msra.mxu0 0
      %380 = vmatprep.subr.bf16.mxu0 0
      %381 = vmatpush1.bf16.msra.mxu0 0
      %382 = vmatprep.subr.bf16.mxu0 0
      %383 = vmatpush1.bf16.msra.mxu0 0
      %384 = vmatprep.mubr.bf16.mxu0 0
      %385 = vmatmul.mubr.bf16.gmra.mrb[0].mxu0 %v350
      %v386 = vpop.f32.mrb[0].mxu0
      %v387 = vadd.f32 %v320, %v386
      %v388 = vpop.f32.mrb[0].mxu0
      %v389 = vpop.f32.mrb[0].mxu0
      %v390 = vpop.f32.mrb[0].mxu0
      %391 = vdwg.mxu0
      %v392 = vld [vmem:[%s219] sm:$0xe]
      %v393 = vld [vmem:[%s1 + $0x40] sm:$0xf]
      %v394 = vld [vmem:[%s1 + $0x44] sm:$0xf]
      %v395 = vld [vmem:[%s1 + $0x48] sm:$0xf]
      %v396 = vld [vmem:[%s1 + $0x4c] sm:$0xf]
      %v397 = vld [vmem:[%s1 + $0x50] sm:$0xf]
      %v398 = vld [vmem:[%s1 + $0x54] sm:$0xf]
      %v399 = vld [vmem:[%s1 + $0x58] sm:$0xf]
      %v400 = vld [vmem:[%s1 + $0x5c] sm:$0xf]
      %v402 = vunpack.c.l.b16 %v392
      %v403 = vpack.c.b16 %v402, %v402
      %v404 = vrot.slane %v403, 1
      %v413 = vunpack.c.l.b16 %v393
      %v414 = vunpack.c.l.b16 %v394
      %v415 = vunpack.c.l.b16 %v395
      %v416 = vunpack.c.l.b16 %v396
      %v417 = vunpack.c.l.b16 %v397
      %v418 = vunpack.c.l.b16 %v398
      %v419 = vunpack.c.l.b16 %v399
      %v420 = vunpack.c.l.b16 %v400
      %v421 = vpack.c.b16 %v414, %v413
      %v422 = vpack.c.b16 %v416, %v415
      %v423 = vpack.c.b16 %v418, %v417
      %v424 = vpack.c.b16 %v420, %v419
      %v430 = vsel %vm281, %v404, 0
      %432 = vmatprep.subr.bf16.mxu0 0
      %433 = vmatpush1.bf16.msra.mxu0 %v421
      %434 = vmatprep.subr.bf16.mxu0 0
      %435 = vmatpush1.bf16.msra.mxu0 %v422
      %436 = vmatprep.subr.bf16.mxu0 0
      %437 = vmatpush1.bf16.msra.mxu0 %v423
      %438 = vmatprep.subr.bf16.mxu0 0
      %439 = vmatpush1.bf16.msra.mxu0 %v424
      %440 = vmatprep.subr.bf16.mxu0 0
      %441 = vmatpush1.bf16.msra.mxu0 0
      %442 = vmatprep.subr.bf16.mxu0 0
      %443 = vmatpush1.bf16.msra.mxu0 0
      %444 = vmatprep.subr.bf16.mxu0 0
      %445 = vmatpush1.bf16.msra.mxu0 0
      %446 = vmatprep.subr.bf16.mxu0 0
      %447 = vmatpush1.bf16.msra.mxu0 0
      %448 = vmatprep.subr.bf16.mxu0 0
      %449 = vmatpush1.bf16.msra.mxu0 0
      %450 = vmatprep.subr.bf16.mxu0 0
      %451 = vmatpush1.bf16.msra.mxu0 0
      %452 = vmatprep.subr.bf16.mxu0 0
      %453 = vmatpush1.bf16.msra.mxu0 0
      %454 = vmatprep.subr.bf16.mxu0 0
      %455 = vmatpush1.bf16.msra.mxu0 0
      %456 = vmatprep.subr.bf16.mxu0 0
      %457 = vmatpush1.bf16.msra.mxu0 0
      %458 = vmatprep.subr.bf16.mxu0 0
      %459 = vmatpush1.bf16.msra.mxu0 0
      %460 = vmatprep.subr.bf16.mxu0 0
      %461 = vmatpush1.bf16.msra.mxu0 0
      %462 = vmatprep.subr.bf16.mxu0 0
      %463 = vmatpush1.bf16.msra.mxu0 0
      %464 = vmatprep.mubr.bf16.mxu0 0
      %465 = vmatmul.mubr.bf16.gmra.mrb[0].mxu0 %v430
      %v466 = vpop.f32.mrb[0].mxu0
      %v467 = vadd.f32 0.0, %v466
      %v468 = vpop.f32.mrb[0].mxu0
      %v469 = vpop.f32.mrb[0].mxu0
      %v470 = vpop.f32.mrb[0].mxu0
      %471 = vdwg.mxu0
      %v472 = vadd.f32 %v387, %v467
      %v474 = vlaneseq
      %v475 = vshrl.u32 %v474, 7
      %v476 = vsub.s32 0, %v475
      %v477 = vrot.slane %v226, %v476
      %v479 = vadd.f32 %v472, %v477
      %vm480 = vcmp.gt.f32.partialorder %v479, 0.0
      %v481 = vmul.f32 %v479, 0.2
      %v482 = vsel %vm480, %v479, %v481
      %s483 = scalar_lea.vmem %s219, 4
      %v484 = vld [vmem:[%s483] sm:$0x7]
      %v485 = vld [vmem:[%s483] sm:$0xf]
      %v487 = vunpack.c.l.b16 %v485
      %v488 = vpack.c.b16 %v487, %v487
      %v490 = vshrl.u32 %v488, 16
      %v492 = vshll.u32 %v488, 16
      %v494 = vrot.slane %v492, 1
      %v495 = vor.u32 %v490, %v494
      %v497 = vsel %vm281, %v495, 0
      %499 = vmatprep.subr.bf16.mxu0 0
      %500 = vmatpush1.bf16.msra.mxu0 %v273
      %501 = vmatprep.subr.bf16.mxu0 0
      %502 = vmatpush1.bf16.msra.mxu0 %v274
      %503 = vmatprep.subr.bf16.mxu0 0
      %504 = vmatpush1.bf16.msra.mxu0 %v275
      %505 = vmatprep.subr.bf16.mxu0 0
      %506 = vmatpush1.bf16.msra.mxu0 %v276
      %507 = vmatprep.subr.bf16.mxu0 0
      %508 = vmatpush1.bf16.msra.mxu0 0
      %509 = vmatprep.subr.bf16.mxu0 0
      %510 = vmatpush1.bf16.msra.mxu0 0
      %511 = vmatprep.subr.bf16.mxu0 0
      %512 = vmatpush1.bf16.msra.mxu0 0
      %513 = vmatprep.subr.bf16.mxu0 0
      %514 = vmatpush1.bf16.msra.mxu0 0
      %515 = vmatprep.subr.bf16.mxu0 0
      %516 = vmatpush1.bf16.msra.mxu0 0
      %517 = vmatprep.subr.bf16.mxu0 0
      %518 = vmatpush1.bf16.msra.mxu0 0
      %519 = vmatprep.subr.bf16.mxu0 0
      %520 = vmatpush1.bf16.msra.mxu0 0
      %521 = vmatprep.subr.bf16.mxu0 0
      %522 = vmatpush1.bf16.msra.mxu0 0
      %523 = vmatprep.subr.bf16.mxu0 0
      %524 = vmatpush1.bf16.msra.mxu0 0
      %525 = vmatprep.subr.bf16.mxu0 0
      %526 = vmatpush1.bf16.msra.mxu0 0
      %527 = vmatprep.subr.bf16.mxu0 0
      %528 = vmatpush1.bf16.msra.mxu0 0
      %529 = vmatprep.subr.bf16.mxu0 0
      %530 = vmatpush1.bf16.msra.mxu0 0
      %531 = vmatprep.mubr.bf16.mxu0 0
      %532 = vmatmul.mubr.bf16.gmra.mrb[0].mxu0 %v497
      %v533 = vpop.f32.mrb[0].mxu0
      %v534 = vadd.f32 0.0, %v533
      %v535 = vpop.f32.mrb[0].mxu0
      %v536 = vpop.f32.mrb[0].mxu0
      %v537 = vpop.f32.mrb[0].mxu0
      %538 = vdwg.mxu0
      %v540 = vsel %vm281, %v484, 0
      %542 = vmatprep.subr.bf16.mxu0 0
      %543 = vmatpush1.bf16.msra.mxu0 %v341
      %544 = vmatprep.subr.bf16.mxu0 0
      %545 = vmatpush1.bf16.msra.mxu0 %v342
      %546 = vmatprep.subr.bf16.mxu0 0
      %547 = vmatpush1.bf16.msra.mxu0 %v343
      %548 = vmatprep.subr.bf16.mxu0 0
      %549 = vmatpush1.bf16.msra.mxu0 %v344
      %550 = vmatprep.subr.bf16.mxu0 0
      %551 = vmatpush1.bf16.msra.mxu0 0
      %552 = vmatprep.subr.bf16.mxu0 0
      %553 = vmatpush1.bf16.msra.mxu0 0
      %554 = vmatprep.subr.bf16.mxu0 0
      %555 = vmatpush1.bf16.msra.mxu0 0
      %556 = vmatprep.subr.bf16.mxu0 0
      %557 = vmatpush1.bf16.msra.mxu0 0
      %558 = vmatprep.subr.bf16.mxu0 0
      %559 = vmatpush1.bf16.msra.mxu0 0
      %560 = vmatprep.subr.bf16.mxu0 0
      %561 = vmatpush1.bf16.msra.mxu0 0
      %562 = vmatprep.subr.bf16.mxu0 0
      %563 = vmatpush1.bf16.msra.mxu0 0
      %564 = vmatprep.subr.bf16.mxu0 0
      %565 = vmatpush1.bf16.msra.mxu0 0
      %566 = vmatprep.subr.bf16.mxu0 0
      %567 = vmatpush1.bf16.msra.mxu0 0
      %568 = vmatprep.subr.bf16.mxu0 0
      %569 = vmatpush1.bf16.msra.mxu0 0
      %570 = vmatprep.subr.bf16.mxu0 0
      %571 = vmatpush1.bf16.msra.mxu0 0
      %572 = vmatprep.subr.bf16.mxu0 0
      %573 = vmatpush1.bf16.msra.mxu0 0
      %574 = vmatprep.mubr.bf16.mxu0 0
      %575 = vmatmul.mubr.bf16.gmra.mrb[0].mxu0 %v540
      %v576 = vpop.f32.mrb[0].mxu0
      %v577 = vadd.f32 %v534, %v576
      %v578 = vpop.f32.mrb[0].mxu0
      %v579 = vpop.f32.mrb[0].mxu0
      %v580 = vpop.f32.mrb[0].mxu0
      %581 = vdwg.mxu0
      %v582 = vld [vmem:[%s483] sm:$0xe]
      %v584 = vunpack.c.l.b16 %v582
      %v585 = vpack.c.b16 %v584, %v584
      %v586 = vrot.slane %v585, 1
      %v588 = vsel %vm281, %v586, 0
      %590 = vmatprep.subr.bf16.mxu0 0
      %591 = vmatpush1.bf16.msra.mxu0 %v421
      %592 = vmatprep.subr.bf16.mxu0 0
      %593 = vmatpush1.bf16.msra.mxu0 %v422
      %594 = vmatprep.subr.bf16.mxu0 0
      %595 = vmatpush1.bf16.msra.mxu0 %v423
      %596 = vmatprep.subr.bf16.mxu0 0
      %597 = vmatpush1.bf16.msra.mxu0 %v424
      %598 = vmatprep.subr.bf16.mxu0 0
      %599 = vmatpush1.bf16.msra.mxu0 0
      %600 = vmatprep.subr.bf16.mxu0 0
      %601 = vmatpush1.bf16.msra.mxu0 0
      %602 = vmatprep.subr.bf16.mxu0 0
      %603 = vmatpush1.bf16.msra.mxu0 0
      %604 = vmatprep.subr.bf16.mxu0 0
      %605 = vmatpush1.bf16.msra.mxu0 0
      %606 = vmatprep.subr.bf16.mxu0 0
      %607 = vmatpush1.bf16.msra.mxu0 0
      %608 = vmatprep.subr.bf16.mxu0 0
      %609 = vmatpush1.bf16.msra.mxu0 0
      %610 = vmatprep.subr.bf16.mxu0 0
      %611 = vmatpush1.bf16.msra.mxu0 0
      %612 = vmatprep.subr.bf16.mxu0 0
      %613 = vmatpush1.bf16.msra.mxu0 0
      %614 = vmatprep.subr.bf16.mxu0 0
      %615 = vmatpush1.bf16.msra.mxu0 0
      %616 = vmatprep.subr.bf16.mxu0 0
      %617 = vmatpush1.bf16.msra.mxu0 0
      %618 = vmatprep.subr.bf16.mxu0 0
      %619 = vmatpush1.bf16.msra.mxu0 0
      %620 = vmatprep.subr.bf16.mxu0 0
      %621 = vmatpush1.bf16.msra.mxu0 0
      %622 = vmatprep.mubr.bf16.mxu0 0
      %623 = vmatmul.mubr.bf16.gmra.mrb[0].mxu0 %v588
      %v624 = vpop.f32.mrb[0].mxu0
      %v625 = vadd.f32 0.0, %v624
      %v626 = vpop.f32.mrb[0].mxu0
      %v627 = vpop.f32.mrb[0].mxu0
      %v628 = vpop.f32.mrb[0].mxu0
      %629 = vdwg.mxu0
      %v630 = vadd.f32 %v577, %v625
      %v631 = vadd.f32 %v630, %v477
      %vm632 = vcmp.gt.f32.partialorder %v631, 0.0
      %v633 = vmul.f32 %v631, 0.2
      %v634 = vsel %vm632, %v631, %v633
      %vm635 = vcmask 521216
      %v636 = vsel %vm635, %v482, 0.0
      %v637 = vrot.slane %v636, 4
      %v638 = vadd.f32 %v636, %v637
      %v639 = vrot.slane %v638, 2
      %v640 = vadd.f32 %v638, %v639
      %v641 = vrot.slane %v640, 1
      %v642 = vadd.f32 %v640, %v641
      %v643 = vmul.f32 %v482, %v482
      %v644 = vsel %vm635, %v643, 0.0
      %v645 = vrot.slane %v644, 4
      %v646 = vadd.f32 %v644, %v645
      %v647 = vrot.slane %v646, 2
      %v648 = vadd.f32 %v646, %v647
      %v649 = vrot.slane %v648, 1
      %v650 = vadd.f32 %v648, %v649
      %v651 = vsel %vm635, %v634, 0.0
      %v652 = vrot.slane %v651, 4
      %v653 = vadd.f32 %v651, %v652
      %v654 = vrot.slane %v653, 2
      %v655 = vadd.f32 %v653, %v654
      %v656 = vrot.slane %v655, 1
      %v657 = vadd.f32 %v655, %v656
      %v658 = vadd.f32 %v642, %v657
      %v659 = vmul.f32 %v634, %v634
      %v660 = vsel %vm635, %v659, 0.0
      %v661 = vrot.slane %v660, 4
      %v662 = vadd.f32 %v660, %v661
      %v663 = vrot.slane %v662, 2
      %v664 = vadd.f32 %v662, %v663
      %v665 = vrot.slane %v664, 1
      %v666 = vadd.f32 %v664, %v665
      %v667 = vadd.f32 %v650, %v666
      %v668 = vmul.f32 %v658, 0.083333336
      %v669 = vmul.f32 %v667, 0.083333336
      %v670 = vmul.f32 %v668, %v668
      %v671 = vsub.f32 %v669, %v670
      %v672 = vadd.f32 %v671, 1e-05
      %v673 = vrsqrt.pop %v672
      %v674 = vmul.f32 %v227, %v673
      %v675 = vmul.f32 %v668, %v674
      %v676 = vsub.f32 %v228, %v675
      %v678 = vlaneseq
      %v679 = vshrl.u32 %v678, 7
      %v680 = vsub.s32 0, %v679
      %v681 = vrot.slane %v674, %v680
      %v683 = vmul.f32 %v482, %v681
      %v685 = vlaneseq
      %v686 = vshrl.u32 %v685, 7
      %v687 = vsub.s32 0, %v686
      %v688 = vrot.slane %v676, %v687
      %v690 = vadd.f32 %v683, %v688
      %v691 = vmul.f32 %v634, %v681
      %v692 = vadd.f32 %v691, %v688
      %v693 = vpack.c.bf16 %v690, %v690
      %vm694 = vcmask 518144
      %695 = vst.msk [vmem:[%s224] sm:$0x7] %vm694, %v693
      %v696 = vpack.c.bf16 %v692, %v692
      %s697 = scalar_lea.vmem %s224, 4
      %698 = vst.msk [vmem:[%s697] sm:$0x7] %vm694, %v696
      %p699 = scmp.lt.s32.totalorder %s16, 7
      %s700 = scalar_select %p699, %s16, 7
      %s701 = smul.addr %s700, 2
      %s702 = smul.addr %s701, 4
      %s703 = scalar_lea.vmem %s5, %s702
      // Predicated region
      $region41: #{baseline_convnet_forward.9} parent=39 // pred_check
        %p704 = pneg %p144
      $region42: #{baseline_convnet_forward.9} parent=39 // pred_check_branch
        %706 = sbr.rel (%p704) target = $region44
      $region43: #{baseline_convnet_forward.9} parent=39 // pred_region
        _
      $region44: #{baseline_convnet_forward.9} parent=39 // pred_fallthru
        _
    $region40: #{baseline_convnet_forward.9} parent=5 // pred_fallthru
      _
    %p707 = scmp.le.s32.totalorder 2, %s11
    // Predicated region
    $region45: #{baseline_convnet_forward.9} parent=5 // pred_check
      %p708 = pneg %p707
    $region46: #{baseline_convnet_forward.9} parent=5 // pred_check_branch
      %710 = sbr.rel (%p708) target = $region48
    $region47: #{baseline_convnet_forward.9} parent=5 // pred_region
      %s711 = ssub.s32 %s11, 2
      // Predicated region
      $region49: #{baseline_convnet_forward.9} parent=47 // pred_check
        %p712 = pneg %p150
      $region50: #{baseline_convnet_forward.9} parent=47 // pred_check_branch
        %714 = sbr.rel (%p712) target = $region52
      $region51: #{baseline_convnet_forward.9} parent=47 // pred_region
        %p715 = scmp.lt.s32.totalorder %s17, 7
        %s716 = scalar_select %p715, %s17, 7
        %s717 = smul.addr %s716, 2
        %s718 = smul.addr %s717, 4
        %s719 = scalar_lea.vmem %s5, %s718
      $region52: #{baseline_convnet_forward.9} parent=47 // pred_fallthru
        _
    $region48: #{baseline_convnet_forward.9} parent=5 // pred_fallthru
      _
  $region6: #{baseline_convnet_forward.9} parent=0 // loop_footer
    %s15 = sadd.s32 1, %s11
  $region7: #{baseline_convnet_forward.9} parent=0 // loop_footer_branch
    %10 = sbr.rel target = $region3
  $region8: #{baseline_convnet_forward.9} parent=0 // loop_exit
    _

// kernel: baseline_convnet_forward.10
$region0: #{baseline_convnet_forward.10}
  #allocation0 [shape = 'u32[]', space=smem, size = 0x4, offset = 0x4, fixed_abs, tag = 'smem constant byte address 0x4 - core index']
  #allocation1 [shape = 'u32[144,128]{1,0:T(1,128)}', space=vmem, size = 0x12000, scoped, tag = 'internal scratch']
  %s0 = inlined_call_operand.vmem [shape: bf16[8,2,1,6,64], index: 0, kind: input, shape index: {}]
  %s1 = inlined_call_operand.vmem [shape: bf16[192,128], index: 1, kind: input, shape index: {}]
  %s2 = inlined_call_operand.vmem [shape: f32[1,128], index: 2, kind: input, shape index: {}]
  %s3 = inlined_call_operand.vmem [shape: f32[1,128], index: 3, kind: input, shape index: {}]
  %s4 = inlined_call_operand.vmem [shape: f32[1,128], index: 4, kind: input, shape index: {}]
  %s5 = inlined_call_operand.vmem [shape: bf16[8,2,4,128], index: 5, kind: output, shape index: {}]
  %s6 = sld [smem:[#allocation0]]
  $region53: #{baseline_convnet_forward.10} parent=0
    _
  %s8 = ssub.s32 1, %s6
  %s9 = scalar_select 0, %s8, %s6
  loop: start=0, step=1, limit=10
  $region2: #{baseline_convnet_forward.10} parent=0 // loop_pre_header
    _
  $region3: #{baseline_convnet_forward.10} parent=0 // loop_header
    %s11 = sphi 0, %s15
    %p12 = scmp.ge.s32.totalorder %s11, 10
    %s21 = sphi 0, %s23
    %s24 = sphi 0, %s21
    %s25 = sphi 0, %s24
    %s41 = sphi 0, %s25
    %s45 = sphi 0, %s45
    %s47 = sphi 0, %s45
    %s48 = sphi 0, %s47
    %s62 = sphi 0, %s48
    %s66 = sphi 0, %s66
    %s68 = sphi 0, %s66
    %s69 = sphi 0, %s68
    %s83 = sphi 0, %s69
    %s87 = sphi 0, %s87
    %s89 = sphi 0, %s87
    %s90 = sphi 0, %s89
    %s104 = sphi 0, %s90
    %s108 = sphi 0, %s108
    %s110 = sphi 0, %s108
    %s111 = sphi 0, %s110
    %s125 = sphi 0, %s111
    %s131 = sphi 0, %s133
    %s134 = sphi 0, %s131
    %s135 = sphi 0, %s134
    %s151 = sphi 0, %s135
  $region4: #{baseline_convnet_forward.10} parent=0 // loop_header_branch
    %14 = sbr.rel (%p12) target = $region8
  $region5: #{baseline_convnet_forward.10} parent=0 // loop_body
    %s16 = ssub.s32 %s11, 1
    %s17 = ssub.s32 %s11, 2
    %s18 = sadd.s32 %s11, 1
    %s19 = ssub.s32 %s11, %s18
    %p20 = scmp.eq.s32.totalorder %s19, 0
    %s22 = sadd.s32 %s21, 1
    %s23 = scalar_select %p20, %s21, %s22
    %p26 = pneg %p20
    %p27 = scmp.eq.s32.totalorder %s11, 7
    %p28 = por %p26, %p27
    %p29 = scmp.ne.s32.totalorder %s21, %s24
    %p30 = scmp.eq.s32.totalorder %s11, 0
    %p31 = por %p29, %p30
    %p32 = scmp.ne.s32.totalorder %s21, %s24
    %p33 = scmp.eq.s32.totalorder %s16, 7
    %p34 = por %p32, %p33
    %p35 = scmp.ne.s32.totalorder %s24, %s25
    %p36 = scmp.eq.s32.totalorder %s16, 0
    %p37 = por %p35, %p36
    %p38 = scmp.ne.s32.totalorder %s24, %s25
    %p39 = scmp.eq.s32.totalorder %s17, 7
    %p40 = por %p38, %p39
    %p42 = scmp.ne.s32.totalorder %s25, %s41
    %p43 = scmp.eq.s32.totalorder %s17, 0
    %p44 = por %p42, %p43
    %s46 = sadd.s32 %s45, 1
    %p49 = scmp.eq.s32.totalorder %s11, 7
    %p50 = scmp.ne.s32.totalorder %s45, %s47
    %p51 = scmp.eq.s32.totalorder %s11, 0
    %p52 = por %p50, %p51
    %p53 = scmp.ne.s32.totalorder %s45, %s47
    %p54 = scmp.eq.s32.totalorder %s16, 7
    %p55 = por %p53, %p54
    %p56 = scmp.ne.s32.totalorder %s47, %s48
    %p57 = scmp.eq.s32.totalorder %s16, 0
    %p58 = por %p56, %p57
    %p59 = scmp.ne.s32.totalorder %s47, %s48
    %p60 = scmp.eq.s32.totalorder %s17, 7
    %p61 = por %p59, %p60
    %p63 = scmp.ne.s32.totalorder %s48, %s62
    %p64 = scmp.eq.s32.totalorder %s17, 0
    %p65 = por %p63, %p64
    %s67 = sadd.s32 %s66, 1
    %p70 = scmp.eq.s32.totalorder %s11, 7
    %p71 = scmp.ne.s32.totalorder %s66, %s68
    %p72 = scmp.eq.s32.totalorder %s11, 0
    %p73 = por %p71, %p72
    %p74 = scmp.ne.s32.totalorder %s66, %s68
    %p75 = scmp.eq.s32.totalorder %s16, 7
    %p76 = por %p74, %p75
    %p77 = scmp.ne.s32.totalorder %s68, %s69
    %p78 = scmp.eq.s32.totalorder %s16, 0
    %p79 = por %p77, %p78
    %p80 = scmp.ne.s32.totalorder %s68, %s69
    %p81 = scmp.eq.s32.totalorder %s17, 7
    %p82 = por %p80, %p81
    %p84 = scmp.ne.s32.totalorder %s69, %s83
    %p85 = scmp.eq.s32.totalorder %s17, 0
    %p86 = por %p84, %p85
    %s88 = sadd.s32 %s87, 1
    %p91 = scmp.eq.s32.totalorder %s11, 7
    %p92 = scmp.ne.s32.totalorder %s87, %s89
    %p93 = scmp.eq.s32.totalorder %s11, 0
    %p94 = por %p92, %p93
    %p95 = scmp.ne.s32.totalorder %s87, %s89
    %p96 = scmp.eq.s32.totalorder %s16, 7
    %p97 = por %p95, %p96
    %p98 = scmp.ne.s32.totalorder %s89, %s90
    %p99 = scmp.eq.s32.totalorder %s16, 0
    %p100 = por %p98, %p99
    %p101 = scmp.ne.s32.totalorder %s89, %s90
    %p102 = scmp.eq.s32.totalorder %s17, 7
    %p103 = por %p101, %p102
    %p105 = scmp.ne.s32.totalorder %s90, %s104
    %p106 = scmp.eq.s32.totalorder %s17, 0
    %p107 = por %p105, %p106
    %s109 = sadd.s32 %s108, 1
    %p112 = scmp.eq.s32.totalorder %s11, 7
    %p113 = scmp.ne.s32.totalorder %s108, %s110
    %p114 = scmp.eq.s32.totalorder %s11, 0
    %p115 = por %p113, %p114
    %p116 = scmp.ne.s32.totalorder %s108, %s110
    %p117 = scmp.eq.s32.totalorder %s16, 7
    %p118 = por %p116, %p117
    %p119 = scmp.ne.s32.totalorder %s110, %s111
    %p120 = scmp.eq.s32.totalorder %s16, 0
    %p121 = por %p119, %p120
    %p122 = scmp.ne.s32.totalorder %s110, %s111
    %p123 = scmp.eq.s32.totalorder %s17, 7
    %p124 = por %p122, %p123
    %p126 = scmp.ne.s32.totalorder %s111, %s125
    %p127 = scmp.eq.s32.totalorder %s17, 0
    %p128 = por %p126, %p127
    %s129 = ssub.s32 %s11, %s18
    %p130 = scmp.eq.s32.totalorder %s129, 0
    %s132 = sadd.s32 %s131, 1
    %s133 = scalar_select %p130, %s131, %s132
    %p136 = pneg %p130
    %p137 = scmp.eq.s32.totalorder %s11, 7
    %p138 = por %p136, %p137
    %p139 = scmp.ne.s32.totalorder %s131, %s134
    %p140 = scmp.eq.s32.totalorder %s11, 0
    %p141 = por %p139, %p140
    %p142 = scmp.ne.s32.totalorder %s131, %s134
    %p143 = scmp.eq.s32.totalorder %s16, 7
    %p144 = por %p142, %p143
    %p145 = scmp.ne.s32.totalorder %s134, %s135
    %p146 = scmp.eq.s32.totalorder %s16, 0
    %p147 = por %p145, %p146
    %p148 = scmp.ne.s32.totalorder %s134, %s135
    %p149 = scmp.eq.s32.totalorder %s17, 7
    %p150 = por %p148, %p149
    %p152 = scmp.ne.s32.totalorder %s135, %s151
    %p153 = scmp.eq.s32.totalorder %s17, 0
    %p154 = por %p152, %p153
    %p155 = scmp.le.s32.totalorder 1, %s11
    %p156 = scmp.lt.s32.totalorder %s11, 9
    %p157 = pnand %p155, %p156
    %p158 = pneg %p157
    // Predicated region
    $region9: #{baseline_convnet_forward.10} parent=5 // pred_check
      _
    $region10: #{baseline_convnet_forward.10} parent=5 // pred_check_branch
      %160 = sbr.rel (%p157) target = $region12
    $region11: #{baseline_convnet_forward.10} parent=5 // pred_region
      %s161 = ssub.s32 %s11, 1
      // Predicated region
      $region13: #{baseline_convnet_forward.10} parent=11 // pred_check
        %p162 = pneg %p58
      $region14: #{baseline_convnet_forward.10} parent=11 // pred_check_branch
        %164 = sbr.rel (%p162) target = $region16
      $region15: #{baseline_convnet_forward.10} parent=11 // pred_region
        _
      $region16: #{baseline_convnet_forward.10} parent=11 // pred_fallthru
        _
      // Predicated region
      $region17: #{baseline_convnet_forward.10} parent=11 // pred_check
        %p165 = pneg %p79
      $region18: #{baseline_convnet_forward.10} parent=11 // pred_check_branch
        %167 = sbr.rel (%p165) target = $region20
      $region19: #{baseline_convnet_forward.10} parent=11 // pred_region
        _
      $region20: #{baseline_convnet_forward.10} parent=11 // pred_fallthru
        _
      // Predicated region
      $region21: #{baseline_convnet_forward.10} parent=11 // pred_check
        %p168 = pneg %p100
      $region22: #{baseline_convnet_forward.10} parent=11 // pred_check_branch
        %170 = sbr.rel (%p168) target = $region24
      $region23: #{baseline_convnet_forward.10} parent=11 // pred_region
        _
      $region24: #{baseline_convnet_forward.10} parent=11 // pred_fallthru
        _
      // Predicated region
      $region25: #{baseline_convnet_forward.10} parent=11 // pred_check
        %p171 = pneg %p121
      $region26: #{baseline_convnet_forward.10} parent=11 // pred_check_branch
        %173 = sbr.rel (%p171) target = $region28
      $region27: #{baseline_convnet_forward.10} parent=11 // pred_region
        _
      $region28: #{baseline_convnet_forward.10} parent=11 // pred_fallthru
        _
    $region12: #{baseline_convnet_forward.10} parent=5 // pred_fallthru
      _
    %p174 = scmp.lt.s32.totalorder %s11, 8
    // Predicated region
    $region29: #{baseline_convnet_forward.10} parent=5 // pred_check
      %p175 = pneg %p174
    $region30: #{baseline_convnet_forward.10} parent=5 // pred_check_branch
      %177 = sbr.rel (%p175) target = $region32
    $region31: #{baseline_convnet_forward.10} parent=5 // pred_region
      // Predicated region
      $region33: #{baseline_convnet_forward.10} parent=31 // pred_check
        %p178 = pneg %p31
      $region34: #{baseline_convnet_forward.10} parent=31 // pred_check_branch
        %180 = sbr.rel (%p178) target = $region36
      $region35: #{baseline_convnet_forward.10} parent=31 // pred_region
        %p181 = scmp.lt.s32.totalorder %s11, 7
        %s182 = scalar_select %p181, %s11, 7
        %s183 = smul.addr %s182, 2
        %s184 = smul.addr %s183, 4
        %s185 = scalar_lea.vmem %s0, %s184
      $region36: #{baseline_convnet_forward.10} parent=31 // pred_fallthru
        _
    $region32: #{baseline_convnet_forward.10} parent=5 // pred_fallthru
      _
    %p186 = scmp.le.s32.totalorder 1, %s11
    %p187 = scmp.lt.s32.totalorder %s11, 9
    %p188 = pnand %p186, %p187
    %p189 = pneg %p188
    // Predicated region
    $region37: #{baseline_convnet_forward.10} parent=5 // pred_check
      _
    $region38: #{baseline_convnet_forward.10} parent=5 // pred_check_branch
      %191 = sbr.rel (%p188) target = $region40
    $region39: #{baseline_convnet_forward.10} parent=5 // pred_region
      %s192 = ssub.s32 %s11, 1
      %p193 = scmp.lt.s32.totalorder %s16, 7
      %s194 = scalar_select %p193, %s16, 7
      %s195 = smul.addr %s194, 2
      %s196 = smul.addr %s195, 4
      %s197 = scalar_lea.vmem %s0, %s196
      %p198 = pneg %p37
      %p199 = pneg %p34
      %p200 = pneg %p58
      %p201 = pneg %p55
      %p202 = pneg %p79
      %p203 = pneg %p76
      %p204 = pneg %p100
      %p205 = pneg %p97
      %p206 = pneg %p121
      %p207 = pneg %p118
      %p208 = pneg %p147
      %p209 = pneg %p144
      %p210 = scmp.lt.s32.totalorder %s16, 7
      %s211 = scalar_select %p210, %s16, 7
      %s212 = smul.addr %s211, 2
      %s213 = smul.addr %s212, 2
      %s214 = scalar_lea.vmem %s5, %s213
      %p215 = scmp.lt.s32.totalorder %s16, 7
      %s216 = scalar_select %p215, %s16, 7
      %s217 = smul.addr %s216, 2
      %s218 = smul.addr %s217, 4
      %s219 = scalar_lea.vmem %s0, %s218
      %p220 = scmp.lt.s32.totalorder %s16, 7
      %s221 = scalar_select %p220, %s16, 7
      %s222 = smul.addr %s221, 2
      %s223 = smul.addr %s222, 2
      %s224 = scalar_lea.vmem %s5, %s223
      %v226 = vld [vmem:[%s2] sm:$0x1]
      %v227 = vld [vmem:[%s3] sm:$0x1]
      %v228 = vld [vmem:[%s4] sm:$0x1]
      %v229 = vld [vmem:[%s219] sm:$0x3]
      %v230 = vld [vmem:[%s1] sm:$0xf]
      %v231 = vld [vmem:[%s1 + $0x4] sm:$0xf]
      %v232 = vld [vmem:[%s1 + $0x8] sm:$0xf]
      %v233 = vld [vmem:[%s1 + $0xc] sm:$0xf]
      %v234 = vld [vmem:[%s1 + $0x10] sm:$0xf]
      %v235 = vld [vmem:[%s1 + $0x14] sm:$0xf]
      %v236 = vld [vmem:[%s1 + $0x18] sm:$0xf]
      %v237 = vld [vmem:[%s1 + $0x1c] sm:$0xf]
      %v238 = vld [vmem:[%s219] sm:$0x7]
      %v239 = vld [vmem:[%s1 + $0x20] sm:$0xf]
      %v240 = vld [vmem:[%s1 + $0x24] sm:$0xf]
      %v241 = vld [vmem:[%s1 + $0x28] sm:$0xf]
      %v242 = vld [vmem:[%s1 + $0x2c] sm:$0xf]
      %v243 = vld [vmem:[%s1 + $0x30] sm:$0xf]
      %v244 = vld [vmem:[%s1 + $0x34] sm:$0xf]
      %v245 = vld [vmem:[%s1 + $0x38] sm:$0xf]
      %v246 = vld [vmem:[%s1 + $0x3c] sm:$0xf]
      %v248 = vunpack.c.l.b16 %v238
      %v249 = vpack.c.b16 %v248, %v248
      %v251 = vshrl.u32 %v249, 16
      %v253 = vshll.u32 %v249, 16
      %v255 = vrot.slane %v253, 1
      %v256 = vor.u32 %v251, %v255
      %v265 = vunpack.c.l.b16 %v239
      %v266 = vunpack.c.l.b16 %v240
      %v267 = vunpack.c.l.b16 %v241
      %v268 = vunpack.c.l.b16 %v242
      %v269 = vunpack.c.l.b16 %v243
      %v270 = vunpack.c.l.b16 %v244
      %v271 = vunpack.c.l.b16 %v245
      %v272 = vunpack.c.l.b16 %v246
      %v273 = vpack.c.b16 %v266, %v265
      %v274 = vpack.c.b16 %v268, %v267
      %v275 = vpack.c.b16 %v270, %v269
      %v276 = vpack.c.b16 %v272, %v271
      %vm281 = vcmask 523264
      %v283 = vsel %vm281, %v256, 0
      %285 = vmatprep.subr.bf16.mxu0 0
      %286 = vmatpush1.bf16.msra.mxu0 %v273
      %287 = vmatprep.subr.bf16.mxu0 0
      %288 = vmatpush1.bf16.msra.mxu0 %v274
      %289 = vmatprep.subr.bf16.mxu0 0
      %290 = vmatpush1.bf16.msra.mxu0 %v275
      %291 = vmatprep.subr.bf16.mxu0 0
      %292 = vmatpush1.bf16.msra.mxu0 %v276
      %293 = vmatprep.subr.bf16.mxu0 0
      %294 = vmatpush1.bf16.msra.mxu0 0
      %295 = vmatprep.subr.bf16.mxu0 0
      %296 = vmatpush1.bf16.msra.mxu0 0
      %297 = vmatprep.subr.bf16.mxu0 0
      %298 = vmatpush1.bf16.msra.mxu0 0
      %299 = vmatprep.subr.bf16.mxu0 0
      %300 = vmatpush1.bf16.msra.mxu0 0
      %301 = vmatprep.subr.bf16.mxu0 0
      %302 = vmatpush1.bf16.msra.mxu0 0
      %303 = vmatprep.subr.bf16.mxu0 0
      %304 = vmatpush1.bf16.msra.mxu0 0
      %305 = vmatprep.subr.bf16.mxu0 0
      %306 = vmatpush1.bf16.msra.mxu0 0
      %307 = vmatprep.subr.bf16.mxu0 0
      %308 = vmatpush1.bf16.msra.mxu0 0
      %309 = vmatprep.subr.bf16.mxu0 0
      %310 = vmatpush1.bf16.msra.mxu0 0
      %311 = vmatprep.subr.bf16.mxu0 0
      %312 = vmatpush1.bf16.msra.mxu0 0
      %313 = vmatprep.subr.bf16.mxu0 0
      %314 = vmatpush1.bf16.msra.mxu0 0
      %315 = vmatprep.subr.bf16.mxu0 0
      %316 = vmatpush1.bf16.msra.mxu0 0
      %317 = vmatprep.mubr.bf16.mxu0 0
      %318 = vmatmul.mubr.bf16.gmra.mrb[0].mxu0 %v283
      %v319 = vpop.f32.mrb[0].mxu0
      %v320 = vadd.f32 0.0, %v319
      %v321 = vpop.f32.mrb[0].mxu0
      %v322 = vpop.f32.mrb[0].mxu0
      %v323 = vpop.f32.mrb[0].mxu0
      %324 = vdwg.mxu0
      %v333 = vunpack.c.l.b16 %v230
      %v334 = vunpack.c.l.b16 %v231
      %v335 = vunpack.c.l.b16 %v232
      %v336 = vunpack.c.l.b16 %v233
      %v337 = vunpack.c.l.b16 %v234
      %v338 = vunpack.c.l.b16 %v235
      %v339 = vunpack.c.l.b16 %v236
      %v340 = vunpack.c.l.b16 %v237
      %v341 = vpack.c.b16 %v334, %v333
      %v342 = vpack.c.b16 %v336, %v335
      %v343 = vpack.c.b16 %v338, %v337
      %v344 = vpack.c.b16 %v340, %v339
      %v350 = vsel %vm281, %v229, 0
      %352 = vmatprep.subr.bf16.mxu0 0
      %353 = vmatpush1.bf16.msra.mxu0 %v341
      %354 = vmatprep.subr.bf16.mxu0 0
      %355 = vmatpush1.bf16.msra.mxu0 %v342
      %356 = vmatprep.subr.bf16.mxu0 0
      %357 = vmatpush1.bf16.msra.mxu0 %v343
      %358 = vmatprep.subr.bf16.mxu0 0
      %359 = vmatpush1.bf16.msra.mxu0 %v344
      %360 = vmatprep.subr.bf16.mxu0 0
      %361 = vmatpush1.bf16.msra.mxu0 0
      %362 = vmatprep.subr.bf16.mxu0 0
      %363 = vmatpush1.bf16.msra.mxu0 0
      %364 = vmatprep.subr.bf16.mxu0 0
      %365 = vmatpush1.bf16.msra.mxu0 0
      %366 = vmatprep.subr.bf16.mxu0 0
      %367 = vmatpush1.bf16.msra.mxu0 0
      %368 = vmatprep.subr.bf16.mxu0 0
      %369 = vmatpush1.bf16.msra.mxu0 0
      %370 = vmatprep.subr.bf16.mxu0 0
      %371 = vmatpush1.bf16.msra.mxu0 0
      %372 = vmatprep.subr.bf16.mxu0 0
      %373 = vmatpush1.bf16.msra.mxu0 0
      %374 = vmatprep.subr.bf16.mxu0 0
      %375 = vmatpush1.bf16.msra.mxu0 0
      %376 = vmatprep.subr.bf16.mxu0 0
      %377 = vmatpush1.bf16.msra.mxu0 0
      %378 = vmatprep.subr.bf16.mxu0 0
      %379 = vmatpush1.bf16.msra.mxu0 0
      %380 = vmatprep.subr.bf16.mxu0 0
      %381 = vmatpush1.bf16.msra.mxu0 0
      %382 = vmatprep.subr.bf16.mxu0 0
      %383 = vmatpush1.bf16.msra.mxu0 0
      %384 = vmatprep.mubr.bf16.mxu0 0
      %385 = vmatmul.mubr.bf16.gmra.mrb[0].mxu0 %v350
      %v386 = vpop.f32.mrb[0].mxu0
      %v387 = vadd.f32 %v320, %v386
      %v388 = vpop.f32.mrb[0].mxu0
      %v389 = vpop.f32.mrb[0].mxu0
      %v390 = vpop.f32.mrb[0].mxu0
      %391 = vdwg.mxu0
      %v392 = vld [vmem:[%s219] sm:$0x6]
      %v393 = vld [vmem:[%s1 + $0x40] sm:$0xf]
      %v394 = vld [vmem:[%s1 + $0x44] sm:$0xf]
      %v395 = vld [vmem:[%s1 + $0x48] sm:$0xf]
      %v396 = vld [vmem:[%s1 + $0x4c] sm:$0xf]
      %v397 = vld [vmem:[%s1 + $0x50] sm:$0xf]
      %v398 = vld [vmem:[%s1 + $0x54] sm:$0xf]
      %v399 = vld [vmem:[%s1 + $0x58] sm:$0xf]
      %v400 = vld [vmem:[%s1 + $0x5c] sm:$0xf]
      %v402 = vunpack.c.l.b16 %v392
      %v403 = vpack.c.b16 %v402, %v402
      %v404 = vrot.slane %v403, 1
      %v413 = vunpack.c.l.b16 %v393
      %v414 = vunpack.c.l.b16 %v394
      %v415 = vunpack.c.l.b16 %v395
      %v416 = vunpack.c.l.b16 %v396
      %v417 = vunpack.c.l.b16 %v397
      %v418 = vunpack.c.l.b16 %v398
      %v419 = vunpack.c.l.b16 %v399
      %v420 = vunpack.c.l.b16 %v400
      %v421 = vpack.c.b16 %v414, %v413
      %v422 = vpack.c.b16 %v416, %v415
      %v423 = vpack.c.b16 %v418, %v417
      %v424 = vpack.c.b16 %v420, %v419
      %v430 = vsel %vm281, %v404, 0
      %432 = vmatprep.subr.bf16.mxu0 0
      %433 = vmatpush1.bf16.msra.mxu0 %v421
      %434 = vmatprep.subr.bf16.mxu0 0
      %435 = vmatpush1.bf16.msra.mxu0 %v422
      %436 = vmatprep.subr.bf16.mxu0 0
      %437 = vmatpush1.bf16.msra.mxu0 %v423
      %438 = vmatprep.subr.bf16.mxu0 0
      %439 = vmatpush1.bf16.msra.mxu0 %v424
      %440 = vmatprep.subr.bf16.mxu0 0
      %441 = vmatpush1.bf16.msra.mxu0 0
      %442 = vmatprep.subr.bf16.mxu0 0
      %443 = vmatpush1.bf16.msra.mxu0 0
      %444 = vmatprep.subr.bf16.mxu0 0
      %445 = vmatpush1.bf16.msra.mxu0 0
      %446 = vmatprep.subr.bf16.mxu0 0
      %447 = vmatpush1.bf16.msra.mxu0 0
      %448 = vmatprep.subr.bf16.mxu0 0
      %449 = vmatpush1.bf16.msra.mxu0 0
      %450 = vmatprep.subr.bf16.mxu0 0
      %451 = vmatpush1.bf16.msra.mxu0 0
      %452 = vmatprep.subr.bf16.mxu0 0
      %453 = vmatpush1.bf16.msra.mxu0 0
      %454 = vmatprep.subr.bf16.mxu0 0
      %455 = vmatpush1.bf16.msra.mxu0 0
      %456 = vmatprep.subr.bf16.mxu0 0
      %457 = vmatpush1.bf16.msra.mxu0 0
      %458 = vmatprep.subr.bf16.mxu0 0
      %459 = vmatpush1.bf16.msra.mxu0 0
      %460 = vmatprep.subr.bf16.mxu0 0
      %461 = vmatpush1.bf16.msra.mxu0 0
      %462 = vmatprep.subr.bf16.mxu0 0
      %463 = vmatpush1.bf16.msra.mxu0 0
      %464 = vmatprep.mubr.bf16.mxu0 0
      %465 = vmatmul.mubr.bf16.gmra.mrb[0].mxu0 %v430
      %v466 = vpop.f32.mrb[0].mxu0
      %v467 = vadd.f32 0.0, %v466
      %v468 = vpop.f32.mrb[0].mxu0
      %v469 = vpop.f32.mrb[0].mxu0
      %v470 = vpop.f32.mrb[0].mxu0
      %471 = vdwg.mxu0
      %v472 = vadd.f32 %v387, %v467
      %v474 = vlaneseq
      %v475 = vshrl.u32 %v474, 7
      %v476 = vsub.s32 0, %v475
      %v477 = vrot.slane %v226, %v476
      %v479 = vadd.f32 %v472, %v477
      %vm480 = vcmp.gt.f32.partialorder %v479, 0.0
      %v481 = vmul.f32 %v479, 0.2
      %v482 = vsel %vm480, %v479, %v481
      %s483 = scalar_lea.vmem %s219, 4
      %v484 = vld [vmem:[%s483] sm:$0x3]
      %v485 = vld [vmem:[%s483] sm:$0x7]
      %v487 = vunpack.c.l.b16 %v485
      %v488 = vpack.c.b16 %v487, %v487
      %v490 = vshrl.u32 %v488, 16
      %v492 = vshll.u32 %v488, 16
      %v494 = vrot.slane %v492, 1
      %v495 = vor.u32 %v490, %v494
      %v497 = vsel %vm281, %v495, 0
      %499 = vmatprep.subr.bf16.mxu0 0
      %500 = vmatpush1.bf16.msra.mxu0 %v273
      %501 = vmatprep.subr.bf16.mxu0 0
      %502 = vmatpush1.bf16.msra.mxu0 %v274
      %503 = vmatprep.subr.bf16.mxu0 0
      %504 = vmatpush1.bf16.msra.mxu0 %v275
      %505 = vmatprep.subr.bf16.mxu0 0
      %506 = vmatpush1.bf16.msra.mxu0 %v276
      %507 = vmatprep.subr.bf16.mxu0 0
      %508 = vmatpush1.bf16.msra.mxu0 0
      %509 = vmatprep.subr.bf16.mxu0 0
      %510 = vmatpush1.bf16.msra.mxu0 0
      %511 = vmatprep.subr.bf16.mxu0 0
      %512 = vmatpush1.bf16.msra.mxu0 0
      %513 = vmatprep.subr.bf16.mxu0 0
      %514 = vmatpush1.bf16.msra.mxu0 0
      %515 = vmatprep.subr.bf16.mxu0 0
      %516 = vmatpush1.bf16.msra.mxu0 0
      %517 = vmatprep.subr.bf16.mxu0 0
      %518 = vmatpush1.bf16.msra.mxu0 0
      %519 = vmatprep.subr.bf16.mxu0 0
      %520 = vmatpush1.bf16.msra.mxu0 0
      %521 = vmatprep.subr.bf16.mxu0 0
      %522 = vmatpush1.bf16.msra.mxu0 0
      %523 = vmatprep.subr.bf16.mxu0 0
      %524 = vmatpush1.bf16.msra.mxu0 0
      %525 = vmatprep.subr.bf16.mxu0 0
      %526 = vmatpush1.bf16.msra.mxu0 0
      %527 = vmatprep.subr.bf16.mxu0 0
      %528 = vmatpush1.bf16.msra.mxu0 0
      %529 = vmatprep.subr.bf16.mxu0 0
      %530 = vmatpush1.bf16.msra.mxu0 0
      %531 = vmatprep.mubr.bf16.mxu0 0
      %532 = vmatmul.mubr.bf16.gmra.mrb[0].mxu0 %v497
      %v533 = vpop.f32.mrb[0].mxu0
      %v534 = vadd.f32 0.0, %v533
      %v535 = vpop.f32.mrb[0].mxu0
      %v536 = vpop.f32.mrb[0].mxu0
      %v537 = vpop.f32.mrb[0].mxu0
      %538 = vdwg.mxu0
      %v540 = vsel %vm281, %v484, 0
      %542 = vmatprep.subr.bf16.mxu0 0
      %543 = vmatpush1.bf16.msra.mxu0 %v341
      %544 = vmatprep.subr.bf16.mxu0 0
      %545 = vmatpush1.bf16.msra.mxu0 %v342
      %546 = vmatprep.subr.bf16.mxu0 0
      %547 = vmatpush1.bf16.msra.mxu0 %v343
      %548 = vmatprep.subr.bf16.mxu0 0
      %549 = vmatpush1.bf16.msra.mxu0 %v344
      %550 = vmatprep.subr.bf16.mxu0 0
      %551 = vmatpush1.bf16.msra.mxu0 0
      %552 = vmatprep.subr.bf16.mxu0 0
      %553 = vmatpush1.bf16.msra.mxu0 0
      %554 = vmatprep.subr.bf16.mxu0 0
      %555 = vmatpush1.bf16.msra.mxu0 0
      %556 = vmatprep.subr.bf16.mxu0 0
      %557 = vmatpush1.bf16.msra.mxu0 0
      %558 = vmatprep.subr.bf16.mxu0 0
      %559 = vmatpush1.bf16.msra.mxu0 0
      %560 = vmatprep.subr.bf16.mxu0 0
      %561 = vmatpush1.bf16.msra.mxu0 0
      %562 = vmatprep.subr.bf16.mxu0 0
      %563 = vmatpush1.bf16.msra.mxu0 0
      %564 = vmatprep.subr.bf16.mxu0 0
      %565 = vmatpush1.bf16.msra.mxu0 0
      %566 = vmatprep.subr.bf16.mxu0 0
      %567 = vmatpush1.bf16.msra.mxu0 0
      %568 = vmatprep.subr.bf16.mxu0 0
      %569 = vmatpush1.bf16.msra.mxu0 0
      %570 = vmatprep.subr.bf16.mxu0 0
      %571 = vmatpush1.bf16.msra.mxu0 0
      %572 = vmatprep.subr.bf16.mxu0 0
      %573 = vmatpush1.bf16.msra.mxu0 0
      %574 = vmatprep.mubr.bf16.mxu0 0
      %575 = vmatmul.mubr.bf16.gmra.mrb[0].mxu0 %v540
      %v576 = vpop.f32.mrb[0].mxu0
      %v577 = vadd.f32 %v534, %v576
      %v578 = vpop.f32.mrb[0].mxu0
      %v579 = vpop.f32.mrb[0].mxu0
      %v580 = vpop.f32.mrb[0].mxu0
      %581 = vdwg.mxu0
      %v582 = vld [vmem:[%s483] sm:$0x6]
      %v584 = vunpack.c.l.b16 %v582
      %v585 = vpack.c.b16 %v584, %v584
      %v586 = vrot.slane %v585, 1
      %v588 = vsel %vm281, %v586, 0
      %590 = vmatprep.subr.bf16.mxu0 0
      %591 = vmatpush1.bf16.msra.mxu0 %v421
      %592 = vmatprep.subr.bf16.mxu0 0
      %593 = vmatpush1.bf16.msra.mxu0 %v422
      %594 = vmatprep.subr.bf16.mxu0 0
      %595 = vmatpush1.bf16.msra.mxu0 %v423
      %596 = vmatprep.subr.bf16.mxu0 0
      %597 = vmatpush1.bf16.msra.mxu0 %v424
      %598 = vmatprep.subr.bf16.mxu0 0
      %599 = vmatpush1.bf16.msra.mxu0 0
      %600 = vmatprep.subr.bf16.mxu0 0
      %601 = vmatpush1.bf16.msra.mxu0 0
      %602 = vmatprep.subr.bf16.mxu0 0
      %603 = vmatpush1.bf16.msra.mxu0 0
      %604 = vmatprep.subr.bf16.mxu0 0
      %605 = vmatpush1.bf16.msra.mxu0 0
      %606 = vmatprep.subr.bf16.mxu0 0
      %607 = vmatpush1.bf16.msra.mxu0 0
      %608 = vmatprep.subr.bf16.mxu0 0
      %609 = vmatpush1.bf16.msra.mxu0 0
      %610 = vmatprep.subr.bf16.mxu0 0
      %611 = vmatpush1.bf16.msra.mxu0 0
      %612 = vmatprep.subr.bf16.mxu0 0
      %613 = vmatpush1.bf16.msra.mxu0 0
      %614 = vmatprep.subr.bf16.mxu0 0
      %615 = vmatpush1.bf16.msra.mxu0 0
      %616 = vmatprep.subr.bf16.mxu0 0
      %617 = vmatpush1.bf16.msra.mxu0 0
      %618 = vmatprep.subr.bf16.mxu0 0
      %619 = vmatpush1.bf16.msra.mxu0 0
      %620 = vmatprep.subr.bf16.mxu0 0
      %621 = vmatpush1.bf16.msra.mxu0 0
      %622 = vmatprep.mubr.bf16.mxu0 0
      %623 = vmatmul.mubr.bf16.gmra.mrb[0].mxu0 %v588
      %v624 = vpop.f32.mrb[0].mxu0
      %v625 = vadd.f32 0.0, %v624
      %v626 = vpop.f32.mrb[0].mxu0
      %v627 = vpop.f32.mrb[0].mxu0
      %v628 = vpop.f32.mrb[0].mxu0
      %629 = vdwg.mxu0
      %v630 = vadd.f32 %v577, %v625
      %v631 = vadd.f32 %v630, %v477
      %vm632 = vcmp.gt.f32.partialorder %v631, 0.0
      %v633 = vmul.f32 %v631, 0.2
      %v634 = vsel %vm632, %v631, %v633
      %vm635 = vcmask 1043456
      %v636 = vsel %vm635, %v482, 0.0
      %v637 = vrot.slane %v636, 4
      %v638 = vadd.f32 %v636, %v637
      %v639 = vrot.slane %v638, 2
      %v640 = vadd.f32 %v638, %v639
      %v641 = vrot.slane %v640, 1
      %v642 = vadd.f32 %v640, %v641
      %v643 = vmul.f32 %v482, %v482
      %v644 = vsel %vm635, %v643, 0.0
      %v645 = vrot.slane %v644, 4
      %v646 = vadd.f32 %v644, %v645
      %v647 = vrot.slane %v646, 2
      %v648 = vadd.f32 %v646, %v647
      %v649 = vrot.slane %v648, 1
      %v650 = vadd.f32 %v648, %v649
      %v651 = vsel %vm635, %v634, 0.0
      %v652 = vrot.slane %v651, 4
      %v653 = vadd.f32 %v651, %v652
      %v654 = vrot.slane %v653, 2
      %v655 = vadd.f32 %v653, %v654
      %v656 = vrot.slane %v655, 1
      %v657 = vadd.f32 %v655, %v656
      %v658 = vadd.f32 %v642, %v657
      %v659 = vmul.f32 %v634, %v634
      %v660 = vsel %vm635, %v659, 0.0
      %v661 = vrot.slane %v660, 4
      %v662 = vadd.f32 %v660, %v661
      %v663 = vrot.slane %v662, 2
      %v664 = vadd.f32 %v662, %v663
      %v665 = vrot.slane %v664, 1
      %v666 = vadd.f32 %v664, %v665
      %v667 = vadd.f32 %v650, %v666
      %v668 = vmul.f32 %v658, 0.125
      %v669 = vmul.f32 %v667, 0.125
      %v670 = vmul.f32 %v668, %v668
      %v671 = vsub.f32 %v669, %v670
      %v672 = vadd.f32 %v671, 1e-05
      %v673 = vrsqrt.pop %v672
      %v674 = vmul.f32 %v227, %v673
      %v675 = vmul.f32 %v668, %v674
      %v676 = vsub.f32 %v228, %v675
      %v678 = vlaneseq
      %v679 = vshrl.u32 %v678, 7
      %v680 = vsub.s32 0, %v679
      %v681 = vrot.slane %v674, %v680
      %v683 = vmul.f32 %v482, %v681
      %v685 = vlaneseq
      %v686 = vshrl.u32 %v685, 7
      %v687 = vsub.s32 0, %v686
      %v688 = vrot.slane %v676, %v687
      %v690 = vadd.f32 %v683, %v688
      %v691 = vmul.f32 %v634, %v681
      %v692 = vadd.f32 %v691, %v688
      %v693 = vpack.c.bf16 %v690, %v690
      %694 = vst [vmem:[%s224] sm:$0x3] %v693
      %v695 = vpack.c.bf16 %v692, %v692
      %s696 = scalar_lea.vmem %s224, 2
      %697 = vst [vmem:[%s696] sm:$0x3] %v695
      %p698 = scmp.lt.s32.totalorder %s16, 7
      %s699 = scalar_select %p698, %s16, 7
      %s700 = smul.addr %s699, 2
      %s701 = smul.addr %s700, 2
      %s702 = scalar_lea.vmem %s5, %s701
      // Predicated region
      $region41: #{baseline_convnet_forward.10} parent=39 // pred_check
        %p703 = pneg %p144
      $region42: #{baseline_convnet_forward.10} parent=39 // pred_check_branch
        %705 = sbr.rel (%p703) target = $region44
      $region43: #{baseline_convnet_forward.10} parent=39 // pred_region
        _
      $region44: #{baseline_convnet_forward.10} parent=39 // pred_fallthru
        _
    $region40: #{baseline_convnet_forward.10} parent=5 // pred_fallthru
      _
    %p706 = scmp.le.s32.totalorder 2, %s11
    // Predicated region
    $region45: #{baseline_convnet_forward.10} parent=5 // pred_check
      %p707 = pneg %p706
    $region46: #{baseline_convnet_forward.10} parent=5 // pred_check_branch
      %709 = sbr.rel (%p707) target = $region48
    $region47: #{baseline_convnet_forward.10} parent=5 // pred_region
      %s710 = ssub.s32 %s11, 2
      // Predicated region
      $region49: #{baseline_convnet_forward.10} parent=47 // pred_check
        %p711 = pneg %p150
      $region50: #{baseline_convnet_forward.10} parent=47 // pred_check_branch
        %713 = sbr.rel (%p711) target = $region52
      $region51: #{baseline_convnet_forward.10} parent=47 // pred_region
        %p714 = scmp.lt.s32.totalorder %s17, 7
        %s715 = scalar_select %p714, %s17, 7
        %s716 = smul.addr %s715, 2
        %s717 = smul.addr %s716, 2
        %s718 = scalar_lea.vmem %s5, %s717
      $region52: #{baseline_convnet_forward.10} parent=47 // pred_fallthru
        _
    $region48: #{baseline_convnet_forward.10} parent=5 // pred_fallthru
      _
  $region6: #{baseline_convnet_forward.10} parent=0 // loop_footer
    %s15 = sadd.s32 1, %s11
  $region7: #{baseline_convnet_forward.10} parent=0 // loop_footer_branch
    %10 = sbr.rel target = $region3
  $region8: #{baseline_convnet_forward.10} parent=0 // loop_exit
    _

// kernel: baseline_convnet_forward.11
$region0: #{baseline_convnet_forward.11}
  #allocation0 [shape = 'u32[]', space=smem, size = 0x4, offset = 0x4, fixed_abs, tag = 'smem constant byte address 0x4 - core index']
  #allocation1 [shape = 'u32[144,128]{1,0:T(1,128)}', space=vmem, size = 0x12000, scoped, tag = 'internal scratch']
  %s0 = inlined_call_operand.vmem [shape: bf16[8,2,1,4,128], index: 0, kind: input, shape index: {}]
  %s1 = inlined_call_operand.vmem [shape: bf16[384,256], index: 1, kind: input, shape index: {}]
  %s2 = inlined_call_operand.vmem [shape: f32[1,256], index: 2, kind: input, shape index: {}]
  %s3 = inlined_call_operand.vmem [shape: f32[1,256], index: 3, kind: input, shape index: {}]
  %s4 = inlined_call_operand.vmem [shape: f32[1,256], index: 4, kind: input, shape index: {}]
  %s5 = inlined_call_operand.vmem [shape: bf16[256,128], index: 5, kind: input, shape index: {}]
  %s6 = inlined_call_operand.vmem [shape: f32[1,128], index: 6, kind: input, shape index: {}]
  %s7 = inlined_call_operand.vmem [shape: f32[8,2,128], index: 7, kind: output, shape index: {}]
  %s8 = sld [smem:[#allocation0]]
  $region61: #{baseline_convnet_forward.11} parent=0
    _
  %s10 = ssub.s32 1, %s8
  %s11 = scalar_select 0, %s10, %s8
  loop: start=0, step=1, limit=10
  $region2: #{baseline_convnet_forward.11} parent=0 // loop_pre_header
    _
  $region3: #{baseline_convnet_forward.11} parent=0 // loop_header
    %s13 = sphi 0, %s17
    %p14 = scmp.ge.s32.totalorder %s13, 10
    %s23 = sphi 0, %s25
    %s26 = sphi 0, %s23
    %s27 = sphi 0, %s26
    %s43 = sphi 0, %s27
    %s47 = sphi 0, %s47
    %s49 = sphi 0, %s47
    %s50 = sphi 0, %s49
    %s64 = sphi 0, %s50
    %s68 = sphi 0, %s68
    %s70 = sphi 0, %s68
    %s71 = sphi 0, %s70
    %s85 = sphi 0, %s71
    %s89 = sphi 0, %s89
    %s91 = sphi 0, %s89
    %s92 = sphi 0, %s91
    %s106 = sphi 0, %s92
    %s110 = sphi 0, %s110
    %s112 = sphi 0, %s110
    %s113 = sphi 0, %s112
    %s127 = sphi 0, %s113
    %s131 = sphi 0, %s131
    %s133 = sphi 0, %s131
    %s134 = sphi 0, %s133
    %s148 = sphi 0, %s134
    %s152 = sphi 0, %s152
    %s154 = sphi 0, %s152
    %s155 = sphi 0, %s154
    %s169 = sphi 0, %s155
    %s175 = sphi 0, %s177
    %s178 = sphi 0, %s175
    %s179 = sphi 0, %s178
    %s195 = sphi 0, %s179
  $region4: #{baseline_convnet_forward.11} parent=0 // loop_header_branch
    %16 = sbr.rel (%p14) target = $region8
  $region5: #{baseline_convnet_forward.11} parent=0 // loop_body
    %s18 = ssub.s32 %s13, 1
    %s19 = ssub.s32 %s13, 2
    %s20 = sadd.s32 %s13, 1
    %s21 = ssub.s32 %s13, %s20
    %p22 = scmp.eq.s32.totalorder %s21, 0
    %s24 = sadd.s32 %s23, 1
    %s25 = scalar_select %p22, %s23, %s24
    %p28 = pneg %p22
    %p29 = scmp.eq.s32.totalorder %s13, 7
    %p30 = por %p28, %p29
    %p31 = scmp.ne.s32.totalorder %s23, %s26
    %p32 = scmp.eq.s32.totalorder %s13, 0
    %p33 = por %p31, %p32
    %p34 = scmp.ne.s32.totalorder %s23, %s26
    %p35 = scmp.eq.s32.totalorder %s18, 7
    %p36 = por %p34, %p35
    %p37 = scmp.ne.s32.totalorder %s26, %s27
    %p38 = scmp.eq.s32.totalorder %s18, 0
    %p39 = por %p37, %p38
    %p40 = scmp.ne.s32.totalorder %s26, %s27
    %p41 = scmp.eq.s32.totalorder %s19, 7
    %p42 = por %p40, %p41
    %p44 = scmp.ne.s32.totalorder %s27, %s43
    %p45 = scmp.eq.s32.totalorder %s19, 0
    %p46 = por %p44, %p45
    %s48 = sadd.s32 %s47, 1
    %p51 = scmp.eq.s32.totalorder %s13, 7
    %p52 = scmp.ne.s32.totalorder %s47, %s49
    %p53 = scmp.eq.s32.totalorder %s13, 0
    %p54 = por %p52, %p53
    %p55 = scmp.ne.s32.totalorder %s47, %s49
    %p56 = scmp.eq.s32.totalorder %s18, 7
    %p57 = por %p55, %p56
    %p58 = scmp.ne.s32.totalorder %s49, %s50
    %p59 = scmp.eq.s32.totalorder %s18, 0
    %p60 = por %p58, %p59
    %p61 = scmp.ne.s32.totalorder %s49, %s50
    %p62 = scmp.eq.s32.totalorder %s19, 7
    %p63 = por %p61, %p62
    %p65 = scmp.ne.s32.totalorder %s50, %s64
    %p66 = scmp.eq.s32.totalorder %s19, 0
    %p67 = por %p65, %p66
    %s69 = sadd.s32 %s68, 1
    %p72 = scmp.eq.s32.totalorder %s13, 7
    %p73 = scmp.ne.s32.totalorder %s68, %s70
    %p74 = scmp.eq.s32.totalorder %s13, 0
    %p75 = por %p73, %p74
    %p76 = scmp.ne.s32.totalorder %s68, %s70
    %p77 = scmp.eq.s32.totalorder %s18, 7
    %p78 = por %p76, %p77
    %p79 = scmp.ne.s32.totalorder %s70, %s71
    %p80 = scmp.eq.s32.totalorder %s18, 0
    %p81 = por %p79, %p80
    %p82 = scmp.ne.s32.totalorder %s70, %s71
    %p83 = scmp.eq.s32.totalorder %s19, 7
    %p84 = por %p82, %p83
    %p86 = scmp.ne.s32.totalorder %s71, %s85
    %p87 = scmp.eq.s32.totalorder %s19, 0
    %p88 = por %p86, %p87
    %s90 = sadd.s32 %s89, 1
    %p93 = scmp.eq.s32.totalorder %s13, 7
    %p94 = scmp.ne.s32.totalorder %s89, %s91
    %p95 = scmp.eq.s32.totalorder %s13, 0
    %p96 = por %p94, %p95
    %p97 = scmp.ne.s32.totalorder %s89, %s91
    %p98 = scmp.eq.s32.totalorder %s18, 7
    %p99 = por %p97, %p98
    %p100 = scmp.ne.s32.totalorder %s91, %s92
    %p101 = scmp.eq.s32.totalorder %s18, 0
    %p102 = por %p100, %p101
    %p103 = scmp.ne.s32.totalorder %s91, %s92
    %p104 = scmp.eq.s32.totalorder %s19, 7
    %p105 = por %p103, %p104
    %p107 = scmp.ne.s32.totalorder %s92, %s106
    %p108 = scmp.eq.s32.totalorder %s19, 0
    %p109 = por %p107, %p108
    %s111 = sadd.s32 %s110, 1
    %p114 = scmp.eq.s32.totalorder %s13, 7
    %p115 = scmp.ne.s32.totalorder %s110, %s112
    %p116 = scmp.eq.s32.totalorder %s13, 0
    %p117 = por %p115, %p116
    %p118 = scmp.ne.s32.totalorder %s110, %s112
    %p119 = scmp.eq.s32.totalorder %s18, 7
    %p120 = por %p118, %p119
    %p121 = scmp.ne.s32.totalorder %s112, %s113
    %p122 = scmp.eq.s32.totalorder %s18, 0
    %p123 = por %p121, %p122
    %p124 = scmp.ne.s32.totalorder %s112, %s113
    %p125 = scmp.eq.s32.totalorder %s19, 7
    %p126 = por %p124, %p125
    %p128 = scmp.ne.s32.totalorder %s113, %s127
    %p129 = scmp.eq.s32.totalorder %s19, 0
    %p130 = por %p128, %p129
    %s132 = sadd.s32 %s131, 1
    %p135 = scmp.eq.s32.totalorder %s13, 7
    %p136 = scmp.ne.s32.totalorder %s131, %s133
    %p137 = scmp.eq.s32.totalorder %s13, 0
    %p138 = por %p136, %p137
    %p139 = scmp.ne.s32.totalorder %s131, %s133
    %p140 = scmp.eq.s32.totalorder %s18, 7
    %p141 = por %p139, %p140
    %p142 = scmp.ne.s32.totalorder %s133, %s134
    %p143 = scmp.eq.s32.totalorder %s18, 0
    %p144 = por %p142, %p143
    %p145 = scmp.ne.s32.totalorder %s133, %s134
    %p146 = scmp.eq.s32.totalorder %s19, 7
    %p147 = por %p145, %p146
    %p149 = scmp.ne.s32.totalorder %s134, %s148
    %p150 = scmp.eq.s32.totalorder %s19, 0
    %p151 = por %p149, %p150
    %s153 = sadd.s32 %s152, 1
    %p156 = scmp.eq.s32.totalorder %s13, 7
    %p157 = scmp.ne.s32.totalorder %s152, %s154
    %p158 = scmp.eq.s32.totalorder %s13, 0
    %p159 = por %p157, %p158
    %p160 = scmp.ne.s32.totalorder %s152, %s154
    %p161 = scmp.eq.s32.totalorder %s18, 7
    %p162 = por %p160, %p161
    %p163 = scmp.ne.s32.totalorder %s154, %s155
    %p164 = scmp.eq.s32.totalorder %s18, 0
    %p165 = por %p163, %p164
    %p166 = scmp.ne.s32.totalorder %s154, %s155
    %p167 = scmp.eq.s32.totalorder %s19, 7
    %p168 = por %p166, %p167
    %p170 = scmp.ne.s32.totalorder %s155, %s169
    %p171 = scmp.eq.s32.totalorder %s19, 0
    %p172 = por %p170, %p171
    %s173 = ssub.s32 %s13, %s20
    %p174 = scmp.eq.s32.totalorder %s173, 0
    %s176 = sadd.s32 %s175, 1
    %s177 = scalar_select %p174, %s175, %s176
    %p180 = pneg %p174
    %p181 = scmp.eq.s32.totalorder %s13, 7
    %p182 = por %p180, %p181
    %p183 = scmp.ne.s32.totalorder %s175, %s178
    %p184 = scmp.eq.s32.totalorder %s13, 0
    %p185 = por %p183, %p184
    %p186 = scmp.ne.s32.totalorder %s175, %s178
    %p187 = scmp.eq.s32.totalorder %s18, 7
    %p188 = por %p186, %p187
    %p189 = scmp.ne.s32.totalorder %s178, %s179
    %p190 = scmp.eq.s32.totalorder %s18, 0
    %p191 = por %p189, %p190
    %p192 = scmp.ne.s32.totalorder %s178, %s179
    %p193 = scmp.eq.s32.totalorder %s19, 7
    %p194 = por %p192, %p193
    %p196 = scmp.ne.s32.totalorder %s179, %s195
    %p197 = scmp.eq.s32.totalorder %s19, 0
    %p198 = por %p196, %p197
    %p199 = scmp.le.s32.totalorder 1, %s13
    %p200 = scmp.lt.s32.totalorder %s13, 9
    %p201 = pnand %p199, %p200
    %p202 = pneg %p201
    // Predicated region
    $region9: #{baseline_convnet_forward.11} parent=5 // pred_check
      _
    $region10: #{baseline_convnet_forward.11} parent=5 // pred_check_branch
      %204 = sbr.rel (%p201) target = $region12
    $region11: #{baseline_convnet_forward.11} parent=5 // pred_region
      %s205 = ssub.s32 %s13, 1
      // Predicated region
      $region13: #{baseline_convnet_forward.11} parent=11 // pred_check
        %p206 = pneg %p60
      $region14: #{baseline_convnet_forward.11} parent=11 // pred_check_branch
        %208 = sbr.rel (%p206) target = $region16
      $region15: #{baseline_convnet_forward.11} parent=11 // pred_region
        _
      $region16: #{baseline_convnet_forward.11} parent=11 // pred_fallthru
        _
      // Predicated region
      $region17: #{baseline_convnet_forward.11} parent=11 // pred_check
        %p209 = pneg %p81
      $region18: #{baseline_convnet_forward.11} parent=11 // pred_check_branch
        %211 = sbr.rel (%p209) target = $region20
      $region19: #{baseline_convnet_forward.11} parent=11 // pred_region
        _
      $region20: #{baseline_convnet_forward.11} parent=11 // pred_fallthru
        _
      // Predicated region
      $region21: #{baseline_convnet_forward.11} parent=11 // pred_check
        %p212 = pneg %p102
      $region22: #{baseline_convnet_forward.11} parent=11 // pred_check_branch
        %214 = sbr.rel (%p212) target = $region24
      $region23: #{baseline_convnet_forward.11} parent=11 // pred_region
        _
      $region24: #{baseline_convnet_forward.11} parent=11 // pred_fallthru
        _
      // Predicated region
      $region25: #{baseline_convnet_forward.11} parent=11 // pred_check
        %p215 = pneg %p123
      $region26: #{baseline_convnet_forward.11} parent=11 // pred_check_branch
        %217 = sbr.rel (%p215) target = $region28
      $region27: #{baseline_convnet_forward.11} parent=11 // pred_region
        _
      $region28: #{baseline_convnet_forward.11} parent=11 // pred_fallthru
        _
      // Predicated region
      $region29: #{baseline_convnet_forward.11} parent=11 // pred_check
        %p218 = pneg %p144
      $region30: #{baseline_convnet_forward.11} parent=11 // pred_check_branch
        %220 = sbr.rel (%p218) target = $region32
      $region31: #{baseline_convnet_forward.11} parent=11 // pred_region
        _
      $region32: #{baseline_convnet_forward.11} parent=11 // pred_fallthru
        _
      // Predicated region
      $region33: #{baseline_convnet_forward.11} parent=11 // pred_check
        %p221 = pneg %p165
      $region34: #{baseline_convnet_forward.11} parent=11 // pred_check_branch
        %223 = sbr.rel (%p221) target = $region36
      $region35: #{baseline_convnet_forward.11} parent=11 // pred_region
        _
      $region36: #{baseline_convnet_forward.11} parent=11 // pred_fallthru
        _
    $region12: #{baseline_convnet_forward.11} parent=5 // pred_fallthru
      _
    %p224 = scmp.lt.s32.totalorder %s13, 8
    // Predicated region
    $region37: #{baseline_convnet_forward.11} parent=5 // pred_check
      %p225 = pneg %p224
    $region38: #{baseline_convnet_forward.11} parent=5 // pred_check_branch
      %227 = sbr.rel (%p225) target = $region40
    $region39: #{baseline_convnet_forward.11} parent=5 // pred_region
      // Predicated region
      $region41: #{baseline_convnet_forward.11} parent=39 // pred_check
        %p228 = pneg %p33
      $region42: #{baseline_convnet_forward.11} parent=39 // pred_check_branch
        %230 = sbr.rel (%p228) target = $region44
      $region43: #{baseline_convnet_forward.11} parent=39 // pred_region
        %p231 = scmp.lt.s32.totalorder %s13, 7
        %s232 = scalar_select %p231, %s13, 7
        %s233 = smul.addr %s232, 2
        %s234 = smul.addr %s233, 2
        %s235 = scalar_lea.vmem %s0, %s234
      $region44: #{baseline_convnet_forward.11} parent=39 // pred_fallthru
        _
    $region40: #{baseline_convnet_forward.11} parent=5 // pred_fallthru
      _
    %p236 = scmp.le.s32.totalorder 1, %s13
    %p237 = scmp.lt.s32.totalorder %s13, 9
    %p238 = pnand %p236, %p237
    %p239 = pneg %p238
    // Predicated region
    $region45: #{baseline_convnet_forward.11} parent=5 // pred_check
      _
    $region46: #{baseline_convnet_forward.11} parent=5 // pred_check_branch
      %241 = sbr.rel (%p238) target = $region48
    $region47: #{baseline_convnet_forward.11} parent=5 // pred_region
      %s242 = ssub.s32 %s13, 1
      %p243 = scmp.lt.s32.totalorder %s18, 7
      %s244 = scalar_select %p243, %s18, 7
      %s245 = smul.addr %s244, 2
      %s246 = smul.addr %s245, 2
      %s247 = scalar_lea.vmem %s0, %s246
      %p248 = pneg %p39
      %p249 = pneg %p36
      %p250 = pneg %p60
      %p251 = pneg %p57
      %p252 = pneg %p81
      %p253 = pneg %p78
      %p254 = pneg %p102
      %p255 = pneg %p99
      %p256 = pneg %p123
      %p257 = pneg %p120
      %p258 = pneg %p144
      %p259 = pneg %p141
      %p260 = pneg %p165
      %p261 = pneg %p162
      %p262 = pneg %p191
      %p263 = pneg %p188
      %p264 = scmp.lt.s32.totalorder %s18, 7
      %s265 = scalar_select %p264, %s18, 7
      %s266 = smul.addr %s265, 2
      %s267 = scalar_lea.vmem %s7, %s266
      %p268 = scmp.lt.s32.totalorder %s18, 7
      %s269 = scalar_select %p268, %s18, 7
      %s270 = smul.addr %s269, 2
      %s271 = smul.addr %s270, 2
      %s272 = scalar_lea.vmem %s0, %s271
      %p273 = scmp.lt.s32.totalorder %s18, 7
      %s274 = scalar_select %p273, %s18, 7
      %s275 = smul.addr %s274, 2
      %s276 = scalar_lea.vmem %s7, %s275
      %v278 = vld [vmem:[%s2] sm:$0x3]
      %v279 = vld [vmem:[%s3] sm:$0x3]
      %v280 = vld [vmem:[%s4] sm:$0x3]
      %v281 = vld [vmem:[%s272] sm:$0x1]
      %v282 = vld [vmem:[%s1] sm:$0xff]
      %v283 = vld [vmem:[%s1 + $0x8] sm:$0xff]
      %v284 = vld [vmem:[%s1 + $0x10] sm:$0xff]
      %v285 = vld [vmem:[%s1 + $0x18] sm:$0xff]
      %v286 = vld [vmem:[%s1 + $0x20] sm:$0xff]
      %v287 = vld [vmem:[%s1 + $0x28] sm:$0xff]
      %v288 = vld [vmem:[%s1 + $0x30] sm:$0xff]
      %v289 = vld [vmem:[%s1 + $0x38] sm:$0xff]
      %v290 = vld [vmem:[%s1 + $0x40] sm:$0xff]
      %v291 = vld [vmem:[%s1 + $0x48] sm:$0xff]
      %v292 = vld [vmem:[%s1 + $0x50] sm:$0xff]
      %v293 = vld [vmem:[%s1 + $0x58] sm:$0xff]
      %v294 = vld [vmem:[%s1 + $0x60] sm:$0xff]
      %v295 = vld [vmem:[%s1 + $0x68] sm:$0xff]
      %v296 = vld [vmem:[%s1 + $0x70] sm:$0xff]
      %v297 = vld [vmem:[%s1 + $0x78] sm:$0xff]
      %v298 = vld [vmem:[%s272] sm:$0x3]
      %v299 = vld [vmem:[%s1 + $0x80] sm:$0xff]
      %v300 = vld [vmem:[%s1 + $0x88] sm:$0xff]
      %v301 = vld [vmem:[%s1 + $0x90] sm:$0xff]
      %v302 = vld [vmem:[%s1 + $0x98] sm:$0xff]
      %v303 = vld [vmem:[%s1 + $0xa0] sm:$0xff]
      %v304 = vld [vmem:[%s1 + $0xa8] sm:$0xff]
      %v305 = vld [vmem:[%s1 + $0xb0] sm:$0xff]
      %v306 = vld [vmem:[%s1 + $0xb8] sm:$0xff]
      %v307 = vld [vmem:[%s1 + $0xc0] sm:$0xff]
      %v308 = vld [vmem:[%s1 + $0xc8] sm:$0xff]
      %v309 = vld [vmem:[%s1 + $0xd0] sm:$0xff]
      %v310 = vld [vmem:[%s1 + $0xd8] sm:$0xff]
      %v311 = vld [vmem:[%s1 + $0xe0] sm:$0xff]
      %v312 = vld [vmem:[%s1 + $0xe8] sm:$0xff]
      %v313 = vld [vmem:[%s1 + $0xf0] sm:$0xff]
      %v314 = vld [vmem:[%s1 + $0xf8] sm:$0xff]
      %v317 = vunpack.c.l.s4 1983009808
      %v318 = vunpack.c.0.s8 %v317
      %v319 = vlaneseq
      %v320 = vshrl.u32 %v319, 7
      %v321 = vsub.s32 %v318, %v320
      %v322 = vrot.slane %v298, %v321
      %v324 = vshrl.u32 %v322, 16
      %v326 = vshll.u32 %v322, 16
      %v328 = vrot.slane %v326, 1
      %v329 = vor.u32 %v324, %v328
      %v347 = vunpack.c.l.b16 %v299
      %v348 = vunpack.c.h.b16 %v299
      %v349 = vunpack.c.l.b16 %v300
      %v350 = vunpack.c.h.b16 %v300
      %v351 = vunpack.c.l.b16 %v301
      %v352 = vunpack.c.h.b16 %v301
      %v353 = vunpack.c.l.b16 %v302
      %v354 = vunpack.c.h.b16 %v302
      %v355 = vunpack.c.l.b16 %v303
      %v356 = vunpack.c.h.b16 %v303
      %v357 = vunpack.c.l.b16 %v304
      %v358 = vunpack.c.h.b16 %v304
      %v359 = vunpack.c.l.b16 %v305
      %v360 = vunpack.c.h.b16 %v305
      %v361 = vunpack.c.l.b16 %v306
      %v362 = vunpack.c.h.b16 %v306
      %v363 = vunpack.c.l.b16 %v307
      %v364 = vunpack.c.h.b16 %v307
      %v365 = vunpack.c.l.b16 %v308
      %v366 = vunpack.c.h.b16 %v308
      %v367 = vunpack.c.l.b16 %v309
      %v368 = vunpack.c.h.b16 %v309
      %v369 = vunpack.c.l.b16 %v310
      %v370 = vunpack.c.h.b16 %v310
      %v371 = vunpack.c.l.b16 %v311
      %v372 = vunpack.c.h.b16 %v311
      %v373 = vunpack.c.l.b16 %v312
      %v374 = vunpack.c.h.b16 %v312
      %v375 = vunpack.c.l.b16 %v313
      %v376 = vunpack.c.h.b16 %v313
      %v377 = vunpack.c.l.b16 %v314
      %v378 = vunpack.c.h.b16 %v314
      %v379 = vpack.c.b16 %v349, %v347
      %v380 = vpack.c.b16 %v350, %v348
      %v381 = vpack.c.b16 %v353, %v351
      %v382 = vpack.c.b16 %v354, %v352
      %v383 = vpack.c.b16 %v357, %v355
      %v384 = vpack.c.b16 %v358, %v356
      %v385 = vpack.c.b16 %v361, %v359
      %v386 = vpack.c.b16 %v362, %v360
      %v387 = vpack.c.b16 %v365, %v363
      %v388 = vpack.c.b16 %v366, %v364
      %v389 = vpack.c.b16 %v369, %v367
      %v390 = vpack.c.b16 %v370, %v368
      %v391 = vpack.c.b16 %v373, %v371
      %v392 = vpack.c.b16 %v374, %v372
      %v393 = vpack.c.b16 %v377, %v375
      %v394 = vpack.c.b16 %v378, %v376
      %411 = vmatprep.subr.bf16.mxu0 %v380
      %412 = vmatpush1.bf16.msra.mxu0 %v379
      %413 = vmatprep.subr.bf16.mxu0 %v382
      %414 = vmatpush1.bf16.msra.mxu0 %v381
      %415 = vmatprep.subr.bf16.mxu0 %v384
      %416 = vmatpush1.bf16.msra.mxu0 %v383
      %417 = vmatprep.subr.bf16.mxu0 %v386
      %418 = vmatpush1.bf16.msra.mxu0 %v385
      %419 = vmatprep.subr.bf16.mxu0 %v388
      %420 = vmatpush1.bf16.msra.mxu0 %v387
      %421 = vmatprep.subr.bf16.mxu0 %v390
      %422 = vmatpush1.bf16.msra.mxu0 %v389
      %423 = vmatprep.subr.bf16.mxu0 %v392
      %424 = vmatpush1.bf16.msra.mxu0 %v391
      %425 = vmatprep.subr.bf16.mxu0 %v394
      %426 = vmatpush1.bf16.msra.mxu0 %v393
      %427 = vmatprep.subr.bf16.mxu0 0
      %428 = vmatpush1.bf16.msra.mxu0 0
      %429 = vmatprep.subr.bf16.mxu0 0
      %430 = vmatpush1.bf16.msra.mxu0 0
      %431 = vmatprep.subr.bf16.mxu0 0
      %432 = vmatpush1.bf16.msra.mxu0 0
      %433 = vmatprep.subr.bf16.mxu0 0
      %434 = vmatpush1.bf16.msra.mxu0 0
      %435 = vmatprep.subr.bf16.mxu0 0
      %436 = vmatpush1.bf16.msra.mxu0 0
      %437 = vmatprep.subr.bf16.mxu0 0
      %438 = vmatpush1.bf16.msra.mxu0 0
      %439 = vmatprep.subr.bf16.mxu0 0
      %440 = vmatpush1.bf16.msra.mxu0 0
      %441 = vmatprep.subr.bf16.mxu0 0
      %442 = vmatpush1.bf16.msra.mxu0 0
      %443 = vmatprep.mubr.bf16.mxu0 0
      %444 = vmatmul.mubr.bf16.gmra.mrb[0].mxu0 %v329
      %v445 = vpop.f32.mrb[0].mxu0
      %v446 = vadd.f32 0.0, %v445
      %v447 = vpop.f32.mrb[0].mxu0
      %v448 = vadd.f32 0.0, %v447
      %v449 = vpop.f32.mrb[0].mxu0
      %v450 = vpop.f32.mrb[0].mxu0
      %451 = vdwg.mxu0
      %v468 = vunpack.c.l.b16 %v282
      %v469 = vunpack.c.h.b16 %v282
      %v470 = vunpack.c.l.b16 %v283
      %v471 = vunpack.c.h.b16 %v283
      %v472 = vunpack.c.l.b16 %v284
      %v473 = vunpack.c.h.b16 %v284
      %v474 = vunpack.c.l.b16 %v285
      %v475 = vunpack.c.h.b16 %v285
      %v476 = vunpack.c.l.b16 %v286
      %v477 = vunpack.c.h.b16 %v286
      %v478 = vunpack.c.l.b16 %v287
      %v479 = vunpack.c.h.b16 %v287
      %v480 = vunpack.c.l.b16 %v288
      %v481 = vunpack.c.h.b16 %v288
      %v482 = vunpack.c.l.b16 %v289
      %v483 = vunpack.c.h.b16 %v289
      %v484 = vunpack.c.l.b16 %v290
      %v485 = vunpack.c.h.b16 %v290
      %v486 = vunpack.c.l.b16 %v291
      %v487 = vunpack.c.h.b16 %v291
      %v488 = vunpack.c.l.b16 %v292
      %v489 = vunpack.c.h.b16 %v292
      %v490 = vunpack.c.l.b16 %v293
      %v491 = vunpack.c.h.b16 %v293
      %v492 = vunpack.c.l.b16 %v294
      %v493 = vunpack.c.h.b16 %v294
      %v494 = vunpack.c.l.b16 %v295
      %v495 = vunpack.c.h.b16 %v295
      %v496 = vunpack.c.l.b16 %v296
      %v497 = vunpack.c.h.b16 %v296
      %v498 = vunpack.c.l.b16 %v297
      %v499 = vunpack.c.h.b16 %v297
      %v500 = vpack.c.b16 %v470, %v468
      %v501 = vpack.c.b16 %v471, %v469
      %v502 = vpack.c.b16 %v474, %v472
      %v503 = vpack.c.b16 %v475, %v473
      %v504 = vpack.c.b16 %v478, %v476
      %v505 = vpack.c.b16 %v479, %v477
      %v506 = vpack.c.b16 %v482, %v480
      %v507 = vpack.c.b16 %v483, %v481
      %v508 = vpack.c.b16 %v486, %v484
      %v509 = vpack.c.b16 %v487, %v485
      %v510 = vpack.c.b16 %v490, %v488
      %v511 = vpack.c.b16 %v491, %v489
      %v512 = vpack.c.b16 %v494, %v492
      %v513 = vpack.c.b16 %v495, %v493
      %v514 = vpack.c.b16 %v498, %v496
      %v515 = vpack.c.b16 %v499, %v497
      %532 = vmatprep.subr.bf16.mxu0 %v501
      %533 = vmatpush1.bf16.msra.mxu0 %v500
      %534 = vmatprep.subr.bf16.mxu0 %v503
      %535 = vmatpush1.bf16.msra.mxu0 %v502
      %536 = vmatprep.subr.bf16.mxu0 %v505
      %537 = vmatpush1.bf16.msra.mxu0 %v504
      %538 = vmatprep.subr.bf16.mxu0 %v507
      %539 = vmatpush1.bf16.msra.mxu0 %v506
      %540 = vmatprep.subr.bf16.mxu0 %v509
      %541 = vmatpush1.bf16.msra.mxu0 %v508
      %542 = vmatprep.subr.bf16.mxu0 %v511
      %543 = vmatpush1.bf16.msra.mxu0 %v510
      %544 = vmatprep.subr.bf16.mxu0 %v513
      %545 = vmatpush1.bf16.msra.mxu0 %v512
      %546 = vmatprep.subr.bf16.mxu0 %v515
      %547 = vmatpush1.bf16.msra.mxu0 %v514
      %548 = vmatprep.subr.bf16.mxu0 0
      %549 = vmatpush1.bf16.msra.mxu0 0
      %550 = vmatprep.subr.bf16.mxu0 0
      %551 = vmatpush1.bf16.msra.mxu0 0
      %552 = vmatprep.subr.bf16.mxu0 0
      %553 = vmatpush1.bf16.msra.mxu0 0
      %554 = vmatprep.subr.bf16.mxu0 0
      %555 = vmatpush1.bf16.msra.mxu0 0
      %556 = vmatprep.subr.bf16.mxu0 0
      %557 = vmatpush1.bf16.msra.mxu0 0
      %558 = vmatprep.subr.bf16.mxu0 0
      %559 = vmatpush1.bf16.msra.mxu0 0
      %560 = vmatprep.subr.bf16.mxu0 0
      %561 = vmatpush1.bf16.msra.mxu0 0
      %562 = vmatprep.subr.bf16.mxu0 0
      %563 = vmatpush1.bf16.msra.mxu0 0
      %564 = vmatprep.mubr.bf16.mxu0 0
      %565 = vmatmul.mubr.bf16.gmra.mrb[0].mxu0 %v281
      %v566 = vpop.f32.mrb[0].mxu0
      %v567 = vadd.f32 %v446, %v566
      %v568 = vpop.f32.mrb[0].mxu0
      %v569 = vadd.f32 %v448, %v568
      %v570 = vpop.f32.mrb[0].mxu0
      %v571 = vpop.f32.mrb[0].mxu0
      %572 = vdwg.mxu0
      %v573 = vld [vmem:[%s272] sm:$0x2]
      %v574 = vld [vmem:[%s1 + $0x100] sm:$0xff]
      %v575 = vld [vmem:[%s1 + $0x108] sm:$0xff]
      %v576 = vld [vmem:[%s1 + $0x110] sm:$0xff]
      %v577 = vld [vmem:[%s1 + $0x118] sm:$0xff]
      %v578 = vld [vmem:[%s1 + $0x120] sm:$0xff]
      %v579 = vld [vmem:[%s1 + $0x128] sm:$0xff]
      %v580 = vld [vmem:[%s1 + $0x130] sm:$0xff]
      %v581 = vld [vmem:[%s1 + $0x138] sm:$0xff]
      %v582 = vld [vmem:[%s1 + $0x140] sm:$0xff]
      %v583 = vld [vmem:[%s1 + $0x148] sm:$0xff]
      %v584 = vld [vmem:[%s1 + $0x150] sm:$0xff]
      %v585 = vld [vmem:[%s1 + $0x158] sm:$0xff]
      %v586 = vld [vmem:[%s1 + $0x160] sm:$0xff]
      %v587 = vld [vmem:[%s1 + $0x168] sm:$0xff]
      %v588 = vld [vmem:[%s1 + $0x170] sm:$0xff]
      %v589 = vld [vmem:[%s1 + $0x178] sm:$0xff]
      %v592 = vunpack.c.l.s4 1983009808
      %v593 = vunpack.c.0.s8 %v592
      %v594 = vlaneseq
      %v595 = vshrl.u32 %v594, 7
      %v596 = vsub.s32 %v593, %v595
      %v597 = vrot.slane %v573, %v596
      %v598 = vrot.slane %v597, 1
      %v616 = vunpack.c.l.b16 %v574
      %v617 = vunpack.c.h.b16 %v574
      %v618 = vunpack.c.l.b16 %v575
      %v619 = vunpack.c.h.b16 %v575
      %v620 = vunpack.c.l.b16 %v576
      %v621 = vunpack.c.h.b16 %v576
      %v622 = vunpack.c.l.b16 %v577
      %v623 = vunpack.c.h.b16 %v577
      %v624 = vunpack.c.l.b16 %v578
      %v625 = vunpack.c.h.b16 %v578
      %v626 = vunpack.c.l.b16 %v579
      %v627 = vunpack.c.h.b16 %v579
      %v628 = vunpack.c.l.b16 %v580
      %v629 = vunpack.c.h.b16 %v580
      %v630 = vunpack.c.l.b16 %v581
      %v631 = vunpack.c.h.b16 %v581
      %v632 = vunpack.c.l.b16 %v582
      %v633 = vunpack.c.h.b16 %v582
      %v634 = vunpack.c.l.b16 %v583
      %v635 = vunpack.c.h.b16 %v583
      %v636 = vunpack.c.l.b16 %v584
      %v637 = vunpack.c.h.b16 %v584
      %v638 = vunpack.c.l.b16 %v585
      %v639 = vunpack.c.h.b16 %v585
      %v640 = vunpack.c.l.b16 %v586
      %v641 = vunpack.c.h.b16 %v586
      %v642 = vunpack.c.l.b16 %v587
      %v643 = vunpack.c.h.b16 %v587
      %v644 = vunpack.c.l.b16 %v588
      %v645 = vunpack.c.h.b16 %v588
      %v646 = vunpack.c.l.b16 %v589
      %v647 = vunpack.c.h.b16 %v589
      %v648 = vpack.c.b16 %v618, %v616
      %v649 = vpack.c.b16 %v619, %v617
      %v650 = vpack.c.b16 %v622, %v620
      %v651 = vpack.c.b16 %v623, %v621
      %v652 = vpack.c.b16 %v626, %v624
      %v653 = vpack.c.b16 %v627, %v625
      %v654 = vpack.c.b16 %v630, %v628
      %v655 = vpack.c.b16 %v631, %v629
      %v656 = vpack.c.b16 %v634, %v632
      %v657 = vpack.c.b16 %v635, %v633
      %v658 = vpack.c.b16 %v638, %v636
      %v659 = vpack.c.b16 %v639, %v637
      %v660 = vpack.c.b16 %v642, %v640
      %v661 = vpack.c.b16 %v643, %v641
      %v662 = vpack.c.b16 %v646, %v644
      %v663 = vpack.c.b16 %v647, %v645
      %680 = vmatprep.subr.bf16.mxu0 %v649
      %681 = vmatpush1.bf16.msra.mxu0 %v648
      %682 = vmatprep.subr.bf16.mxu0 %v651
      %683 = vmatpush1.bf16.msra.mxu0 %v650
      %684 = vmatprep.subr.bf16.mxu0 %v653
      %685 = vmatpush1.bf16.msra.mxu0 %v652
      %686 = vmatprep.subr.bf16.mxu0 %v655
      %687 = vmatpush1.bf16.msra.mxu0 %v654
      %688 = vmatprep.subr.bf16.mxu0 %v657
      %689 = vmatpush1.bf16.msra.mxu0 %v656
      %690 = vmatprep.subr.bf16.mxu0 %v659
      %691 = vmatpush1.bf16.msra.mxu0 %v658
      %692 = vmatprep.subr.bf16.mxu0 %v661
      %693 = vmatpush1.bf16.msra.mxu0 %v660
      %694 = vmatprep.subr.bf16.mxu0 %v663
      %695 = vmatpush1.bf16.msra.mxu0 %v662
      %696 = vmatprep.subr.bf16.mxu0 0
      %697 = vmatpush1.bf16.msra.mxu0 0
      %698 = vmatprep.subr.bf16.mxu0 0
      %699 = vmatpush1.bf16.msra.mxu0 0
      %700 = vmatprep.subr.bf16.mxu0 0
      %701 = vmatpush1.bf16.msra.mxu0 0
      %702 = vmatprep.subr.bf16.mxu0 0
      %703 = vmatpush1.bf16.msra.mxu0 0
      %704 = vmatprep.subr.bf16.mxu0 0
      %705 = vmatpush1.bf16.msra.mxu0 0
      %706 = vmatprep.subr.bf16.mxu0 0
      %707 = vmatpush1.bf16.msra.mxu0 0
      %708 = vmatprep.subr.bf16.mxu0 0
      %709 = vmatpush1.bf16.msra.mxu0 0
      %710 = vmatprep.subr.bf16.mxu0 0
      %711 = vmatpush1.bf16.msra.mxu0 0
      %712 = vmatprep.mubr.bf16.mxu0 0
      %713 = vmatmul.mubr.bf16.gmra.mrb[0].mxu0 %v598
      %v714 = vpop.f32.mrb[0].mxu0
      %v715 = vadd.f32 0.0, %v714
      %v716 = vpop.f32.mrb[0].mxu0
      %v717 = vadd.f32 0.0, %v716
      %v718 = vpop.f32.mrb[0].mxu0
      %v719 = vpop.f32.mrb[0].mxu0
      %720 = vdwg.mxu0
      %v721 = vadd.f32 %v567, %v715
      %v722 = vadd.f32 %v569, %v717
      %v724 = vlaneseq
      %v725 = vshrl.u32 %v724, 7
      %v726 = vsub.s32 0, %v725
      %v727 = vrot.slane %v278, %v726
      %v728 = vlaneseq
      %v729 = vshrl.u32 %v728, 7
      %v730 = vsub.s32 1, %v729
      %v731 = vrot.slane %v278, %v730
      %v734 = vadd.f32 %v721, %v727
      %v735 = vadd.f32 %v722, %v731
      %vm736 = vcmp.gt.f32.partialorder %v734, 0.0
      %vm737 = vcmp.gt.f32.partialorder %v735, 0.0
      %v738 = vmul.f32 %v734, 0.2
      %v739 = vmul.f32 %v735, 0.2
      %v740 = vsel %vm736, %v734, %v738
      %v741 = vsel %vm737, %v735, %v739
      %s742 = scalar_lea.vmem %s272, 2
      %v743 = vld [vmem:[%s742] sm:$0x1]
      %v744 = vld [vmem:[%s742] sm:$0x3]
      %v747 = vunpack.c.l.s4 1983009808
      %v748 = vunpack.c.0.s8 %v747
      %v749 = vlaneseq
      %v750 = vshrl.u32 %v749, 7
      %v751 = vsub.s32 %v748, %v750
      %v752 = vrot.slane %v744, %v751
      %v754 = vshrl.u32 %v752, 16
      %v756 = vshll.u32 %v752, 16
      %v758 = vrot.slane %v756, 1
      %v759 = vor.u32 %v754, %v758
      %761 = vmatprep.subr.bf16.mxu0 %v380
      %762 = vmatpush1.bf16.msra.mxu0 %v379
      %763 = vmatprep.subr.bf16.mxu0 %v382
      %764 = vmatpush1.bf16.msra.mxu0 %v381
      %765 = vmatprep.subr.bf16.mxu0 %v384
      %766 = vmatpush1.bf16.msra.mxu0 %v383
      %767 = vmatprep.subr.bf16.mxu0 %v386
      %768 = vmatpush1.bf16.msra.mxu0 %v385
      %769 = vmatprep.subr.bf16.mxu0 %v388
      %770 = vmatpush1.bf16.msra.mxu0 %v387
      %771 = vmatprep.subr.bf16.mxu0 %v390
      %772 = vmatpush1.bf16.msra.mxu0 %v389
      %773 = vmatprep.subr.bf16.mxu0 %v392
      %774 = vmatpush1.bf16.msra.mxu0 %v391
      %775 = vmatprep.subr.bf16.mxu0 %v394
      %776 = vmatpush1.bf16.msra.mxu0 %v393
      %777 = vmatprep.subr.bf16.mxu0 0
      %778 = vmatpush1.bf16.msra.mxu0 0
      %779 = vmatprep.subr.bf16.mxu0 0
      %780 = vmatpush1.bf16.msra.mxu0 0
      %781 = vmatprep.subr.bf16.mxu0 0
      %782 = vmatpush1.bf16.msra.mxu0 0
      %783 = vmatprep.subr.bf16.mxu0 0
      %784 = vmatpush1.bf16.msra.mxu0 0
      %785 = vmatprep.subr.bf16.mxu0 0
      %786 = vmatpush1.bf16.msra.mxu0 0
      %787 = vmatprep.subr.bf16.mxu0 0
      %788 = vmatpush1.bf16.msra.mxu0 0
      %789 = vmatprep.subr.bf16.mxu0 0
      %790 = vmatpush1.bf16.msra.mxu0 0
      %791 = vmatprep.subr.bf16.mxu0 0
      %792 = vmatpush1.bf16.msra.mxu0 0
      %793 = vmatprep.mubr.bf16.mxu0 0
      %794 = vmatmul.mubr.bf16.gmra.mrb[0].mxu0 %v759
      %v795 = vpop.f32.mrb[0].mxu0
      %v796 = vadd.f32 0.0, %v795
      %v797 = vpop.f32.mrb[0].mxu0
      %v798 = vadd.f32 0.0, %v797
      %v799 = vpop.f32.mrb[0].mxu0
      %v800 = vpop.f32.mrb[0].mxu0
      %801 = vdwg.mxu0
      %802 = vmatprep.subr.bf16.mxu0 %v501
      %803 = vmatpush1.bf16.msra.mxu0 %v500
      %804 = vmatprep.subr.bf16.mxu0 %v503
      %805 = vmatpush1.bf16.msra.mxu0 %v502
      %806 = vmatprep.subr.bf16.mxu0 %v505
      %807 = vmatpush1.bf16.msra.mxu0 %v504
      %808 = vmatprep.subr.bf16.mxu0 %v507
      %809 = vmatpush1.bf16.msra.mxu0 %v506
      %810 = vmatprep.subr.bf16.mxu0 %v509
      %811 = vmatpush1.bf16.msra.mxu0 %v508
      %812 = vmatprep.subr.bf16.mxu0 %v511
      %813 = vmatpush1.bf16.msra.mxu0 %v510
      %814 = vmatprep.subr.bf16.mxu0 %v513
      %815 = vmatpush1.bf16.msra.mxu0 %v512
      %816 = vmatprep.subr.bf16.mxu0 %v515
      %817 = vmatpush1.bf16.msra.mxu0 %v514
      %818 = vmatprep.subr.bf16.mxu0 0
      %819 = vmatpush1.bf16.msra.mxu0 0
      %820 = vmatprep.subr.bf16.mxu0 0
      %821 = vmatpush1.bf16.msra.mxu0 0
      %822 = vmatprep.subr.bf16.mxu0 0
      %823 = vmatpush1.bf16.msra.mxu0 0
      %824 = vmatprep.subr.bf16.mxu0 0
      %825 = vmatpush1.bf16.msra.mxu0 0
      %826 = vmatprep.subr.bf16.mxu0 0
      %827 = vmatpush1.bf16.msra.mxu0 0
      %828 = vmatprep.subr.bf16.mxu0 0
      %829 = vmatpush1.bf16.msra.mxu0 0
      %830 = vmatprep.subr.bf16.mxu0 0
      %831 = vmatpush1.bf16.msra.mxu0 0
      %832 = vmatprep.subr.bf16.mxu0 0
      %833 = vmatpush1.bf16.msra.mxu0 0
      %834 = vmatprep.mubr.bf16.mxu0 0
      %835 = vmatmul.mubr.bf16.gmra.mrb[0].mxu0 %v743
      %v836 = vpop.f32.mrb[0].mxu0
      %v837 = vadd.f32 %v796, %v836
      %v838 = vpop.f32.mrb[0].mxu0
      %v839 = vadd.f32 %v798, %v838
      %v840 = vpop.f32.mrb[0].mxu0
      %v841 = vpop.f32.mrb[0].mxu0
      %842 = vdwg.mxu0
      %v843 = vld [vmem:[%s742] sm:$0x2]
      %v846 = vunpack.c.l.s4 1983009808
      %v847 = vunpack.c.0.s8 %v846
      %v848 = vlaneseq
      %v849 = vshrl.u32 %v848, 7
      %v850 = vsub.s32 %v847, %v849
      %v851 = vrot.slane %v843, %v850
      %v852 = vrot.slane %v851, 1
      %854 = vmatprep.subr.bf16.mxu0 %v649
      %855 = vmatpush1.bf16.msra.mxu0 %v648
      %856 = vmatprep.subr.bf16.mxu0 %v651
      %857 = vmatpush1.bf16.msra.mxu0 %v650
      %858 = vmatprep.subr.bf16.mxu0 %v653
      %859 = vmatpush1.bf16.msra.mxu0 %v652
      %860 = vmatprep.subr.bf16.mxu0 %v655
      %861 = vmatpush1.bf16.msra.mxu0 %v654
      %862 = vmatprep.subr.bf16.mxu0 %v657
      %863 = vmatpush1.bf16.msra.mxu0 %v656
      %864 = vmatprep.subr.bf16.mxu0 %v659
      %865 = vmatpush1.bf16.msra.mxu0 %v658
      %866 = vmatprep.subr.bf16.mxu0 %v661
      %867 = vmatpush1.bf16.msra.mxu0 %v660
      %868 = vmatprep.subr.bf16.mxu0 %v663
      %869 = vmatpush1.bf16.msra.mxu0 %v662
      %870 = vmatprep.subr.bf16.mxu0 0
      %871 = vmatpush1.bf16.msra.mxu0 0
      %872 = vmatprep.subr.bf16.mxu0 0
      %873 = vmatpush1.bf16.msra.mxu0 0
      %874 = vmatprep.subr.bf16.mxu0 0
      %875 = vmatpush1.bf16.msra.mxu0 0
      %876 = vmatprep.subr.bf16.mxu0 0
      %877 = vmatpush1.bf16.msra.mxu0 0
      %878 = vmatprep.subr.bf16.mxu0 0
      %879 = vmatpush1.bf16.msra.mxu0 0
      %880 = vmatprep.subr.bf16.mxu0 0
      %881 = vmatpush1.bf16.msra.mxu0 0
      %882 = vmatprep.subr.bf16.mxu0 0
      %883 = vmatpush1.bf16.msra.mxu0 0
      %884 = vmatprep.subr.bf16.mxu0 0
      %885 = vmatpush1.bf16.msra.mxu0 0
      %886 = vmatprep.mubr.bf16.mxu0 0
      %887 = vmatmul.mubr.bf16.gmra.mrb[0].mxu0 %v852
      %v888 = vpop.f32.mrb[0].mxu0
      %v889 = vadd.f32 0.0, %v888
      %v890 = vpop.f32.mrb[0].mxu0
      %v891 = vadd.f32 0.0, %v890
      %v892 = vpop.f32.mrb[0].mxu0
      %v893 = vpop.f32.mrb[0].mxu0
      %894 = vdwg.mxu0
      %v895 = vadd.f32 %v837, %v889
      %v896 = vadd.f32 %v839, %v891
      %v897 = vadd.f32 %v895, %v727
      %v898 = vadd.f32 %v896, %v731
      %vm899 = vcmp.gt.f32.partialorder %v897, 0.0
      %vm900 = vcmp.gt.f32.partialorder %v898, 0.0
      %v901 = vmul.f32 %v897, 0.2
      %v902 = vmul.f32 %v898, 0.2
      %v903 = vsel %vm899, %v897, %v901
      %v904 = vsel %vm900, %v898, %v902
      %vm905 = vcmask 1041408
      %v906 = vsel %vm905, %v740, 0.0
      %v907 = vrot.slane %v906, 4
      %v908 = vadd.f32 %v906, %v907
      %v909 = vrot.slane %v908, 2
      %v910 = vadd.f32 %v908, %v909
      %v911 = vrot.slane %v910, 1
      %v912 = vadd.f32 %v910, %v911
      %v913 = vsel %vm905, %v741, 0.0
      %v914 = vrot.slane %v913, 4
      %v915 = vadd.f32 %v913, %v914
      %v916 = vrot.slane %v915, 2
      %v917 = vadd.f32 %v915, %v916
      %v918 = vrot.slane %v917, 1
      %v919 = vadd.f32 %v917, %v918
      %v920 = vmul.f32 %v740, %v740
      %v921 = vmul.f32 %v741, %v741
      %v922 = vsel %vm905, %v920, 0.0
      %v923 = vrot.slane %v922, 4
      %v924 = vadd.f32 %v922, %v923
      %v925 = vrot.slane %v924, 2
      %v926 = vadd.f32 %v924, %v925
      %v927 = vrot.slane %v926, 1
      %v928 = vadd.f32 %v926, %v927
      %v929 = vsel %vm905, %v921, 0.0
      %v930 = vrot.slane %v929, 4
      %v931 = vadd.f32 %v929, %v930
      %v932 = vrot.slane %v931, 2
      %v933 = vadd.f32 %v931, %v932
      %v934 = vrot.slane %v933, 1
      %v935 = vadd.f32 %v933, %v934
      %v936 = vsel %vm905, %v903, 0.0
      %v937 = vrot.slane %v936, 4
      %v938 = vadd.f32 %v936, %v937
      %v939 = vrot.slane %v938, 2
      %v940 = vadd.f32 %v938, %v939
      %v941 = vrot.slane %v940, 1
      %v942 = vadd.f32 %v940, %v941
      %v943 = vsel %vm905, %v904, 0.0
      %v944 = vrot.slane %v943, 4
      %v945 = vadd.f32 %v943, %v944
      %v946 = vrot.slane %v945, 2
      %v947 = vadd.f32 %v945, %v946
      %v948 = vrot.slane %v947, 1
      %v949 = vadd.f32 %v947, %v948
      %v950 = vadd.f32 %v912, %v942
      %v951 = vadd.f32 %v919, %v949
      %v952 = vmul.f32 %v903, %v903
      %v953 = vmul.f32 %v904, %v904
      %v954 = vsel %vm905, %v952, 0.0
      %v955 = vrot.slane %v954, 4
      %v956 = vadd.f32 %v954, %v955
      %v957 = vrot.slane %v956, 2
      %v958 = vadd.f32 %v956, %v957
      %v959 = vrot.slane %v958, 1
      %v960 = vadd.f32 %v958, %v959
      %v961 = vsel %vm905, %v953, 0.0
      %v962 = vrot.slane %v961, 4
      %v963 = vadd.f32 %v961, %v962
      %v964 = vrot.slane %v963, 2
      %v965 = vadd.f32 %v963, %v964
      %v966 = vrot.slane %v965, 1
      %v967 = vadd.f32 %v965, %v966
      %v968 = vadd.f32 %v928, %v960
      %v969 = vadd.f32 %v935, %v967
      %v970 = vmul.f32 %v950, 0.25
      %v971 = vmul.f32 %v951, 0.25
      %v972 = vmul.f32 %v968, 0.25
      %v973 = vmul.f32 %v969, 0.25
      %v974 = vmul.f32 %v970, %v970
      %v975 = vmul.f32 %v971, %v971
      %v976 = vsub.f32 %v972, %v974
      %v977 = vsub.f32 %v973, %v975
      %v978 = vadd.f32 %v976, 1e-05
      %v979 = vadd.f32 %v977, 1e-05
      %v980 = vrsqrt.pop %v978
      %v981 = vrsqrt.pop %v979
      %v984 = vcombine.low %v980, %v981
      %v986 = vunpack.c.l.s4 1966171168
      %v987 = vunpack.c.0.s8 %v986
      %v988 = vlaneseq
      %v989 = vshrl.u32 %v988, 7
      %v990 = vsub.s32 %v987, %v989
      %v991 = vrot.slane %v984, %v990
      %v993 = vunpack.c.l.s4 1966171168
      %v994 = vunpack.c.0.s8 %v993
      %v995 = vlaneseq
      %v996 = vshrl.u32 %v995, 7
      %v997 = vsub.s32 %v994, %v996
      %v998 = vrot.slane %v991, %v997
      %v1000 = vmul.f32 %v279, %v998
      %v1002 = vlaneseq
      %v1003 = vshrl.u32 %v1002, 7
      %v1004 = vsub.s32 0, %v1003
      %v1005 = vrot.slane %v1000, %v1004
      %v1006 = vlaneseq
      %v1007 = vshrl.u32 %v1006, 7
      %v1008 = vsub.s32 1, %v1007
      %v1009 = vrot.slane %v1000, %v1008
      %v1012 = vmul.f32 %v970, %v1005
      %v1013 = vmul.f32 %v971, %v1009
      %v1016 = vcombine.low %v1012, %v1013
      %v1018 = vunpack.c.l.s4 1966171168
      %v1019 = vunpack.c.0.s8 %v1018
      %v1020 = vlaneseq
      %v1021 = vshrl.u32 %v1020, 7
      %v1022 = vsub.s32 %v1019, %v1021
      %v1023 = vrot.slane %v1016, %v1022
      %v1025 = vunpack.c.l.s4 1966171168
      %v1026 = vunpack.c.0.s8 %v1025
      %v1027 = vlaneseq
      %v1028 = vshrl.u32 %v1027, 7
      %v1029 = vsub.s32 %v1026, %v1028
      %v1030 = vrot.slane %v1023, %v1029
      %v1032 = vsub.f32 %v280, %v1030
      %v1033 = vmul.f32 %v740, %v1005
      %v1034 = vmul.f32 %v741, %v1009
      %v1036 = vlaneseq
      %v1037 = vshrl.u32 %v1036, 7
      %v1038 = vsub.s32 0, %v1037
      %v1039 = vrot.slane %v1032, %v1038
      %v1040 = vlaneseq
      %v1041 = vshrl.u32 %v1040, 7
      %v1042 = vsub.s32 1, %v1041
      %v1043 = vrot.slane %v1032, %v1042
      %v1046 = vadd.f32 %v1033, %v1039
      %v1047 = vadd.f32 %v1034, %v1043
      %v1048 = vmul.f32 %v903, %v1005
      %v1049 = vmul.f32 %v904, %v1009
      %v1050 = vadd.f32 %v1048, %v1039
      %v1051 = vadd.f32 %v1049, %v1043
      %v1052 = vld [vmem:[%s5] sm:$0xf]
      %v1053 = vld [vmem:[%s5 + $0x4] sm:$0xf]
      %v1054 = vld [vmem:[%s5 + $0x8] sm:$0xf]
      %v1055 = vld [vmem:[%s5 + $0xc] sm:$0xf]
      %v1056 = vld [vmem:[%s5 + $0x10] sm:$0xf]
      %v1057 = vld [vmem:[%s5 + $0x14] sm:$0xf]
      %v1058 = vld [vmem:[%s5 + $0x18] sm:$0xf]
      %v1059 = vld [vmem:[%s5 + $0x1c] sm:$0xf]
      %v1060 = vld [vmem:[%s5 + $0x20] sm:$0xf]
      %v1061 = vld [vmem:[%s5 + $0x24] sm:$0xf]
      %v1062 = vld [vmem:[%s5 + $0x28] sm:$0xf]
      %v1063 = vld [vmem:[%s5 + $0x2c] sm:$0xf]
      %v1064 = vld [vmem:[%s5 + $0x30] sm:$0xf]
      %v1065 = vld [vmem:[%s5 + $0x34] sm:$0xf]
      %v1066 = vld [vmem:[%s5 + $0x38] sm:$0xf]
      %v1067 = vld [vmem:[%s5 + $0x3c] sm:$0xf]
      %v1068 = vld [vmem:[%s5 + $0x40] sm:$0xf]
      %v1069 = vld [vmem:[%s5 + $0x44] sm:$0xf]
      %v1070 = vld [vmem:[%s5 + $0x48] sm:$0xf]
      %v1071 = vld [vmem:[%s5 + $0x4c] sm:$0xf]
      %v1072 = vld [vmem:[%s5 + $0x50] sm:$0xf]
      %v1073 = vld [vmem:[%s5 + $0x54] sm:$0xf]
      %v1074 = vld [vmem:[%s5 + $0x58] sm:$0xf]
      %v1075 = vld [vmem:[%s5 + $0x5c] sm:$0xf]
      %v1076 = vld [vmem:[%s5 + $0x60] sm:$0xf]
      %v1077 = vld [vmem:[%s5 + $0x64] sm:$0xf]
      %v1078 = vld [vmem:[%s5 + $0x68] sm:$0xf]
      %v1079 = vld [vmem:[%s5 + $0x6c] sm:$0xf]
      %v1080 = vld [vmem:[%s5 + $0x70] sm:$0xf]
      %v1081 = vld [vmem:[%s5 + $0x74] sm:$0xf]
      %v1082 = vld [vmem:[%s5 + $0x78] sm:$0xf]
      %v1083 = vld [vmem:[%s5 + $0x7c] sm:$0xf]
      %v1084 = vld [vmem:[%s6] sm:$0x1]
      %v1085 = vsel %vm905, %v1046, 0.0
      %v1086 = vrot.slane %v1085, 4
      %v1087 = vadd.f32 %v1085, %v1086
      %v1088 = vrot.slane %v1087, 2
      %v1089 = vadd.f32 %v1087, %v1088
      %v1090 = vrot.slane %v1089, 1
      %v1091 = vadd.f32 %v1089, %v1090
      %v1092 = vsel %vm905, %v1047, 0.0
      %v1093 = vrot.slane %v1092, 4
      %v1094 = vadd.f32 %v1092, %v1093
      %v1095 = vrot.slane %v1094, 2
      %v1096 = vadd.f32 %v1094, %v1095
      %v1097 = vrot.slane %v1096, 1
      %v1098 = vadd.f32 %v1096, %v1097
      %v1099 = vrcp.pop 2.0
      %v1100 = vmul.f32 %v1091, %v1099
      %v1101 = vmul.f32 %v1098, %v1099
      %v1102 = vpack.c.bf16 %v1100, %v1100
      %v1103 = vpack.c.bf16 %v1101, %v1101
      %v1136 = vunpack.c.l.b16 %v1052
      %v1137 = vunpack.c.l.b16 %v1053
      %v1138 = vunpack.c.l.b16 %v1054
      %v1139 = vunpack.c.l.b16 %v1055
      %v1140 = vunpack.c.l.b16 %v1056
      %v1141 = vunpack.c.l.b16 %v1057
      %v1142 = vunpack.c.l.b16 %v1058
      %v1143 = vunpack.c.l.b16 %v1059
      %v1144 = vunpack.c.l.b16 %v1060
      %v1145 = vunpack.c.l.b16 %v1061
      %v1146 = vunpack.c.l.b16 %v1062
      %v1147 = vunpack.c.l.b16 %v1063
      %v1148 = vunpack.c.l.b16 %v1064
      %v1149 = vunpack.c.l.b16 %v1065
      %v1150 = vunpack.c.l.b16 %v1066
      %v1151 = vunpack.c.l.b16 %v1067
      %v1152 = vunpack.c.l.b16 %v1068
      %v1153 = vunpack.c.l.b16 %v1069
      %v1154 = vunpack.c.l.b16 %v1070
      %v1155 = vunpack.c.l.b16 %v1071
      %v1156 = vunpack.c.l.b16 %v1072
      %v1157 = vunpack.c.l.b16 %v1073
      %v1158 = vunpack.c.l.b16 %v1074
      %v1159 = vunpack.c.l.b16 %v1075
      %v1160 = vunpack.c.l.b16 %v1076
      %v1161 = vunpack.c.l.b16 %v1077
      %v1162 = vunpack.c.l.b16 %v1078
      %v1163 = vunpack.c.l.b16 %v1079
      %v1164 = vunpack.c.l.b16 %v1080
      %v1165 = vunpack.c.l.b16 %v1081
      %v1166 = vunpack.c.l.b16 %v1082
      %v1167 = vunpack.c.l.b16 %v1083
      %v1168 = vpack.c.b16 %v1137, %v1136
      %v1169 = vpack.c.b16 %v1139, %v1138
      %v1170 = vpack.c.b16 %v1141, %v1140
      %v1171 = vpack.c.b16 %v1143, %v1142
      %v1172 = vpack.c.b16 %v1145, %v1144
      %v1173 = vpack.c.b16 %v1147, %v1146
      %v1174 = vpack.c.b16 %v1149, %v1148
      %v1175 = vpack.c.b16 %v1151, %v1150
      %v1176 = vpack.c.b16 %v1153, %v1152
      %v1177 = vpack.c.b16 %v1155, %v1154
      %v1178 = vpack.c.b16 %v1157, %v1156
      %v1179 = vpack.c.b16 %v1159, %v1158
      %v1180 = vpack.c.b16 %v1161, %v1160
      %v1181 = vpack.c.b16 %v1163, %v1162
      %v1182 = vpack.c.b16 %v1165, %v1164
      %v1183 = vpack.c.b16 %v1167, %v1166
      %1200 = vmatprep.subr.bf16.mxu0 0
      %1201 = vmatpush1.bf16.msra.mxu0 %v1168
      %1202 = vmatprep.subr.bf16.mxu0 0
      %1203 = vmatpush1.bf16.msra.mxu0 %v1169
      %1204 = vmatprep.subr.bf16.mxu0 0
      %1205 = vmatpush1.bf16.msra.mxu0 %v1170
      %1206 = vmatprep.subr.bf16.mxu0 0
      %1207 = vmatpush1.bf16.msra.mxu0 %v1171
      %1208 = vmatprep.subr.bf16.mxu0 0
      %1209 = vmatpush1.bf16.msra.mxu0 %v1172
      %1210 = vmatprep.subr.bf16.mxu0 0
      %1211 = vmatpush1.bf16.msra.mxu0 %v1173
      %1212 = vmatprep.subr.bf16.mxu0 0
      %1213 = vmatpush1.bf16.msra.mxu0 %v1174
      %1214 = vmatprep.subr.bf16.mxu0 0
      %1215 = vmatpush1.bf16.msra.mxu0 %v1175
      %1216 = vmatprep.subr.bf16.mxu0 0
      %1217 = vmatpush1.bf16.msra.mxu0 %v1176
      %1218 = vmatprep.subr.bf16.mxu0 0
      %1219 = vmatpush1.bf16.msra.mxu0 %v1177
      %1220 = vmatprep.subr.bf16.mxu0 0
      %1221 = vmatpush1.bf16.msra.mxu0 %v1178
      %1222 = vmatprep.subr.bf16.mxu0 0
      %1223 = vmatpush1.bf16.msra.mxu0 %v1179
      %1224 = vmatprep.subr.bf16.mxu0 0
      %1225 = vmatpush1.bf16.msra.mxu0 %v1180
      %1226 = vmatprep.subr.bf16.mxu0 0
      %1227 = vmatpush1.bf16.msra.mxu0 %v1181
      %1228 = vmatprep.subr.bf16.mxu0 0
      %1229 = vmatpush1.bf16.msra.mxu0 %v1182
      %1230 = vmatprep.subr.bf16.mxu0 0
      %1231 = vmatpush1.bf16.msra.mxu0 %v1183
      %1232 = vmatprep.mubr.bf16.mxu0 %v1103
      %1233 = vmatmul.mubr.bf16.gmra.mrb[0].mxu0 %v1102
      %v1234 = vpop.f32.mrb[0].mxu0
      %v1235 = vadd.f32 %v1084, %v1234
      %v1236 = vpop.f32.mrb[0].mxu0
      %v1237 = vpop.f32.mrb[0].mxu0
      %v1238 = vpop.f32.mrb[0].mxu0
      %1239 = vdwg.mxu0
      %1240 = vst [vmem:[%s276] sm:$0x1] %v1235
      %v1241 = vsel %vm905, %v1050, 0.0
      %v1242 = vrot.slane %v1241, 4
      %v1243 = vadd.f32 %v1241, %v1242
      %v1244 = vrot.slane %v1243, 2
      %v1245 = vadd.f32 %v1243, %v1244
      %v1246 = vrot.slane %v1245, 1
      %v1247 = vadd.f32 %v1245, %v1246
      %v1248 = vsel %vm905, %v1051, 0.0
      %v1249 = vrot.slane %v1248, 4
      %v1250 = vadd.f32 %v1248, %v1249
      %v1251 = vrot.slane %v1250, 2
      %v1252 = vadd.f32 %v1250, %v1251
      %v1253 = vrot.slane %v1252, 1
      %v1254 = vadd.f32 %v1252, %v1253
      %v1255 = vmul.f32 %v1247, %v1099
      %v1256 = vmul.f32 %v1254, %v1099
      %v1257 = vpack.c.bf16 %v1255, %v1255
      %v1258 = vpack.c.bf16 %v1256, %v1256
      %1259 = vmatprep.subr.bf16.mxu0 0
      %1260 = vmatpush1.bf16.msra.mxu0 %v1168
      %1261 = vmatprep.subr.bf16.mxu0 0
      %1262 = vmatpush1.bf16.msra.mxu0 %v1169
      %1263 = vmatprep.subr.bf16.mxu0 0
      %1264 = vmatpush1.bf16.msra.mxu0 %v1170
      %1265 = vmatprep.subr.bf16.mxu0 0
      %1266 = vmatpush1.bf16.msra.mxu0 %v1171
      %1267 = vmatprep.subr.bf16.mxu0 0
      %1268 = vmatpush1.bf16.msra.mxu0 %v1172
      %1269 = vmatprep.subr.bf16.mxu0 0
      %1270 = vmatpush1.bf16.msra.mxu0 %v1173
      %1271 = vmatprep.subr.bf16.mxu0 0
      %1272 = vmatpush1.bf16.msra.mxu0 %v1174
      %1273 = vmatprep.subr.bf16.mxu0 0
      %1274 = vmatpush1.bf16.msra.mxu0 %v1175
      %1275 = vmatprep.subr.bf16.mxu0 0
      %1276 = vmatpush1.bf16.msra.mxu0 %v1176
      %1277 = vmatprep.subr.bf16.mxu0 0
      %1278 = vmatpush1.bf16.msra.mxu0 %v1177
      %1279 = vmatprep.subr.bf16.mxu0 0
      %1280 = vmatpush1.bf16.msra.mxu0 %v1178
      %1281 = vmatprep.subr.bf16.mxu0 0
      %1282 = vmatpush1.bf16.msra.mxu0 %v1179
      %1283 = vmatprep.subr.bf16.mxu0 0
      %1284 = vmatpush1.bf16.msra.mxu0 %v1180
      %1285 = vmatprep.subr.bf16.mxu0 0
      %1286 = vmatpush1.bf16.msra.mxu0 %v1181
      %1287 = vmatprep.subr.bf16.mxu0 0
      %1288 = vmatpush1.bf16.msra.mxu0 %v1182
      %1289 = vmatprep.subr.bf16.mxu0 0
      %1290 = vmatpush1.bf16.msra.mxu0 %v1183
      %1291 = vmatprep.mubr.bf16.mxu0 %v1258
      %1292 = vmatmul.mubr.bf16.gmra.mrb[0].mxu0 %v1257
      %v1293 = vpop.f32.mrb[0].mxu0
      %v1294 = vadd.f32 %v1084, %v1293
      %v1295 = vpop.f32.mrb[0].mxu0
      %v1296 = vpop.f32.mrb[0].mxu0
      %v1297 = vpop.f32.mrb[0].mxu0
      %1298 = vdwg.mxu0
      %1299 = vst [vmem:[%s276 + $0x1] sm:$0x1] %v1294
      %p1300 = scmp.lt.s32.totalorder %s18, 7
      %s1301 = scalar_select %p1300, %s18, 7
      %s1302 = smul.addr %s1301, 2
      %s1303 = scalar_lea.vmem %s7, %s1302
      // Predicated region
      $region49: #{baseline_convnet_forward.11} parent=47 // pred_check
        %p1304 = pneg %p188
      $region50: #{baseline_convnet_forward.11} parent=47 // pred_check_branch
        %1306 = sbr.rel (%p1304) target = $region52
      $region51: #{baseline_convnet_forward.11} parent=47 // pred_region
        _
      $region52: #{baseline_convnet_forward.11} parent=47 // pred_fallthru
        _
    $region48: #{baseline_convnet_forward.11} parent=5 // pred_fallthru
      _
    %p1307 = scmp.le.s32.totalorder 2, %s13
    // Predicated region
    $region53: #{baseline_convnet_forward.11} parent=5 // pred_check
      %p1308 = pneg %p1307
    $region54: #{baseline_convnet_forward.11} parent=5 // pred_check_branch
      %1310 = sbr.rel (%p1308) target = $region56
    $region55: #{baseline_convnet_forward.11} parent=5 // pred_region
      %s1311 = ssub.s32 %s13, 2
      // Predicated region
      $region57: #{baseline_convnet_forward.11} parent=55 // pred_check
        %p1312 = pneg %p194
      $region58: #{baseline_convnet_forward.11} parent=55 // pred_check_branch
        %1314 = sbr.rel (%p1312) target = $region60
      $region59: #{baseline_convnet_forward.11} parent=55 // pred_region
        %p1315 = scmp.lt.s32.totalorder %s19, 7
        %s1316 = scalar_select %p1315, %s19, 7
        %s1317 = smul.addr %s1316, 2
        %s1318 = scalar_lea.vmem %s7, %s1317
      $region60: #{baseline_convnet_forward.11} parent=55 // pred_fallthru
        _
    $region56: #{baseline_convnet_forward.11} parent=5 // pred_fallthru
      _
  $region6: #{baseline_convnet_forward.11} parent=0 // loop_footer
    %s17 = sadd.s32 1, %s13
  $region7: #{baseline_convnet_forward.11} parent=0 // loop_footer_branch
    %12 = sbr.rel target = $region3
  $region8: #{baseline_convnet_forward.11} parent=0 // loop_exit
    _

</llo_original>
